<compile_context>
chip_gen: v7x
topology: tpu7x:2x2x1
jax: 0.10.0
libtpu: 0.0.40
codegen_flags: <defaults>
</compile_context>

<pallas_src>
import functools

import jax
import jax.numpy as jnp
from jax.experimental import pallas as pl
from jax.experimental.pallas import tpu as pltpu


# ----------------------------------------------------------------------------- linear (M-tiled)
def linear_kernel(x_ref, w_ref, b_ref, o_ref, *, apply_relu):
    y = jnp.dot(x_ref[...].astype(jnp.bfloat16), w_ref[...],
                preferred_element_type=jnp.float32) + b_ref[...]
    if apply_relu:
        y = jnp.maximum(y, 0.0)
    o_ref[...] = y.astype(o_ref.dtype)


def pallas_linear(x, w, b, apply_relu=False, out_dtype=jnp.float32, tile_m=256):
    # x: (M, K), w: (K, N), b: (N,)
    M, K = x.shape
    N = w.shape[1]
    tm = M if M <= tile_m else tile_m
    return pl.pallas_call(
        functools.partial(linear_kernel, apply_relu=apply_relu),
        out_shape=jax.ShapeDtypeStruct((M, N), out_dtype),
        grid_spec=pltpu.PrefetchScalarGridSpec(
            num_scalar_prefetch=0,
            grid=(pl.cdiv(M, tm),),
            in_specs=[pl.BlockSpec((tm, K), lambda i: (i, 0)),
                      pl.BlockSpec((K, N), lambda i: (0, 0)),
                      pl.BlockSpec((1, N), lambda i: (0, 0))],
            out_specs=pl.BlockSpec((tm, N), lambda i: (i, 0))),
        compiler_params=pltpu.CompilerParams(dimension_semantics=("parallel",)),
    )(x, w.astype(jnp.bfloat16), b.reshape(1, N).astype(jnp.float32))


# ----------------------------------------------------------------------------- fused BiLSTM (+ optional fused maxout)
def _pick_bb(B, bytes_per_row, budget_bytes=20 * 1024 * 1024, bb_cap=128):
    """Batch block for the recurrent kernels: big enough to feed the MXU with many
    sublanes per step, small enough that double-buffered xp / y tiles fit the VMEM
    budget (v7x has only 64 MiB physical VMEM), and leaving >= 2 grid blocks so
    dual-TensorCore chips can split the grid."""
    if B <= 8:
        return B
    fit = (budget_bytes // max(1, 2 * bytes_per_row)) // 8 * 8
    bb = max(8, min(bb_cap, fit))
    half = max(8, (((B + 1) // 2) + 7) // 8 * 8)
    return min(bb, half)


def bilstm_kernel(xp_ref, whf_ref, whb_ref, len_ref, o_ref,
                  hf_scr, cf_scr, hb_scr, cb_scr, *extra, T, H, emit_max):
    # xp_ref : (Bb, T, 8H) bf16 = [x@Wih_f^T + b_f | x@Wih_b^T + b_b]
    # whf/whb: (H, 4H)      bf16 recurrent weights (transposed)
    # len_ref: (Bb, 1)      int32 sequence lengths
    # o_ref  : emit_max=False -> (Bb, T, 2H) bf16  [h_fwd | h_bwd], padded steps = 0
    #          emit_max=True  -> (Bb, 2H)    f32   masked max over time
    H4 = 4 * H
    y_scr = None if emit_max else extra[0]          # (Bb, T, 2H) f32

    hf_scr[...] = jnp.zeros_like(hf_scr)
    cf_scr[...] = jnp.zeros_like(cf_scr)
    hb_scr[...] = jnp.zeros_like(hb_scr)
    cb_scr[...] = jnp.zeros_like(cb_scr)
    if emit_max:
        o_ref[...] = jnp.full(o_ref.shape, -1e30, dtype=o_ref.dtype)
    lens = len_ref[...]                              # (Bb, 1) int32

    def cell(g, c_prev):
        i_g = jax.nn.sigmoid(g[:, 0 * H:1 * H])
        f_g = jax.nn.sigmoid(g[:, 1 * H:2 * H])
        g_g = jnp.tanh(g[:, 2 * H:3 * H])
        o_g = jax.nn.sigmoid(g[:, 3 * H:4 * H])
        c_new = f_g * c_prev + i_g * g_g
        h_new = o_g * jnp.tanh(c_new)
        return h_new, c_new

    def step(t):
        tf = t
        tb = T - 1 - t
        # two half-width recurrent matmuls (no zero-padded block-diagonal RHS)
        rec_f = jnp.dot(hf_scr[...].astype(jnp.bfloat16), whf_ref[...],
                        preferred_element_type=jnp.float32)          # (Bb, 4H)
        rec_b = jnp.dot(hb_scr[...].astype(jnp.bfloat16), whb_ref[...],
                        preferred_element_type=jnp.float32)
        xf = xp_ref[:, pl.ds(tf, 1), pl.ds(0, H4)][:, 0, :].astype(jnp.float32)
        xb = xp_ref[:, pl.ds(tb, 1), pl.ds(H4, H4)][:, 0, :].astype(jnp.float32)

        hf_new, cf_new = cell(xf + rec_f, cf_scr[...])
        hb_new, cb_new = cell(xb + rec_b, cb_scr[...])

        mf = lens > tf                                               # (Bb, 1) bool
        mb = lens > tb

        # hold state at padded positions (pack_padded_sequence semantics)
        hf_scr[...] = jnp.where(mf, hf_new, hf_scr[...])
        cf_scr[...] = jnp.where(mf, cf_new, cf_scr[...])
        hb_scr[...] = jnp.where(mb, hb_new, hb_scr[...])
        cb_scr[...] = jnp.where(mb, cb_new, cb_scr[...])

        if emit_max:
            cand = jnp.concatenate([jnp.where(mf, hf_new, -1e30),
                                    jnp.where(mb, hb_new, -1e30)], axis=1)   # (Bb, 2H)
            o_ref[...] = jnp.maximum(o_ref[...], cand)
        else:
            y_scr[:, pl.ds(tf, 1), pl.ds(0, H)] = jnp.where(mf, hf_new, 0.0)[:, None, :]
            y_scr[:, pl.ds(tb, 1), pl.ds(H, H)] = jnp.where(mb, hb_new, 0.0)[:, None, :]
        return None

    if T <= 64:                      # fully unroll short recurrences (LLO visibility)
        for t in range(T):
            step(t)
    else:
        def body(t, carry):
            step(t)
            return carry
        jax.lax.fori_loop(0, T, body, None, unroll=4)

    if not emit_max:
        # one dense bf16 store of the whole tile (no per-step masked sub-lane HBM stores)
        o_ref[...] = y_scr[...].astype(o_ref.dtype)


def pallas_bilstm(xp, lengths, whf, whb, H, emit_max):
    # xp: (B, T, 8H) bf16, lengths: (B,) int32, whf/whb: (H, 4H) bf16
    B, T, _ = xp.shape
    if emit_max:
        row_bytes = T * 8 * H * 2 + 2 * H * 4
    else:
        row_bytes = T * (8 * H * 2 + 2 * H * 2 + 2 * H * 4)
    Bb = _pick_bb(B, row_bytes)
    lens2d = lengths.reshape(B, 1).astype(jnp.int32)

    if emit_max:
        out_shape = jax.ShapeDtypeStruct((B, 2 * H), jnp.float32)
        out_spec = pl.BlockSpec((Bb, 2 * H), lambda b: (b, 0))
        scratch = []
    else:
        out_shape = jax.ShapeDtypeStruct((B, T, 2 * H), jnp.bfloat16)
        out_spec = pl.BlockSpec((Bb, T, 2 * H), lambda b: (b, 0, 0))
        scratch = [pltpu.VMEM((Bb, T, 2 * H), jnp.float32)]

    return pl.pallas_call(
        functools.partial(bilstm_kernel, T=T, H=H, emit_max=emit_max),
        out_shape=out_shape,
        grid_spec=pltpu.PrefetchScalarGridSpec(
            num_scalar_prefetch=0,
            grid=(pl.cdiv(B, Bb),),
            in_specs=[pl.BlockSpec((Bb, T, 8 * H), lambda b: (b, 0, 0)),
                      pl.BlockSpec((H, 4 * H), lambda b: (0, 0)),
                      pl.BlockSpec((H, 4 * H), lambda b: (0, 0)),
                      pl.BlockSpec((Bb, 1), lambda b: (b, 0))],
            out_specs=out_spec,
            scratch_shapes=[pltpu.VMEM((Bb, H), jnp.float32)] * 4 + scratch),
        compiler_params=pltpu.CompilerParams(
            dimension_semantics=("parallel",),
            vmem_limit_bytes=48 * 1024 * 1024),
    )(xp, whf, whb, lens2d)


def bilstm_pair(x1, l1, x2, l2, p, emit_max):
    """Shared-weight fused BiLSTM for the two sentences.  The input projections of the
    forward+backward directions AND of both sentences are batched into one matmul; the
    projected activations (xp) are carried through HBM in bf16."""
    B, T1, Din = x1.shape
    T2 = x2.shape[1]
    H = p['w_hh_f'].shape[1]

    w_ih = jnp.concatenate([p['w_ih_f'].T, p['w_ih_b'].T], axis=1)          # (Din, 8H)
    bias = jnp.concatenate([p['b_ih_f'] + p['b_hh_f'],
                            p['b_ih_b'] + p['b_hh_b']])                     # (8H,)
    whf = p['w_hh_f'].T.astype(jnp.bfloat16)                                # (H, 4H)
    whb = p['w_hh_b'].T.astype(jnp.bfloat16)

    xcat = jnp.concatenate([x1.reshape(B * T1, Din), x2.reshape(B * T2, Din)], axis=0)
    xp = pallas_linear(xcat, w_ih, bias, out_dtype=jnp.bfloat16)            # (B*(T1+T2), 8H)
    xp1 = xp[:B * T1].reshape(B, T1, 8 * H)
    xp2 = xp[B * T1:].reshape(B, T2, 8 * H)

    y1 = pallas_bilstm(xp1, l1, whf, whb, H, emit_max)
    y2 = pallas_bilstm(xp2, l2, whf, whb, H, emit_max)
    return y1, y2


# ----------------------------------------------------------------------------- biDafAttn (batched)
def bidaf_kernel(s1_ref, s2_ref, l1_ref, l2_ref, att1_ref, att2_ref):
    s1 = s1_ref[...]                                        # (Bb, T1, D) bf16
    s2 = s2_ref[...]                                        # (Bb, T2, D) bf16
    l1 = l1_ref[...]                                        # (Bb, 1) int32
    l2 = l2_ref[...]
    Bb = s1.shape[0]

    def score_softmax_attend(q, k, key_len):
        # scores (Bb,Tq,Tk) via rhs-transposed contraction; mask only the key axis
        S = jnp.einsum('bqd,bkd->bqk', q, k, preferred_element_type=jnp.float32)
        Tq, Tk = S.shape[1], S.shape[2]
        col = jax.lax.broadcasted_iota(jnp.int32, (Bb, Tq, Tk), 2)
        Sm = jnp.where(col < key_len[:, :, None], S, -1e30)
        mx = jnp.max(Sm, axis=-1, keepdims=True)
        p = jnp.exp(Sm - mx)
        inv = pl.reciprocal(jnp.sum(p, axis=-1, keepdims=True), approx=True)
        w = (p * inv).astype(jnp.bfloat16)
        return jnp.einsum('bqk,bkd->bqd', w, k, preferred_element_type=jnp.float32)

    att1_ref[...] = score_softmax_attend(s1, s2, l2).astype(att1_ref.dtype)
    att2_ref[...] = score_softmax_attend(s2, s1, l1).astype(att2_ref.dtype)


def pallas_bidaf(s1, l1, s2, l2, block_b=8):
    # s1: (B, T1, D) bf16, s2: (B, T2, D) bf16
    B, T1, D = s1.shape
    T2 = s2.shape[1]
    Bb = B if B <= block_b else block_b
    l1_2d = l1.reshape(B, 1).astype(jnp.int32)
    l2_2d = l2.reshape(B, 1).astype(jnp.int32)
    return pl.pallas_call(
        bidaf_kernel,
        out_shape=(jax.ShapeDtypeStruct((B, T1, D), jnp.bfloat16),
                   jax.ShapeDtypeStruct((B, T2, D), jnp.bfloat16)),
        grid_spec=pltpu.PrefetchScalarGridSpec(
            num_scalar_prefetch=0,
            grid=(pl.cdiv(B, Bb),),
            in_specs=[pl.BlockSpec((Bb, T1, D), lambda b: (b, 0, 0)),
                      pl.BlockSpec((Bb, T2, D), lambda b: (b, 0, 0)),
                      pl.BlockSpec((Bb, 1), lambda b: (b, 0)),
                      pl.BlockSpec((Bb, 1), lambda b: (b, 0))],
            out_specs=[pl.BlockSpec((Bb, T1, D), lambda b: (b, 0, 0)),
                       pl.BlockSpec((Bb, T2, D), lambda b: (b, 0, 0))]),
        compiler_params=pltpu.CompilerParams(dimension_semantics=("parallel",)),
    )(s1.astype(jnp.bfloat16), s2.astype(jnp.bfloat16), l1_2d, l2_2d)


# ----------------------------------------------------------------------------- co-attention features + projection (fused, folded weights)
def coattn_proj_kernel(s_ref, a_ref, w_ref, b_ref, o_ref):
    s = s_ref[...]
    a = a_ref[...]
    # (s - att) feature is folded into w host-side: concat is only [s, att, s*att]
    x = jnp.concatenate([s, a, s * a], axis=1).astype(jnp.bfloat16)          # (tm, 6H)
    y = jnp.dot(x, w_ref[...], preferred_element_type=jnp.float32) + b_ref[...]
    o_ref[...] = jnp.maximum(y, 0.0).astype(o_ref.dtype)


def pallas_coattn_proj(s, a, w_fold, b, out_dtype=jnp.bfloat16, tile_m=256):
    # s, a: (M, 2H) bf16 ; w_fold: (6H, H) ; b: (H,)
    M, D2 = s.shape
    N = w_fold.shape[1]
    tm = M if M <= tile_m else tile_m
    return pl.pallas_call(
        coattn_proj_kernel,
        out_shape=jax.ShapeDtypeStruct((M, N), out_dtype),
        grid_spec=pltpu.PrefetchScalarGridSpec(
            num_scalar_prefetch=0,
            grid=(pl.cdiv(M, tm),),
            in_specs=[pl.BlockSpec((tm, D2), lambda i: (i, 0)),
                      pl.BlockSpec((tm, D2), lambda i: (i, 0)),
                      pl.BlockSpec((3 * D2, N), lambda i: (0, 0)),
                      pl.BlockSpec((1, N), lambda i: (0, 0))],
            out_specs=pl.BlockSpec((tm, N), lambda i: (i, 0))),
        compiler_params=pltpu.CompilerParams(dimension_semantics=("parallel",)),
    )(s, a, w_fold.astype(jnp.bfloat16), b.reshape(1, N).astype(jnp.float32))


# ----------------------------------------------------------------------------- fused classifier (feature math + mlp_1 + relu + sm)
def classifier_kernel(m1_ref, m2_ref, w1_ref, b1_ref, w2_ref, b2_ref, o_ref):
    m1 = m1_ref[...]
    m2 = m2_ref[...]
    feats = jnp.concatenate([m1, m2, jnp.abs(m1 - m2), m1 * m2], axis=1)
    h = jnp.dot(feats.astype(jnp.bfloat16), w1_ref[...],
                preferred_element_type=jnp.float32) + b1_ref[...]
    h = jnp.maximum(h, 0.0)
    o_ref[...] = jnp.dot(h.astype(jnp.bfloat16), w2_ref[...],
                         preferred_element_type=jnp.float32) + b2_ref[...]


def pallas_classifier(m1, m2, w1, b1, w2, b2, tile_m=256):
    B, D = m1.shape
    mlp_d = w1.shape[1]
    n_cls = w2.shape[1]
    tm = B if B <= tile_m else tile_m
    return pl.pallas_call(
        classifier_kernel,
        out_shape=jax.ShapeDtypeStruct((B, n_cls), jnp.float32),
        grid_spec=pltpu.PrefetchScalarGridSpec(
            num_scalar_prefetch=0,
            grid=(pl.cdiv(B, tm),),
            in_specs=[pl.BlockSpec((tm, D), lambda i: (i, 0)),
                      pl.BlockSpec((tm, D), lambda i: (i, 0)),
                      pl.BlockSpec((4 * D, mlp_d), lambda i: (0, 0)),
                      pl.BlockSpec((1, mlp_d), lambda i: (0, 0)),
                      pl.BlockSpec((mlp_d, n_cls), lambda i: (0, 0)),
                      pl.BlockSpec((1, n_cls), lambda i: (0, 0))],
            out_specs=pl.BlockSpec((tm, n_cls), lambda i: (i, 0))),
        compiler_params=pltpu.CompilerParams(dimension_semantics=("parallel",)),
    )(m1, m2,
      w1.astype(jnp.bfloat16), b1.reshape(1, -1).astype(jnp.float32),
      w2.astype(jnp.bfloat16), b2.reshape(1, -1).astype(jnp.float32))


# ----------------------------------------------------------------------------- parameters
def init_lstm_params(key, input_size, hidden):
    names = ['w_ih_f', 'w_hh_f', 'b_ih_f', 'b_hh_f', 'w_ih_b', 'w_hh_b', 'b_ih_b', 'b_hh_b']
    shapes = [(4 * hidden, input_size), (4 * hidden, hidden), (4 * hidden,), (4 * hidden,)] * 2
    ks = jax.random.split(key, len(names))
    return {n: jax.random.normal(k, s, jnp.float32) * 0.1 for n, s, k in zip(names, shapes, ks)}


def init_params(key, vocab, glove_dim, elmo_dim, hidden, mlp_d, n_cls):
    keys = jax.random.split(key, 12)
    glove = jax.random.normal(keys[0], (vocab, glove_dim), jnp.float32) * 0.1
    glove = glove.at[0].set(0.0)                       # padding_index=0
    elmo = jax.random.normal(keys[1], (vocab, elmo_dim), jnp.float32) * 0.1
    elmo = elmo.at[0].set(0.0)
    return {
        'glove': glove,
        'elmo': elmo,
        'lstm1': init_lstm_params(keys[2], glove_dim + elmo_dim, hidden),
        'lstm2': init_lstm_params(keys[3], hidden + elmo_dim, hidden),
        'proj_w': jax.random.normal(keys[4], (hidden, hidden * 2 * 4), jnp.float32) * 0.1,
        'proj_b': jax.random.normal(keys[5], (hidden,), jnp.float32) * 0.1,
        'mlp1_w': jax.random.normal(keys[6], (mlp_d, hidden * 2 * 4), jnp.float32) * 0.1,
        'mlp1_b': jax.random.normal(keys[7], (mlp_d,), jnp.float32) * 0.1,
        'sm_w': jax.random.normal(keys[8], (n_cls, mlp_d), jnp.float32) * 0.1,
        'sm_b': jax.random.normal(keys[9], (n_cls,), jnp.float32) * 0.1,
    }


# ----------------------------------------------------------------------------- full forward
def model_forward(params, s1_tokens, s2_tokens):
    B, T1 = s1_tokens.shape
    T2 = s2_tokens.shape[1]

    # get_length_and_mask
    l1 = jnp.sum((s1_tokens != 0).astype(jnp.int32), axis=1)
    l2 = jnp.sum((s2_tokens != 0).astype(jnp.int32), axis=1)

    # embeddings (glue: gather)
    g1 = params['glove'][s1_tokens]
    g2 = params['glove'][s2_tokens]
    e1 = params['elmo'][s1_tokens]     # TODO(synk): stand-in for ELMo biLM output
    e2 = params['elmo'][s2_tokens]

    x1 = jnp.concatenate([g1, e1], axis=2)
    x2 = jnp.concatenate([g2, e2], axis=2)

    # dropout -> identity (inference).  Layer-1 fused BiLSTM (shared weights, fused dirs).
    s1_l1, s2_l1 = bilstm_pair(x1, l1, x2, l2, params['lstm1'], emit_max=False)   # bf16

    s1_att, s2_att = pallas_bidaf(s1_l1, l1, s2_l1, l2)                            # bf16

    # co-attention features + projection + relu (folded weights), both sentences in one call
    H = params['proj_w'].shape[0]
    H2 = 2 * H
    wp = params['proj_w'].T                                                        # (8H, H)
    w_fold = jnp.concatenate([wp[0:H2] + wp[2 * H2:3 * H2],
                              wp[H2:2 * H2] - wp[2 * H2:3 * H2],
                              wp[3 * H2:4 * H2]], axis=0)                          # (6H, H)
    s_flat = jnp.concatenate([s1_l1.reshape(B * T1, -1), s2_l1.reshape(B * T2, -1)], axis=0)
    a_flat = jnp.concatenate([s1_att.reshape(B * T1, -1), s2_att.reshape(B * T2, -1)], axis=0)
    pc = pallas_coattn_proj(s_flat, a_flat, w_fold, params['proj_b'])              # bf16
    p1 = pc[:B * T1].reshape(B, T1, H)
    p2 = pc[B * T1:].reshape(B, T2, H)

    f1 = jnp.concatenate([p1, e1.astype(jnp.bfloat16)], axis=2)
    f2 = jnp.concatenate([p2, e2.astype(jnp.bfloat16)], axis=2)

    # Layer-2 fused BiLSTM with fused masked max-over-time (no (B,T,2H) HBM roundtrip)
    m1, m2 = bilstm_pair(f1, l1, f2, l2, params['lstm2'], emit_max=True)           # f32 (B,2H)

    # fused [m1, m2, |m1-m2|, m1*m2] -> mlp_1 -> relu -> sm
    return pallas_classifier(m1, m2, params['mlp1_w'].T, params['mlp1_b'],
                             params['sm_w'].T, params['sm_b'])


# ----------------------------------------------------------------------------- main
if __name__ == "__main__":
    B, T1, T2 = 2, 8, 8
    VOCAB, GLOVE_D, ELMO_D = 50, 16, 48
    HIDDEN, MLP_D, N_CLS = 32, 32, 3

    key = jax.random.PRNGKey(0)
    pkey, tkey1, tkey2 = jax.random.split(key, 3)
    params = init_params(pkey, VOCAB, GLOVE_D, ELMO_D, HIDDEN, MLP_D, N_CLS)

    # token ids with trailing padding (id 0)
    s1_tokens = jax.random.randint(tkey1, (B, T1), 1, VOCAB, dtype=jnp.int32)
    s2_tokens = jax.random.randint(tkey2, (B, T2), 1, VOCAB, dtype=jnp.int32)
    lens1 = jnp.array([8, 5], dtype=jnp.int32)
    lens2 = jnp.array([6, 8], dtype=jnp.int32)
    s1_tokens = jnp.where(jnp.arange(T1)[None, :] < lens1[:, None], s1_tokens, 0)
    s2_tokens = jnp.where(jnp.arange(T2)[None, :] < lens2[:, None], s2_tokens, 0)

    fwd = jax.jit(model_forward)
    out = jax.block_until_ready(fwd(params, s1_tokens, s2_tokens))
    assert out.shape == (B, N_CLS)
    assert bool(jnp.all(jnp.isfinite(out)))
    print("KERNEL_OK")
</pallas_src>

<mosaic_0001>
module attributes {stable_mosaic.version = 11 : i64} {
  func.func @linear_kernel(%arg0: i32, %arg1: memref<32x64xf32, #tpu.memory_space<vmem>>, %arg2: memref<64x256xbf16, #tpu.memory_space<vmem>>, %arg3: memref<1x256xf32, #tpu.memory_space<vmem>>, %arg4: memref<32x256xbf16, #tpu.memory_space<vmem>>) attributes {dimension_semantics = [#tpu.dimension_semantics<parallel>], iteration_bounds = array<i64: 1>, scalar_prefetch = 0 : i64, scratch_operands = 0 : i64, tpu.core_type = #tpu.core_type<tc>, window_params = [{transform_indices = @transform_0, window_bounds = array<i64: 32, 64>}, {pipeline_mode = #tpu.pipeline_mode<synchronous>, transform_indices = @transform_1, window_bounds = array<i64: 64, 256>}, {pipeline_mode = #tpu.pipeline_mode<synchronous>, transform_indices = @transform_2, window_bounds = array<i64: 1, 256>}, {transform_indices = @transform_3, window_bounds = array<i64: 32, 256>}]} {
    %c0 = arith.constant 0 : index
    %c0_0 = arith.constant 0 : index
    %0 = vector.load %arg1[%c0, %c0_0] : memref<32x64xf32, #tpu.memory_space<vmem>>, vector<32x64xf32>
    %1 = arith.truncf %0 : vector<32x64xf32> to vector<32x64xbf16>
    %c0_1 = arith.constant 0 : index
    %c0_2 = arith.constant 0 : index
    %2 = vector.load %arg2[%c0_1, %c0_2] : memref<64x256xbf16, #tpu.memory_space<vmem>>, vector<64x256xbf16>
    %cst = arith.constant dense<0.000000e+00> : vector<32x256xf32>
    %3 = tpu.matmul %1, %2, %cst {dimension_numbers = #tpu.dot_dimension_numbers<[1], [0], [0], [1], [0, 0, 1, 1], [], []>} : vector<32x64xbf16>, vector<64x256xbf16>, vector<32x256xf32> -> vector<32x256xf32>
    %c0_3 = arith.constant 0 : index
    %c0_4 = arith.constant 0 : index
    %4 = vector.load %arg3[%c0_3, %c0_4] : memref<1x256xf32, #tpu.memory_space<vmem>>, vector<1x256xf32>
    %5 = vector.broadcast %4 : vector<1x256xf32> to vector<32x256xf32>
    %6 = arith.addf %3, %5 : vector<32x256xf32>
    %7 = arith.truncf %6 : vector<32x256xf32> to vector<32x256xbf16>
    %c0_5 = arith.constant 0 : index
    %c0_6 = arith.constant 0 : index
    %8 = vector.load %arg4[%c0_5, %c0_6] : memref<32x256xbf16, #tpu.memory_space<vmem>>, vector<32x256xbf16>
    tpu.vector_store %arg4[%c0_5, %c0_6], %7 {strides = array<i32>} : memref<32x256xbf16, #tpu.memory_space<vmem>>, vector<32x256xbf16>,
    return
  }
  func.func @transform_0(%arg0: i32) -> (i32, i32) {
    %c0_i32 = arith.constant 0 : i32
    %c0_i32_0 = arith.constant 0 : i32
    return %arg0, %c0_i32 : i32, i32
  }
  func.func @transform_1(%arg0: i32) -> (i32, i32) {
    %c0_i32 = arith.constant 0 : i32
    %c0_i32_0 = arith.constant 0 : i32
    %c0_i32_1 = arith.constant 0 : i32
    return %c0_i32, %c0_i32_0 : i32, i32
  }
  func.func @transform_2(%arg0: i32) -> (i32, i32) {
    %c0_i32 = arith.constant 0 : i32
    %c0_i32_0 = arith.constant 0 : i32
    %c0_i32_1 = arith.constant 0 : i32
    return %c0_i32, %c0_i32_0 : i32, i32
  }
  func.func @transform_3(%arg0: i32) -> (i32, i32) {
    %c0_i32 = arith.constant 0 : i32
    %c0_i32_0 = arith.constant 0 : i32
    return %arg0, %c0_i32 : i32, i32
  }
}

module attributes {stable_mosaic.version = 11 : i64} {
  func.func @coattn_proj_kernel(%arg0: i32, %arg1: memref<32x64xbf16, #tpu.memory_space<vmem>>, %arg2: memref<32x64xbf16, #tpu.memory_space<vmem>>, %arg3: memref<192x32xbf16, #tpu.memory_space<vmem>>, %arg4: memref<1x32xf32, #tpu.memory_space<vmem>>, %arg5: memref<32x32xbf16, #tpu.memory_space<vmem>>) attributes {dimension_semantics = [#tpu.dimension_semantics<parallel>], iteration_bounds = array<i64: 1>, scalar_prefetch = 0 : i64, scratch_operands = 0 : i64, tpu.core_type = #tpu.core_type<tc>, window_params = [{transform_indices = @transform_0, window_bounds = array<i64: 32, 64>}, {transform_indices = @transform_1, window_bounds = array<i64: 32, 64>}, {pipeline_mode = #tpu.pipeline_mode<synchronous>, transform_indices = @transform_2, window_bounds = array<i64: 192, 32>}, {pipeline_mode = #tpu.pipeline_mode<synchronous>, transform_indices = @transform_3, window_bounds = array<i64: 1, 32>}, {transform_indices = @transform_4, window_bounds = array<i64: 32, 32>}]} {
    %c0 = arith.constant 0 : index
    %c0_0 = arith.constant 0 : index
    %0 = vector.load %arg1[%c0, %c0_0] : memref<32x64xbf16, #tpu.memory_space<vmem>>, vector<32x64xbf16>
    %c0_1 = arith.constant 0 : index
    %c0_2 = arith.constant 0 : index
    %1 = vector.load %arg2[%c0_1, %c0_2] : memref<32x64xbf16, #tpu.memory_space<vmem>>, vector<32x64xbf16>
    %2 = arith.mulf %0, %1 : vector<32x64xbf16>
    %3 = tpu.concatenate %0, %1, %2 in 1 : vector<32x64xbf16>, vector<32x64xbf16>, vector<32x64xbf16> -> vector<32x192xbf16>
    %c0_3 = arith.constant 0 : index
    %c0_4 = arith.constant 0 : index
    %4 = vector.load %arg3[%c0_3, %c0_4] : memref<192x32xbf16, #tpu.memory_space<vmem>>, vector<192x32xbf16>
    %cst = arith.constant dense<0.000000e+00> : vector<32x32xf32>
    %5 = tpu.matmul %3, %4, %cst {dimension_numbers = #tpu.dot_dimension_numbers<[1], [0], [0], [1], [0, 0, 1, 1], [], []>} : vector<32x192xbf16>, vector<192x32xbf16>, vector<32x32xf32> -> vector<32x32xf32>
    %c0_5 = arith.constant 0 : index
    %c0_6 = arith.constant 0 : index
    %6 = vector.load %arg4[%c0_5, %c0_6] : memref<1x32xf32, #tpu.memory_space<vmem>>, vector<1x32xf32>
    %7 = vector.broadcast %6 : vector<1x32xf32> to vector<32x32xf32>
    %8 = arith.addf %5, %7 : vector<32x32xf32>
    %cst_7 = arith.constant 0.000000e+00 : f32
    %9 = vector.broadcast %cst_7 : f32 to vector<32x32xf32>
    %10 = arith.maximumf %8, %9 : vector<32x32xf32>
    %11 = arith.truncf %10 : vector<32x32xf32> to vector<32x32xbf16>
    %c0_8 = arith.constant 0 : index
    %c0_9 = arith.constant 0 : index
    %12 = vector.load %arg5[%c0_8, %c0_9] : memref<32x32xbf16, #tpu.memory_space<vmem>>, vector<32x32xbf16>
    tpu.vector_store %arg5[%c0_8, %c0_9], %11 {strides = array<i32>} : memref<32x32xbf16, #tpu.memory_space<vmem>>, vector<32x32xbf16>,
    return
  }
  func.func @transform_0(%arg0: i32) -> (i32, i32) {
    %c0_i32 = arith.constant 0 : i32
    %c0_i32_0 = arith.constant 0 : i32
    return %arg0, %c0_i32 : i32, i32
  }
  func.func @transform_1(%arg0: i32) -> (i32, i32) {
    %c0_i32 = arith.constant 0 : i32
    %c0_i32_0 = arith.constant 0 : i32
    return %arg0, %c0_i32 : i32, i32
  }
  func.func @transform_2(%arg0: i32) -> (i32, i32) {
    %c0_i32 = arith.constant 0 : i32
    %c0_i32_0 = arith.constant 0 : i32
    %c0_i32_1 = arith.constant 0 : i32
    return %c0_i32, %c0_i32_0 : i32, i32
  }
  func.func @transform_3(%arg0: i32) -> (i32, i32) {
    %c0_i32 = arith.constant 0 : i32
    %c0_i32_0 = arith.constant 0 : i32
    %c0_i32_1 = arith.constant 0 : i32
    return %c0_i32, %c0_i32_0 : i32, i32
  }
  func.func @transform_4(%arg0: i32) -> (i32, i32) {
    %c0_i32 = arith.constant 0 : i32
    %c0_i32_0 = arith.constant 0 : i32
    return %arg0, %c0_i32 : i32, i32
  }
}

module attributes {stable_mosaic.version = 11 : i64} {
  func.func @bidaf_kernel(%arg0: i32, %arg1: memref<2x8x64xbf16, #tpu.memory_space<vmem>>, %arg2: memref<2x8x64xbf16, #tpu.memory_space<vmem>>, %arg3: memref<2x1xi32, #tpu.memory_space<vmem>>, %arg4: memref<2x1xi32, #tpu.memory_space<vmem>>, %arg5: memref<2x8x64xbf16, #tpu.memory_space<vmem>>, %arg6: memref<2x8x64xbf16, #tpu.memory_space<vmem>>) attributes {dimension_semantics = [#tpu.dimension_semantics<parallel>], iteration_bounds = array<i64: 1>, scalar_prefetch = 0 : i64, scratch_operands = 0 : i64, tpu.core_type = #tpu.core_type<tc>, window_params = [{transform_indices = @transform_0, window_bounds = array<i64: 2, 8, 64>}, {transform_indices = @transform_1, window_bounds = array<i64: 2, 8, 64>}, {transform_indices = @transform_2, window_bounds = array<i64: 2, 1>}, {transform_indices = @transform_3, window_bounds = array<i64: 2, 1>}, {transform_indices = @transform_4, window_bounds = array<i64: 2, 8, 64>}, {transform_indices = @transform_5, window_bounds = array<i64: 2, 8, 64>}]} {
    %c0 = arith.constant 0 : index
    %c0_0 = arith.constant 0 : index
    %c0_1 = arith.constant 0 : index
    %0 = vector.load %arg1[%c0, %c0_0, %c0_1] : memref<2x8x64xbf16, #tpu.memory_space<vmem>>, vector<2x8x64xbf16>
    %c0_2 = arith.constant 0 : index
    %c0_3 = arith.constant 0 : index
    %c0_4 = arith.constant 0 : index
    %1 = vector.load %arg2[%c0_2, %c0_3, %c0_4] : memref<2x8x64xbf16, #tpu.memory_space<vmem>>, vector<2x8x64xbf16>
    %c0_5 = arith.constant 0 : index
    %c0_6 = arith.constant 0 : index
    %2 = vector.load %arg3[%c0_5, %c0_6] : memref<2x1xi32, #tpu.memory_space<vmem>>, vector<2x1xi32>
    %c0_7 = arith.constant 0 : index
    %c0_8 = arith.constant 0 : index
    %3 = vector.load %arg4[%c0_7, %c0_8] : memref<2x1xi32, #tpu.memory_space<vmem>>, vector<2x1xi32>
    "tpu.trace_start"() <{level = 10 : i32, message = "bqd,bkd->bqk"}> : () -> ()
    %cst = arith.constant dense<0.000000e+00> : vector<2x8x8xf32>
    %4 = tpu.matmul %0, %1, %cst {dimension_numbers = #tpu.dot_dimension_numbers<[2], [2], [1], [1], [0, 0, 0, 1, 1, 1], [0], [0]>} : vector<2x8x64xbf16>, vector<2x8x64xbf16>, vector<2x8x8xf32> -> vector<2x8x8xf32>
    "tpu.trace_stop"() : () -> ()
    %5 = tpu.iota {dimensions = array<i32: 2>} : vector<2x8x8xi32>
    %6 = vector.shape_cast %3 : vector<2x1xi32> to vector<2x1x1xi32>
    %7 = vector.broadcast %6 : vector<2x1x1xi32> to vector<2x8x8xi32>
    %8 = arith.cmpi slt, %5, %7 : vector<2x8x8xi32>
    %cst_9 = arith.constant -1.000000e+30 : f32
    %9 = vector.broadcast %cst_9 : f32 to vector<2x8x8xf32>
    %10 = arith.select %8, %4, %9 : vector<2x8x8xi1>, vector<2x8x8xf32>
    %cst_10 = arith.constant dense<0xFF800000> : vector<2x8xf32>
    %11 = vector.multi_reduction <maximumf>, %10, %cst_10 [2] : vector<2x8x8xf32> to vector<2x8xf32>
    %12 = vector.shape_cast %11 : vector<2x8xf32> to vector<2x8x1xf32>
    %13 = vector.broadcast %12 : vector<2x8x1xf32> to vector<2x8x8xf32>
    %14 = arith.subf %10, %13 : vector<2x8x8xf32>
    %15 = math.exp %14 : vector<2x8x8xf32>
    %cst_11 = arith.constant dense<0.000000e+00> : vector<2x8xf32>
    %16 = vector.multi_reduction <add>, %15, %cst_11 [2] : vector<2x8x8xf32> to vector<2x8xf32>
    %17 = vector.shape_cast %16 : vector<2x8xf32> to vector<2x8x1xf32>
    %18 = tpu.reciprocal %17 {approx = true} : vector<2x8x1xf32> -> vector<2x8x1xf32>
    %19 = vector.broadcast %18 : vector<2x8x1xf32> to vector<2x8x8xf32>
    %20 = arith.mulf %15, %19 : vector<2x8x8xf32>
    %21 = arith.truncf %20 : vector<2x8x8xf32> to vector<2x8x8xbf16>
    "tpu.trace_start"() <{level = 10 : i32, message = "bqk,bkd->bqd"}> : () -> ()
    %cst_12 = arith.constant dense<0.000000e+00> : vector<2x8x64xf32>
    %22 = tpu.matmul %21, %1, %cst_12 {dimension_numbers = #tpu.dot_dimension_numbers<[2], [1], [1], [2], [0, 0, 0, 1, 1, 2], [0], [0]>} : vector<2x8x8xbf16>, vector<2x8x64xbf16>, vector<2x8x64xf32> -> vector<2x8x64xf32>
    "tpu.trace_stop"() : () -> ()
    %23 = arith.truncf %22 : vector<2x8x64xf32> to vector<2x8x64xbf16>
    %c0_13 = arith.constant 0 : index
    %c0_14 = arith.constant 0 : index
    %c0_15 = arith.constant 0 : index
    %24 = vector.load %arg5[%c0_13, %c0_14, %c0_15] : memref<2x8x64xbf16, #tpu.memory_space<vmem>>, vector<2x8x64xbf16>
    tpu.vector_store %arg5[%c0_13, %c0_14, %c0_15], %23 {strides = array<i32>} : memref<2x8x64xbf16, #tpu.memory_space<vmem>>, vector<2x8x64xbf16>,
    "tpu.trace_start"() <{level = 10 : i32, message = "bqd,bkd->bqk"}> : () -> ()
    %cst_16 = arith.constant dense<0.000000e+00> : vector<2x8x8xf32>
    %25 = tpu.matmul %1, %0, %cst_16 {dimension_numbers = #tpu.dot_dimension_numbers<[2], [2], [1], [1], [0, 0, 0, 1, 1, 1], [0], [0]>} : vector<2x8x64xbf16>, vector<2x8x64xbf16>, vector<2x8x8xf32> -> vector<2x8x8xf32>
    "tpu.trace_stop"() : () -> ()
    %26 = tpu.iota {dimensions = array<i32: 2>} : vector<2x8x8xi32>
    %27 = vector.shape_cast %2 : vector<2x1xi32> to vector<2x1x1xi32>
    %28 = vector.broadcast %27 : vector<2x1x1xi32> to vector<2x8x8xi32>
    %29 = arith.cmpi slt, %26, %28 : vector<2x8x8xi32>
    %cst_17 = arith.constant -1.000000e+30 : f32
    %30 = vector.broadcast %cst_17 : f32 to vector<2x8x8xf32>
    %31 = arith.select %29, %25, %30 : vector<2x8x8xi1>, vector<2x8x8xf32>
    %cst_18 = arith.constant dense<0xFF800000> : vector<2x8xf32>
    %32 = vector.multi_reduction <maximumf>, %31, %cst_18 [2] : vector<2x8x8xf32> to vector<2x8xf32>
    %33 = vector.shape_cast %32 : vector<2x8xf32> to vector<2x8x1xf32>
    %34 = vector.broadcast %33 : vector<2x8x1xf32> to vector<2x8x8xf32>
    %35 = arith.subf %31, %34 : vector<2x8x8xf32>
    %36 = math.exp %35 : vector<2x8x8xf32>
    %cst_19 = arith.constant dense<0.000000e+00> : vector<2x8xf32>
    %37 = vector.multi_reduction <add>, %36, %cst_19 [2] : vector<2x8x8xf32> to vector<2x8xf32>
    %38 = vector.shape_cast %37 : vector<2x8xf32> to vector<2x8x1xf32>
    %39 = tpu.reciprocal %38 {approx = true} : vector<2x8x1xf32> -> vector<2x8x1xf32>
    %40 = vector.broadcast %39 : vector<2x8x1xf32> to vector<2x8x8xf32>
    %41 = arith.mulf %36, %40 : vector<2x8x8xf32>
    %42 = arith.truncf %41 : vector<2x8x8xf32> to vector<2x8x8xbf16>
    "tpu.trace_start"() <{level = 10 : i32, message = "bqk,bkd->bqd"}> : () -> ()
    %cst_20 = arith.constant dense<0.000000e+00> : vector<2x8x64xf32>
    %43 = tpu.matmul %42, %0, %cst_20 {dimension_numbers = #tpu.dot_dimension_numbers<[2], [1], [1], [2], [0, 0, 0, 1, 1, 2], [0], [0]>} : vector<2x8x8xbf16>, vector<2x8x64xbf16>, vector<2x8x64xf32> -> vector<2x8x64xf32>
    "tpu.trace_stop"() : () -> ()
    %44 = arith.truncf %43 : vector<2x8x64xf32> to vector<2x8x64xbf16>
    %c0_21 = arith.constant 0 : index
    %c0_22 = arith.constant 0 : index
    %c0_23 = arith.constant 0 : index
    %45 = vector.load %arg6[%c0_21, %c0_22, %c0_23] : memref<2x8x64xbf16, #tpu.memory_space<vmem>>, vector<2x8x64xbf16>
    tpu.vector_store %arg6[%c0_21, %c0_22, %c0_23], %44 {strides = array<i32>} : memref<2x8x64xbf16, #tpu.memory_space<vmem>>, vector<2x8x64xbf16>,
    return
  }
  func.func @transform_0(%arg0: i32) -> (i32, i32, i32) {
    %c0_i32 = arith.constant 0 : i32
    %c0_i32_0 = arith.constant 0 : i32
    %c0_i32_1 = arith.constant 0 : i32
    return %arg0, %c0_i32, %c0_i32_0 : i32, i32, i32
  }
  func.func @transform_1(%arg0: i32) -> (i32, i32, i32) {
    %c0_i32 = arith.constant 0 : i32
    %c0_i32_0 = arith.constant 0 : i32
    %c0_i32_1 = arith.constant 0 : i32
    return %arg0, %c0_i32, %c0_i32_0 : i32, i32, i32
  }
  func.func @transform_2(%arg0: i32) -> (i32, i32) {
    %c0_i32 = arith.constant 0 : i32
    %c0_i32_0 = arith.constant 0 : i32
    return %arg0, %c0_i32 : i32, i32
  }
  func.func @transform_3(%arg0: i32) -> (i32, i32) {
    %c0_i32 = arith.constant 0 : i32
    %c0_i32_0 = arith.constant 0 : i32
    return %arg0, %c0_i32 : i32, i32
  }
  func.func @transform_4(%arg0: i32) -> (i32, i32, i32) {
    %c0_i32 = arith.constant 0 : i32
    %c0_i32_0 = arith.constant 0 : i32
    %c0_i32_1 = arith.constant 0 : i32
    return %arg0, %c0_i32, %c0_i32_0 : i32, i32, i32
  }
  func.func @transform_5(%arg0: i32) -> (i32, i32, i32) {
    %c0_i32 = arith.constant 0 : i32
    %c0_i32_0 = arith.constant 0 : i32
    %c0_i32_1 = arith.constant 0 : i32
    return %arg0, %c0_i32, %c0_i32_0 : i32, i32, i32
  }
}

module attributes {stable_mosaic.version = 11 : i64} {
  func.func @bilstm_kernel(%arg0: i32, %arg1: memref<2x8x256xbf16, #tpu.memory_space<vmem>>, %arg2: memref<32x128xbf16, #tpu.memory_space<vmem>>, %arg3: memref<32x128xbf16, #tpu.memory_space<vmem>>, %arg4: memref<2x1xi32, #tpu.memory_space<vmem>>, %arg5: memref<2x8x64xbf16, #tpu.memory_space<vmem>>, %arg6: memref<2x32xf32, #tpu.memory_space<vmem>>, %arg7: memref<2x32xf32, #tpu.memory_space<vmem>>, %arg8: memref<2x32xf32, #tpu.memory_space<vmem>>, %arg9: memref<2x32xf32, #tpu.memory_space<vmem>>, %arg10: memref<2x8x64xf32, #tpu.memory_space<vmem>>) attributes {dimension_semantics = [#tpu.dimension_semantics<parallel>], iteration_bounds = array<i64: 1>, scalar_prefetch = 0 : i64, scratch_operands = 5 : i64, tpu.core_type = #tpu.core_type<tc>, window_params = [{transform_indices = @transform_0, window_bounds = array<i64: 2, 8, 256>}, {pipeline_mode = #tpu.pipeline_mode<synchronous>, transform_indices = @transform_1, window_bounds = array<i64: 32, 128>}, {pipeline_mode = #tpu.pipeline_mode<synchronous>, transform_indices = @transform_2, window_bounds = array<i64: 32, 128>}, {transform_indices = @transform_3, window_bounds = array<i64: 2, 1>}, {transform_indices = @transform_4, window_bounds = array<i64: 2, 8, 64>}]} {
    %cst = arith.constant 0.000000e+00 : f32
    %0 = vector.broadcast %cst : f32 to vector<2x32xf32>
    %c0 = arith.constant 0 : index
    %c0_0 = arith.constant 0 : index
    %1 = vector.load %arg6[%c0, %c0_0] : memref<2x32xf32, #tpu.memory_space<vmem>>, vector<2x32xf32>
    tpu.vector_store %arg6[%c0, %c0_0], %0 {strides = array<i32>} : memref<2x32xf32, #tpu.memory_space<vmem>>, vector<2x32xf32>,
    %cst_1 = arith.constant 0.000000e+00 : f32
    %2 = vector.broadcast %cst_1 : f32 to vector<2x32xf32>
    %c0_2 = arith.constant 0 : index
    %c0_3 = arith.constant 0 : index
    %3 = vector.load %arg7[%c0_2, %c0_3] : memref<2x32xf32, #tpu.memory_space<vmem>>, vector<2x32xf32>
    tpu.vector_store %arg7[%c0_2, %c0_3], %2 {strides = array<i32>} : memref<2x32xf32, #tpu.memory_space<vmem>>, vector<2x32xf32>,
    %cst_4 = arith.constant 0.000000e+00 : f32
    %4 = vector.broadcast %cst_4 : f32 to vector<2x32xf32>
    %c0_5 = arith.constant 0 : index
    %c0_6 = arith.constant 0 : index
    %5 = vector.load %arg8[%c0_5, %c0_6] : memref<2x32xf32, #tpu.memory_space<vmem>>, vector<2x32xf32>
    tpu.vector_store %arg8[%c0_5, %c0_6], %4 {strides = array<i32>} : memref<2x32xf32, #tpu.memory_space<vmem>>, vector<2x32xf32>,
    %cst_7 = arith.constant 0.000000e+00 : f32
    %6 = vector.broadcast %cst_7 : f32 to vector<2x32xf32>
    %c0_8 = arith.constant 0 : index
    %c0_9 = arith.constant 0 : index
    %7 = vector.load %arg9[%c0_8, %c0_9] : memref<2x32xf32, #tpu.memory_space<vmem>>, vector<2x32xf32>
    tpu.vector_store %arg9[%c0_8, %c0_9], %6 {strides = array<i32>} : memref<2x32xf32, #tpu.memory_space<vmem>>, vector<2x32xf32>,
    %c0_10 = arith.constant 0 : index
    %c0_11 = arith.constant 0 : index
    %8 = vector.load %arg4[%c0_10, %c0_11] : memref<2x1xi32, #tpu.memory_space<vmem>>, vector<2x1xi32>
    %c0_12 = arith.constant 0 : index
    %c0_13 = arith.constant 0 : index
    %9 = vector.load %arg6[%c0_12, %c0_13] : memref<2x32xf32, #tpu.memory_space<vmem>>, vector<2x32xf32>
    %10 = arith.truncf %9 : vector<2x32xf32> to vector<2x32xbf16>
    %c0_14 = arith.constant 0 : index
    %c0_15 = arith.constant 0 : index
    %11 = vector.load %arg2[%c0_14, %c0_15] : memref<32x128xbf16, #tpu.memory_space<vmem>>, vector<32x128xbf16>
    %cst_16 = arith.constant dense<0.000000e+00> : vector<2x128xf32>
    %12 = tpu.matmul %10, %11, %cst_16 {dimension_numbers = #tpu.dot_dimension_numbers<[1], [0], [0], [1], [0, 0, 1, 1], [], []>} : vector<2x32xbf16>, vector<32x128xbf16>, vector<2x128xf32> -> vector<2x128xf32>
    %c0_17 = arith.constant 0 : index
    %c0_18 = arith.constant 0 : index
    %13 = vector.load %arg8[%c0_17, %c0_18] : memref<2x32xf32, #tpu.memory_space<vmem>>, vector<2x32xf32>
    %14 = arith.truncf %13 : vector<2x32xf32> to vector<2x32xbf16>
    %c0_19 = arith.constant 0 : index
    %c0_20 = arith.constant 0 : index
    %15 = vector.load %arg3[%c0_19, %c0_20] : memref<32x128xbf16, #tpu.memory_space<vmem>>, vector<32x128xbf16>
    %cst_21 = arith.constant dense<0.000000e+00> : vector<2x128xf32>
    %16 = tpu.matmul %14, %15, %cst_21 {dimension_numbers = #tpu.dot_dimension_numbers<[1], [0], [0], [1], [0, 0, 1, 1], [], []>} : vector<2x32xbf16>, vector<32x128xbf16>, vector<2x128xf32> -> vector<2x128xf32>
    %c0_22 = arith.constant 0 : index
    %c0_23 = arith.constant 0 : index
    %c0_24 = arith.constant 0 : index
    %17 = vector.load %arg1[%c0_22, %c0_23, %c0_24] : memref<2x8x256xbf16, #tpu.memory_space<vmem>>, vector<2x1x128xbf16>
    %18 = vector.shape_cast %17 : vector<2x1x128xbf16> to vector<2x128xbf16>
    %19 = arith.extf %18 : vector<2x128xbf16> to vector<2x128xf32>
    %c0_25 = arith.constant 0 : index
    %c7 = arith.constant 7 : index
    %c128 = arith.constant 128 : index
    %20 = vector.load %arg1[%c0_25, %c7, %c128] : memref<2x8x256xbf16, #tpu.memory_space<vmem>>, vector<2x1x128xbf16>
    %21 = vector.shape_cast %20 : vector<2x1x128xbf16> to vector<2x128xbf16>
    %22 = arith.extf %21 : vector<2x128xbf16> to vector<2x128xf32>
    %23 = arith.addf %19, %12 : vector<2x128xf32>
    %c0_26 = arith.constant 0 : index
    %c0_27 = arith.constant 0 : index
    %24 = vector.load %arg7[%c0_26, %c0_27] : memref<2x32xf32, #tpu.memory_space<vmem>>, vector<2x32xf32>
    %25 = vector.extract_strided_slice %23 {offsets = [0, 0], sizes = [2, 32], strides = [1, 1]} : vector<2x128xf32> to vector<2x32xf32>
    %26 = arith.negf %25 : vector<2x32xf32>
    %27 = math.exp %26 : vector<2x32xf32>
    %cst_28 = arith.constant 1.000000e+00 : f32
    %28 = vector.broadcast %cst_28 : f32 to vector<2x32xf32>
    %29 = arith.addf %28, %27 : vector<2x32xf32>
    %30 = arith.divf %28, %29 : vector<2x32xf32>
    %31 = vector.extract_strided_slice %23 {offsets = [0, 32], sizes = [2, 32], strides = [1, 1]} : vector<2x128xf32> to vector<2x32xf32>
    %32 = arith.negf %31 : vector<2x32xf32>
    %33 = math.exp %32 : vector<2x32xf32>
    %cst_29 = arith.constant 1.000000e+00 : f32
    %34 = vector.broadcast %cst_29 : f32 to vector<2x32xf32>
    %35 = arith.addf %34, %33 : vector<2x32xf32>
    %36 = arith.divf %34, %35 : vector<2x32xf32>
    %37 = vector.extract_strided_slice %23 {offsets = [0, 64], sizes = [2, 32], strides = [1, 1]} : vector<2x128xf32> to vector<2x32xf32>
    %38 = math.tanh %37 : vector<2x32xf32>
    %39 = vector.extract_strided_slice %23 {offsets = [0, 96], sizes = [2, 32], strides = [1, 1]} : vector<2x128xf32> to vector<2x32xf32>
    %40 = arith.negf %39 : vector<2x32xf32>
    %41 = math.exp %40 : vector<2x32xf32>
    %cst_30 = arith.constant 1.000000e+00 : f32
    %42 = vector.broadcast %cst_30 : f32 to vector<2x32xf32>
    %43 = arith.addf %42, %41 : vector<2x32xf32>
    %44 = arith.divf %42, %43 : vector<2x32xf32>
    %45 = arith.mulf %36, %24 : vector<2x32xf32>
    %46 = arith.mulf %30, %38 : vector<2x32xf32>
    %47 = arith.addf %45, %46 : vector<2x32xf32>
    %48 = math.tanh %47 : vector<2x32xf32>
    %49 = arith.mulf %44, %48 : vector<2x32xf32>
    %50 = arith.addf %22, %16 : vector<2x128xf32>
    %c0_31 = arith.constant 0 : index
    %c0_32 = arith.constant 0 : index
    %51 = vector.load %arg9[%c0_31, %c0_32] : memref<2x32xf32, #tpu.memory_space<vmem>>, vector<2x32xf32>
    %52 = vector.extract_strided_slice %50 {offsets = [0, 0], sizes = [2, 32], strides = [1, 1]} : vector<2x128xf32> to vector<2x32xf32>
    %53 = arith.negf %52 : vector<2x32xf32>
    %54 = math.exp %53 : vector<2x32xf32>
    %cst_33 = arith.constant 1.000000e+00 : f32
    %55 = vector.broadcast %cst_33 : f32 to vector<2x32xf32>
    %56 = arith.addf %55, %54 : vector<2x32xf32>
    %57 = arith.divf %55, %56 : vector<2x32xf32>
    %58 = vector.extract_strided_slice %50 {offsets = [0, 32], sizes = [2, 32], strides = [1, 1]} : vector<2x128xf32> to vector<2x32xf32>
    %59 = arith.negf %58 : vector<2x32xf32>
    %60 = math.exp %59 : vector<2x32xf32>
    %cst_34 = arith.constant 1.000000e+00 : f32
    %61 = vector.broadcast %cst_34 : f32 to vector<2x32xf32>
    %62 = arith.addf %61, %60 : vector<2x32xf32>
    %63 = arith.divf %61, %62 : vector<2x32xf32>
    %64 = vector.extract_strided_slice %50 {offsets = [0, 64], sizes = [2, 32], strides = [1, 1]} : vector<2x128xf32> to vector<2x32xf32>
    %65 = math.tanh %64 : vector<2x32xf32>
    %66 = vector.extract_strided_slice %50 {offsets = [0, 96], sizes = [2, 32], strides = [1, 1]} : vector<2x128xf32> to vector<2x32xf32>
    %67 = arith.negf %66 : vector<2x32xf32>
    %68 = math.exp %67 : vector<2x32xf32>
    %cst_35 = arith.constant 1.000000e+00 : f32
    %69 = vector.broadcast %cst_35 : f32 to vector<2x32xf32>
    %70 = arith.addf %69, %68 : vector<2x32xf32>
    %71 = arith.divf %69, %70 : vector<2x32xf32>
    %72 = arith.mulf %63, %51 : vector<2x32xf32>
    %73 = arith.mulf %57, %65 : vector<2x32xf32>
    %74 = arith.addf %72, %73 : vector<2x32xf32>
    %75 = math.tanh %74 : vector<2x32xf32>
    %76 = arith.mulf %71, %75 : vector<2x32xf32>
    %c0_i32 = arith.constant 0 : i32
    %77 = vector.broadcast %c0_i32 : i32 to vector<2x1xi32>
    %78 = arith.cmpi sgt, %8, %77 : vector<2x1xi32>
    %c7_i32 = arith.constant 7 : i32
    %79 = vector.broadcast %c7_i32 : i32 to vector<2x1xi32>
    %80 = arith.cmpi sgt, %8, %79 : vector<2x1xi32>
    %c0_36 = arith.constant 0 : index
    %c0_37 = arith.constant 0 : index
    %81 = vector.load %arg6[%c0_36, %c0_37] : memref<2x32xf32, #tpu.memory_space<vmem>>, vector<2x32xf32>
    %82 = vector.shape_cast %78 : vector<2x1xi1> to vector<2x1xi1>
    %83 = vector.broadcast %82 : vector<2x1xi1> to vector<2x32xi1>
    %84 = arith.select %83, %49, %81 : vector<2x32xi1>, vector<2x32xf32>
    %c0_38 = arith.constant 0 : index
    %c0_39 = arith.constant 0 : index
    %85 = vector.load %arg6[%c0_38, %c0_39] : memref<2x32xf32, #tpu.memory_space<vmem>>, vector<2x32xf32>
    tpu.vector_store %arg6[%c0_38, %c0_39], %84 {strides = array<i32>} : memref<2x32xf32, #tpu.memory_space<vmem>>, vector<2x32xf32>,
    %c0_40 = arith.constant 0 : index
    %c0_41 = arith.constant 0 : index
    %86 = vector.load %arg7[%c0_40, %c0_41] : memref<2x32xf32, #tpu.memory_space<vmem>>, vector<2x32xf32>
    %87 = vector.shape_cast %78 : vector<2x1xi1> to vector<2x1xi1>
    %88 = vector.broadcast %87 : vector<2x1xi1> to vector<2x32xi1>
    %89 = arith.select %88, %47, %86 : vector<2x32xi1>, vector<2x32xf32>
    %c0_42 = arith.constant 0 : index
    %c0_43 = arith.constant 0 : index
    %90 = vector.load %arg7[%c0_42, %c0_43] : memref<2x32xf32, #tpu.memory_space<vmem>>, vector<2x32xf32>
    tpu.vector_store %arg7[%c0_42, %c0_43], %89 {strides = array<i32>} : memref<2x32xf32, #tpu.memory_space<vmem>>, vector<2x32xf32>,
    %c0_44 = arith.constant 0 : index
    %c0_45 = arith.constant 0 : index
    %91 = vector.load %arg8[%c0_44, %c0_45] : memref<2x32xf32, #tpu.memory_space<vmem>>, vector<2x32xf32>
    %92 = vector.shape_cast %80 : vector<2x1xi1> to vector<2x1xi1>
    %93 = vector.broadcast %92 : vector<2x1xi1> to vector<2x32xi1>
    %94 = arith.select %93, %76, %91 : vector<2x32xi1>, vector<2x32xf32>
    %c0_46 = arith.constant 0 : index
    %c0_47 = arith.constant 0 : index
    %95 = vector.load %arg8[%c0_46, %c0_47] : memref<2x32xf32, #tpu.memory_space<vmem>>, vector<2x32xf32>
    tpu.vector_store %arg8[%c0_46, %c0_47], %94 {strides = array<i32>} : memref<2x32xf32, #tpu.memory_space<vmem>>, vector<2x32xf32>,
    %c0_48 = arith.constant 0 : index
    %c0_49 = arith.constant 0 : index
    %96 = vector.load %arg9[%c0_48, %c0_49] : memref<2x32xf32, #tpu.memory_space<vmem>>, vector<2x32xf32>
    %97 = vector.shape_cast %80 : vector<2x1xi1> to vector<2x1xi1>
    %98 = vector.broadcast %97 : vector<2x1xi1> to vector<2x32xi1>
    %99 = arith.select %98, %74, %96 : vector<2x32xi1>, vector<2x32xf32>
    %c0_50 = arith.constant 0 : index
    %c0_51 = arith.constant 0 : index
    %100 = vector.load %arg9[%c0_50, %c0_51] : memref<2x32xf32, #tpu.memory_space<vmem>>, vector<2x32xf32>
    tpu.vector_store %arg9[%c0_50, %c0_51], %99 {strides = array<i32>} : memref<2x32xf32, #tpu.memory_space<vmem>>, vector<2x32xf32>,
    %cst_52 = arith.constant 0.000000e+00 : f32
    %101 = vector.shape_cast %78 : vector<2x1xi1> to vector<2x1xi1>
    %102 = vector.broadcast %101 : vector<2x1xi1> to vector<2x32xi1>
    %103 = vector.broadcast %cst_52 : f32 to vector<2x32xf32>
    %104 = arith.select %102, %49, %103 : vector<2x32xi1>, vector<2x32xf32>
    %105 = vector.shape_cast %104 : vector<2x32xf32> to vector<2x1x32xf32>
    %c0_53 = arith.constant 0 : index
    %c0_54 = arith.constant 0 : index
    %c0_55 = arith.constant 0 : index
    %106 = vector.load %arg10[%c0_53, %c0_54, %c0_55] : memref<2x8x64xf32, #tpu.memory_space<vmem>>, vector<2x1x32xf32>
    tpu.vector_store %arg10[%c0_53, %c0_54, %c0_55], %105 {strides = array<i32>} : memref<2x8x64xf32, #tpu.memory_space<vmem>>, vector<2x1x32xf32>,
    %cst_56 = arith.constant 0.000000e+00 : f32
    %107 = vector.shape_cast %80 : vector<2x1xi1> to vector<2x1xi1>
    %108 = vector.broadcast %107 : vector<2x1xi1> to vector<2x32xi1>
    %109 = vector.broadcast %cst_56 : f32 to vector<2x32xf32>
    %110 = arith.select %108, %76, %109 : vector<2x32xi1>, vector<2x32xf32>
    %111 = vector.shape_cast %110 : vector<2x32xf32> to vector<2x1x32xf32>
    %c0_57 = arith.constant 0 : index
    %c7_58 = arith.constant 7 : index
    %c32 = arith.constant 32 : index
    %112 = vector.load %arg10[%c0_57, %c7_58, %c32] : memref<2x8x64xf32, #tpu.memory_space<vmem>>, vector<2x1x32xf32>
    tpu.vector_store %arg10[%c0_57, %c7_58, %c32], %111 {strides = array<i32>} : memref<2x8x64xf32, #tpu.memory_space<vmem>>, vector<2x1x32xf32>,
    %c0_59 = arith.constant 0 : index
    %c0_60 = arith.constant 0 : index
    %113 = vector.load %arg6[%c0_59, %c0_60] : memref<2x32xf32, #tpu.memory_space<vmem>>, vector<2x32xf32>
    %114 = arith.truncf %113 : vector<2x32xf32> to vector<2x32xbf16>
    %c0_61 = arith.constant 0 : index
    %c0_62 = arith.constant 0 : index
    %115 = vector.load %arg2[%c0_61, %c0_62] : memref<32x128xbf16, #tpu.memory_space<vmem>>, vector<32x128xbf16>
    %cst_63 = arith.constant dense<0.000000e+00> : vector<2x128xf32>
    %116 = tpu.matmul %114, %115, %cst_63 {dimension_numbers = #tpu.dot_dimension_numbers<[1], [0], [0], [1], [0, 0, 1, 1], [], []>} : vector<2x32xbf16>, vector<32x128xbf16>, vector<2x128xf32> -> vector<2x128xf32>
    %c0_64 = arith.constant 0 : index
    %c0_65 = arith.constant 0 : index
    %117 = vector.load %arg8[%c0_64, %c0_65] : memref<2x32xf32, #tpu.memory_space<vmem>>, vector<2x32xf32>
    %118 = arith.truncf %117 : vector<2x32xf32> to vector<2x32xbf16>
    %c0_66 = arith.constant 0 : index
    %c0_67 = arith.constant 0 : index
    %119 = vector.load %arg3[%c0_66, %c0_67] : memref<32x128xbf16, #tpu.memory_space<vmem>>, vector<32x128xbf16>
    %cst_68 = arith.constant dense<0.000000e+00> : vector<2x128xf32>
    %120 = tpu.matmul %118, %119, %cst_68 {dimension_numbers = #tpu.dot_dimension_numbers<[1], [0], [0], [1], [0, 0, 1, 1], [], []>} : vector<2x32xbf16>, vector<32x128xbf16>, vector<2x128xf32> -> vector<2x128xf32>
    %c0_69 = arith.constant 0 : index
    %c1 = arith.constant 1 : index
    %c0_70 = arith.constant 0 : index
    %121 = vector.load %arg1[%c0_69, %c1, %c0_70] : memref<2x8x256xbf16, #tpu.memory_space<vmem>>, vector<2x1x128xbf16>
    %122 = vector.shape_cast %121 : vector<2x1x128xbf16> to vector<2x128xbf16>
    %123 = arith.extf %122 : vector<2x128xbf16> to vector<2x128xf32>
    %c0_71 = arith.constant 0 : index
    %c6 = arith.constant 6 : index
    %c128_72 = arith.constant 128 : index
    %124 = vector.load %arg1[%c0_71, %c6, %c128_72] : memref<2x8x256xbf16, #tpu.memory_space<vmem>>, vector<2x1x128xbf16>
    %125 = vector.shape_cast %124 : vector<2x1x128xbf16> to vector<2x128xbf16>
    %126 = arith.extf %125 : vector<2x128xbf16> to vector<2x128xf32>
    %127 = arith.addf %123, %116 : vector<2x128xf32>
    %c0_73 = arith.constant 0 : index
    %c0_74 = arith.constant 0 : index
    %128 = vector.load %arg7[%c0_73, %c0_74] : memref<2x32xf32, #tpu.memory_space<vmem>>, vector<2x32xf32>
    %129 = vector.extract_strided_slice %127 {offsets = [0, 0], sizes = [2, 32], strides = [1, 1]} : vector<2x128xf32> to vector<2x32xf32>
    %130 = arith.negf %129 : vector<2x32xf32>
    %131 = math.exp %130 : vector<2x32xf32>
    %cst_75 = arith.constant 1.000000e+00 : f32
    %132 = vector.broadcast %cst_75 : f32 to vector<2x32xf32>
    %133 = arith.addf %132, %131 : vector<2x32xf32>
    %134 = arith.divf %132, %133 : vector<2x32xf32>
    %135 = vector.extract_strided_slice %127 {offsets = [0, 32], sizes = [2, 32], strides = [1, 1]} : vector<2x128xf32> to vector<2x32xf32>
    %136 = arith.negf %135 : vector<2x32xf32>
    %137 = math.exp %136 : vector<2x32xf32>
    %cst_76 = arith.constant 1.000000e+00 : f32
    %138 = vector.broadcast %cst_76 : f32 to vector<2x32xf32>
    %139 = arith.addf %138, %137 : vector<2x32xf32>
    %140 = arith.divf %138, %139 : vector<2x32xf32>
    %141 = vector.extract_strided_slice %127 {offsets = [0, 64], sizes = [2, 32], strides = [1, 1]} : vector<2x128xf32> to vector<2x32xf32>
    %142 = math.tanh %141 : vector<2x32xf32>
    %143 = vector.extract_strided_slice %127 {offsets = [0, 96], sizes = [2, 32], strides = [1, 1]} : vector<2x128xf32> to vector<2x32xf32>
    %144 = arith.negf %143 : vector<2x32xf32>
    %145 = math.exp %144 : vector<2x32xf32>
    %cst_77 = arith.constant 1.000000e+00 : f32
    %146 = vector.broadcast %cst_77 : f32 to vector<2x32xf32>
    %147 = arith.addf %146, %145 : vector<2x32xf32>
    %148 = arith.divf %146, %147 : vector<2x32xf32>
    %149 = arith.mulf %140, %128 : vector<2x32xf32>
    %150 = arith.mulf %134, %142 : vector<2x32xf32>
    %151 = arith.addf %149, %150 : vector<2x32xf32>
    %152 = math.tanh %151 : vector<2x32xf32>
    %153 = arith.mulf %148, %152 : vector<2x32xf32>
    %154 = arith.addf %126, %120 : vector<2x128xf32>
    %c0_78 = arith.constant 0 : index
    %c0_79 = arith.constant 0 : index
    %155 = vector.load %arg9[%c0_78, %c0_79] : memref<2x32xf32, #tpu.memory_space<vmem>>, vector<2x32xf32>
    %156 = vector.extract_strided_slice %154 {offsets = [0, 0], sizes = [2, 32], strides = [1, 1]} : vector<2x128xf32> to vector<2x32xf32>
    %157 = arith.negf %156 : vector<2x32xf32>
    %158 = math.exp %157 : vector<2x32xf32>
    %cst_80 = arith.constant 1.000000e+00 : f32
    %159 = vector.broadcast %cst_80 : f32 to vector<2x32xf32>
    %160 = arith.addf %159, %158 : vector<2x32xf32>
    %161 = arith.divf %159, %160 : vector<2x32xf32>
    %162 = vector.extract_strided_slice %154 {offsets = [0, 32], sizes = [2, 32], strides = [1, 1]} : vector<2x128xf32> to vector<2x32xf32>
    %163 = arith.negf %162 : vector<2x32xf32>
    %164 = math.exp %163 : vector<2x32xf32>
    %cst_81 = arith.constant 1.000000e+00 : f32
    %165 = vector.broadcast %cst_81 : f32 to vector<2x32xf32>
    %166 = arith.addf %165, %164 : vector<2x32xf32>
    %167 = arith.divf %165, %166 : vector<2x32xf32>
    %168 = vector.extract_strided_slice %154 {offsets = [0, 64], sizes = [2, 32], strides = [1, 1]} : vector<2x128xf32> to vector<2x32xf32>
    %169 = math.tanh %168 : vector<2x32xf32>
    %170 = vector.extract_strided_slice %154 {offsets = [0, 96], sizes = [2, 32], strides = [1, 1]} : vector<2x128xf32> to vector<2x32xf32>
    %171 = arith.negf %170 : vector<2x32xf32>
    %172 = math.exp %171 : vector<2x32xf32>
    %cst_82 = arith.constant 1.000000e+00 : f32
    %173 = vector.broadcast %cst_82 : f32 to vector<2x32xf32>
    %174 = arith.addf %173, %172 : vector<2x32xf32>
    %175 = arith.divf %173, %174 : vector<2x32xf32>
    %176 = arith.mulf %167, %155 : vector<2x32xf32>
    %177 = arith.mulf %161, %169 : vector<2x32xf32>
    %178 = arith.addf %176, %177 : vector<2x32xf32>
    %179 = math.tanh %178 : vector<2x32xf32>
    %180 = arith.mulf %175, %179 : vector<2x32xf32>
    %c1_i32 = arith.constant 1 : i32
    %181 = vector.broadcast %c1_i32 : i32 to vector<2x1xi32>
    %182 = arith.cmpi sgt, %8, %181 : vector<2x1xi32>
    %c6_i32 = arith.constant 6 : i32
    %183 = vector.broadcast %c6_i32 : i32 to vector<2x1xi32>
    %184 = arith.cmpi sgt, %8, %183 : vector<2x1xi32>
    %c0_83 = arith.constant 0 : index
    %c0_84 = arith.constant 0 : index
    %185 = vector.load %arg6[%c0_83, %c0_84] : memref<2x32xf32, #tpu.memory_space<vmem>>, vector<2x32xf32>
    %186 = vector.shape_cast %182 : vector<2x1xi1> to vector<2x1xi1>
    %187 = vector.broadcast %186 : vector<2x1xi1> to vector<2x32xi1>
    %188 = arith.select %187, %153, %185 : vector<2x32xi1>, vector<2x32xf32>
    %c0_85 = arith.constant 0 : index
    %c0_86 = arith.constant 0 : index
    %189 = vector.load %arg6[%c0_85, %c0_86] : memref<2x32xf32, #tpu.memory_space<vmem>>, vector<2x32xf32>
    tpu.vector_store %arg6[%c0_85, %c0_86], %188 {strides = array<i32>} : memref<2x32xf32, #tpu.memory_space<vmem>>, vector<2x32xf32>,
    %c0_87 = arith.constant 0 : index
    %c0_88 = arith.constant 0 : index
    %190 = vector.load %arg7[%c0_87, %c0_88] : memref<2x32xf32, #tpu.memory_space<vmem>>, vector<2x32xf32>
    %191 = vector.shape_cast %182 : vector<2x1xi1> to vector<2x1xi1>
    %192 = vector.broadcast %191 : vector<2x1xi1> to vector<2x32xi1>
    %193 = arith.select %192, %151, %190 : vector<2x32xi1>, vector<2x32xf32>
    %c0_89 = arith.constant 0 : index
    %c0_90 = arith.constant 0 : index
    %194 = vector.load %arg7[%c0_89, %c0_90] : memref<2x32xf32, #tpu.memory_space<vmem>>, vector<2x32xf32>
    tpu.vector_store %arg7[%c0_89, %c0_90], %193 {strides = array<i32>} : memref<2x32xf32, #tpu.memory_space<vmem>>, vector<2x32xf32>,
    %c0_91 = arith.constant 0 : index
    %c0_92 = arith.constant 0 : index
    %195 = vector.load %arg8[%c0_91, %c0_92] : memref<2x32xf32, #tpu.memory_space<vmem>>, vector<2x32xf32>
    %196 = vector.shape_cast %184 : vector<2x1xi1> to vector<2x1xi1>
    %197 = vector.broadcast %196 : vector<2x1xi1> to vector<2x32xi1>
    %198 = arith.select %197, %180, %195 : vector<2x32xi1>, vector<2x32xf32>
    %c0_93 = arith.constant 0 : index
    %c0_94 = arith.constant 0 : index
    %199 = vector.load %arg8[%c0_93, %c0_94] : memref<2x32xf32, #tpu.memory_space<vmem>>, vector<2x32xf32>
    tpu.vector_store %arg8[%c0_93, %c0_94], %198 {strides = array<i32>} : memref<2x32xf32, #tpu.memory_space<vmem>>, vector<2x32xf32>,
    %c0_95 = arith.constant 0 : index
    %c0_96 = arith.constant 0 : index
    %200 = vector.load %arg9[%c0_95, %c0_96] : memref<2x32xf32, #tpu.memory_space<vmem>>, vector<2x32xf32>
    %201 = vector.shape_cast %184 : vector<2x1xi1> to vector<2x1xi1>
    %202 = vector.broadcast %201 : vector<2x1xi1> to vector<2x32xi1>
    %203 = arith.select %202, %178, %200 : vector<2x32xi1>, vector<2x32xf32>
    %c0_97 = arith.constant 0 : index
    %c0_98 = arith.constant 0 : index
    %204 = vector.load %arg9[%c0_97, %c0_98] : memref<2x32xf32, #tpu.memory_space<vmem>>, vector<2x32xf32>
    tpu.vector_store %arg9[%c0_97, %c0_98], %203 {strides = array<i32>} : memref<2x32xf32, #tpu.memory_space<vmem>>, vector<2x32xf32>,
    %cst_99 = arith.constant 0.000000e+00 : f32
    %205 = vector.shape_cast %182 : vector<2x1xi1> to vector<2x1xi1>
    %206 = vector.broadcast %205 : vector<2x1xi1> to vector<2x32xi1>
    %207 = vector.broadcast %cst_99 : f32 to vector<2x32xf32>
    %208 = arith.select %206, %153, %207 : vector<2x32xi1>, vector<2x32xf32>
    %209 = vector.shape_cast %208 : vector<2x32xf32> to vector<2x1x32xf32>
    %c0_100 = arith.constant 0 : index
    %c1_101 = arith.constant 1 : index
    %c0_102 = arith.constant 0 : index
    %210 = vector.load %arg10[%c0_100, %c1_101, %c0_102] : memref<2x8x64xf32, #tpu.memory_space<vmem>>, vector<2x1x32xf32>
    tpu.vector_store %arg10[%c0_100, %c1_101, %c0_102], %209 {strides = array<i32>} : memref<2x8x64xf32, #tpu.memory_space<vmem>>, vector<2x1x32xf32>,
    %cst_103 = arith.constant 0.000000e+00 : f32
    %211 = vector.shape_cast %184 : vector<2x1xi1> to vector<2x1xi1>
    %212 = vector.broadcast %211 : vector<2x1xi1> to vector<2x32xi1>
    %213 = vector.broadcast %cst_103 : f32 to vector<2x32xf32>
    %214 = arith.select %212, %180, %213 : vector<2x32xi1>, vector<2x32xf32>
    %215 = vector.shape_cast %214 : vector<2x32xf32> to vector<2x1x32xf32>
    %c0_104 = arith.constant 0 : index
    %c6_105 = arith.constant 6 : index
    %c32_106 = arith.constant 32 : index
    %216 = vector.load %arg10[%c0_104, %c6_105, %c32_106] : memref<2x8x64xf32, #tpu.memory_space<vmem>>, vector<2x1x32xf32>
    tpu.vector_store %arg10[%c0_104, %c6_105, %c32_106], %215 {strides = array<i32>} : memref<2x8x64xf32, #tpu.memory_space<vmem>>, vector<2x1x32xf32>,
    %c0_107 = arith.constant 0 : index
    %c0_108 = arith.constant 0 : index
    %217 = vector.load %arg6[%c0_107, %c0_108] : memref<2x32xf32, #tpu.memory_space<vmem>>, vector<2x32xf32>
    %218 = arith.truncf %217 : vector<2x32xf32> to vector<2x32xbf16>
    %c0_109 = arith.constant 0 : index
    %c0_110 = arith.constant 0 : index
    %219 = vector.load %arg2[%c0_109, %c0_110] : memref<32x128xbf16, #tpu.memory_space<vmem>>, vector<32x128xbf16>
    %cst_111 = arith.constant dense<0.000000e+00> : vector<2x128xf32>
    %220 = tpu.matmul %218, %219, %cst_111 {dimension_numbers = #tpu.dot_dimension_numbers<[1], [0], [0], [1], [0, 0, 1, 1], [], []>} : vector<2x32xbf16>, vector<32x128xbf16>, vector<2x128xf32> -> vector<2x128xf32>
    %c0_112 = arith.constant 0 : index
    %c0_113 = arith.constant 0 : index
    %221 = vector.load %arg8[%c0_112, %c0_113] : memref<2x32xf32, #tpu.memory_space<vmem>>, vector<2x32xf32>
    %222 = arith.truncf %221 : vector<2x32xf32> to vector<2x32xbf16>
    %c0_114 = arith.constant 0 : index
    %c0_115 = arith.constant 0 : index
    %223 = vector.load %arg3[%c0_114, %c0_115] : memref<32x128xbf16, #tpu.memory_space<vmem>>, vector<32x128xbf16>
    %cst_116 = arith.constant dense<0.000000e+00> : vector<2x128xf32>
    %224 = tpu.matmul %222, %223, %cst_116 {dimension_numbers = #tpu.dot_dimension_numbers<[1], [0], [0], [1], [0, 0, 1, 1], [], []>} : vector<2x32xbf16>, vector<32x128xbf16>, vector<2x128xf32> -> vector<2x128xf32>
    %c0_117 = arith.constant 0 : index
    %c2 = arith.constant 2 : index
    %c0_118 = arith.constant 0 : index
    %225 = vector.load %arg1[%c0_117, %c2, %c0_118] : memref<2x8x256xbf16, #tpu.memory_space<vmem>>, vector<2x1x128xbf16>
    %226 = vector.shape_cast %225 : vector<2x1x128xbf16> to vector<2x128xbf16>
    %227 = arith.extf %226 : vector<2x128xbf16> to vector<2x128xf32>
    %c0_119 = arith.constant 0 : index
    %c5 = arith.constant 5 : index
    %c128_120 = arith.constant 128 : index
    %228 = vector.load %arg1[%c0_119, %c5, %c128_120] : memref<2x8x256xbf16, #tpu.memory_space<vmem>>, vector<2x1x128xbf16>
    %229 = vector.shape_cast %228 : vector<2x1x128xbf16> to vector<2x128xbf16>
    %230 = arith.extf %229 : vector<2x128xbf16> to vector<2x128xf32>
    %231 = arith.addf %227, %220 : vector<2x128xf32>
    %c0_121 = arith.constant 0 : index
    %c0_122 = arith.constant 0 : index
    %232 = vector.load %arg7[%c0_121, %c0_122] : memref<2x32xf32, #tpu.memory_space<vmem>>, vector<2x32xf32>
    %233 = vector.extract_strided_slice %231 {offsets = [0, 0], sizes = [2, 32], strides = [1, 1]} : vector<2x128xf32> to vector<2x32xf32>
    %234 = arith.negf %233 : vector<2x32xf32>
    %235 = math.exp %234 : vector<2x32xf32>
    %cst_123 = arith.constant 1.000000e+00 : f32
    %236 = vector.broadcast %cst_123 : f32 to vector<2x32xf32>
    %237 = arith.addf %236, %235 : vector<2x32xf32>
    %238 = arith.divf %236, %237 : vector<2x32xf32>
    %239 = vector.extract_strided_slice %231 {offsets = [0, 32], sizes = [2, 32], strides = [1, 1]} : vector<2x128xf32> to vector<2x32xf32>
    %240 = arith.negf %239 : vector<2x32xf32>
    %241 = math.exp %240 : vector<2x32xf32>
    %cst_124 = arith.constant 1.000000e+00 : f32
    %242 = vector.broadcast %cst_124 : f32 to vector<2x32xf32>
    %243 = arith.addf %242, %241 : vector<2x32xf32>
    %244 = arith.divf %242, %243 : vector<2x32xf32>
    %245 = vector.extract_strided_slice %231 {offsets = [0, 64], sizes = [2, 32], strides = [1, 1]} : vector<2x128xf32> to vector<2x32xf32>
    %246 = math.tanh %245 : vector<2x32xf32>
    %247 = vector.extract_strided_slice %231 {offsets = [0, 96], sizes = [2, 32], strides = [1, 1]} : vector<2x128xf32> to vector<2x32xf32>
    %248 = arith.negf %247 : vector<2x32xf32>
    %249 = math.exp %248 : vector<2x32xf32>
    %cst_125 = arith.constant 1.000000e+00 : f32
    %250 = vector.broadcast %cst_125 : f32 to vector<2x32xf32>
    %251 = arith.addf %250, %249 : vector<2x32xf32>
    %252 = arith.divf %250, %251 : vector<2x32xf32>
    %253 = arith.mulf %244, %232 : vector<2x32xf32>
    %254 = arith.mulf %238, %246 : vector<2x32xf32>
    %255 = arith.addf %253, %254 : vector<2x32xf32>
    %256 = math.tanh %255 : vector<2x32xf32>
    %257 = arith.mulf %252, %256 : vector<2x32xf32>
    %258 = arith.addf %230, %224 : vector<2x128xf32>
    %c0_126 = arith.constant 0 : index
    %c0_127 = arith.constant 0 : index
    %259 = vector.load %arg9[%c0_126, %c0_127] : memref<2x32xf32, #tpu.memory_space<vmem>>, vector<2x32xf32>
    %260 = vector.extract_strided_slice %258 {offsets = [0, 0], sizes = [2, 32], strides = [1, 1]} : vector<2x128xf32> to vector<2x32xf32>
    %261 = arith.negf %260 : vector<2x32xf32>
    %262 = math.exp %261 : vector<2x32xf32>
    %cst_128 = arith.constant 1.000000e+00 : f32
    %263 = vector.broadcast %cst_128 : f32 to vector<2x32xf32>
    %264 = arith.addf %263, %262 : vector<2x32xf32>
    %265 = arith.divf %263, %264 : vector<2x32xf32>
    %266 = vector.extract_strided_slice %258 {offsets = [0, 32], sizes = [2, 32], strides = [1, 1]} : vector<2x128xf32> to vector<2x32xf32>
    %267 = arith.negf %266 : vector<2x32xf32>
    %268 = math.exp %267 : vector<2x32xf32>
    %cst_129 = arith.constant 1.000000e+00 : f32
    %269 = vector.broadcast %cst_129 : f32 to vector<2x32xf32>
    %270 = arith.addf %269, %268 : vector<2x32xf32>
    %271 = arith.divf %269, %270 : vector<2x32xf32>
    %272 = vector.extract_strided_slice %258 {offsets = [0, 64], sizes = [2, 32], strides = [1, 1]} : vector<2x128xf32> to vector<2x32xf32>
    %273 = math.tanh %272 : vector<2x32xf32>
    %274 = vector.extract_strided_slice %258 {offsets = [0, 96], sizes = [2, 32], strides = [1, 1]} : vector<2x128xf32> to vector<2x32xf32>
    %275 = arith.negf %274 : vector<2x32xf32>
    %276 = math.exp %275 : vector<2x32xf32>
    %cst_130 = arith.constant 1.000000e+00 : f32
    %277 = vector.broadcast %cst_130 : f32 to vector<2x32xf32>
    %278 = arith.addf %277, %276 : vector<2x32xf32>
    %279 = arith.divf %277, %278 : vector<2x32xf32>
    %280 = arith.mulf %271, %259 : vector<2x32xf32>
    %281 = arith.mulf %265, %273 : vector<2x32xf32>
    %282 = arith.addf %280, %281 : vector<2x32xf32>
    %283 = math.tanh %282 : vector<2x32xf32>
    %284 = arith.mulf %279, %283 : vector<2x32xf32>
    %c2_i32 = arith.constant 2 : i32
    %285 = vector.broadcast %c2_i32 : i32 to vector<2x1xi32>
    %286 = arith.cmpi sgt, %8, %285 : vector<2x1xi32>
    %c5_i32 = arith.constant 5 : i32
    %287 = vector.broadcast %c5_i32 : i32 to vector<2x1xi32>
    %288 = arith.cmpi sgt, %8, %287 : vector<2x1xi32>
    %c0_131 = arith.constant 0 : index
    %c0_132 = arith.constant 0 : index
    %289 = vector.load %arg6[%c0_131, %c0_132] : memref<2x32xf32, #tpu.memory_space<vmem>>, vector<2x32xf32>
    %290 = vector.shape_cast %286 : vector<2x1xi1> to vector<2x1xi1>
    %291 = vector.broadcast %290 : vector<2x1xi1> to vector<2x32xi1>
    %292 = arith.select %291, %257, %289 : vector<2x32xi1>, vector<2x32xf32>
    %c0_133 = arith.constant 0 : index
    %c0_134 = arith.constant 0 : index
    %293 = vector.load %arg6[%c0_133, %c0_134] : memref<2x32xf32, #tpu.memory_space<vmem>>, vector<2x32xf32>
    tpu.vector_store %arg6[%c0_133, %c0_134], %292 {strides = array<i32>} : memref<2x32xf32, #tpu.memory_space<vmem>>, vector<2x32xf32>,
    %c0_135 = arith.constant 0 : index
    %c0_136 = arith.constant 0 : index
    %294 = vector.load %arg7[%c0_135, %c0_136] : memref<2x32xf32, #tpu.memory_space<vmem>>, vector<2x32xf32>
    %295 = vector.shape_cast %286 : vector<2x1xi1> to vector<2x1xi1>
    %296 = vector.broadcast %295 : vector<2x1xi1> to vector<2x32xi1>
    %297 = arith.select %296, %255, %294 : vector<2x32xi1>, vector<2x32xf32>
    %c0_137 = arith.constant 0 : index
    %c0_138 = arith.constant 0 : index
    %298 = vector.load %arg7[%c0_137, %c0_138] : memref<2x32xf32, #tpu.memory_space<vmem>>, vector<2x32xf32>
    tpu.vector_store %arg7[%c0_137, %c0_138], %297 {strides = array<i32>} : memref<2x32xf32, #tpu.memory_space<vmem>>, vector<2x32xf32>,
    %c0_139 = arith.constant 0 : index
    %c0_140 = arith.constant 0 : index
    %299 = vector.load %arg8[%c0_139, %c0_140] : memref<2x32xf32, #tpu.memory_space<vmem>>, vector<2x32xf32>
    %300 = vector.shape_cast %288 : vector<2x1xi1> to vector<2x1xi1>
    %301 = vector.broadcast %300 : vector<2x1xi1> to vector<2x32xi1>
    %302 = arith.select %301, %284, %299 : vector<2x32xi1>, vector<2x32xf32>
    %c0_141 = arith.constant 0 : index
    %c0_142 = arith.constant 0 : index
    %303 = vector.load %arg8[%c0_141, %c0_142] : memref<2x32xf32, #tpu.memory_space<vmem>>, vector<2x32xf32>
    tpu.vector_store %arg8[%c0_141, %c0_142], %302 {strides = array<i32>} : memref<2x32xf32, #tpu.memory_space<vmem>>, vector<2x32xf32>,
    %c0_143 = arith.constant 0 : index
    %c0_144 = arith.constant 0 : index
    %304 = vector.load %arg9[%c0_143, %c0_144] : memref<2x32xf32, #tpu.memory_space<vmem>>, vector<2x32xf32>
    %305 = vector.shape_cast %288 : vector<2x1xi1> to vector<2x1xi1>
    %306 = vector.broadcast %305 : vector<2x1xi1> to vector<2x32xi1>
    %307 = arith.select %306, %282, %304 : vector<2x32xi1>, vector<2x32xf32>
    %c0_145 = arith.constant 0 : index
    %c0_146 = arith.constant 0 : index
    %308 = vector.load %arg9[%c0_145, %c0_146] : memref<2x32xf32, #tpu.memory_space<vmem>>, vector<2x32xf32>
    tpu.vector_store %arg9[%c0_145, %c0_146], %307 {strides = array<i32>} : memref<2x32xf32, #tpu.memory_space<vmem>>, vector<2x32xf32>,
    %cst_147 = arith.constant 0.000000e+00 : f32
    %309 = vector.shape_cast %286 : vector<2x1xi1> to vector<2x1xi1>
    %310 = vector.broadcast %309 : vector<2x1xi1> to vector<2x32xi1>
    %311 = vector.broadcast %cst_147 : f32 to vector<2x32xf32>
    %312 = arith.select %310, %257, %311 : vector<2x32xi1>, vector<2x32xf32>
    %313 = vector.shape_cast %312 : vector<2x32xf32> to vector<2x1x32xf32>
    %c0_148 = arith.constant 0 : index
    %c2_149 = arith.constant 2 : index
    %c0_150 = arith.constant 0 : index
    %314 = vector.load %arg10[%c0_148, %c2_149, %c0_150] : memref<2x8x64xf32, #tpu.memory_space<vmem>>, vector<2x1x32xf32>
    tpu.vector_store %arg10[%c0_148, %c2_149, %c0_150], %313 {strides = array<i32>} : memref<2x8x64xf32, #tpu.memory_space<vmem>>, vector<2x1x32xf32>,
    %cst_151 = arith.constant 0.000000e+00 : f32
    %315 = vector.shape_cast %288 : vector<2x1xi1> to vector<2x1xi1>
    %316 = vector.broadcast %315 : vector<2x1xi1> to vector<2x32xi1>
    %317 = vector.broadcast %cst_151 : f32 to vector<2x32xf32>
    %318 = arith.select %316, %284, %317 : vector<2x32xi1>, vector<2x32xf32>
    %319 = vector.shape_cast %318 : vector<2x32xf32> to vector<2x1x32xf32>
    %c0_152 = arith.constant 0 : index
    %c5_153 = arith.constant 5 : index
    %c32_154 = arith.constant 32 : index
    %320 = vector.load %arg10[%c0_152, %c5_153, %c32_154] : memref<2x8x64xf32, #tpu.memory_space<vmem>>, vector<2x1x32xf32>
    tpu.vector_store %arg10[%c0_152, %c5_153, %c32_154], %319 {strides = array<i32>} : memref<2x8x64xf32, #tpu.memory_space<vmem>>, vector<2x1x32xf32>,
    %c0_155 = arith.constant 0 : index
    %c0_156 = arith.constant 0 : index
    %321 = vector.load %arg6[%c0_155, %c0_156] : memref<2x32xf32, #tpu.memory_space<vmem>>, vector<2x32xf32>
    %322 = arith.truncf %321 : vector<2x32xf32> to vector<2x32xbf16>
    %c0_157 = arith.constant 0 : index
    %c0_158 = arith.constant 0 : index
    %323 = vector.load %arg2[%c0_157, %c0_158] : memref<32x128xbf16, #tpu.memory_space<vmem>>, vector<32x128xbf16>
    %cst_159 = arith.constant dense<0.000000e+00> : vector<2x128xf32>
    %324 = tpu.matmul %322, %323, %cst_159 {dimension_numbers = #tpu.dot_dimension_numbers<[1], [0], [0], [1], [0, 0, 1, 1], [], []>} : vector<2x32xbf16>, vector<32x128xbf16>, vector<2x128xf32> -> vector<2x128xf32>
    %c0_160 = arith.constant 0 : index
    %c0_161 = arith.constant 0 : index
    %325 = vector.load %arg8[%c0_160, %c0_161] : memref<2x32xf32, #tpu.memory_space<vmem>>, vector<2x32xf32>
    %326 = arith.truncf %325 : vector<2x32xf32> to vector<2x32xbf16>
    %c0_162 = arith.constant 0 : index
    %c0_163 = arith.constant 0 : index
    %327 = vector.load %arg3[%c0_162, %c0_163] : memref<32x128xbf16, #tpu.memory_space<vmem>>, vector<32x128xbf16>
    %cst_164 = arith.constant dense<0.000000e+00> : vector<2x128xf32>
    %328 = tpu.matmul %326, %327, %cst_164 {dimension_numbers = #tpu.dot_dimension_numbers<[1], [0], [0], [1], [0, 0, 1, 1], [], []>} : vector<2x32xbf16>, vector<32x128xbf16>, vector<2x128xf32> -> vector<2x128xf32>
    %c0_165 = arith.constant 0 : index
    %c3 = arith.constant 3 : index
    %c0_166 = arith.constant 0 : index
    %329 = vector.load %arg1[%c0_165, %c3, %c0_166] : memref<2x8x256xbf16, #tpu.memory_space<vmem>>, vector<2x1x128xbf16>
    %330 = vector.shape_cast %329 : vector<2x1x128xbf16> to vector<2x128xbf16>
    %331 = arith.extf %330 : vector<2x128xbf16> to vector<2x128xf32>
    %c0_167 = arith.constant 0 : index
    %c4 = arith.constant 4 : index
    %c128_168 = arith.constant 128 : index
    %332 = vector.load %arg1[%c0_167, %c4, %c128_168] : memref<2x8x256xbf16, #tpu.memory_space<vmem>>, vector<2x1x128xbf16>
    %333 = vector.shape_cast %332 : vector<2x1x128xbf16> to vector<2x128xbf16>
    %334 = arith.extf %333 : vector<2x128xbf16> to vector<2x128xf32>
    %335 = arith.addf %331, %324 : vector<2x128xf32>
    %c0_169 = arith.constant 0 : index
    %c0_170 = arith.constant 0 : index
    %336 = vector.load %arg7[%c0_169, %c0_170] : memref<2x32xf32, #tpu.memory_space<vmem>>, vector<2x32xf32>
    %337 = vector.extract_strided_slice %335 {offsets = [0, 0], sizes = [2, 32], strides = [1, 1]} : vector<2x128xf32> to vector<2x32xf32>
    %338 = arith.negf %337 : vector<2x32xf32>
    %339 = math.exp %338 : vector<2x32xf32>
    %cst_171 = arith.constant 1.000000e+00 : f32
    %340 = vector.broadcast %cst_171 : f32 to vector<2x32xf32>
    %341 = arith.addf %340, %339 : vector<2x32xf32>
    %342 = arith.divf %340, %341 : vector<2x32xf32>
    %343 = vector.extract_strided_slice %335 {offsets = [0, 32], sizes = [2, 32], strides = [1, 1]} : vector<2x128xf32> to vector<2x32xf32>
    %344 = arith.negf %343 : vector<2x32xf32>
    %345 = math.exp %344 : vector<2x32xf32>
    %cst_172 = arith.constant 1.000000e+00 : f32
    %346 = vector.broadcast %cst_172 : f32 to vector<2x32xf32>
    %347 = arith.addf %346, %345 : vector<2x32xf32>
    %348 = arith.divf %346, %347 : vector<2x32xf32>
    %349 = vector.extract_strided_slice %335 {offsets = [0, 64], sizes = [2, 32], strides = [1, 1]} : vector<2x128xf32> to vector<2x32xf32>
    %350 = math.tanh %349 : vector<2x32xf32>
    %351 = vector.extract_strided_slice %335 {offsets = [0, 96], sizes = [2, 32], strides = [1, 1]} : vector<2x128xf32> to vector<2x32xf32>
    %352 = arith.negf %351 : vector<2x32xf32>
    %353 = math.exp %352 : vector<2x32xf32>
    %cst_173 = arith.constant 1.000000e+00 : f32
    %354 = vector.broadcast %cst_173 : f32 to vector<2x32xf32>
    %355 = arith.addf %354, %353 : vector<2x32xf32>
    %356 = arith.divf %354, %355 : vector<2x32xf32>
    %357 = arith.mulf %348, %336 : vector<2x32xf32>
    %358 = arith.mulf %342, %350 : vector<2x32xf32>
    %359 = arith.addf %357, %358 : vector<2x32xf32>
    %360 = math.tanh %359 : vector<2x32xf32>
    %361 = arith.mulf %356, %360 : vector<2x32xf32>
    %362 = arith.addf %334, %328 : vector<2x128xf32>
    %c0_174 = arith.constant 0 : index
    %c0_175 = arith.constant 0 : index
    %363 = vector.load %arg9[%c0_174, %c0_175] : memref<2x32xf32, #tpu.memory_space<vmem>>, vector<2x32xf32>
    %364 = vector.extract_strided_slice %362 {offsets = [0, 0], sizes = [2, 32], strides = [1, 1]} : vector<2x128xf32> to vector<2x32xf32>
    %365 = arith.negf %364 : vector<2x32xf32>
    %366 = math.exp %365 : vector<2x32xf32>
    %cst_176 = arith.constant 1.000000e+00 : f32
    %367 = vector.broadcast %cst_176 : f32 to vector<2x32xf32>
    %368 = arith.addf %367, %366 : vector<2x32xf32>
    %369 = arith.divf %367, %368 : vector<2x32xf32>
    %370 = vector.extract_strided_slice %362 {offsets = [0, 32], sizes = [2, 32], strides = [1, 1]} : vector<2x128xf32> to vector<2x32xf32>
    %371 = arith.negf %370 : vector<2x32xf32>
    %372 = math.exp %371 : vector<2x32xf32>
    %cst_177 = arith.constant 1.000000e+00 : f32
    %373 = vector.broadcast %cst_177 : f32 to vector<2x32xf32>
    %374 = arith.addf %373, %372 : vector<2x32xf32>
    %375 = arith.divf %373, %374 : vector<2x32xf32>
    %376 = vector.extract_strided_slice %362 {offsets = [0, 64], sizes = [2, 32], strides = [1, 1]} : vector<2x128xf32> to vector<2x32xf32>
    %377 = math.tanh %376 : vector<2x32xf32>
    %378 = vector.extract_strided_slice %362 {offsets = [0, 96], sizes = [2, 32], strides = [1, 1]} : vector<2x128xf32> to vector<2x32xf32>
    %379 = arith.negf %378 : vector<2x32xf32>
    %380 = math.exp %379 : vector<2x32xf32>
    %cst_178 = arith.constant 1.000000e+00 : f32
    %381 = vector.broadcast %cst_178 : f32 to vector<2x32xf32>
    %382 = arith.addf %381, %380 : vector<2x32xf32>
    %383 = arith.divf %381, %382 : vector<2x32xf32>
    %384 = arith.mulf %375, %363 : vector<2x32xf32>
    %385 = arith.mulf %369, %377 : vector<2x32xf32>
    %386 = arith.addf %384, %385 : vector<2x32xf32>
    %387 = math.tanh %386 : vector<2x32xf32>
    %388 = arith.mulf %383, %387 : vector<2x32xf32>
    %c3_i32 = arith.constant 3 : i32
    %389 = vector.broadcast %c3_i32 : i32 to vector<2x1xi32>
    %390 = arith.cmpi sgt, %8, %389 : vector<2x1xi32>
    %c4_i32 = arith.constant 4 : i32
    %391 = vector.broadcast %c4_i32 : i32 to vector<2x1xi32>
    %392 = arith.cmpi sgt, %8, %391 : vector<2x1xi32>
    %c0_179 = arith.constant 0 : index
    %c0_180 = arith.constant 0 : index
    %393 = vector.load %arg6[%c0_179, %c0_180] : memref<2x32xf32, #tpu.memory_space<vmem>>, vector<2x32xf32>
    %394 = vector.shape_cast %390 : vector<2x1xi1> to vector<2x1xi1>
    %395 = vector.broadcast %394 : vector<2x1xi1> to vector<2x32xi1>
    %396 = arith.select %395, %361, %393 : vector<2x32xi1>, vector<2x32xf32>
    %c0_181 = arith.constant 0 : index
    %c0_182 = arith.constant 0 : index
    %397 = vector.load %arg6[%c0_181, %c0_182] : memref<2x32xf32, #tpu.memory_space<vmem>>, vector<2x32xf32>
    tpu.vector_store %arg6[%c0_181, %c0_182], %396 {strides = array<i32>} : memref<2x32xf32, #tpu.memory_space<vmem>>, vector<2x32xf32>,
    %c0_183 = arith.constant 0 : index
    %c0_184 = arith.constant 0 : index
    %398 = vector.load %arg7[%c0_183, %c0_184] : memref<2x32xf32, #tpu.memory_space<vmem>>, vector<2x32xf32>
    %399 = vector.shape_cast %390 : vector<2x1xi1> to vector<2x1xi1>
    %400 = vector.broadcast %399 : vector<2x1xi1> to vector<2x32xi1>
    %401 = arith.select %400, %359, %398 : vector<2x32xi1>, vector<2x32xf32>
    %c0_185 = arith.constant 0 : index
    %c0_186 = arith.constant 0 : index
    %402 = vector.load %arg7[%c0_185, %c0_186] : memref<2x32xf32, #tpu.memory_space<vmem>>, vector<2x32xf32>
    tpu.vector_store %arg7[%c0_185, %c0_186], %401 {strides = array<i32>} : memref<2x32xf32, #tpu.memory_space<vmem>>, vector<2x32xf32>,
    %c0_187 = arith.constant 0 : index
    %c0_188 = arith.constant 0 : index
    %403 = vector.load %arg8[%c0_187, %c0_188] : memref<2x32xf32, #tpu.memory_space<vmem>>, vector<2x32xf32>
    %404 = vector.shape_cast %392 : vector<2x1xi1> to vector<2x1xi1>
    %405 = vector.broadcast %404 : vector<2x1xi1> to vector<2x32xi1>
    %406 = arith.select %405, %388, %403 : vector<2x32xi1>, vector<2x32xf32>
    %c0_189 = arith.constant 0 : index
    %c0_190 = arith.constant 0 : index
    %407 = vector.load %arg8[%c0_189, %c0_190] : memref<2x32xf32, #tpu.memory_space<vmem>>, vector<2x32xf32>
    tpu.vector_store %arg8[%c0_189, %c0_190], %406 {strides = array<i32>} : memref<2x32xf32, #tpu.memory_space<vmem>>, vector<2x32xf32>,
    %c0_191 = arith.constant 0 : index
    %c0_192 = arith.constant 0 : index
    %408 = vector.load %arg9[%c0_191, %c0_192] : memref<2x32xf32, #tpu.memory_space<vmem>>, vector<2x32xf32>
    %409 = vector.shape_cast %392 : vector<2x1xi1> to vector<2x1xi1>
    %410 = vector.broadcast %409 : vector<2x1xi1> to vector<2x32xi1>
    %411 = arith.select %410, %386, %408 : vector<2x32xi1>, vector<2x32xf32>
    %c0_193 = arith.constant 0 : index
    %c0_194 = arith.constant 0 : index
    %412 = vector.load %arg9[%c0_193, %c0_194] : memref<2x32xf32, #tpu.memory_space<vmem>>, vector<2x32xf32>
    tpu.vector_store %arg9[%c0_193, %c0_194], %411 {strides = array<i32>} : memref<2x32xf32, #tpu.memory_space<vmem>>, vector<2x32xf32>,
    %cst_195 = arith.constant 0.000000e+00 : f32
    %413 = vector.shape_cast %390 : vector<2x1xi1> to vector<2x1xi1>
    %414 = vector.broadcast %413 : vector<2x1xi1> to vector<2x32xi1>
    %415 = vector.broadcast %cst_195 : f32 to vector<2x32xf32>
    %416 = arith.select %414, %361, %415 : vector<2x32xi1>, vector<2x32xf32>
    %417 = vector.shape_cast %416 : vector<2x32xf32> to vector<2x1x32xf32>
    %c0_196 = arith.constant 0 : index
    %c3_197 = arith.constant 3 : index
    %c0_198 = arith.constant 0 : index
    %418 = vector.load %arg10[%c0_196, %c3_197, %c0_198] : memref<2x8x64xf32, #tpu.memory_space<vmem>>, vector<2x1x32xf32>
    tpu.vector_store %arg10[%c0_196, %c3_197, %c0_198], %417 {strides = array<i32>} : memref<2x8x64xf32, #tpu.memory_space<vmem>>, vector<2x1x32xf32>,
    %cst_199 = arith.constant 0.000000e+00 : f32
    %419 = vector.shape_cast %392 : vector<2x1xi1> to vector<2x1xi1>
    %420 = vector.broadcast %419 : vector<2x1xi1> to vector<2x32xi1>
    %421 = vector.broadcast %cst_199 : f32 to vector<2x32xf32>
    %422 = arith.select %420, %388, %421 : vector<2x32xi1>, vector<2x32xf32>
    %423 = vector.shape_cast %422 : vector<2x32xf32> to vector<2x1x32xf32>
    %c0_200 = arith.constant 0 : index
    %c4_201 = arith.constant 4 : index
    %c32_202 = arith.constant 32 : index
    %424 = vector.load %arg10[%c0_200, %c4_201, %c32_202] : memref<2x8x64xf32, #tpu.memory_space<vmem>>, vector<2x1x32xf32>
    tpu.vector_store %arg10[%c0_200, %c4_201, %c32_202], %423 {strides = array<i32>} : memref<2x8x64xf32, #tpu.memory_space<vmem>>, vector<2x1x32xf32>,
    %c0_203 = arith.constant 0 : index
    %c0_204 = arith.constant 0 : index
    %425 = vector.load %arg6[%c0_203, %c0_204] : memref<2x32xf32, #tpu.memory_space<vmem>>, vector<2x32xf32>
    %426 = arith.truncf %425 : vector<2x32xf32> to vector<2x32xbf16>
    %c0_205 = arith.constant 0 : index
    %c0_206 = arith.constant 0 : index
    %427 = vector.load %arg2[%c0_205, %c0_206] : memref<32x128xbf16, #tpu.memory_space<vmem>>, vector<32x128xbf16>
    %cst_207 = arith.constant dense<0.000000e+00> : vector<2x128xf32>
    %428 = tpu.matmul %426, %427, %cst_207 {dimension_numbers = #tpu.dot_dimension_numbers<[1], [0], [0], [1], [0, 0, 1, 1], [], []>} : vector<2x32xbf16>, vector<32x128xbf16>, vector<2x128xf32> -> vector<2x128xf32>
    %c0_208 = arith.constant 0 : index
    %c0_209 = arith.constant 0 : index
    %429 = vector.load %arg8[%c0_208, %c0_209] : memref<2x32xf32, #tpu.memory_space<vmem>>, vector<2x32xf32>
    %430 = arith.truncf %429 : vector<2x32xf32> to vector<2x32xbf16>
    %c0_210 = arith.constant 0 : index
    %c0_211 = arith.constant 0 : index
    %431 = vector.load %arg3[%c0_210, %c0_211] : memref<32x128xbf16, #tpu.memory_space<vmem>>, vector<32x128xbf16>
    %cst_212 = arith.constant dense<0.000000e+00> : vector<2x128xf32>
    %432 = tpu.matmul %430, %431, %cst_212 {dimension_numbers = #tpu.dot_dimension_numbers<[1], [0], [0], [1], [0, 0, 1, 1], [], []>} : vector<2x32xbf16>, vector<32x128xbf16>, vector<2x128xf32> -> vector<2x128xf32>
    %c0_213 = arith.constant 0 : index
    %c4_214 = arith.constant 4 : index
    %c0_215 = arith.constant 0 : index
    %433 = vector.load %arg1[%c0_213, %c4_214, %c0_215] : memref<2x8x256xbf16, #tpu.memory_space<vmem>>, vector<2x1x128xbf16>
    %434 = vector.shape_cast %433 : vector<2x1x128xbf16> to vector<2x128xbf16>
    %435 = arith.extf %434 : vector<2x128xbf16> to vector<2x128xf32>
    %c0_216 = arith.constant 0 : index
    %c3_217 = arith.constant 3 : index
    %c128_218 = arith.constant 128 : index
    %436 = vector.load %arg1[%c0_216, %c3_217, %c128_218] : memref<2x8x256xbf16, #tpu.memory_space<vmem>>, vector<2x1x128xbf16>
    %437 = vector.shape_cast %436 : vector<2x1x128xbf16> to vector<2x128xbf16>
    %438 = arith.extf %437 : vector<2x128xbf16> to vector<2x128xf32>
    %439 = arith.addf %435, %428 : vector<2x128xf32>
    %c0_219 = arith.constant 0 : index
    %c0_220 = arith.constant 0 : index
    %440 = vector.load %arg7[%c0_219, %c0_220] : memref<2x32xf32, #tpu.memory_space<vmem>>, vector<2x32xf32>
    %441 = vector.extract_strided_slice %439 {offsets = [0, 0], sizes = [2, 32], strides = [1, 1]} : vector<2x128xf32> to vector<2x32xf32>
    %442 = arith.negf %441 : vector<2x32xf32>
    %443 = math.exp %442 : vector<2x32xf32>
    %cst_221 = arith.constant 1.000000e+00 : f32
    %444 = vector.broadcast %cst_221 : f32 to vector<2x32xf32>
    %445 = arith.addf %444, %443 : vector<2x32xf32>
    %446 = arith.divf %444, %445 : vector<2x32xf32>
    %447 = vector.extract_strided_slice %439 {offsets = [0, 32], sizes = [2, 32], strides = [1, 1]} : vector<2x128xf32> to vector<2x32xf32>
    %448 = arith.negf %447 : vector<2x32xf32>
    %449 = math.exp %448 : vector<2x32xf32>
    %cst_222 = arith.constant 1.000000e+00 : f32
    %450 = vector.broadcast %cst_222 : f32 to vector<2x32xf32>
    %451 = arith.addf %450, %449 : vector<2x32xf32>
    %452 = arith.divf %450, %451 : vector<2x32xf32>
    %453 = vector.extract_strided_slice %439 {offsets = [0, 64], sizes = [2, 32], strides = [1, 1]} : vector<2x128xf32> to vector<2x32xf32>
    %454 = math.tanh %453 : vector<2x32xf32>
    %455 = vector.extract_strided_slice %439 {offsets = [0, 96], sizes = [2, 32], strides = [1, 1]} : vector<2x128xf32> to vector<2x32xf32>
    %456 = arith.negf %455 : vector<2x32xf32>
    %457 = math.exp %456 : vector<2x32xf32>
    %cst_223 = arith.constant 1.000000e+00 : f32
    %458 = vector.broadcast %cst_223 : f32 to vector<2x32xf32>
    %459 = arith.addf %458, %457 : vector<2x32xf32>
    %460 = arith.divf %458, %459 : vector<2x32xf32>
    %461 = arith.mulf %452, %440 : vector<2x32xf32>
    %462 = arith.mulf %446, %454 : vector<2x32xf32>
    %463 = arith.addf %461, %462 : vector<2x32xf32>
    %464 = math.tanh %463 : vector<2x32xf32>
    %465 = arith.mulf %460, %464 : vector<2x32xf32>
    %466 = arith.addf %438, %432 : vector<2x128xf32>
    %c0_224 = arith.constant 0 : index
    %c0_225 = arith.constant 0 : index
    %467 = vector.load %arg9[%c0_224, %c0_225] : memref<2x32xf32, #tpu.memory_space<vmem>>, vector<2x32xf32>
    %468 = vector.extract_strided_slice %466 {offsets = [0, 0], sizes = [2, 32], strides = [1, 1]} : vector<2x128xf32> to vector<2x32xf32>
    %469 = arith.negf %468 : vector<2x32xf32>
    %470 = math.exp %469 : vector<2x32xf32>
    %cst_226 = arith.constant 1.000000e+00 : f32
    %471 = vector.broadcast %cst_226 : f32 to vector<2x32xf32>
    %472 = arith.addf %471, %470 : vector<2x32xf32>
    %473 = arith.divf %471, %472 : vector<2x32xf32>
    %474 = vector.extract_strided_slice %466 {offsets = [0, 32], sizes = [2, 32], strides = [1, 1]} : vector<2x128xf32> to vector<2x32xf32>
    %475 = arith.negf %474 : vector<2x32xf32>
    %476 = math.exp %475 : vector<2x32xf32>
    %cst_227 = arith.constant 1.000000e+00 : f32
    %477 = vector.broadcast %cst_227 : f32 to vector<2x32xf32>
    %478 = arith.addf %477, %476 : vector<2x32xf32>
    %479 = arith.divf %477, %478 : vector<2x32xf32>
    %480 = vector.extract_strided_slice %466 {offsets = [0, 64], sizes = [2, 32], strides = [1, 1]} : vector<2x128xf32> to vector<2x32xf32>
    %481 = math.tanh %480 : vector<2x32xf32>
    %482 = vector.extract_strided_slice %466 {offsets = [0, 96], sizes = [2, 32], strides = [1, 1]} : vector<2x128xf32> to vector<2x32xf32>
    %483 = arith.negf %482 : vector<2x32xf32>
    %484 = math.exp %483 : vector<2x32xf32>
    %cst_228 = arith.constant 1.000000e+00 : f32
    %485 = vector.broadcast %cst_228 : f32 to vector<2x32xf32>
    %486 = arith.addf %485, %484 : vector<2x32xf32>
    %487 = arith.divf %485, %486 : vector<2x32xf32>
    %488 = arith.mulf %479, %467 : vector<2x32xf32>
    %489 = arith.mulf %473, %481 : vector<2x32xf32>
    %490 = arith.addf %488, %489 : vector<2x32xf32>
    %491 = math.tanh %490 : vector<2x32xf32>
    %492 = arith.mulf %487, %491 : vector<2x32xf32>
    %c4_i32_229 = arith.constant 4 : i32
    %493 = vector.broadcast %c4_i32_229 : i32 to vector<2x1xi32>
    %494 = arith.cmpi sgt, %8, %493 : vector<2x1xi32>
    %c3_i32_230 = arith.constant 3 : i32
    %495 = vector.broadcast %c3_i32_230 : i32 to vector<2x1xi32>
    %496 = arith.cmpi sgt, %8, %495 : vector<2x1xi32>
    %c0_231 = arith.constant 0 : index
    %c0_232 = arith.constant 0 : index
    %497 = vector.load %arg6[%c0_231, %c0_232] : memref<2x32xf32, #tpu.memory_space<vmem>>, vector<2x32xf32>
    %498 = vector.shape_cast %494 : vector<2x1xi1> to vector<2x1xi1>
    %499 = vector.broadcast %498 : vector<2x1xi1> to vector<2x32xi1>
    %500 = arith.select %499, %465, %497 : vector<2x32xi1>, vector<2x32xf32>
    %c0_233 = arith.constant 0 : index
    %c0_234 = arith.constant 0 : index
    %501 = vector.load %arg6[%c0_233, %c0_234] : memref<2x32xf32, #tpu.memory_space<vmem>>, vector<2x32xf32>
    tpu.vector_store %arg6[%c0_233, %c0_234], %500 {strides = array<i32>} : memref<2x32xf32, #tpu.memory_space<vmem>>, vector<2x32xf32>,
    %c0_235 = arith.constant 0 : index
    %c0_236 = arith.constant 0 : index
    %502 = vector.load %arg7[%c0_235, %c0_236] : memref<2x32xf32, #tpu.memory_space<vmem>>, vector<2x32xf32>
    %503 = vector.shape_cast %494 : vector<2x1xi1> to vector<2x1xi1>
    %504 = vector.broadcast %503 : vector<2x1xi1> to vector<2x32xi1>
    %505 = arith.select %504, %463, %502 : vector<2x32xi1>, vector<2x32xf32>
    %c0_237 = arith.constant 0 : index
    %c0_238 = arith.constant 0 : index
    %506 = vector.load %arg7[%c0_237, %c0_238] : memref<2x32xf32, #tpu.memory_space<vmem>>, vector<2x32xf32>
    tpu.vector_store %arg7[%c0_237, %c0_238], %505 {strides = array<i32>} : memref<2x32xf32, #tpu.memory_space<vmem>>, vector<2x32xf32>,
    %c0_239 = arith.constant 0 : index
    %c0_240 = arith.constant 0 : index
    %507 = vector.load %arg8[%c0_239, %c0_240] : memref<2x32xf32, #tpu.memory_space<vmem>>, vector<2x32xf32>
    %508 = vector.shape_cast %496 : vector<2x1xi1> to vector<2x1xi1>
    %509 = vector.broadcast %508 : vector<2x1xi1> to vector<2x32xi1>
    %510 = arith.select %509, %492, %507 : vector<2x32xi1>, vector<2x32xf32>
    %c0_241 = arith.constant 0 : index
    %c0_242 = arith.constant 0 : index
    %511 = vector.load %arg8[%c0_241, %c0_242] : memref<2x32xf32, #tpu.memory_space<vmem>>, vector<2x32xf32>
    tpu.vector_store %arg8[%c0_241, %c0_242], %510 {strides = array<i32>} : memref<2x32xf32, #tpu.memory_space<vmem>>, vector<2x32xf32>,
    %c0_243 = arith.constant 0 : index
    %c0_244 = arith.constant 0 : index
    %512 = vector.load %arg9[%c0_243, %c0_244] : memref<2x32xf32, #tpu.memory_space<vmem>>, vector<2x32xf32>
    %513 = vector.shape_cast %496 : vector<2x1xi1> to vector<2x1xi1>
    %514 = vector.broadcast %513 : vector<2x1xi1> to vector<2x32xi1>
    %515 = arith.select %514, %490, %512 : vector<2x32xi1>, vector<2x32xf32>
    %c0_245 = arith.constant 0 : index
    %c0_246 = arith.constant 0 : index
    %516 = vector.load %arg9[%c0_245, %c0_246] : memref<2x32xf32, #tpu.memory_space<vmem>>, vector<2x32xf32>
    tpu.vector_store %arg9[%c0_245, %c0_246], %515 {strides = array<i32>} : memref<2x32xf32, #tpu.memory_space<vmem>>, vector<2x32xf32>,
    %cst_247 = arith.constant 0.000000e+00 : f32
    %517 = vector.shape_cast %494 : vector<2x1xi1> to vector<2x1xi1>
    %518 = vector.broadcast %517 : vector<2x1xi1> to vector<2x32xi1>
    %519 = vector.broadcast %cst_247 : f32 to vector<2x32xf32>
    %520 = arith.select %518, %465, %519 : vector<2x32xi1>, vector<2x32xf32>
    %521 = vector.shape_cast %520 : vector<2x32xf32> to vector<2x1x32xf32>
    %c0_248 = arith.constant 0 : index
    %c4_249 = arith.constant 4 : index
    %c0_250 = arith.constant 0 : index
    %522 = vector.load %arg10[%c0_248, %c4_249, %c0_250] : memref<2x8x64xf32, #tpu.memory_space<vmem>>, vector<2x1x32xf32>
    tpu.vector_store %arg10[%c0_248, %c4_249, %c0_250], %521 {strides = array<i32>} : memref<2x8x64xf32, #tpu.memory_space<vmem>>, vector<2x1x32xf32>,
    %cst_251 = arith.constant 0.000000e+00 : f32
    %523 = vector.shape_cast %496 : vector<2x1xi1> to vector<2x1xi1>
    %524 = vector.broadcast %523 : vector<2x1xi1> to vector<2x32xi1>
    %525 = vector.broadcast %cst_251 : f32 to vector<2x32xf32>
    %526 = arith.select %524, %492, %525 : vector<2x32xi1>, vector<2x32xf32>
    %527 = vector.shape_cast %526 : vector<2x32xf32> to vector<2x1x32xf32>
    %c0_252 = arith.constant 0 : index
    %c3_253 = arith.constant 3 : index
    %c32_254 = arith.constant 32 : index
    %528 = vector.load %arg10[%c0_252, %c3_253, %c32_254] : memref<2x8x64xf32, #tpu.memory_space<vmem>>, vector<2x1x32xf32>
    tpu.vector_store %arg10[%c0_252, %c3_253, %c32_254], %527 {strides = array<i32>} : memref<2x8x64xf32, #tpu.memory_space<vmem>>, vector<2x1x32xf32>,
    %c0_255 = arith.constant 0 : index
    %c0_256 = arith.constant 0 : index
    %529 = vector.load %arg6[%c0_255, %c0_256] : memref<2x32xf32, #tpu.memory_space<vmem>>, vector<2x32xf32>
    %530 = arith.truncf %529 : vector<2x32xf32> to vector<2x32xbf16>
    %c0_257 = arith.constant 0 : index
    %c0_258 = arith.constant 0 : index
    %531 = vector.load %arg2[%c0_257, %c0_258] : memref<32x128xbf16, #tpu.memory_space<vmem>>, vector<32x128xbf16>
    %cst_259 = arith.constant dense<0.000000e+00> : vector<2x128xf32>
    %532 = tpu.matmul %530, %531, %cst_259 {dimension_numbers = #tpu.dot_dimension_numbers<[1], [0], [0], [1], [0, 0, 1, 1], [], []>} : vector<2x32xbf16>, vector<32x128xbf16>, vector<2x128xf32> -> vector<2x128xf32>
    %c0_260 = arith.constant 0 : index
    %c0_261 = arith.constant 0 : index
    %533 = vector.load %arg8[%c0_260, %c0_261] : memref<2x32xf32, #tpu.memory_space<vmem>>, vector<2x32xf32>
    %534 = arith.truncf %533 : vector<2x32xf32> to vector<2x32xbf16>
    %c0_262 = arith.constant 0 : index
    %c0_263 = arith.constant 0 : index
    %535 = vector.load %arg3[%c0_262, %c0_263] : memref<32x128xbf16, #tpu.memory_space<vmem>>, vector<32x128xbf16>
    %cst_264 = arith.constant dense<0.000000e+00> : vector<2x128xf32>
    %536 = tpu.matmul %534, %535, %cst_264 {dimension_numbers = #tpu.dot_dimension_numbers<[1], [0], [0], [1], [0, 0, 1, 1], [], []>} : vector<2x32xbf16>, vector<32x128xbf16>, vector<2x128xf32> -> vector<2x128xf32>
    %c0_265 = arith.constant 0 : index
    %c5_266 = arith.constant 5 : index
    %c0_267 = arith.constant 0 : index
    %537 = vector.load %arg1[%c0_265, %c5_266, %c0_267] : memref<2x8x256xbf16, #tpu.memory_space<vmem>>, vector<2x1x128xbf16>
    %538 = vector.shape_cast %537 : vector<2x1x128xbf16> to vector<2x128xbf16>
    %539 = arith.extf %538 : vector<2x128xbf16> to vector<2x128xf32>
    %c0_268 = arith.constant 0 : index
    %c2_269 = arith.constant 2 : index
    %c128_270 = arith.constant 128 : index
    %540 = vector.load %arg1[%c0_268, %c2_269, %c128_270] : memref<2x8x256xbf16, #tpu.memory_space<vmem>>, vector<2x1x128xbf16>
    %541 = vector.shape_cast %540 : vector<2x1x128xbf16> to vector<2x128xbf16>
    %542 = arith.extf %541 : vector<2x128xbf16> to vector<2x128xf32>
    %543 = arith.addf %539, %532 : vector<2x128xf32>
    %c0_271 = arith.constant 0 : index
    %c0_272 = arith.constant 0 : index
    %544 = vector.load %arg7[%c0_271, %c0_272] : memref<2x32xf32, #tpu.memory_space<vmem>>, vector<2x32xf32>
    %545 = vector.extract_strided_slice %543 {offsets = [0, 0], sizes = [2, 32], strides = [1, 1]} : vector<2x128xf32> to vector<2x32xf32>
    %546 = arith.negf %545 : vector<2x32xf32>
    %547 = math.exp %546 : vector<2x32xf32>
    %cst_273 = arith.constant 1.000000e+00 : f32
    %548 = vector.broadcast %cst_273 : f32 to vector<2x32xf32>
    %549 = arith.addf %548, %547 : vector<2x32xf32>
    %550 = arith.divf %548, %549 : vector<2x32xf32>
    %551 = vector.extract_strided_slice %543 {offsets = [0, 32], sizes = [2, 32], strides = [1, 1]} : vector<2x128xf32> to vector<2x32xf32>
    %552 = arith.negf %551 : vector<2x32xf32>
    %553 = math.exp %552 : vector<2x32xf32>
    %cst_274 = arith.constant 1.000000e+00 : f32
    %554 = vector.broadcast %cst_274 : f32 to vector<2x32xf32>
    %555 = arith.addf %554, %553 : vector<2x32xf32>
    %556 = arith.divf %554, %555 : vector<2x32xf32>
    %557 = vector.extract_strided_slice %543 {offsets = [0, 64], sizes = [2, 32], strides = [1, 1]} : vector<2x128xf32> to vector<2x32xf32>
    %558 = math.tanh %557 : vector<2x32xf32>
    %559 = vector.extract_strided_slice %543 {offsets = [0, 96], sizes = [2, 32], strides = [1, 1]} : vector<2x128xf32> to vector<2x32xf32>
    %560 = arith.negf %559 : vector<2x32xf32>
    %561 = math.exp %560 : vector<2x32xf32>
    %cst_275 = arith.constant 1.000000e+00 : f32
    %562 = vector.broadcast %cst_275 : f32 to vector<2x32xf32>
    %563 = arith.addf %562, %561 : vector<2x32xf32>
    %564 = arith.divf %562, %563 : vector<2x32xf32>
    %565 = arith.mulf %556, %544 : vector<2x32xf32>
    %566 = arith.mulf %550, %558 : vector<2x32xf32>
    %567 = arith.addf %565, %566 : vector<2x32xf32>
    %568 = math.tanh %567 : vector<2x32xf32>
    %569 = arith.mulf %564, %568 : vector<2x32xf32>
    %570 = arith.addf %542, %536 : vector<2x128xf32>
    %c0_276 = arith.constant 0 : index
    %c0_277 = arith.constant 0 : index
    %571 = vector.load %arg9[%c0_276, %c0_277] : memref<2x32xf32, #tpu.memory_space<vmem>>, vector<2x32xf32>
    %572 = vector.extract_strided_slice %570 {offsets = [0, 0], sizes = [2, 32], strides = [1, 1]} : vector<2x128xf32> to vector<2x32xf32>
    %573 = arith.negf %572 : vector<2x32xf32>
    %574 = math.exp %573 : vector<2x32xf32>
    %cst_278 = arith.constant 1.000000e+00 : f32
    %575 = vector.broadcast %cst_278 : f32 to vector<2x32xf32>
    %576 = arith.addf %575, %574 : vector<2x32xf32>
    %577 = arith.divf %575, %576 : vector<2x32xf32>
    %578 = vector.extract_strided_slice %570 {offsets = [0, 32], sizes = [2, 32], strides = [1, 1]} : vector<2x128xf32> to vector<2x32xf32>
    %579 = arith.negf %578 : vector<2x32xf32>
    %580 = math.exp %579 : vector<2x32xf32>
    %cst_279 = arith.constant 1.000000e+00 : f32
    %581 = vector.broadcast %cst_279 : f32 to vector<2x32xf32>
    %582 = arith.addf %581, %580 : vector<2x32xf32>
    %583 = arith.divf %581, %582 : vector<2x32xf32>
    %584 = vector.extract_strided_slice %570 {offsets = [0, 64], sizes = [2, 32], strides = [1, 1]} : vector<2x128xf32> to vector<2x32xf32>
    %585 = math.tanh %584 : vector<2x32xf32>
    %586 = vector.extract_strided_slice %570 {offsets = [0, 96], sizes = [2, 32], strides = [1, 1]} : vector<2x128xf32> to vector<2x32xf32>
    %587 = arith.negf %586 : vector<2x32xf32>
    %588 = math.exp %587 : vector<2x32xf32>
    %cst_280 = arith.constant 1.000000e+00 : f32
    %589 = vector.broadcast %cst_280 : f32 to vector<2x32xf32>
    %590 = arith.addf %589, %588 : vector<2x32xf32>
    %591 = arith.divf %589, %590 : vector<2x32xf32>
    %592 = arith.mulf %583, %571 : vector<2x32xf32>
    %593 = arith.mulf %577, %585 : vector<2x32xf32>
    %594 = arith.addf %592, %593 : vector<2x32xf32>
    %595 = math.tanh %594 : vector<2x32xf32>
    %596 = arith.mulf %591, %595 : vector<2x32xf32>
    %c5_i32_281 = arith.constant 5 : i32
    %597 = vector.broadcast %c5_i32_281 : i32 to vector<2x1xi32>
    %598 = arith.cmpi sgt, %8, %597 : vector<2x1xi32>
    %c2_i32_282 = arith.constant 2 : i32
    %599 = vector.broadcast %c2_i32_282 : i32 to vector<2x1xi32>
    %600 = arith.cmpi sgt, %8, %599 : vector<2x1xi32>
    %c0_283 = arith.constant 0 : index
    %c0_284 = arith.constant 0 : index
    %601 = vector.load %arg6[%c0_283, %c0_284] : memref<2x32xf32, #tpu.memory_space<vmem>>, vector<2x32xf32>
    %602 = vector.shape_cast %598 : vector<2x1xi1> to vector<2x1xi1>
    %603 = vector.broadcast %602 : vector<2x1xi1> to vector<2x32xi1>
    %604 = arith.select %603, %569, %601 : vector<2x32xi1>, vector<2x32xf32>
    %c0_285 = arith.constant 0 : index
    %c0_286 = arith.constant 0 : index
    %605 = vector.load %arg6[%c0_285, %c0_286] : memref<2x32xf32, #tpu.memory_space<vmem>>, vector<2x32xf32>
    tpu.vector_store %arg6[%c0_285, %c0_286], %604 {strides = array<i32>} : memref<2x32xf32, #tpu.memory_space<vmem>>, vector<2x32xf32>,
    %c0_287 = arith.constant 0 : index
    %c0_288 = arith.constant 0 : index
    %606 = vector.load %arg7[%c0_287, %c0_288] : memref<2x32xf32, #tpu.memory_space<vmem>>, vector<2x32xf32>
    %607 = vector.shape_cast %598 : vector<2x1xi1> to vector<2x1xi1>
    %608 = vector.broadcast %607 : vector<2x1xi1> to vector<2x32xi1>
    %609 = arith.select %608, %567, %606 : vector<2x32xi1>, vector<2x32xf32>
    %c0_289 = arith.constant 0 : index
    %c0_290 = arith.constant 0 : index
    %610 = vector.load %arg7[%c0_289, %c0_290] : memref<2x32xf32, #tpu.memory_space<vmem>>, vector<2x32xf32>
    tpu.vector_store %arg7[%c0_289, %c0_290], %609 {strides = array<i32>} : memref<2x32xf32, #tpu.memory_space<vmem>>, vector<2x32xf32>,
    %c0_291 = arith.constant 0 : index
    %c0_292 = arith.constant 0 : index
    %611 = vector.load %arg8[%c0_291, %c0_292] : memref<2x32xf32, #tpu.memory_space<vmem>>, vector<2x32xf32>
    %612 = vector.shape_cast %600 : vector<2x1xi1> to vector<2x1xi1>
    %613 = vector.broadcast %612 : vector<2x1xi1> to vector<2x32xi1>
    %614 = arith.select %613, %596, %611 : vector<2x32xi1>, vector<2x32xf32>
    %c0_293 = arith.constant 0 : index
    %c0_294 = arith.constant 0 : index
    %615 = vector.load %arg8[%c0_293, %c0_294] : memref<2x32xf32, #tpu.memory_space<vmem>>, vector<2x32xf32>
    tpu.vector_store %arg8[%c0_293, %c0_294], %614 {strides = array<i32>} : memref<2x32xf32, #tpu.memory_space<vmem>>, vector<2x32xf32>,
    %c0_295 = arith.constant 0 : index
    %c0_296 = arith.constant 0 : index
    %616 = vector.load %arg9[%c0_295, %c0_296] : memref<2x32xf32, #tpu.memory_space<vmem>>, vector<2x32xf32>
    %617 = vector.shape_cast %600 : vector<2x1xi1> to vector<2x1xi1>
    %618 = vector.broadcast %617 : vector<2x1xi1> to vector<2x32xi1>
    %619 = arith.select %618, %594, %616 : vector<2x32xi1>, vector<2x32xf32>
    %c0_297 = arith.constant 0 : index
    %c0_298 = arith.constant 0 : index
    %620 = vector.load %arg9[%c0_297, %c0_298] : memref<2x32xf32, #tpu.memory_space<vmem>>, vector<2x32xf32>
    tpu.vector_store %arg9[%c0_297, %c0_298], %619 {strides = array<i32>} : memref<2x32xf32, #tpu.memory_space<vmem>>, vector<2x32xf32>,
    %cst_299 = arith.constant 0.000000e+00 : f32
    %621 = vector.shape_cast %598 : vector<2x1xi1> to vector<2x1xi1>
    %622 = vector.broadcast %621 : vector<2x1xi1> to vector<2x32xi1>
    %623 = vector.broadcast %cst_299 : f32 to vector<2x32xf32>
    %624 = arith.select %622, %569, %623 : vector<2x32xi1>, vector<2x32xf32>
    %625 = vector.shape_cast %624 : vector<2x32xf32> to vector<2x1x32xf32>
    %c0_300 = arith.constant 0 : index
    %c5_301 = arith.constant 5 : index
    %c0_302 = arith.constant 0 : index
    %626 = vector.load %arg10[%c0_300, %c5_301, %c0_302] : memref<2x8x64xf32, #tpu.memory_space<vmem>>, vector<2x1x32xf32>
    tpu.vector_store %arg10[%c0_300, %c5_301, %c0_302], %625 {strides = array<i32>} : memref<2x8x64xf32, #tpu.memory_space<vmem>>, vector<2x1x32xf32>,
    %cst_303 = arith.constant 0.000000e+00 : f32
    %627 = vector.shape_cast %600 : vector<2x1xi1> to vector<2x1xi1>
    %628 = vector.broadcast %627 : vector<2x1xi1> to vector<2x32xi1>
    %629 = vector.broadcast %cst_303 : f32 to vector<2x32xf32>
    %630 = arith.select %628, %596, %629 : vector<2x32xi1>, vector<2x32xf32>
    %631 = vector.shape_cast %630 : vector<2x32xf32> to vector<2x1x32xf32>
    %c0_304 = arith.constant 0 : index
    %c2_305 = arith.constant 2 : index
    %c32_306 = arith.constant 32 : index
    %632 = vector.load %arg10[%c0_304, %c2_305, %c32_306] : memref<2x8x64xf32, #tpu.memory_space<vmem>>, vector<2x1x32xf32>
    tpu.vector_store %arg10[%c0_304, %c2_305, %c32_306], %631 {strides = array<i32>} : memref<2x8x64xf32, #tpu.memory_space<vmem>>, vector<2x1x32xf32>,
    %c0_307 = arith.constant 0 : index
    %c0_308 = arith.constant 0 : index
    %633 = vector.load %arg6[%c0_307, %c0_308] : memref<2x32xf32, #tpu.memory_space<vmem>>, vector<2x32xf32>
    %634 = arith.truncf %633 : vector<2x32xf32> to vector<2x32xbf16>
    %c0_309 = arith.constant 0 : index
    %c0_310 = arith.constant 0 : index
    %635 = vector.load %arg2[%c0_309, %c0_310] : memref<32x128xbf16, #tpu.memory_space<vmem>>, vector<32x128xbf16>
    %cst_311 = arith.constant dense<0.000000e+00> : vector<2x128xf32>
    %636 = tpu.matmul %634, %635, %cst_311 {dimension_numbers = #tpu.dot_dimension_numbers<[1], [0], [0], [1], [0, 0, 1, 1], [], []>} : vector<2x32xbf16>, vector<32x128xbf16>, vector<2x128xf32> -> vector<2x128xf32>
    %c0_312 = arith.constant 0 : index
    %c0_313 = arith.constant 0 : index
    %637 = vector.load %arg8[%c0_312, %c0_313] : memref<2x32xf32, #tpu.memory_space<vmem>>, vector<2x32xf32>
    %638 = arith.truncf %637 : vector<2x32xf32> to vector<2x32xbf16>
    %c0_314 = arith.constant 0 : index
    %c0_315 = arith.constant 0 : index
    %639 = vector.load %arg3[%c0_314, %c0_315] : memref<32x128xbf16, #tpu.memory_space<vmem>>, vector<32x128xbf16>
    %cst_316 = arith.constant dense<0.000000e+00> : vector<2x128xf32>
    %640 = tpu.matmul %638, %639, %cst_316 {dimension_numbers = #tpu.dot_dimension_numbers<[1], [0], [0], [1], [0, 0, 1, 1], [], []>} : vector<2x32xbf16>, vector<32x128xbf16>, vector<2x128xf32> -> vector<2x128xf32>
    %c0_317 = arith.constant 0 : index
    %c6_318 = arith.constant 6 : index
    %c0_319 = arith.constant 0 : index
    %641 = vector.load %arg1[%c0_317, %c6_318, %c0_319] : memref<2x8x256xbf16, #tpu.memory_space<vmem>>, vector<2x1x128xbf16>
    %642 = vector.shape_cast %641 : vector<2x1x128xbf16> to vector<2x128xbf16>
    %643 = arith.extf %642 : vector<2x128xbf16> to vector<2x128xf32>
    %c0_320 = arith.constant 0 : index
    %c1_321 = arith.constant 1 : index
    %c128_322 = arith.constant 128 : index
    %644 = vector.load %arg1[%c0_320, %c1_321, %c128_322] : memref<2x8x256xbf16, #tpu.memory_space<vmem>>, vector<2x1x128xbf16>
    %645 = vector.shape_cast %644 : vector<2x1x128xbf16> to vector<2x128xbf16>
    %646 = arith.extf %645 : vector<2x128xbf16> to vector<2x128xf32>
    %647 = arith.addf %643, %636 : vector<2x128xf32>
    %c0_323 = arith.constant 0 : index
    %c0_324 = arith.constant 0 : index
    %648 = vector.load %arg7[%c0_323, %c0_324] : memref<2x32xf32, #tpu.memory_space<vmem>>, vector<2x32xf32>
    %649 = vector.extract_strided_slice %647 {offsets = [0, 0], sizes = [2, 32], strides = [1, 1]} : vector<2x128xf32> to vector<2x32xf32>
    %650 = arith.negf %649 : vector<2x32xf32>
    %651 = math.exp %650 : vector<2x32xf32>
    %cst_325 = arith.constant 1.000000e+00 : f32
    %652 = vector.broadcast %cst_325 : f32 to vector<2x32xf32>
    %653 = arith.addf %652, %651 : vector<2x32xf32>
    %654 = arith.divf %652, %653 : vector<2x32xf32>
    %655 = vector.extract_strided_slice %647 {offsets = [0, 32], sizes = [2, 32], strides = [1, 1]} : vector<2x128xf32> to vector<2x32xf32>
    %656 = arith.negf %655 : vector<2x32xf32>
    %657 = math.exp %656 : vector<2x32xf32>
    %cst_326 = arith.constant 1.000000e+00 : f32
    %658 = vector.broadcast %cst_326 : f32 to vector<2x32xf32>
    %659 = arith.addf %658, %657 : vector<2x32xf32>
    %660 = arith.divf %658, %659 : vector<2x32xf32>
    %661 = vector.extract_strided_slice %647 {offsets = [0, 64], sizes = [2, 32], strides = [1, 1]} : vector<2x128xf32> to vector<2x32xf32>
    %662 = math.tanh %661 : vector<2x32xf32>
    %663 = vector.extract_strided_slice %647 {offsets = [0, 96], sizes = [2, 32], strides = [1, 1]} : vector<2x128xf32> to vector<2x32xf32>
    %664 = arith.negf %663 : vector<2x32xf32>
    %665 = math.exp %664 : vector<2x32xf32>
    %cst_327 = arith.constant 1.000000e+00 : f32
    %666 = vector.broadcast %cst_327 : f32 to vector<2x32xf32>
    %667 = arith.addf %666, %665 : vector<2x32xf32>
    %668 = arith.divf %666, %667 : vector<2x32xf32>
    %669 = arith.mulf %660, %648 : vector<2x32xf32>
    %670 = arith.mulf %654, %662 : vector<2x32xf32>
    %671 = arith.addf %669, %670 : vector<2x32xf32>
    %672 = math.tanh %671 : vector<2x32xf32>
    %673 = arith.mulf %668, %672 : vector<2x32xf32>
    %674 = arith.addf %646, %640 : vector<2x128xf32>
    %c0_328 = arith.constant 0 : index
    %c0_329 = arith.constant 0 : index
    %675 = vector.load %arg9[%c0_328, %c0_329] : memref<2x32xf32, #tpu.memory_space<vmem>>, vector<2x32xf32>
    %676 = vector.extract_strided_slice %674 {offsets = [0, 0], sizes = [2, 32], strides = [1, 1]} : vector<2x128xf32> to vector<2x32xf32>
    %677 = arith.negf %676 : vector<2x32xf32>
    %678 = math.exp %677 : vector<2x32xf32>
    %cst_330 = arith.constant 1.000000e+00 : f32
    %679 = vector.broadcast %cst_330 : f32 to vector<2x32xf32>
    %680 = arith.addf %679, %678 : vector<2x32xf32>
    %681 = arith.divf %679, %680 : vector<2x32xf32>
    %682 = vector.extract_strided_slice %674 {offsets = [0, 32], sizes = [2, 32], strides = [1, 1]} : vector<2x128xf32> to vector<2x32xf32>
    %683 = arith.negf %682 : vector<2x32xf32>
    %684 = math.exp %683 : vector<2x32xf32>
    %cst_331 = arith.constant 1.000000e+00 : f32
    %685 = vector.broadcast %cst_331 : f32 to vector<2x32xf32>
    %686 = arith.addf %685, %684 : vector<2x32xf32>
    %687 = arith.divf %685, %686 : vector<2x32xf32>
    %688 = vector.extract_strided_slice %674 {offsets = [0, 64], sizes = [2, 32], strides = [1, 1]} : vector<2x128xf32> to vector<2x32xf32>
    %689 = math.tanh %688 : vector<2x32xf32>
    %690 = vector.extract_strided_slice %674 {offsets = [0, 96], sizes = [2, 32], strides = [1, 1]} : vector<2x128xf32> to vector<2x32xf32>
    %691 = arith.negf %690 : vector<2x32xf32>
    %692 = math.exp %691 : vector<2x32xf32>
    %cst_332 = arith.constant 1.000000e+00 : f32
    %693 = vector.broadcast %cst_332 : f32 to vector<2x32xf32>
    %694 = arith.addf %693, %692 : vector<2x32xf32>
    %695 = arith.divf %693, %694 : vector<2x32xf32>
    %696 = arith.mulf %687, %675 : vector<2x32xf32>
    %697 = arith.mulf %681, %689 : vector<2x32xf32>
    %698 = arith.addf %696, %697 : vector<2x32xf32>
    %699 = math.tanh %698 : vector<2x32xf32>
    %700 = arith.mulf %695, %699 : vector<2x32xf32>
    %c6_i32_333 = arith.constant 6 : i32
    %701 = vector.broadcast %c6_i32_333 : i32 to vector<2x1xi32>
    %702 = arith.cmpi sgt, %8, %701 : vector<2x1xi32>
    %c1_i32_334 = arith.constant 1 : i32
    %703 = vector.broadcast %c1_i32_334 : i32 to vector<2x1xi32>
    %704 = arith.cmpi sgt, %8, %703 : vector<2x1xi32>
    %c0_335 = arith.constant 0 : index
    %c0_336 = arith.constant 0 : index
    %705 = vector.load %arg6[%c0_335, %c0_336] : memref<2x32xf32, #tpu.memory_space<vmem>>, vector<2x32xf32>
    %706 = vector.shape_cast %702 : vector<2x1xi1> to vector<2x1xi1>
    %707 = vector.broadcast %706 : vector<2x1xi1> to vector<2x32xi1>
    %708 = arith.select %707, %673, %705 : vector<2x32xi1>, vector<2x32xf32>
    %c0_337 = arith.constant 0 : index
    %c0_338 = arith.constant 0 : index
    %709 = vector.load %arg6[%c0_337, %c0_338] : memref<2x32xf32, #tpu.memory_space<vmem>>, vector<2x32xf32>
    tpu.vector_store %arg6[%c0_337, %c0_338], %708 {strides = array<i32>} : memref<2x32xf32, #tpu.memory_space<vmem>>, vector<2x32xf32>,
    %c0_339 = arith.constant 0 : index
    %c0_340 = arith.constant 0 : index
    %710 = vector.load %arg7[%c0_339, %c0_340] : memref<2x32xf32, #tpu.memory_space<vmem>>, vector<2x32xf32>
    %711 = vector.shape_cast %702 : vector<2x1xi1> to vector<2x1xi1>
    %712 = vector.broadcast %711 : vector<2x1xi1> to vector<2x32xi1>
    %713 = arith.select %712, %671, %710 : vector<2x32xi1>, vector<2x32xf32>
    %c0_341 = arith.constant 0 : index
    %c0_342 = arith.constant 0 : index
    %714 = vector.load %arg7[%c0_341, %c0_342] : memref<2x32xf32, #tpu.memory_space<vmem>>, vector<2x32xf32>
    tpu.vector_store %arg7[%c0_341, %c0_342], %713 {strides = array<i32>} : memref<2x32xf32, #tpu.memory_space<vmem>>, vector<2x32xf32>,
    %c0_343 = arith.constant 0 : index
    %c0_344 = arith.constant 0 : index
    %715 = vector.load %arg8[%c0_343, %c0_344] : memref<2x32xf32, #tpu.memory_space<vmem>>, vector<2x32xf32>
    %716 = vector.shape_cast %704 : vector<2x1xi1> to vector<2x1xi1>
    %717 = vector.broadcast %716 : vector<2x1xi1> to vector<2x32xi1>
    %718 = arith.select %717, %700, %715 : vector<2x32xi1>, vector<2x32xf32>
    %c0_345 = arith.constant 0 : index
    %c0_346 = arith.constant 0 : index
    %719 = vector.load %arg8[%c0_345, %c0_346] : memref<2x32xf32, #tpu.memory_space<vmem>>, vector<2x32xf32>
    tpu.vector_store %arg8[%c0_345, %c0_346], %718 {strides = array<i32>} : memref<2x32xf32, #tpu.memory_space<vmem>>, vector<2x32xf32>,
    %c0_347 = arith.constant 0 : index
    %c0_348 = arith.constant 0 : index
    %720 = vector.load %arg9[%c0_347, %c0_348] : memref<2x32xf32, #tpu.memory_space<vmem>>, vector<2x32xf32>
    %721 = vector.shape_cast %704 : vector<2x1xi1> to vector<2x1xi1>
    %722 = vector.broadcast %721 : vector<2x1xi1> to vector<2x32xi1>
    %723 = arith.select %722, %698, %720 : vector<2x32xi1>, vector<2x32xf32>
    %c0_349 = arith.constant 0 : index
    %c0_350 = arith.constant 0 : index
    %724 = vector.load %arg9[%c0_349, %c0_350] : memref<2x32xf32, #tpu.memory_space<vmem>>, vector<2x32xf32>
    tpu.vector_store %arg9[%c0_349, %c0_350], %723 {strides = array<i32>} : memref<2x32xf32, #tpu.memory_space<vmem>>, vector<2x32xf32>,
    %cst_351 = arith.constant 0.000000e+00 : f32
    %725 = vector.shape_cast %702 : vector<2x1xi1> to vector<2x1xi1>
    %726 = vector.broadcast %725 : vector<2x1xi1> to vector<2x32xi1>
    %727 = vector.broadcast %cst_351 : f32 to vector<2x32xf32>
    %728 = arith.select %726, %673, %727 : vector<2x32xi1>, vector<2x32xf32>
    %729 = vector.shape_cast %728 : vector<2x32xf32> to vector<2x1x32xf32>
    %c0_352 = arith.constant 0 : index
    %c6_353 = arith.constant 6 : index
    %c0_354 = arith.constant 0 : index
    %730 = vector.load %arg10[%c0_352, %c6_353, %c0_354] : memref<2x8x64xf32, #tpu.memory_space<vmem>>, vector<2x1x32xf32>
    tpu.vector_store %arg10[%c0_352, %c6_353, %c0_354], %729 {strides = array<i32>} : memref<2x8x64xf32, #tpu.memory_space<vmem>>, vector<2x1x32xf32>,
    %cst_355 = arith.constant 0.000000e+00 : f32
    %731 = vector.shape_cast %704 : vector<2x1xi1> to vector<2x1xi1>
    %732 = vector.broadcast %731 : vector<2x1xi1> to vector<2x32xi1>
    %733 = vector.broadcast %cst_355 : f32 to vector<2x32xf32>
    %734 = arith.select %732, %700, %733 : vector<2x32xi1>, vector<2x32xf32>
    %735 = vector.shape_cast %734 : vector<2x32xf32> to vector<2x1x32xf32>
    %c0_356 = arith.constant 0 : index
    %c1_357 = arith.constant 1 : index
    %c32_358 = arith.constant 32 : index
    %736 = vector.load %arg10[%c0_356, %c1_357, %c32_358] : memref<2x8x64xf32, #tpu.memory_space<vmem>>, vector<2x1x32xf32>
    tpu.vector_store %arg10[%c0_356, %c1_357, %c32_358], %735 {strides = array<i32>} : memref<2x8x64xf32, #tpu.memory_space<vmem>>, vector<2x1x32xf32>,
    %c0_359 = arith.constant 0 : index
    %c0_360 = arith.constant 0 : index
    %737 = vector.load %arg6[%c0_359, %c0_360] : memref<2x32xf32, #tpu.memory_space<vmem>>, vector<2x32xf32>
    %738 = arith.truncf %737 : vector<2x32xf32> to vector<2x32xbf16>
    %c0_361 = arith.constant 0 : index
    %c0_362 = arith.constant 0 : index
    %739 = vector.load %arg2[%c0_361, %c0_362] : memref<32x128xbf16, #tpu.memory_space<vmem>>, vector<32x128xbf16>
    %cst_363 = arith.constant dense<0.000000e+00> : vector<2x128xf32>
    %740 = tpu.matmul %738, %739, %cst_363 {dimension_numbers = #tpu.dot_dimension_numbers<[1], [0], [0], [1], [0, 0, 1, 1], [], []>} : vector<2x32xbf16>, vector<32x128xbf16>, vector<2x128xf32> -> vector<2x128xf32>
    %c0_364 = arith.constant 0 : index
    %c0_365 = arith.constant 0 : index
    %741 = vector.load %arg8[%c0_364, %c0_365] : memref<2x32xf32, #tpu.memory_space<vmem>>, vector<2x32xf32>
    %742 = arith.truncf %741 : vector<2x32xf32> to vector<2x32xbf16>
    %c0_366 = arith.constant 0 : index
    %c0_367 = arith.constant 0 : index
    %743 = vector.load %arg3[%c0_366, %c0_367] : memref<32x128xbf16, #tpu.memory_space<vmem>>, vector<32x128xbf16>
    %cst_368 = arith.constant dense<0.000000e+00> : vector<2x128xf32>
    %744 = tpu.matmul %742, %743, %cst_368 {dimension_numbers = #tpu.dot_dimension_numbers<[1], [0], [0], [1], [0, 0, 1, 1], [], []>} : vector<2x32xbf16>, vector<32x128xbf16>, vector<2x128xf32> -> vector<2x128xf32>
    %c0_369 = arith.constant 0 : index
    %c7_370 = arith.constant 7 : index
    %c0_371 = arith.constant 0 : index
    %745 = vector.load %arg1[%c0_369, %c7_370, %c0_371] : memref<2x8x256xbf16, #tpu.memory_space<vmem>>, vector<2x1x128xbf16>
    %746 = vector.shape_cast %745 : vector<2x1x128xbf16> to vector<2x128xbf16>
    %747 = arith.extf %746 : vector<2x128xbf16> to vector<2x128xf32>
    %c0_372 = arith.constant 0 : index
    %c0_373 = arith.constant 0 : index
    %c128_374 = arith.constant 128 : index
    %748 = vector.load %arg1[%c0_372, %c0_373, %c128_374] : memref<2x8x256xbf16, #tpu.memory_space<vmem>>, vector<2x1x128xbf16>
    %749 = vector.shape_cast %748 : vector<2x1x128xbf16> to vector<2x128xbf16>
    %750 = arith.extf %749 : vector<2x128xbf16> to vector<2x128xf32>
    %751 = arith.addf %747, %740 : vector<2x128xf32>
    %c0_375 = arith.constant 0 : index
    %c0_376 = arith.constant 0 : index
    %752 = vector.load %arg7[%c0_375, %c0_376] : memref<2x32xf32, #tpu.memory_space<vmem>>, vector<2x32xf32>
    %753 = vector.extract_strided_slice %751 {offsets = [0, 0], sizes = [2, 32], strides = [1, 1]} : vector<2x128xf32> to vector<2x32xf32>
    %754 = arith.negf %753 : vector<2x32xf32>
    %755 = math.exp %754 : vector<2x32xf32>
    %cst_377 = arith.constant 1.000000e+00 : f32
    %756 = vector.broadcast %cst_377 : f32 to vector<2x32xf32>
    %757 = arith.addf %756, %755 : vector<2x32xf32>
    %758 = arith.divf %756, %757 : vector<2x32xf32>
    %759 = vector.extract_strided_slice %751 {offsets = [0, 32], sizes = [2, 32], strides = [1, 1]} : vector<2x128xf32> to vector<2x32xf32>
    %760 = arith.negf %759 : vector<2x32xf32>
    %761 = math.exp %760 : vector<2x32xf32>
    %cst_378 = arith.constant 1.000000e+00 : f32
    %762 = vector.broadcast %cst_378 : f32 to vector<2x32xf32>
    %763 = arith.addf %762, %761 : vector<2x32xf32>
    %764 = arith.divf %762, %763 : vector<2x32xf32>
    %765 = vector.extract_strided_slice %751 {offsets = [0, 64], sizes = [2, 32], strides = [1, 1]} : vector<2x128xf32> to vector<2x32xf32>
    %766 = math.tanh %765 : vector<2x32xf32>
    %767 = vector.extract_strided_slice %751 {offsets = [0, 96], sizes = [2, 32], strides = [1, 1]} : vector<2x128xf32> to vector<2x32xf32>
    %768 = arith.negf %767 : vector<2x32xf32>
    %769 = math.exp %768 : vector<2x32xf32>
    %cst_379 = arith.constant 1.000000e+00 : f32
    %770 = vector.broadcast %cst_379 : f32 to vector<2x32xf32>
    %771 = arith.addf %770, %769 : vector<2x32xf32>
    %772 = arith.divf %770, %771 : vector<2x32xf32>
    %773 = arith.mulf %764, %752 : vector<2x32xf32>
    %774 = arith.mulf %758, %766 : vector<2x32xf32>
    %775 = arith.addf %773, %774 : vector<2x32xf32>
    %776 = math.tanh %775 : vector<2x32xf32>
    %777 = arith.mulf %772, %776 : vector<2x32xf32>
    %778 = arith.addf %750, %744 : vector<2x128xf32>
    %c0_380 = arith.constant 0 : index
    %c0_381 = arith.constant 0 : index
    %779 = vector.load %arg9[%c0_380, %c0_381] : memref<2x32xf32, #tpu.memory_space<vmem>>, vector<2x32xf32>
    %780 = vector.extract_strided_slice %778 {offsets = [0, 0], sizes = [2, 32], strides = [1, 1]} : vector<2x128xf32> to vector<2x32xf32>
    %781 = arith.negf %780 : vector<2x32xf32>
    %782 = math.exp %781 : vector<2x32xf32>
    %cst_382 = arith.constant 1.000000e+00 : f32
    %783 = vector.broadcast %cst_382 : f32 to vector<2x32xf32>
    %784 = arith.addf %783, %782 : vector<2x32xf32>
    %785 = arith.divf %783, %784 : vector<2x32xf32>
    %786 = vector.extract_strided_slice %778 {offsets = [0, 32], sizes = [2, 32], strides = [1, 1]} : vector<2x128xf32> to vector<2x32xf32>
    %787 = arith.negf %786 : vector<2x32xf32>
    %788 = math.exp %787 : vector<2x32xf32>
    %cst_383 = arith.constant 1.000000e+00 : f32
    %789 = vector.broadcast %cst_383 : f32 to vector<2x32xf32>
    %790 = arith.addf %789, %788 : vector<2x32xf32>
    %791 = arith.divf %789, %790 : vector<2x32xf32>
    %792 = vector.extract_strided_slice %778 {offsets = [0, 64], sizes = [2, 32], strides = [1, 1]} : vector<2x128xf32> to vector<2x32xf32>
    %793 = math.tanh %792 : vector<2x32xf32>
    %794 = vector.extract_strided_slice %778 {offsets = [0, 96], sizes = [2, 32], strides = [1, 1]} : vector<2x128xf32> to vector<2x32xf32>
    %795 = arith.negf %794 : vector<2x32xf32>
    %796 = math.exp %795 : vector<2x32xf32>
    %cst_384 = arith.constant 1.000000e+00 : f32
    %797 = vector.broadcast %cst_384 : f32 to vector<2x32xf32>
    %798 = arith.addf %797, %796 : vector<2x32xf32>
    %799 = arith.divf %797, %798 : vector<2x32xf32>
    %800 = arith.mulf %791, %779 : vector<2x32xf32>
    %801 = arith.mulf %785, %793 : vector<2x32xf32>
    %802 = arith.addf %800, %801 : vector<2x32xf32>
    %803 = math.tanh %802 : vector<2x32xf32>
    %804 = arith.mulf %799, %803 : vector<2x32xf32>
    %c7_i32_385 = arith.constant 7 : i32
    %805 = vector.broadcast %c7_i32_385 : i32 to vector<2x1xi32>
    %806 = arith.cmpi sgt, %8, %805 : vector<2x1xi32>
    %c0_i32_386 = arith.constant 0 : i32
    %807 = vector.broadcast %c0_i32_386 : i32 to vector<2x1xi32>
    %808 = arith.cmpi sgt, %8, %807 : vector<2x1xi32>
    %c0_387 = arith.constant 0 : index
    %c0_388 = arith.constant 0 : index
    %809 = vector.load %arg6[%c0_387, %c0_388] : memref<2x32xf32, #tpu.memory_space<vmem>>, vector<2x32xf32>
    %810 = vector.shape_cast %806 : vector<2x1xi1> to vector<2x1xi1>
    %811 = vector.broadcast %810 : vector<2x1xi1> to vector<2x32xi1>
    %812 = arith.select %811, %777, %809 : vector<2x32xi1>, vector<2x32xf32>
    %c0_389 = arith.constant 0 : index
    %c0_390 = arith.constant 0 : index
    %813 = vector.load %arg6[%c0_389, %c0_390] : memref<2x32xf32, #tpu.memory_space<vmem>>, vector<2x32xf32>
    tpu.vector_store %arg6[%c0_389, %c0_390], %812 {strides = array<i32>} : memref<2x32xf32, #tpu.memory_space<vmem>>, vector<2x32xf32>,
    %c0_391 = arith.constant 0 : index
    %c0_392 = arith.constant 0 : index
    %814 = vector.load %arg7[%c0_391, %c0_392] : memref<2x32xf32, #tpu.memory_space<vmem>>, vector<2x32xf32>
    %815 = vector.shape_cast %806 : vector<2x1xi1> to vector<2x1xi1>
    %816 = vector.broadcast %815 : vector<2x1xi1> to vector<2x32xi1>
    %817 = arith.select %816, %775, %814 : vector<2x32xi1>, vector<2x32xf32>
    %c0_393 = arith.constant 0 : index
    %c0_394 = arith.constant 0 : index
    %818 = vector.load %arg7[%c0_393, %c0_394] : memref<2x32xf32, #tpu.memory_space<vmem>>, vector<2x32xf32>
    tpu.vector_store %arg7[%c0_393, %c0_394], %817 {strides = array<i32>} : memref<2x32xf32, #tpu.memory_space<vmem>>, vector<2x32xf32>,
    %c0_395 = arith.constant 0 : index
    %c0_396 = arith.constant 0 : index
    %819 = vector.load %arg8[%c0_395, %c0_396] : memref<2x32xf32, #tpu.memory_space<vmem>>, vector<2x32xf32>
    %820 = vector.shape_cast %808 : vector<2x1xi1> to vector<2x1xi1>
    %821 = vector.broadcast %820 : vector<2x1xi1> to vector<2x32xi1>
    %822 = arith.select %821, %804, %819 : vector<2x32xi1>, vector<2x32xf32>
    %c0_397 = arith.constant 0 : index
    %c0_398 = arith.constant 0 : index
    %823 = vector.load %arg8[%c0_397, %c0_398] : memref<2x32xf32, #tpu.memory_space<vmem>>, vector<2x32xf32>
    tpu.vector_store %arg8[%c0_397, %c0_398], %822 {strides = array<i32>} : memref<2x32xf32, #tpu.memory_space<vmem>>, vector<2x32xf32>,
    %c0_399 = arith.constant 0 : index
    %c0_400 = arith.constant 0 : index
    %824 = vector.load %arg9[%c0_399, %c0_400] : memref<2x32xf32, #tpu.memory_space<vmem>>, vector<2x32xf32>
    %825 = vector.shape_cast %808 : vector<2x1xi1> to vector<2x1xi1>
    %826 = vector.broadcast %825 : vector<2x1xi1> to vector<2x32xi1>
    %827 = arith.select %826, %802, %824 : vector<2x32xi1>, vector<2x32xf32>
    %c0_401 = arith.constant 0 : index
    %c0_402 = arith.constant 0 : index
    %828 = vector.load %arg9[%c0_401, %c0_402] : memref<2x32xf32, #tpu.memory_space<vmem>>, vector<2x32xf32>
    tpu.vector_store %arg9[%c0_401, %c0_402], %827 {strides = array<i32>} : memref<2x32xf32, #tpu.memory_space<vmem>>, vector<2x32xf32>,
    %cst_403 = arith.constant 0.000000e+00 : f32
    %829 = vector.shape_cast %806 : vector<2x1xi1> to vector<2x1xi1>
    %830 = vector.broadcast %829 : vector<2x1xi1> to vector<2x32xi1>
    %831 = vector.broadcast %cst_403 : f32 to vector<2x32xf32>
    %832 = arith.select %830, %777, %831 : vector<2x32xi1>, vector<2x32xf32>
    %833 = vector.shape_cast %832 : vector<2x32xf32> to vector<2x1x32xf32>
    %c0_404 = arith.constant 0 : index
    %c7_405 = arith.constant 7 : index
    %c0_406 = arith.constant 0 : index
    %834 = vector.load %arg10[%c0_404, %c7_405, %c0_406] : memref<2x8x64xf32, #tpu.memory_space<vmem>>, vector<2x1x32xf32>
    tpu.vector_store %arg10[%c0_404, %c7_405, %c0_406], %833 {strides = array<i32>} : memref<2x8x64xf32, #tpu.memory_space<vmem>>, vector<2x1x32xf32>,
    %cst_407 = arith.constant 0.000000e+00 : f32
    %835 = vector.shape_cast %808 : vector<2x1xi1> to vector<2x1xi1>
    %836 = vector.broadcast %835 : vector<2x1xi1> to vector<2x32xi1>
    %837 = vector.broadcast %cst_407 : f32 to vector<2x32xf32>
    %838 = arith.select %836, %804, %837 : vector<2x32xi1>, vector<2x32xf32>
    %839 = vector.shape_cast %838 : vector<2x32xf32> to vector<2x1x32xf32>
    %c0_408 = arith.constant 0 : index
    %c0_409 = arith.constant 0 : index
    %c32_410 = arith.constant 32 : index
    %840 = vector.load %arg10[%c0_408, %c0_409, %c32_410] : memref<2x8x64xf32, #tpu.memory_space<vmem>>, vector<2x1x32xf32>
    tpu.vector_store %arg10[%c0_408, %c0_409, %c32_410], %839 {strides = array<i32>} : memref<2x8x64xf32, #tpu.memory_space<vmem>>, vector<2x1x32xf32>,
    %c0_411 = arith.constant 0 : index
    %c0_412 = arith.constant 0 : index
    %c0_413 = arith.constant 0 : index
    %841 = vector.load %arg10[%c0_411, %c0_412, %c0_413] : memref<2x8x64xf32, #tpu.memory_space<vmem>>, vector<2x8x64xf32>
    %842 = arith.truncf %841 : vector<2x8x64xf32> to vector<2x8x64xbf16>
    %c0_414 = arith.constant 0 : index
    %c0_415 = arith.constant 0 : index
    %c0_416 = arith.constant 0 : index
    %843 = vector.load %arg5[%c0_414, %c0_415, %c0_416] : memref<2x8x64xbf16, #tpu.memory_space<vmem>>, vector<2x8x64xbf16>
    tpu.vector_store %arg5[%c0_414, %c0_415, %c0_416], %842 {strides = array<i32>} : memref<2x8x64xbf16, #tpu.memory_space<vmem>>, vector<2x8x64xbf16>,
    return
  }
  func.func @transform_0(%arg0: i32) -> (i32, i32, i32) {
    %c0_i32 = arith.constant 0 : i32
    %c0_i32_0 = arith.constant 0 : i32
    %c0_i32_1 = arith.constant 0 : i32
    return %arg0, %c0_i32, %c0_i32_0 : i32, i32, i32
  }
  func.func @transform_1(%arg0: i32) -> (i32, i32) {
    %c0_i32 = arith.constant 0 : i32
    %c0_i32_0 = arith.constant 0 : i32
    %c0_i32_1 = arith.constant 0 : i32
    return %c0_i32, %c0_i32_0 : i32, i32
  }
  func.func @transform_2(%arg0: i32) -> (i32, i32) {
    %c0_i32 = arith.constant 0 : i32
    %c0_i32_0 = arith.constant 0 : i32
    %c0_i32_1 = arith.constant 0 : i32
    return %c0_i32, %c0_i32_0 : i32, i32
  }
  func.func @transform_3(%arg0: i32) -> (i32, i32) {
    %c0_i32 = arith.constant 0 : i32
    %c0_i32_0 = arith.constant 0 : i32
    return %arg0, %c0_i32 : i32, i32
  }
  func.func @transform_4(%arg0: i32) -> (i32, i32, i32) {
    %c0_i32 = arith.constant 0 : i32
    %c0_i32_0 = arith.constant 0 : i32
    %c0_i32_1 = arith.constant 0 : i32
    return %arg0, %c0_i32, %c0_i32_0 : i32, i32, i32
  }
}

module attributes {stable_mosaic.version = 11 : i64} {
  func.func @linear_kernel(%arg0: i32, %arg1: memref<32x80xbf16, #tpu.memory_space<vmem>>, %arg2: memref<80x256xbf16, #tpu.memory_space<vmem>>, %arg3: memref<1x256xf32, #tpu.memory_space<vmem>>, %arg4: memref<32x256xbf16, #tpu.memory_space<vmem>>) attributes {dimension_semantics = [#tpu.dimension_semantics<parallel>], iteration_bounds = array<i64: 1>, scalar_prefetch = 0 : i64, scratch_operands = 0 : i64, tpu.core_type = #tpu.core_type<tc>, window_params = [{transform_indices = @transform_0, window_bounds = array<i64: 32, 80>}, {pipeline_mode = #tpu.pipeline_mode<synchronous>, transform_indices = @transform_1, window_bounds = array<i64: 80, 256>}, {pipeline_mode = #tpu.pipeline_mode<synchronous>, transform_indices = @transform_2, window_bounds = array<i64: 1, 256>}, {transform_indices = @transform_3, window_bounds = array<i64: 32, 256>}]} {
    %c0 = arith.constant 0 : index
    %c0_0 = arith.constant 0 : index
    %0 = vector.load %arg1[%c0, %c0_0] : memref<32x80xbf16, #tpu.memory_space<vmem>>, vector<32x80xbf16>
    %c0_1 = arith.constant 0 : index
    %c0_2 = arith.constant 0 : index
    %1 = vector.load %arg2[%c0_1, %c0_2] : memref<80x256xbf16, #tpu.memory_space<vmem>>, vector<80x256xbf16>
    %cst = arith.constant dense<0.000000e+00> : vector<32x256xf32>
    %2 = tpu.matmul %0, %1, %cst {dimension_numbers = #tpu.dot_dimension_numbers<[1], [0], [0], [1], [0, 0, 1, 1], [], []>} : vector<32x80xbf16>, vector<80x256xbf16>, vector<32x256xf32> -> vector<32x256xf32>
    %c0_3 = arith.constant 0 : index
    %c0_4 = arith.constant 0 : index
    %3 = vector.load %arg3[%c0_3, %c0_4] : memref<1x256xf32, #tpu.memory_space<vmem>>, vector<1x256xf32>
    %4 = vector.broadcast %3 : vector<1x256xf32> to vector<32x256xf32>
    %5 = arith.addf %2, %4 : vector<32x256xf32>
    %6 = arith.truncf %5 : vector<32x256xf32> to vector<32x256xbf16>
    %c0_5 = arith.constant 0 : index
    %c0_6 = arith.constant 0 : index
    %7 = vector.load %arg4[%c0_5, %c0_6] : memref<32x256xbf16, #tpu.memory_space<vmem>>, vector<32x256xbf16>
    tpu.vector_store %arg4[%c0_5, %c0_6], %6 {strides = array<i32>} : memref<32x256xbf16, #tpu.memory_space<vmem>>, vector<32x256xbf16>,
    return
  }
  func.func @transform_0(%arg0: i32) -> (i32, i32) {
    %c0_i32 = arith.constant 0 : i32
    %c0_i32_0 = arith.constant 0 : i32
    return %arg0, %c0_i32 : i32, i32
  }
  func.func @transform_1(%arg0: i32) -> (i32, i32) {
    %c0_i32 = arith.constant 0 : i32
    %c0_i32_0 = arith.constant 0 : i32
    %c0_i32_1 = arith.constant 0 : i32
    return %c0_i32, %c0_i32_0 : i32, i32
  }
  func.func @transform_2(%arg0: i32) -> (i32, i32) {
    %c0_i32 = arith.constant 0 : i32
    %c0_i32_0 = arith.constant 0 : i32
    %c0_i32_1 = arith.constant 0 : i32
    return %c0_i32, %c0_i32_0 : i32, i32
  }
  func.func @transform_3(%arg0: i32) -> (i32, i32) {
    %c0_i32 = arith.constant 0 : i32
    %c0_i32_0 = arith.constant 0 : i32
    return %arg0, %c0_i32 : i32, i32
  }
}

module attributes {stable_mosaic.version = 11 : i64} {
  func.func @bilstm_kernel(%arg0: i32, %arg1: memref<2x8x256xbf16, #tpu.memory_space<vmem>>, %arg2: memref<32x128xbf16, #tpu.memory_space<vmem>>, %arg3: memref<32x128xbf16, #tpu.memory_space<vmem>>, %arg4: memref<2x1xi32, #tpu.memory_space<vmem>>, %arg5: memref<2x64xf32, #tpu.memory_space<vmem>>, %arg6: memref<2x32xf32, #tpu.memory_space<vmem>>, %arg7: memref<2x32xf32, #tpu.memory_space<vmem>>, %arg8: memref<2x32xf32, #tpu.memory_space<vmem>>, %arg9: memref<2x32xf32, #tpu.memory_space<vmem>>) attributes {dimension_semantics = [#tpu.dimension_semantics<parallel>], iteration_bounds = array<i64: 1>, scalar_prefetch = 0 : i64, scratch_operands = 4 : i64, tpu.core_type = #tpu.core_type<tc>, window_params = [{transform_indices = @transform_0, window_bounds = array<i64: 2, 8, 256>}, {pipeline_mode = #tpu.pipeline_mode<synchronous>, transform_indices = @transform_1, window_bounds = array<i64: 32, 128>}, {pipeline_mode = #tpu.pipeline_mode<synchronous>, transform_indices = @transform_2, window_bounds = array<i64: 32, 128>}, {transform_indices = @transform_3, window_bounds = array<i64: 2, 1>}, {transform_indices = @transform_4, window_bounds = array<i64: 2, 64>}]} {
    %cst = arith.constant 0.000000e+00 : f32
    %0 = vector.broadcast %cst : f32 to vector<2x32xf32>
    %c0 = arith.constant 0 : index
    %c0_0 = arith.constant 0 : index
    %1 = vector.load %arg6[%c0, %c0_0] : memref<2x32xf32, #tpu.memory_space<vmem>>, vector<2x32xf32>
    tpu.vector_store %arg6[%c0, %c0_0], %0 {strides = array<i32>} : memref<2x32xf32, #tpu.memory_space<vmem>>, vector<2x32xf32>,
    %cst_1 = arith.constant 0.000000e+00 : f32
    %2 = vector.broadcast %cst_1 : f32 to vector<2x32xf32>
    %c0_2 = arith.constant 0 : index
    %c0_3 = arith.constant 0 : index
    %3 = vector.load %arg7[%c0_2, %c0_3] : memref<2x32xf32, #tpu.memory_space<vmem>>, vector<2x32xf32>
    tpu.vector_store %arg7[%c0_2, %c0_3], %2 {strides = array<i32>} : memref<2x32xf32, #tpu.memory_space<vmem>>, vector<2x32xf32>,
    %cst_4 = arith.constant 0.000000e+00 : f32
    %4 = vector.broadcast %cst_4 : f32 to vector<2x32xf32>
    %c0_5 = arith.constant 0 : index
    %c0_6 = arith.constant 0 : index
    %5 = vector.load %arg8[%c0_5, %c0_6] : memref<2x32xf32, #tpu.memory_space<vmem>>, vector<2x32xf32>
    tpu.vector_store %arg8[%c0_5, %c0_6], %4 {strides = array<i32>} : memref<2x32xf32, #tpu.memory_space<vmem>>, vector<2x32xf32>,
    %cst_7 = arith.constant 0.000000e+00 : f32
    %6 = vector.broadcast %cst_7 : f32 to vector<2x32xf32>
    %c0_8 = arith.constant 0 : index
    %c0_9 = arith.constant 0 : index
    %7 = vector.load %arg9[%c0_8, %c0_9] : memref<2x32xf32, #tpu.memory_space<vmem>>, vector<2x32xf32>
    tpu.vector_store %arg9[%c0_8, %c0_9], %6 {strides = array<i32>} : memref<2x32xf32, #tpu.memory_space<vmem>>, vector<2x32xf32>,
    %cst_10 = arith.constant -1.000000e+30 : f32
    %8 = vector.broadcast %cst_10 : f32 to vector<2x64xf32>
    %c0_11 = arith.constant 0 : index
    %c0_12 = arith.constant 0 : index
    %9 = vector.load %arg5[%c0_11, %c0_12] : memref<2x64xf32, #tpu.memory_space<vmem>>, vector<2x64xf32>
    tpu.vector_store %arg5[%c0_11, %c0_12], %8 {strides = array<i32>} : memref<2x64xf32, #tpu.memory_space<vmem>>, vector<2x64xf32>,
    %c0_13 = arith.constant 0 : index
    %c0_14 = arith.constant 0 : index
    %10 = vector.load %arg4[%c0_13, %c0_14] : memref<2x1xi32, #tpu.memory_space<vmem>>, vector<2x1xi32>
    %c0_15 = arith.constant 0 : index
    %c0_16 = arith.constant 0 : index
    %11 = vector.load %arg6[%c0_15, %c0_16] : memref<2x32xf32, #tpu.memory_space<vmem>>, vector<2x32xf32>
    %12 = arith.truncf %11 : vector<2x32xf32> to vector<2x32xbf16>
    %c0_17 = arith.constant 0 : index
    %c0_18 = arith.constant 0 : index
    %13 = vector.load %arg2[%c0_17, %c0_18] : memref<32x128xbf16, #tpu.memory_space<vmem>>, vector<32x128xbf16>
    %cst_19 = arith.constant dense<0.000000e+00> : vector<2x128xf32>
    %14 = tpu.matmul %12, %13, %cst_19 {dimension_numbers = #tpu.dot_dimension_numbers<[1], [0], [0], [1], [0, 0, 1, 1], [], []>} : vector<2x32xbf16>, vector<32x128xbf16>, vector<2x128xf32> -> vector<2x128xf32>
    %c0_20 = arith.constant 0 : index
    %c0_21 = arith.constant 0 : index
    %15 = vector.load %arg8[%c0_20, %c0_21] : memref<2x32xf32, #tpu.memory_space<vmem>>, vector<2x32xf32>
    %16 = arith.truncf %15 : vector<2x32xf32> to vector<2x32xbf16>
    %c0_22 = arith.constant 0 : index
    %c0_23 = arith.constant 0 : index
    %17 = vector.load %arg3[%c0_22, %c0_23] : memref<32x128xbf16, #tpu.memory_space<vmem>>, vector<32x128xbf16>
    %cst_24 = arith.constant dense<0.000000e+00> : vector<2x128xf32>
    %18 = tpu.matmul %16, %17, %cst_24 {dimension_numbers = #tpu.dot_dimension_numbers<[1], [0], [0], [1], [0, 0, 1, 1], [], []>} : vector<2x32xbf16>, vector<32x128xbf16>, vector<2x128xf32> -> vector<2x128xf32>
    %c0_25 = arith.constant 0 : index
    %c0_26 = arith.constant 0 : index
    %c0_27 = arith.constant 0 : index
    %19 = vector.load %arg1[%c0_25, %c0_26, %c0_27] : memref<2x8x256xbf16, #tpu.memory_space<vmem>>, vector<2x1x128xbf16>
    %20 = vector.shape_cast %19 : vector<2x1x128xbf16> to vector<2x128xbf16>
    %21 = arith.extf %20 : vector<2x128xbf16> to vector<2x128xf32>
    %c0_28 = arith.constant 0 : index
    %c7 = arith.constant 7 : index
    %c128 = arith.constant 128 : index
    %22 = vector.load %arg1[%c0_28, %c7, %c128] : memref<2x8x256xbf16, #tpu.memory_space<vmem>>, vector<2x1x128xbf16>
    %23 = vector.shape_cast %22 : vector<2x1x128xbf16> to vector<2x128xbf16>
    %24 = arith.extf %23 : vector<2x128xbf16> to vector<2x128xf32>
    %25 = arith.addf %21, %14 : vector<2x128xf32>
    %c0_29 = arith.constant 0 : index
    %c0_30 = arith.constant 0 : index
    %26 = vector.load %arg7[%c0_29, %c0_30] : memref<2x32xf32, #tpu.memory_space<vmem>>, vector<2x32xf32>
    %27 = vector.extract_strided_slice %25 {offsets = [0, 0], sizes = [2, 32], strides = [1, 1]} : vector<2x128xf32> to vector<2x32xf32>
    %28 = arith.negf %27 : vector<2x32xf32>
    %29 = math.exp %28 : vector<2x32xf32>
    %cst_31 = arith.constant 1.000000e+00 : f32
    %30 = vector.broadcast %cst_31 : f32 to vector<2x32xf32>
    %31 = arith.addf %30, %29 : vector<2x32xf32>
    %32 = arith.divf %30, %31 : vector<2x32xf32>
    %33 = vector.extract_strided_slice %25 {offsets = [0, 32], sizes = [2, 32], strides = [1, 1]} : vector<2x128xf32> to vector<2x32xf32>
    %34 = arith.negf %33 : vector<2x32xf32>
    %35 = math.exp %34 : vector<2x32xf32>
    %cst_32 = arith.constant 1.000000e+00 : f32
    %36 = vector.broadcast %cst_32 : f32 to vector<2x32xf32>
    %37 = arith.addf %36, %35 : vector<2x32xf32>
    %38 = arith.divf %36, %37 : vector<2x32xf32>
    %39 = vector.extract_strided_slice %25 {offsets = [0, 64], sizes = [2, 32], strides = [1, 1]} : vector<2x128xf32> to vector<2x32xf32>
    %40 = math.tanh %39 : vector<2x32xf32>
    %41 = vector.extract_strided_slice %25 {offsets = [0, 96], sizes = [2, 32], strides = [1, 1]} : vector<2x128xf32> to vector<2x32xf32>
    %42 = arith.negf %41 : vector<2x32xf32>
    %43 = math.exp %42 : vector<2x32xf32>
    %cst_33 = arith.constant 1.000000e+00 : f32
    %44 = vector.broadcast %cst_33 : f32 to vector<2x32xf32>
    %45 = arith.addf %44, %43 : vector<2x32xf32>
    %46 = arith.divf %44, %45 : vector<2x32xf32>
    %47 = arith.mulf %38, %26 : vector<2x32xf32>
    %48 = arith.mulf %32, %40 : vector<2x32xf32>
    %49 = arith.addf %47, %48 : vector<2x32xf32>
    %50 = math.tanh %49 : vector<2x32xf32>
    %51 = arith.mulf %46, %50 : vector<2x32xf32>
    %52 = arith.addf %24, %18 : vector<2x128xf32>
    %c0_34 = arith.constant 0 : index
    %c0_35 = arith.constant 0 : index
    %53 = vector.load %arg9[%c0_34, %c0_35] : memref<2x32xf32, #tpu.memory_space<vmem>>, vector<2x32xf32>
    %54 = vector.extract_strided_slice %52 {offsets = [0, 0], sizes = [2, 32], strides = [1, 1]} : vector<2x128xf32> to vector<2x32xf32>
    %55 = arith.negf %54 : vector<2x32xf32>
    %56 = math.exp %55 : vector<2x32xf32>
    %cst_36 = arith.constant 1.000000e+00 : f32
    %57 = vector.broadcast %cst_36 : f32 to vector<2x32xf32>
    %58 = arith.addf %57, %56 : vector<2x32xf32>
    %59 = arith.divf %57, %58 : vector<2x32xf32>
    %60 = vector.extract_strided_slice %52 {offsets = [0, 32], sizes = [2, 32], strides = [1, 1]} : vector<2x128xf32> to vector<2x32xf32>
    %61 = arith.negf %60 : vector<2x32xf32>
    %62 = math.exp %61 : vector<2x32xf32>
    %cst_37 = arith.constant 1.000000e+00 : f32
    %63 = vector.broadcast %cst_37 : f32 to vector<2x32xf32>
    %64 = arith.addf %63, %62 : vector<2x32xf32>
    %65 = arith.divf %63, %64 : vector<2x32xf32>
    %66 = vector.extract_strided_slice %52 {offsets = [0, 64], sizes = [2, 32], strides = [1, 1]} : vector<2x128xf32> to vector<2x32xf32>
    %67 = math.tanh %66 : vector<2x32xf32>
    %68 = vector.extract_strided_slice %52 {offsets = [0, 96], sizes = [2, 32], strides = [1, 1]} : vector<2x128xf32> to vector<2x32xf32>
    %69 = arith.negf %68 : vector<2x32xf32>
    %70 = math.exp %69 : vector<2x32xf32>
    %cst_38 = arith.constant 1.000000e+00 : f32
    %71 = vector.broadcast %cst_38 : f32 to vector<2x32xf32>
    %72 = arith.addf %71, %70 : vector<2x32xf32>
    %73 = arith.divf %71, %72 : vector<2x32xf32>
    %74 = arith.mulf %65, %53 : vector<2x32xf32>
    %75 = arith.mulf %59, %67 : vector<2x32xf32>
    %76 = arith.addf %74, %75 : vector<2x32xf32>
    %77 = math.tanh %76 : vector<2x32xf32>
    %78 = arith.mulf %73, %77 : vector<2x32xf32>
    %c0_i32 = arith.constant 0 : i32
    %79 = vector.broadcast %c0_i32 : i32 to vector<2x1xi32>
    %80 = arith.cmpi sgt, %10, %79 : vector<2x1xi32>
    %c7_i32 = arith.constant 7 : i32
    %81 = vector.broadcast %c7_i32 : i32 to vector<2x1xi32>
    %82 = arith.cmpi sgt, %10, %81 : vector<2x1xi32>
    %c0_39 = arith.constant 0 : index
    %c0_40 = arith.constant 0 : index
    %83 = vector.load %arg6[%c0_39, %c0_40] : memref<2x32xf32, #tpu.memory_space<vmem>>, vector<2x32xf32>
    %84 = vector.shape_cast %80 : vector<2x1xi1> to vector<2x1xi1>
    %85 = vector.broadcast %84 : vector<2x1xi1> to vector<2x32xi1>
    %86 = arith.select %85, %51, %83 : vector<2x32xi1>, vector<2x32xf32>
    %c0_41 = arith.constant 0 : index
    %c0_42 = arith.constant 0 : index
    %87 = vector.load %arg6[%c0_41, %c0_42] : memref<2x32xf32, #tpu.memory_space<vmem>>, vector<2x32xf32>
    tpu.vector_store %arg6[%c0_41, %c0_42], %86 {strides = array<i32>} : memref<2x32xf32, #tpu.memory_space<vmem>>, vector<2x32xf32>,
    %c0_43 = arith.constant 0 : index
    %c0_44 = arith.constant 0 : index
    %88 = vector.load %arg7[%c0_43, %c0_44] : memref<2x32xf32, #tpu.memory_space<vmem>>, vector<2x32xf32>
    %89 = vector.shape_cast %80 : vector<2x1xi1> to vector<2x1xi1>
    %90 = vector.broadcast %89 : vector<2x1xi1> to vector<2x32xi1>
    %91 = arith.select %90, %49, %88 : vector<2x32xi1>, vector<2x32xf32>
    %c0_45 = arith.constant 0 : index
    %c0_46 = arith.constant 0 : index
    %92 = vector.load %arg7[%c0_45, %c0_46] : memref<2x32xf32, #tpu.memory_space<vmem>>, vector<2x32xf32>
    tpu.vector_store %arg7[%c0_45, %c0_46], %91 {strides = array<i32>} : memref<2x32xf32, #tpu.memory_space<vmem>>, vector<2x32xf32>,
    %c0_47 = arith.constant 0 : index
    %c0_48 = arith.constant 0 : index
    %93 = vector.load %arg8[%c0_47, %c0_48] : memref<2x32xf32, #tpu.memory_space<vmem>>, vector<2x32xf32>
    %94 = vector.shape_cast %82 : vector<2x1xi1> to vector<2x1xi1>
    %95 = vector.broadcast %94 : vector<2x1xi1> to vector<2x32xi1>
    %96 = arith.select %95, %78, %93 : vector<2x32xi1>, vector<2x32xf32>
    %c0_49 = arith.constant 0 : index
    %c0_50 = arith.constant 0 : index
    %97 = vector.load %arg8[%c0_49, %c0_50] : memref<2x32xf32, #tpu.memory_space<vmem>>, vector<2x32xf32>
    tpu.vector_store %arg8[%c0_49, %c0_50], %96 {strides = array<i32>} : memref<2x32xf32, #tpu.memory_space<vmem>>, vector<2x32xf32>,
    %c0_51 = arith.constant 0 : index
    %c0_52 = arith.constant 0 : index
    %98 = vector.load %arg9[%c0_51, %c0_52] : memref<2x32xf32, #tpu.memory_space<vmem>>, vector<2x32xf32>
    %99 = vector.shape_cast %82 : vector<2x1xi1> to vector<2x1xi1>
    %100 = vector.broadcast %99 : vector<2x1xi1> to vector<2x32xi1>
    %101 = arith.select %100, %76, %98 : vector<2x32xi1>, vector<2x32xf32>
    %c0_53 = arith.constant 0 : index
    %c0_54 = arith.constant 0 : index
    %102 = vector.load %arg9[%c0_53, %c0_54] : memref<2x32xf32, #tpu.memory_space<vmem>>, vector<2x32xf32>
    tpu.vector_store %arg9[%c0_53, %c0_54], %101 {strides = array<i32>} : memref<2x32xf32, #tpu.memory_space<vmem>>, vector<2x32xf32>,
    %cst_55 = arith.constant -1.000000e+30 : f32
    %103 = vector.shape_cast %80 : vector<2x1xi1> to vector<2x1xi1>
    %104 = vector.broadcast %103 : vector<2x1xi1> to vector<2x32xi1>
    %105 = vector.broadcast %cst_55 : f32 to vector<2x32xf32>
    %106 = arith.select %104, %51, %105 : vector<2x32xi1>, vector<2x32xf32>
    %cst_56 = arith.constant -1.000000e+30 : f32
    %107 = vector.shape_cast %82 : vector<2x1xi1> to vector<2x1xi1>
    %108 = vector.broadcast %107 : vector<2x1xi1> to vector<2x32xi1>
    %109 = vector.broadcast %cst_56 : f32 to vector<2x32xf32>
    %110 = arith.select %108, %78, %109 : vector<2x32xi1>, vector<2x32xf32>
    %111 = tpu.concatenate %106, %110 in 1 : vector<2x32xf32>, vector<2x32xf32> -> vector<2x64xf32>
    %c0_57 = arith.constant 0 : index
    %c0_58 = arith.constant 0 : index
    %112 = vector.load %arg5[%c0_57, %c0_58] : memref<2x64xf32, #tpu.memory_space<vmem>>, vector<2x64xf32>
    %113 = arith.maximumf %112, %111 : vector<2x64xf32>
    %c0_59 = arith.constant 0 : index
    %c0_60 = arith.constant 0 : index
    %114 = vector.load %arg5[%c0_59, %c0_60] : memref<2x64xf32, #tpu.memory_space<vmem>>, vector<2x64xf32>
    tpu.vector_store %arg5[%c0_59, %c0_60], %113 {strides = array<i32>} : memref<2x64xf32, #tpu.memory_space<vmem>>, vector<2x64xf32>,
    %c0_61 = arith.constant 0 : index
    %c0_62 = arith.constant 0 : index
    %115 = vector.load %arg6[%c0_61, %c0_62] : memref<2x32xf32, #tpu.memory_space<vmem>>, vector<2x32xf32>
    %116 = arith.truncf %115 : vector<2x32xf32> to vector<2x32xbf16>
    %c0_63 = arith.constant 0 : index
    %c0_64 = arith.constant 0 : index
    %117 = vector.load %arg2[%c0_63, %c0_64] : memref<32x128xbf16, #tpu.memory_space<vmem>>, vector<32x128xbf16>
    %cst_65 = arith.constant dense<0.000000e+00> : vector<2x128xf32>
    %118 = tpu.matmul %116, %117, %cst_65 {dimension_numbers = #tpu.dot_dimension_numbers<[1], [0], [0], [1], [0, 0, 1, 1], [], []>} : vector<2x32xbf16>, vector<32x128xbf16>, vector<2x128xf32> -> vector<2x128xf32>
    %c0_66 = arith.constant 0 : index
    %c0_67 = arith.constant 0 : index
    %119 = vector.load %arg8[%c0_66, %c0_67] : memref<2x32xf32, #tpu.memory_space<vmem>>, vector<2x32xf32>
    %120 = arith.truncf %119 : vector<2x32xf32> to vector<2x32xbf16>
    %c0_68 = arith.constant 0 : index
    %c0_69 = arith.constant 0 : index
    %121 = vector.load %arg3[%c0_68, %c0_69] : memref<32x128xbf16, #tpu.memory_space<vmem>>, vector<32x128xbf16>
    %cst_70 = arith.constant dense<0.000000e+00> : vector<2x128xf32>
    %122 = tpu.matmul %120, %121, %cst_70 {dimension_numbers = #tpu.dot_dimension_numbers<[1], [0], [0], [1], [0, 0, 1, 1], [], []>} : vector<2x32xbf16>, vector<32x128xbf16>, vector<2x128xf32> -> vector<2x128xf32>
    %c0_71 = arith.constant 0 : index
    %c1 = arith.constant 1 : index
    %c0_72 = arith.constant 0 : index
    %123 = vector.load %arg1[%c0_71, %c1, %c0_72] : memref<2x8x256xbf16, #tpu.memory_space<vmem>>, vector<2x1x128xbf16>
    %124 = vector.shape_cast %123 : vector<2x1x128xbf16> to vector<2x128xbf16>
    %125 = arith.extf %124 : vector<2x128xbf16> to vector<2x128xf32>
    %c0_73 = arith.constant 0 : index
    %c6 = arith.constant 6 : index
    %c128_74 = arith.constant 128 : index
    %126 = vector.load %arg1[%c0_73, %c6, %c128_74] : memref<2x8x256xbf16, #tpu.memory_space<vmem>>, vector<2x1x128xbf16>
    %127 = vector.shape_cast %126 : vector<2x1x128xbf16> to vector<2x128xbf16>
    %128 = arith.extf %127 : vector<2x128xbf16> to vector<2x128xf32>
    %129 = arith.addf %125, %118 : vector<2x128xf32>
    %c0_75 = arith.constant 0 : index
    %c0_76 = arith.constant 0 : index
    %130 = vector.load %arg7[%c0_75, %c0_76] : memref<2x32xf32, #tpu.memory_space<vmem>>, vector<2x32xf32>
    %131 = vector.extract_strided_slice %129 {offsets = [0, 0], sizes = [2, 32], strides = [1, 1]} : vector<2x128xf32> to vector<2x32xf32>
    %132 = arith.negf %131 : vector<2x32xf32>
    %133 = math.exp %132 : vector<2x32xf32>
    %cst_77 = arith.constant 1.000000e+00 : f32
    %134 = vector.broadcast %cst_77 : f32 to vector<2x32xf32>
    %135 = arith.addf %134, %133 : vector<2x32xf32>
    %136 = arith.divf %134, %135 : vector<2x32xf32>
    %137 = vector.extract_strided_slice %129 {offsets = [0, 32], sizes = [2, 32], strides = [1, 1]} : vector<2x128xf32> to vector<2x32xf32>
    %138 = arith.negf %137 : vector<2x32xf32>
    %139 = math.exp %138 : vector<2x32xf32>
    %cst_78 = arith.constant 1.000000e+00 : f32
    %140 = vector.broadcast %cst_78 : f32 to vector<2x32xf32>
    %141 = arith.addf %140, %139 : vector<2x32xf32>
    %142 = arith.divf %140, %141 : vector<2x32xf32>
    %143 = vector.extract_strided_slice %129 {offsets = [0, 64], sizes = [2, 32], strides = [1, 1]} : vector<2x128xf32> to vector<2x32xf32>
    %144 = math.tanh %143 : vector<2x32xf32>
    %145 = vector.extract_strided_slice %129 {offsets = [0, 96], sizes = [2, 32], strides = [1, 1]} : vector<2x128xf32> to vector<2x32xf32>
    %146 = arith.negf %145 : vector<2x32xf32>
    %147 = math.exp %146 : vector<2x32xf32>
    %cst_79 = arith.constant 1.000000e+00 : f32
    %148 = vector.broadcast %cst_79 : f32 to vector<2x32xf32>
    %149 = arith.addf %148, %147 : vector<2x32xf32>
    %150 = arith.divf %148, %149 : vector<2x32xf32>
    %151 = arith.mulf %142, %130 : vector<2x32xf32>
    %152 = arith.mulf %136, %144 : vector<2x32xf32>
    %153 = arith.addf %151, %152 : vector<2x32xf32>
    %154 = math.tanh %153 : vector<2x32xf32>
    %155 = arith.mulf %150, %154 : vector<2x32xf32>
    %156 = arith.addf %128, %122 : vector<2x128xf32>
    %c0_80 = arith.constant 0 : index
    %c0_81 = arith.constant 0 : index
    %157 = vector.load %arg9[%c0_80, %c0_81] : memref<2x32xf32, #tpu.memory_space<vmem>>, vector<2x32xf32>
    %158 = vector.extract_strided_slice %156 {offsets = [0, 0], sizes = [2, 32], strides = [1, 1]} : vector<2x128xf32> to vector<2x32xf32>
    %159 = arith.negf %158 : vector<2x32xf32>
    %160 = math.exp %159 : vector<2x32xf32>
    %cst_82 = arith.constant 1.000000e+00 : f32
    %161 = vector.broadcast %cst_82 : f32 to vector<2x32xf32>
    %162 = arith.addf %161, %160 : vector<2x32xf32>
    %163 = arith.divf %161, %162 : vector<2x32xf32>
    %164 = vector.extract_strided_slice %156 {offsets = [0, 32], sizes = [2, 32], strides = [1, 1]} : vector<2x128xf32> to vector<2x32xf32>
    %165 = arith.negf %164 : vector<2x32xf32>
    %166 = math.exp %165 : vector<2x32xf32>
    %cst_83 = arith.constant 1.000000e+00 : f32
    %167 = vector.broadcast %cst_83 : f32 to vector<2x32xf32>
    %168 = arith.addf %167, %166 : vector<2x32xf32>
    %169 = arith.divf %167, %168 : vector<2x32xf32>
    %170 = vector.extract_strided_slice %156 {offsets = [0, 64], sizes = [2, 32], strides = [1, 1]} : vector<2x128xf32> to vector<2x32xf32>
    %171 = math.tanh %170 : vector<2x32xf32>
    %172 = vector.extract_strided_slice %156 {offsets = [0, 96], sizes = [2, 32], strides = [1, 1]} : vector<2x128xf32> to vector<2x32xf32>
    %173 = arith.negf %172 : vector<2x32xf32>
    %174 = math.exp %173 : vector<2x32xf32>
    %cst_84 = arith.constant 1.000000e+00 : f32
    %175 = vector.broadcast %cst_84 : f32 to vector<2x32xf32>
    %176 = arith.addf %175, %174 : vector<2x32xf32>
    %177 = arith.divf %175, %176 : vector<2x32xf32>
    %178 = arith.mulf %169, %157 : vector<2x32xf32>
    %179 = arith.mulf %163, %171 : vector<2x32xf32>
    %180 = arith.addf %178, %179 : vector<2x32xf32>
    %181 = math.tanh %180 : vector<2x32xf32>
    %182 = arith.mulf %177, %181 : vector<2x32xf32>
    %c1_i32 = arith.constant 1 : i32
    %183 = vector.broadcast %c1_i32 : i32 to vector<2x1xi32>
    %184 = arith.cmpi sgt, %10, %183 : vector<2x1xi32>
    %c6_i32 = arith.constant 6 : i32
    %185 = vector.broadcast %c6_i32 : i32 to vector<2x1xi32>
    %186 = arith.cmpi sgt, %10, %185 : vector<2x1xi32>
    %c0_85 = arith.constant 0 : index
    %c0_86 = arith.constant 0 : index
    %187 = vector.load %arg6[%c0_85, %c0_86] : memref<2x32xf32, #tpu.memory_space<vmem>>, vector<2x32xf32>
    %188 = vector.shape_cast %184 : vector<2x1xi1> to vector<2x1xi1>
    %189 = vector.broadcast %188 : vector<2x1xi1> to vector<2x32xi1>
    %190 = arith.select %189, %155, %187 : vector<2x32xi1>, vector<2x32xf32>
    %c0_87 = arith.constant 0 : index
    %c0_88 = arith.constant 0 : index
    %191 = vector.load %arg6[%c0_87, %c0_88] : memref<2x32xf32, #tpu.memory_space<vmem>>, vector<2x32xf32>
    tpu.vector_store %arg6[%c0_87, %c0_88], %190 {strides = array<i32>} : memref<2x32xf32, #tpu.memory_space<vmem>>, vector<2x32xf32>,
    %c0_89 = arith.constant 0 : index
    %c0_90 = arith.constant 0 : index
    %192 = vector.load %arg7[%c0_89, %c0_90] : memref<2x32xf32, #tpu.memory_space<vmem>>, vector<2x32xf32>
    %193 = vector.shape_cast %184 : vector<2x1xi1> to vector<2x1xi1>
    %194 = vector.broadcast %193 : vector<2x1xi1> to vector<2x32xi1>
    %195 = arith.select %194, %153, %192 : vector<2x32xi1>, vector<2x32xf32>
    %c0_91 = arith.constant 0 : index
    %c0_92 = arith.constant 0 : index
    %196 = vector.load %arg7[%c0_91, %c0_92] : memref<2x32xf32, #tpu.memory_space<vmem>>, vector<2x32xf32>
    tpu.vector_store %arg7[%c0_91, %c0_92], %195 {strides = array<i32>} : memref<2x32xf32, #tpu.memory_space<vmem>>, vector<2x32xf32>,
    %c0_93 = arith.constant 0 : index
    %c0_94 = arith.constant 0 : index
    %197 = vector.load %arg8[%c0_93, %c0_94] : memref<2x32xf32, #tpu.memory_space<vmem>>, vector<2x32xf32>
    %198 = vector.shape_cast %186 : vector<2x1xi1> to vector<2x1xi1>
    %199 = vector.broadcast %198 : vector<2x1xi1> to vector<2x32xi1>
    %200 = arith.select %199, %182, %197 : vector<2x32xi1>, vector<2x32xf32>
    %c0_95 = arith.constant 0 : index
    %c0_96 = arith.constant 0 : index
    %201 = vector.load %arg8[%c0_95, %c0_96] : memref<2x32xf32, #tpu.memory_space<vmem>>, vector<2x32xf32>
    tpu.vector_store %arg8[%c0_95, %c0_96], %200 {strides = array<i32>} : memref<2x32xf32, #tpu.memory_space<vmem>>, vector<2x32xf32>,
    %c0_97 = arith.constant 0 : index
    %c0_98 = arith.constant 0 : index
    %202 = vector.load %arg9[%c0_97, %c0_98] : memref<2x32xf32, #tpu.memory_space<vmem>>, vector<2x32xf32>
    %203 = vector.shape_cast %186 : vector<2x1xi1> to vector<2x1xi1>
    %204 = vector.broadcast %203 : vector<2x1xi1> to vector<2x32xi1>
    %205 = arith.select %204, %180, %202 : vector<2x32xi1>, vector<2x32xf32>
    %c0_99 = arith.constant 0 : index
    %c0_100 = arith.constant 0 : index
    %206 = vector.load %arg9[%c0_99, %c0_100] : memref<2x32xf32, #tpu.memory_space<vmem>>, vector<2x32xf32>
    tpu.vector_store %arg9[%c0_99, %c0_100], %205 {strides = array<i32>} : memref<2x32xf32, #tpu.memory_space<vmem>>, vector<2x32xf32>,
    %cst_101 = arith.constant -1.000000e+30 : f32
    %207 = vector.shape_cast %184 : vector<2x1xi1> to vector<2x1xi1>
    %208 = vector.broadcast %207 : vector<2x1xi1> to vector<2x32xi1>
    %209 = vector.broadcast %cst_101 : f32 to vector<2x32xf32>
    %210 = arith.select %208, %155, %209 : vector<2x32xi1>, vector<2x32xf32>
    %cst_102 = arith.constant -1.000000e+30 : f32
    %211 = vector.shape_cast %186 : vector<2x1xi1> to vector<2x1xi1>
    %212 = vector.broadcast %211 : vector<2x1xi1> to vector<2x32xi1>
    %213 = vector.broadcast %cst_102 : f32 to vector<2x32xf32>
    %214 = arith.select %212, %182, %213 : vector<2x32xi1>, vector<2x32xf32>
    %215 = tpu.concatenate %210, %214 in 1 : vector<2x32xf32>, vector<2x32xf32> -> vector<2x64xf32>
    %c0_103 = arith.constant 0 : index
    %c0_104 = arith.constant 0 : index
    %216 = vector.load %arg5[%c0_103, %c0_104] : memref<2x64xf32, #tpu.memory_space<vmem>>, vector<2x64xf32>
    %217 = arith.maximumf %216, %215 : vector<2x64xf32>
    %c0_105 = arith.constant 0 : index
    %c0_106 = arith.constant 0 : index
    %218 = vector.load %arg5[%c0_105, %c0_106] : memref<2x64xf32, #tpu.memory_space<vmem>>, vector<2x64xf32>
    tpu.vector_store %arg5[%c0_105, %c0_106], %217 {strides = array<i32>} : memref<2x64xf32, #tpu.memory_space<vmem>>, vector<2x64xf32>,
    %c0_107 = arith.constant 0 : index
    %c0_108 = arith.constant 0 : index
    %219 = vector.load %arg6[%c0_107, %c0_108] : memref<2x32xf32, #tpu.memory_space<vmem>>, vector<2x32xf32>
    %220 = arith.truncf %219 : vector<2x32xf32> to vector<2x32xbf16>
    %c0_109 = arith.constant 0 : index
    %c0_110 = arith.constant 0 : index
    %221 = vector.load %arg2[%c0_109, %c0_110] : memref<32x128xbf16, #tpu.memory_space<vmem>>, vector<32x128xbf16>
    %cst_111 = arith.constant dense<0.000000e+00> : vector<2x128xf32>
    %222 = tpu.matmul %220, %221, %cst_111 {dimension_numbers = #tpu.dot_dimension_numbers<[1], [0], [0], [1], [0, 0, 1, 1], [], []>} : vector<2x32xbf16>, vector<32x128xbf16>, vector<2x128xf32> -> vector<2x128xf32>
    %c0_112 = arith.constant 0 : index
    %c0_113 = arith.constant 0 : index
    %223 = vector.load %arg8[%c0_112, %c0_113] : memref<2x32xf32, #tpu.memory_space<vmem>>, vector<2x32xf32>
    %224 = arith.truncf %223 : vector<2x32xf32> to vector<2x32xbf16>
    %c0_114 = arith.constant 0 : index
    %c0_115 = arith.constant 0 : index
    %225 = vector.load %arg3[%c0_114, %c0_115] : memref<32x128xbf16, #tpu.memory_space<vmem>>, vector<32x128xbf16>
    %cst_116 = arith.constant dense<0.000000e+00> : vector<2x128xf32>
    %226 = tpu.matmul %224, %225, %cst_116 {dimension_numbers = #tpu.dot_dimension_numbers<[1], [0], [0], [1], [0, 0, 1, 1], [], []>} : vector<2x32xbf16>, vector<32x128xbf16>, vector<2x128xf32> -> vector<2x128xf32>
    %c0_117 = arith.constant 0 : index
    %c2 = arith.constant 2 : index
    %c0_118 = arith.constant 0 : index
    %227 = vector.load %arg1[%c0_117, %c2, %c0_118] : memref<2x8x256xbf16, #tpu.memory_space<vmem>>, vector<2x1x128xbf16>
    %228 = vector.shape_cast %227 : vector<2x1x128xbf16> to vector<2x128xbf16>
    %229 = arith.extf %228 : vector<2x128xbf16> to vector<2x128xf32>
    %c0_119 = arith.constant 0 : index
    %c5 = arith.constant 5 : index
    %c128_120 = arith.constant 128 : index
    %230 = vector.load %arg1[%c0_119, %c5, %c128_120] : memref<2x8x256xbf16, #tpu.memory_space<vmem>>, vector<2x1x128xbf16>
    %231 = vector.shape_cast %230 : vector<2x1x128xbf16> to vector<2x128xbf16>
    %232 = arith.extf %231 : vector<2x128xbf16> to vector<2x128xf32>
    %233 = arith.addf %229, %222 : vector<2x128xf32>
    %c0_121 = arith.constant 0 : index
    %c0_122 = arith.constant 0 : index
    %234 = vector.load %arg7[%c0_121, %c0_122] : memref<2x32xf32, #tpu.memory_space<vmem>>, vector<2x32xf32>
    %235 = vector.extract_strided_slice %233 {offsets = [0, 0], sizes = [2, 32], strides = [1, 1]} : vector<2x128xf32> to vector<2x32xf32>
    %236 = arith.negf %235 : vector<2x32xf32>
    %237 = math.exp %236 : vector<2x32xf32>
    %cst_123 = arith.constant 1.000000e+00 : f32
    %238 = vector.broadcast %cst_123 : f32 to vector<2x32xf32>
    %239 = arith.addf %238, %237 : vector<2x32xf32>
    %240 = arith.divf %238, %239 : vector<2x32xf32>
    %241 = vector.extract_strided_slice %233 {offsets = [0, 32], sizes = [2, 32], strides = [1, 1]} : vector<2x128xf32> to vector<2x32xf32>
    %242 = arith.negf %241 : vector<2x32xf32>
    %243 = math.exp %242 : vector<2x32xf32>
    %cst_124 = arith.constant 1.000000e+00 : f32
    %244 = vector.broadcast %cst_124 : f32 to vector<2x32xf32>
    %245 = arith.addf %244, %243 : vector<2x32xf32>
    %246 = arith.divf %244, %245 : vector<2x32xf32>
    %247 = vector.extract_strided_slice %233 {offsets = [0, 64], sizes = [2, 32], strides = [1, 1]} : vector<2x128xf32> to vector<2x32xf32>
    %248 = math.tanh %247 : vector<2x32xf32>
    %249 = vector.extract_strided_slice %233 {offsets = [0, 96], sizes = [2, 32], strides = [1, 1]} : vector<2x128xf32> to vector<2x32xf32>
    %250 = arith.negf %249 : vector<2x32xf32>
    %251 = math.exp %250 : vector<2x32xf32>
    %cst_125 = arith.constant 1.000000e+00 : f32
    %252 = vector.broadcast %cst_125 : f32 to vector<2x32xf32>
    %253 = arith.addf %252, %251 : vector<2x32xf32>
    %254 = arith.divf %252, %253 : vector<2x32xf32>
    %255 = arith.mulf %246, %234 : vector<2x32xf32>
    %256 = arith.mulf %240, %248 : vector<2x32xf32>
    %257 = arith.addf %255, %256 : vector<2x32xf32>
    %258 = math.tanh %257 : vector<2x32xf32>
    %259 = arith.mulf %254, %258 : vector<2x32xf32>
    %260 = arith.addf %232, %226 : vector<2x128xf32>
    %c0_126 = arith.constant 0 : index
    %c0_127 = arith.constant 0 : index
    %261 = vector.load %arg9[%c0_126, %c0_127] : memref<2x32xf32, #tpu.memory_space<vmem>>, vector<2x32xf32>
    %262 = vector.extract_strided_slice %260 {offsets = [0, 0], sizes = [2, 32], strides = [1, 1]} : vector<2x128xf32> to vector<2x32xf32>
    %263 = arith.negf %262 : vector<2x32xf32>
    %264 = math.exp %263 : vector<2x32xf32>
    %cst_128 = arith.constant 1.000000e+00 : f32
    %265 = vector.broadcast %cst_128 : f32 to vector<2x32xf32>
    %266 = arith.addf %265, %264 : vector<2x32xf32>
    %267 = arith.divf %265, %266 : vector<2x32xf32>
    %268 = vector.extract_strided_slice %260 {offsets = [0, 32], sizes = [2, 32], strides = [1, 1]} : vector<2x128xf32> to vector<2x32xf32>
    %269 = arith.negf %268 : vector<2x32xf32>
    %270 = math.exp %269 : vector<2x32xf32>
    %cst_129 = arith.constant 1.000000e+00 : f32
    %271 = vector.broadcast %cst_129 : f32 to vector<2x32xf32>
    %272 = arith.addf %271, %270 : vector<2x32xf32>
    %273 = arith.divf %271, %272 : vector<2x32xf32>
    %274 = vector.extract_strided_slice %260 {offsets = [0, 64], sizes = [2, 32], strides = [1, 1]} : vector<2x128xf32> to vector<2x32xf32>
    %275 = math.tanh %274 : vector<2x32xf32>
    %276 = vector.extract_strided_slice %260 {offsets = [0, 96], sizes = [2, 32], strides = [1, 1]} : vector<2x128xf32> to vector<2x32xf32>
    %277 = arith.negf %276 : vector<2x32xf32>
    %278 = math.exp %277 : vector<2x32xf32>
    %cst_130 = arith.constant 1.000000e+00 : f32
    %279 = vector.broadcast %cst_130 : f32 to vector<2x32xf32>
    %280 = arith.addf %279, %278 : vector<2x32xf32>
    %281 = arith.divf %279, %280 : vector<2x32xf32>
    %282 = arith.mulf %273, %261 : vector<2x32xf32>
    %283 = arith.mulf %267, %275 : vector<2x32xf32>
    %284 = arith.addf %282, %283 : vector<2x32xf32>
    %285 = math.tanh %284 : vector<2x32xf32>
    %286 = arith.mulf %281, %285 : vector<2x32xf32>
    %c2_i32 = arith.constant 2 : i32
    %287 = vector.broadcast %c2_i32 : i32 to vector<2x1xi32>
    %288 = arith.cmpi sgt, %10, %287 : vector<2x1xi32>
    %c5_i32 = arith.constant 5 : i32
    %289 = vector.broadcast %c5_i32 : i32 to vector<2x1xi32>
    %290 = arith.cmpi sgt, %10, %289 : vector<2x1xi32>
    %c0_131 = arith.constant 0 : index
    %c0_132 = arith.constant 0 : index
    %291 = vector.load %arg6[%c0_131, %c0_132] : memref<2x32xf32, #tpu.memory_space<vmem>>, vector<2x32xf32>
    %292 = vector.shape_cast %288 : vector<2x1xi1> to vector<2x1xi1>
    %293 = vector.broadcast %292 : vector<2x1xi1> to vector<2x32xi1>
    %294 = arith.select %293, %259, %291 : vector<2x32xi1>, vector<2x32xf32>
    %c0_133 = arith.constant 0 : index
    %c0_134 = arith.constant 0 : index
    %295 = vector.load %arg6[%c0_133, %c0_134] : memref<2x32xf32, #tpu.memory_space<vmem>>, vector<2x32xf32>
    tpu.vector_store %arg6[%c0_133, %c0_134], %294 {strides = array<i32>} : memref<2x32xf32, #tpu.memory_space<vmem>>, vector<2x32xf32>,
    %c0_135 = arith.constant 0 : index
    %c0_136 = arith.constant 0 : index
    %296 = vector.load %arg7[%c0_135, %c0_136] : memref<2x32xf32, #tpu.memory_space<vmem>>, vector<2x32xf32>
    %297 = vector.shape_cast %288 : vector<2x1xi1> to vector<2x1xi1>
    %298 = vector.broadcast %297 : vector<2x1xi1> to vector<2x32xi1>
    %299 = arith.select %298, %257, %296 : vector<2x32xi1>, vector<2x32xf32>
    %c0_137 = arith.constant 0 : index
    %c0_138 = arith.constant 0 : index
    %300 = vector.load %arg7[%c0_137, %c0_138] : memref<2x32xf32, #tpu.memory_space<vmem>>, vector<2x32xf32>
    tpu.vector_store %arg7[%c0_137, %c0_138], %299 {strides = array<i32>} : memref<2x32xf32, #tpu.memory_space<vmem>>, vector<2x32xf32>,
    %c0_139 = arith.constant 0 : index
    %c0_140 = arith.constant 0 : index
    %301 = vector.load %arg8[%c0_139, %c0_140] : memref<2x32xf32, #tpu.memory_space<vmem>>, vector<2x32xf32>
    %302 = vector.shape_cast %290 : vector<2x1xi1> to vector<2x1xi1>
    %303 = vector.broadcast %302 : vector<2x1xi1> to vector<2x32xi1>
    %304 = arith.select %303, %286, %301 : vector<2x32xi1>, vector<2x32xf32>
    %c0_141 = arith.constant 0 : index
    %c0_142 = arith.constant 0 : index
    %305 = vector.load %arg8[%c0_141, %c0_142] : memref<2x32xf32, #tpu.memory_space<vmem>>, vector<2x32xf32>
    tpu.vector_store %arg8[%c0_141, %c0_142], %304 {strides = array<i32>} : memref<2x32xf32, #tpu.memory_space<vmem>>, vector<2x32xf32>,
    %c0_143 = arith.constant 0 : index
    %c0_144 = arith.constant 0 : index
    %306 = vector.load %arg9[%c0_143, %c0_144] : memref<2x32xf32, #tpu.memory_space<vmem>>, vector<2x32xf32>
    %307 = vector.shape_cast %290 : vector<2x1xi1> to vector<2x1xi1>
    %308 = vector.broadcast %307 : vector<2x1xi1> to vector<2x32xi1>
    %309 = arith.select %308, %284, %306 : vector<2x32xi1>, vector<2x32xf32>
    %c0_145 = arith.constant 0 : index
    %c0_146 = arith.constant 0 : index
    %310 = vector.load %arg9[%c0_145, %c0_146] : memref<2x32xf32, #tpu.memory_space<vmem>>, vector<2x32xf32>
    tpu.vector_store %arg9[%c0_145, %c0_146], %309 {strides = array<i32>} : memref<2x32xf32, #tpu.memory_space<vmem>>, vector<2x32xf32>,
    %cst_147 = arith.constant -1.000000e+30 : f32
    %311 = vector.shape_cast %288 : vector<2x1xi1> to vector<2x1xi1>
    %312 = vector.broadcast %311 : vector<2x1xi1> to vector<2x32xi1>
    %313 = vector.broadcast %cst_147 : f32 to vector<2x32xf32>
    %314 = arith.select %312, %259, %313 : vector<2x32xi1>, vector<2x32xf32>
    %cst_148 = arith.constant -1.000000e+30 : f32
    %315 = vector.shape_cast %290 : vector<2x1xi1> to vector<2x1xi1>
    %316 = vector.broadcast %315 : vector<2x1xi1> to vector<2x32xi1>
    %317 = vector.broadcast %cst_148 : f32 to vector<2x32xf32>
    %318 = arith.select %316, %286, %317 : vector<2x32xi1>, vector<2x32xf32>
    %319 = tpu.concatenate %314, %318 in 1 : vector<2x32xf32>, vector<2x32xf32> -> vector<2x64xf32>
    %c0_149 = arith.constant 0 : index
    %c0_150 = arith.constant 0 : index
    %320 = vector.load %arg5[%c0_149, %c0_150] : memref<2x64xf32, #tpu.memory_space<vmem>>, vector<2x64xf32>
    %321 = arith.maximumf %320, %319 : vector<2x64xf32>
    %c0_151 = arith.constant 0 : index
    %c0_152 = arith.constant 0 : index
    %322 = vector.load %arg5[%c0_151, %c0_152] : memref<2x64xf32, #tpu.memory_space<vmem>>, vector<2x64xf32>
    tpu.vector_store %arg5[%c0_151, %c0_152], %321 {strides = array<i32>} : memref<2x64xf32, #tpu.memory_space<vmem>>, vector<2x64xf32>,
    %c0_153 = arith.constant 0 : index
    %c0_154 = arith.constant 0 : index
    %323 = vector.load %arg6[%c0_153, %c0_154] : memref<2x32xf32, #tpu.memory_space<vmem>>, vector<2x32xf32>
    %324 = arith.truncf %323 : vector<2x32xf32> to vector<2x32xbf16>
    %c0_155 = arith.constant 0 : index
    %c0_156 = arith.constant 0 : index
    %325 = vector.load %arg2[%c0_155, %c0_156] : memref<32x128xbf16, #tpu.memory_space<vmem>>, vector<32x128xbf16>
    %cst_157 = arith.constant dense<0.000000e+00> : vector<2x128xf32>
    %326 = tpu.matmul %324, %325, %cst_157 {dimension_numbers = #tpu.dot_dimension_numbers<[1], [0], [0], [1], [0, 0, 1, 1], [], []>} : vector<2x32xbf16>, vector<32x128xbf16>, vector<2x128xf32> -> vector<2x128xf32>
    %c0_158 = arith.constant 0 : index
    %c0_159 = arith.constant 0 : index
    %327 = vector.load %arg8[%c0_158, %c0_159] : memref<2x32xf32, #tpu.memory_space<vmem>>, vector<2x32xf32>
    %328 = arith.truncf %327 : vector<2x32xf32> to vector<2x32xbf16>
    %c0_160 = arith.constant 0 : index
    %c0_161 = arith.constant 0 : index
    %329 = vector.load %arg3[%c0_160, %c0_161] : memref<32x128xbf16, #tpu.memory_space<vmem>>, vector<32x128xbf16>
    %cst_162 = arith.constant dense<0.000000e+00> : vector<2x128xf32>
    %330 = tpu.matmul %328, %329, %cst_162 {dimension_numbers = #tpu.dot_dimension_numbers<[1], [0], [0], [1], [0, 0, 1, 1], [], []>} : vector<2x32xbf16>, vector<32x128xbf16>, vector<2x128xf32> -> vector<2x128xf32>
    %c0_163 = arith.constant 0 : index
    %c3 = arith.constant 3 : index
    %c0_164 = arith.constant 0 : index
    %331 = vector.load %arg1[%c0_163, %c3, %c0_164] : memref<2x8x256xbf16, #tpu.memory_space<vmem>>, vector<2x1x128xbf16>
    %332 = vector.shape_cast %331 : vector<2x1x128xbf16> to vector<2x128xbf16>
    %333 = arith.extf %332 : vector<2x128xbf16> to vector<2x128xf32>
    %c0_165 = arith.constant 0 : index
    %c4 = arith.constant 4 : index
    %c128_166 = arith.constant 128 : index
    %334 = vector.load %arg1[%c0_165, %c4, %c128_166] : memref<2x8x256xbf16, #tpu.memory_space<vmem>>, vector<2x1x128xbf16>
    %335 = vector.shape_cast %334 : vector<2x1x128xbf16> to vector<2x128xbf16>
    %336 = arith.extf %335 : vector<2x128xbf16> to vector<2x128xf32>
    %337 = arith.addf %333, %326 : vector<2x128xf32>
    %c0_167 = arith.constant 0 : index
    %c0_168 = arith.constant 0 : index
    %338 = vector.load %arg7[%c0_167, %c0_168] : memref<2x32xf32, #tpu.memory_space<vmem>>, vector<2x32xf32>
    %339 = vector.extract_strided_slice %337 {offsets = [0, 0], sizes = [2, 32], strides = [1, 1]} : vector<2x128xf32> to vector<2x32xf32>
    %340 = arith.negf %339 : vector<2x32xf32>
    %341 = math.exp %340 : vector<2x32xf32>
    %cst_169 = arith.constant 1.000000e+00 : f32
    %342 = vector.broadcast %cst_169 : f32 to vector<2x32xf32>
    %343 = arith.addf %342, %341 : vector<2x32xf32>
    %344 = arith.divf %342, %343 : vector<2x32xf32>
    %345 = vector.extract_strided_slice %337 {offsets = [0, 32], sizes = [2, 32], strides = [1, 1]} : vector<2x128xf32> to vector<2x32xf32>
    %346 = arith.negf %345 : vector<2x32xf32>
    %347 = math.exp %346 : vector<2x32xf32>
    %cst_170 = arith.constant 1.000000e+00 : f32
    %348 = vector.broadcast %cst_170 : f32 to vector<2x32xf32>
    %349 = arith.addf %348, %347 : vector<2x32xf32>
    %350 = arith.divf %348, %349 : vector<2x32xf32>
    %351 = vector.extract_strided_slice %337 {offsets = [0, 64], sizes = [2, 32], strides = [1, 1]} : vector<2x128xf32> to vector<2x32xf32>
    %352 = math.tanh %351 : vector<2x32xf32>
    %353 = vector.extract_strided_slice %337 {offsets = [0, 96], sizes = [2, 32], strides = [1, 1]} : vector<2x128xf32> to vector<2x32xf32>
    %354 = arith.negf %353 : vector<2x32xf32>
    %355 = math.exp %354 : vector<2x32xf32>
    %cst_171 = arith.constant 1.000000e+00 : f32
    %356 = vector.broadcast %cst_171 : f32 to vector<2x32xf32>
    %357 = arith.addf %356, %355 : vector<2x32xf32>
    %358 = arith.divf %356, %357 : vector<2x32xf32>
    %359 = arith.mulf %350, %338 : vector<2x32xf32>
    %360 = arith.mulf %344, %352 : vector<2x32xf32>
    %361 = arith.addf %359, %360 : vector<2x32xf32>
    %362 = math.tanh %361 : vector<2x32xf32>
    %363 = arith.mulf %358, %362 : vector<2x32xf32>
    %364 = arith.addf %336, %330 : vector<2x128xf32>
    %c0_172 = arith.constant 0 : index
    %c0_173 = arith.constant 0 : index
    %365 = vector.load %arg9[%c0_172, %c0_173] : memref<2x32xf32, #tpu.memory_space<vmem>>, vector<2x32xf32>
    %366 = vector.extract_strided_slice %364 {offsets = [0, 0], sizes = [2, 32], strides = [1, 1]} : vector<2x128xf32> to vector<2x32xf32>
    %367 = arith.negf %366 : vector<2x32xf32>
    %368 = math.exp %367 : vector<2x32xf32>
    %cst_174 = arith.constant 1.000000e+00 : f32
    %369 = vector.broadcast %cst_174 : f32 to vector<2x32xf32>
    %370 = arith.addf %369, %368 : vector<2x32xf32>
    %371 = arith.divf %369, %370 : vector<2x32xf32>
    %372 = vector.extract_strided_slice %364 {offsets = [0, 32], sizes = [2, 32], strides = [1, 1]} : vector<2x128xf32> to vector<2x32xf32>
    %373 = arith.negf %372 : vector<2x32xf32>
    %374 = math.exp %373 : vector<2x32xf32>
    %cst_175 = arith.constant 1.000000e+00 : f32
    %375 = vector.broadcast %cst_175 : f32 to vector<2x32xf32>
    %376 = arith.addf %375, %374 : vector<2x32xf32>
    %377 = arith.divf %375, %376 : vector<2x32xf32>
    %378 = vector.extract_strided_slice %364 {offsets = [0, 64], sizes = [2, 32], strides = [1, 1]} : vector<2x128xf32> to vector<2x32xf32>
    %379 = math.tanh %378 : vector<2x32xf32>
    %380 = vector.extract_strided_slice %364 {offsets = [0, 96], sizes = [2, 32], strides = [1, 1]} : vector<2x128xf32> to vector<2x32xf32>
    %381 = arith.negf %380 : vector<2x32xf32>
    %382 = math.exp %381 : vector<2x32xf32>
    %cst_176 = arith.constant 1.000000e+00 : f32
    %383 = vector.broadcast %cst_176 : f32 to vector<2x32xf32>
    %384 = arith.addf %383, %382 : vector<2x32xf32>
    %385 = arith.divf %383, %384 : vector<2x32xf32>
    %386 = arith.mulf %377, %365 : vector<2x32xf32>
    %387 = arith.mulf %371, %379 : vector<2x32xf32>
    %388 = arith.addf %386, %387 : vector<2x32xf32>
    %389 = math.tanh %388 : vector<2x32xf32>
    %390 = arith.mulf %385, %389 : vector<2x32xf32>
    %c3_i32 = arith.constant 3 : i32
    %391 = vector.broadcast %c3_i32 : i32 to vector<2x1xi32>
    %392 = arith.cmpi sgt, %10, %391 : vector<2x1xi32>
    %c4_i32 = arith.constant 4 : i32
    %393 = vector.broadcast %c4_i32 : i32 to vector<2x1xi32>
    %394 = arith.cmpi sgt, %10, %393 : vector<2x1xi32>
    %c0_177 = arith.constant 0 : index
    %c0_178 = arith.constant 0 : index
    %395 = vector.load %arg6[%c0_177, %c0_178] : memref<2x32xf32, #tpu.memory_space<vmem>>, vector<2x32xf32>
    %396 = vector.shape_cast %392 : vector<2x1xi1> to vector<2x1xi1>
    %397 = vector.broadcast %396 : vector<2x1xi1> to vector<2x32xi1>
    %398 = arith.select %397, %363, %395 : vector<2x32xi1>, vector<2x32xf32>
    %c0_179 = arith.constant 0 : index
    %c0_180 = arith.constant 0 : index
    %399 = vector.load %arg6[%c0_179, %c0_180] : memref<2x32xf32, #tpu.memory_space<vmem>>, vector<2x32xf32>
    tpu.vector_store %arg6[%c0_179, %c0_180], %398 {strides = array<i32>} : memref<2x32xf32, #tpu.memory_space<vmem>>, vector<2x32xf32>,
    %c0_181 = arith.constant 0 : index
    %c0_182 = arith.constant 0 : index
    %400 = vector.load %arg7[%c0_181, %c0_182] : memref<2x32xf32, #tpu.memory_space<vmem>>, vector<2x32xf32>
    %401 = vector.shape_cast %392 : vector<2x1xi1> to vector<2x1xi1>
    %402 = vector.broadcast %401 : vector<2x1xi1> to vector<2x32xi1>
    %403 = arith.select %402, %361, %400 : vector<2x32xi1>, vector<2x32xf32>
    %c0_183 = arith.constant 0 : index
    %c0_184 = arith.constant 0 : index
    %404 = vector.load %arg7[%c0_183, %c0_184] : memref<2x32xf32, #tpu.memory_space<vmem>>, vector<2x32xf32>
    tpu.vector_store %arg7[%c0_183, %c0_184], %403 {strides = array<i32>} : memref<2x32xf32, #tpu.memory_space<vmem>>, vector<2x32xf32>,
    %c0_185 = arith.constant 0 : index
    %c0_186 = arith.constant 0 : index
    %405 = vector.load %arg8[%c0_185, %c0_186] : memref<2x32xf32, #tpu.memory_space<vmem>>, vector<2x32xf32>
    %406 = vector.shape_cast %394 : vector<2x1xi1> to vector<2x1xi1>
    %407 = vector.broadcast %406 : vector<2x1xi1> to vector<2x32xi1>
    %408 = arith.select %407, %390, %405 : vector<2x32xi1>, vector<2x32xf32>
    %c0_187 = arith.constant 0 : index
    %c0_188 = arith.constant 0 : index
    %409 = vector.load %arg8[%c0_187, %c0_188] : memref<2x32xf32, #tpu.memory_space<vmem>>, vector<2x32xf32>
    tpu.vector_store %arg8[%c0_187, %c0_188], %408 {strides = array<i32>} : memref<2x32xf32, #tpu.memory_space<vmem>>, vector<2x32xf32>,
    %c0_189 = arith.constant 0 : index
    %c0_190 = arith.constant 0 : index
    %410 = vector.load %arg9[%c0_189, %c0_190] : memref<2x32xf32, #tpu.memory_space<vmem>>, vector<2x32xf32>
    %411 = vector.shape_cast %394 : vector<2x1xi1> to vector<2x1xi1>
    %412 = vector.broadcast %411 : vector<2x1xi1> to vector<2x32xi1>
    %413 = arith.select %412, %388, %410 : vector<2x32xi1>, vector<2x32xf32>
    %c0_191 = arith.constant 0 : index
    %c0_192 = arith.constant 0 : index
    %414 = vector.load %arg9[%c0_191, %c0_192] : memref<2x32xf32, #tpu.memory_space<vmem>>, vector<2x32xf32>
    tpu.vector_store %arg9[%c0_191, %c0_192], %413 {strides = array<i32>} : memref<2x32xf32, #tpu.memory_space<vmem>>, vector<2x32xf32>,
    %cst_193 = arith.constant -1.000000e+30 : f32
    %415 = vector.shape_cast %392 : vector<2x1xi1> to vector<2x1xi1>
    %416 = vector.broadcast %415 : vector<2x1xi1> to vector<2x32xi1>
    %417 = vector.broadcast %cst_193 : f32 to vector<2x32xf32>
    %418 = arith.select %416, %363, %417 : vector<2x32xi1>, vector<2x32xf32>
    %cst_194 = arith.constant -1.000000e+30 : f32
    %419 = vector.shape_cast %394 : vector<2x1xi1> to vector<2x1xi1>
    %420 = vector.broadcast %419 : vector<2x1xi1> to vector<2x32xi1>
    %421 = vector.broadcast %cst_194 : f32 to vector<2x32xf32>
    %422 = arith.select %420, %390, %421 : vector<2x32xi1>, vector<2x32xf32>
    %423 = tpu.concatenate %418, %422 in 1 : vector<2x32xf32>, vector<2x32xf32> -> vector<2x64xf32>
    %c0_195 = arith.constant 0 : index
    %c0_196 = arith.constant 0 : index
    %424 = vector.load %arg5[%c0_195, %c0_196] : memref<2x64xf32, #tpu.memory_space<vmem>>, vector<2x64xf32>
    %425 = arith.maximumf %424, %423 : vector<2x64xf32>
    %c0_197 = arith.constant 0 : index
    %c0_198 = arith.constant 0 : index
    %426 = vector.load %arg5[%c0_197, %c0_198] : memref<2x64xf32, #tpu.memory_space<vmem>>, vector<2x64xf32>
    tpu.vector_store %arg5[%c0_197, %c0_198], %425 {strides = array<i32>} : memref<2x64xf32, #tpu.memory_space<vmem>>, vector<2x64xf32>,
    %c0_199 = arith.constant 0 : index
    %c0_200 = arith.constant 0 : index
    %427 = vector.load %arg6[%c0_199, %c0_200] : memref<2x32xf32, #tpu.memory_space<vmem>>, vector<2x32xf32>
    %428 = arith.truncf %427 : vector<2x32xf32> to vector<2x32xbf16>
    %c0_201 = arith.constant 0 : index
    %c0_202 = arith.constant 0 : index
    %429 = vector.load %arg2[%c0_201, %c0_202] : memref<32x128xbf16, #tpu.memory_space<vmem>>, vector<32x128xbf16>
    %cst_203 = arith.constant dense<0.000000e+00> : vector<2x128xf32>
    %430 = tpu.matmul %428, %429, %cst_203 {dimension_numbers = #tpu.dot_dimension_numbers<[1], [0], [0], [1], [0, 0, 1, 1], [], []>} : vector<2x32xbf16>, vector<32x128xbf16>, vector<2x128xf32> -> vector<2x128xf32>
    %c0_204 = arith.constant 0 : index
    %c0_205 = arith.constant 0 : index
    %431 = vector.load %arg8[%c0_204, %c0_205] : memref<2x32xf32, #tpu.memory_space<vmem>>, vector<2x32xf32>
    %432 = arith.truncf %431 : vector<2x32xf32> to vector<2x32xbf16>
    %c0_206 = arith.constant 0 : index
    %c0_207 = arith.constant 0 : index
    %433 = vector.load %arg3[%c0_206, %c0_207] : memref<32x128xbf16, #tpu.memory_space<vmem>>, vector<32x128xbf16>
    %cst_208 = arith.constant dense<0.000000e+00> : vector<2x128xf32>
    %434 = tpu.matmul %432, %433, %cst_208 {dimension_numbers = #tpu.dot_dimension_numbers<[1], [0], [0], [1], [0, 0, 1, 1], [], []>} : vector<2x32xbf16>, vector<32x128xbf16>, vector<2x128xf32> -> vector<2x128xf32>
    %c0_209 = arith.constant 0 : index
    %c4_210 = arith.constant 4 : index
    %c0_211 = arith.constant 0 : index
    %435 = vector.load %arg1[%c0_209, %c4_210, %c0_211] : memref<2x8x256xbf16, #tpu.memory_space<vmem>>, vector<2x1x128xbf16>
    %436 = vector.shape_cast %435 : vector<2x1x128xbf16> to vector<2x128xbf16>
    %437 = arith.extf %436 : vector<2x128xbf16> to vector<2x128xf32>
    %c0_212 = arith.constant 0 : index
    %c3_213 = arith.constant 3 : index
    %c128_214 = arith.constant 128 : index
    %438 = vector.load %arg1[%c0_212, %c3_213, %c128_214] : memref<2x8x256xbf16, #tpu.memory_space<vmem>>, vector<2x1x128xbf16>
    %439 = vector.shape_cast %438 : vector<2x1x128xbf16> to vector<2x128xbf16>
    %440 = arith.extf %439 : vector<2x128xbf16> to vector<2x128xf32>
    %441 = arith.addf %437, %430 : vector<2x128xf32>
    %c0_215 = arith.constant 0 : index
    %c0_216 = arith.constant 0 : index
    %442 = vector.load %arg7[%c0_215, %c0_216] : memref<2x32xf32, #tpu.memory_space<vmem>>, vector<2x32xf32>
    %443 = vector.extract_strided_slice %441 {offsets = [0, 0], sizes = [2, 32], strides = [1, 1]} : vector<2x128xf32> to vector<2x32xf32>
    %444 = arith.negf %443 : vector<2x32xf32>
    %445 = math.exp %444 : vector<2x32xf32>
    %cst_217 = arith.constant 1.000000e+00 : f32
    %446 = vector.broadcast %cst_217 : f32 to vector<2x32xf32>
    %447 = arith.addf %446, %445 : vector<2x32xf32>
    %448 = arith.divf %446, %447 : vector<2x32xf32>
    %449 = vector.extract_strided_slice %441 {offsets = [0, 32], sizes = [2, 32], strides = [1, 1]} : vector<2x128xf32> to vector<2x32xf32>
    %450 = arith.negf %449 : vector<2x32xf32>
    %451 = math.exp %450 : vector<2x32xf32>
    %cst_218 = arith.constant 1.000000e+00 : f32
    %452 = vector.broadcast %cst_218 : f32 to vector<2x32xf32>
    %453 = arith.addf %452, %451 : vector<2x32xf32>
    %454 = arith.divf %452, %453 : vector<2x32xf32>
    %455 = vector.extract_strided_slice %441 {offsets = [0, 64], sizes = [2, 32], strides = [1, 1]} : vector<2x128xf32> to vector<2x32xf32>
    %456 = math.tanh %455 : vector<2x32xf32>
    %457 = vector.extract_strided_slice %441 {offsets = [0, 96], sizes = [2, 32], strides = [1, 1]} : vector<2x128xf32> to vector<2x32xf32>
    %458 = arith.negf %457 : vector<2x32xf32>
    %459 = math.exp %458 : vector<2x32xf32>
    %cst_219 = arith.constant 1.000000e+00 : f32
    %460 = vector.broadcast %cst_219 : f32 to vector<2x32xf32>
    %461 = arith.addf %460, %459 : vector<2x32xf32>
    %462 = arith.divf %460, %461 : vector<2x32xf32>
    %463 = arith.mulf %454, %442 : vector<2x32xf32>
    %464 = arith.mulf %448, %456 : vector<2x32xf32>
    %465 = arith.addf %463, %464 : vector<2x32xf32>
    %466 = math.tanh %465 : vector<2x32xf32>
    %467 = arith.mulf %462, %466 : vector<2x32xf32>
    %468 = arith.addf %440, %434 : vector<2x128xf32>
    %c0_220 = arith.constant 0 : index
    %c0_221 = arith.constant 0 : index
    %469 = vector.load %arg9[%c0_220, %c0_221] : memref<2x32xf32, #tpu.memory_space<vmem>>, vector<2x32xf32>
    %470 = vector.extract_strided_slice %468 {offsets = [0, 0], sizes = [2, 32], strides = [1, 1]} : vector<2x128xf32> to vector<2x32xf32>
    %471 = arith.negf %470 : vector<2x32xf32>
    %472 = math.exp %471 : vector<2x32xf32>
    %cst_222 = arith.constant 1.000000e+00 : f32
    %473 = vector.broadcast %cst_222 : f32 to vector<2x32xf32>
    %474 = arith.addf %473, %472 : vector<2x32xf32>
    %475 = arith.divf %473, %474 : vector<2x32xf32>
    %476 = vector.extract_strided_slice %468 {offsets = [0, 32], sizes = [2, 32], strides = [1, 1]} : vector<2x128xf32> to vector<2x32xf32>
    %477 = arith.negf %476 : vector<2x32xf32>
    %478 = math.exp %477 : vector<2x32xf32>
    %cst_223 = arith.constant 1.000000e+00 : f32
    %479 = vector.broadcast %cst_223 : f32 to vector<2x32xf32>
    %480 = arith.addf %479, %478 : vector<2x32xf32>
    %481 = arith.divf %479, %480 : vector<2x32xf32>
    %482 = vector.extract_strided_slice %468 {offsets = [0, 64], sizes = [2, 32], strides = [1, 1]} : vector<2x128xf32> to vector<2x32xf32>
    %483 = math.tanh %482 : vector<2x32xf32>
    %484 = vector.extract_strided_slice %468 {offsets = [0, 96], sizes = [2, 32], strides = [1, 1]} : vector<2x128xf32> to vector<2x32xf32>
    %485 = arith.negf %484 : vector<2x32xf32>
    %486 = math.exp %485 : vector<2x32xf32>
    %cst_224 = arith.constant 1.000000e+00 : f32
    %487 = vector.broadcast %cst_224 : f32 to vector<2x32xf32>
    %488 = arith.addf %487, %486 : vector<2x32xf32>
    %489 = arith.divf %487, %488 : vector<2x32xf32>
    %490 = arith.mulf %481, %469 : vector<2x32xf32>
    %491 = arith.mulf %475, %483 : vector<2x32xf32>
    %492 = arith.addf %490, %491 : vector<2x32xf32>
    %493 = math.tanh %492 : vector<2x32xf32>
    %494 = arith.mulf %489, %493 : vector<2x32xf32>
    %c4_i32_225 = arith.constant 4 : i32
    %495 = vector.broadcast %c4_i32_225 : i32 to vector<2x1xi32>
    %496 = arith.cmpi sgt, %10, %495 : vector<2x1xi32>
    %c3_i32_226 = arith.constant 3 : i32
    %497 = vector.broadcast %c3_i32_226 : i32 to vector<2x1xi32>
    %498 = arith.cmpi sgt, %10, %497 : vector<2x1xi32>
    %c0_227 = arith.constant 0 : index
    %c0_228 = arith.constant 0 : index
    %499 = vector.load %arg6[%c0_227, %c0_228] : memref<2x32xf32, #tpu.memory_space<vmem>>, vector<2x32xf32>
    %500 = vector.shape_cast %496 : vector<2x1xi1> to vector<2x1xi1>
    %501 = vector.broadcast %500 : vector<2x1xi1> to vector<2x32xi1>
    %502 = arith.select %501, %467, %499 : vector<2x32xi1>, vector<2x32xf32>
    %c0_229 = arith.constant 0 : index
    %c0_230 = arith.constant 0 : index
    %503 = vector.load %arg6[%c0_229, %c0_230] : memref<2x32xf32, #tpu.memory_space<vmem>>, vector<2x32xf32>
    tpu.vector_store %arg6[%c0_229, %c0_230], %502 {strides = array<i32>} : memref<2x32xf32, #tpu.memory_space<vmem>>, vector<2x32xf32>,
    %c0_231 = arith.constant 0 : index
    %c0_232 = arith.constant 0 : index
    %504 = vector.load %arg7[%c0_231, %c0_232] : memref<2x32xf32, #tpu.memory_space<vmem>>, vector<2x32xf32>
    %505 = vector.shape_cast %496 : vector<2x1xi1> to vector<2x1xi1>
    %506 = vector.broadcast %505 : vector<2x1xi1> to vector<2x32xi1>
    %507 = arith.select %506, %465, %504 : vector<2x32xi1>, vector<2x32xf32>
    %c0_233 = arith.constant 0 : index
    %c0_234 = arith.constant 0 : index
    %508 = vector.load %arg7[%c0_233, %c0_234] : memref<2x32xf32, #tpu.memory_space<vmem>>, vector<2x32xf32>
    tpu.vector_store %arg7[%c0_233, %c0_234], %507 {strides = array<i32>} : memref<2x32xf32, #tpu.memory_space<vmem>>, vector<2x32xf32>,
    %c0_235 = arith.constant 0 : index
    %c0_236 = arith.constant 0 : index
    %509 = vector.load %arg8[%c0_235, %c0_236] : memref<2x32xf32, #tpu.memory_space<vmem>>, vector<2x32xf32>
    %510 = vector.shape_cast %498 : vector<2x1xi1> to vector<2x1xi1>
    %511 = vector.broadcast %510 : vector<2x1xi1> to vector<2x32xi1>
    %512 = arith.select %511, %494, %509 : vector<2x32xi1>, vector<2x32xf32>
    %c0_237 = arith.constant 0 : index
    %c0_238 = arith.constant 0 : index
    %513 = vector.load %arg8[%c0_237, %c0_238] : memref<2x32xf32, #tpu.memory_space<vmem>>, vector<2x32xf32>
    tpu.vector_store %arg8[%c0_237, %c0_238], %512 {strides = array<i32>} : memref<2x32xf32, #tpu.memory_space<vmem>>, vector<2x32xf32>,
    %c0_239 = arith.constant 0 : index
    %c0_240 = arith.constant 0 : index
    %514 = vector.load %arg9[%c0_239, %c0_240] : memref<2x32xf32, #tpu.memory_space<vmem>>, vector<2x32xf32>
    %515 = vector.shape_cast %498 : vector<2x1xi1> to vector<2x1xi1>
    %516 = vector.broadcast %515 : vector<2x1xi1> to vector<2x32xi1>
    %517 = arith.select %516, %492, %514 : vector<2x32xi1>, vector<2x32xf32>
    %c0_241 = arith.constant 0 : index
    %c0_242 = arith.constant 0 : index
    %518 = vector.load %arg9[%c0_241, %c0_242] : memref<2x32xf32, #tpu.memory_space<vmem>>, vector<2x32xf32>
    tpu.vector_store %arg9[%c0_241, %c0_242], %517 {strides = array<i32>} : memref<2x32xf32, #tpu.memory_space<vmem>>, vector<2x32xf32>,
    %cst_243 = arith.constant -1.000000e+30 : f32
    %519 = vector.shape_cast %496 : vector<2x1xi1> to vector<2x1xi1>
    %520 = vector.broadcast %519 : vector<2x1xi1> to vector<2x32xi1>
    %521 = vector.broadcast %cst_243 : f32 to vector<2x32xf32>
    %522 = arith.select %520, %467, %521 : vector<2x32xi1>, vector<2x32xf32>
    %cst_244 = arith.constant -1.000000e+30 : f32
    %523 = vector.shape_cast %498 : vector<2x1xi1> to vector<2x1xi1>
    %524 = vector.broadcast %523 : vector<2x1xi1> to vector<2x32xi1>
    %525 = vector.broadcast %cst_244 : f32 to vector<2x32xf32>
    %526 = arith.select %524, %494, %525 : vector<2x32xi1>, vector<2x32xf32>
    %527 = tpu.concatenate %522, %526 in 1 : vector<2x32xf32>, vector<2x32xf32> -> vector<2x64xf32>
    %c0_245 = arith.constant 0 : index
    %c0_246 = arith.constant 0 : index
    %528 = vector.load %arg5[%c0_245, %c0_246] : memref<2x64xf32, #tpu.memory_space<vmem>>, vector<2x64xf32>
    %529 = arith.maximumf %528, %527 : vector<2x64xf32>
    %c0_247 = arith.constant 0 : index
    %c0_248 = arith.constant 0 : index
    %530 = vector.load %arg5[%c0_247, %c0_248] : memref<2x64xf32, #tpu.memory_space<vmem>>, vector<2x64xf32>
    tpu.vector_store %arg5[%c0_247, %c0_248], %529 {strides = array<i32>} : memref<2x64xf32, #tpu.memory_space<vmem>>, vector<2x64xf32>,
    %c0_249 = arith.constant 0 : index
    %c0_250 = arith.constant 0 : index
    %531 = vector.load %arg6[%c0_249, %c0_250] : memref<2x32xf32, #tpu.memory_space<vmem>>, vector<2x32xf32>
    %532 = arith.truncf %531 : vector<2x32xf32> to vector<2x32xbf16>
    %c0_251 = arith.constant 0 : index
    %c0_252 = arith.constant 0 : index
    %533 = vector.load %arg2[%c0_251, %c0_252] : memref<32x128xbf16, #tpu.memory_space<vmem>>, vector<32x128xbf16>
    %cst_253 = arith.constant dense<0.000000e+00> : vector<2x128xf32>
    %534 = tpu.matmul %532, %533, %cst_253 {dimension_numbers = #tpu.dot_dimension_numbers<[1], [0], [0], [1], [0, 0, 1, 1], [], []>} : vector<2x32xbf16>, vector<32x128xbf16>, vector<2x128xf32> -> vector<2x128xf32>
    %c0_254 = arith.constant 0 : index
    %c0_255 = arith.constant 0 : index
    %535 = vector.load %arg8[%c0_254, %c0_255] : memref<2x32xf32, #tpu.memory_space<vmem>>, vector<2x32xf32>
    %536 = arith.truncf %535 : vector<2x32xf32> to vector<2x32xbf16>
    %c0_256 = arith.constant 0 : index
    %c0_257 = arith.constant 0 : index
    %537 = vector.load %arg3[%c0_256, %c0_257] : memref<32x128xbf16, #tpu.memory_space<vmem>>, vector<32x128xbf16>
    %cst_258 = arith.constant dense<0.000000e+00> : vector<2x128xf32>
    %538 = tpu.matmul %536, %537, %cst_258 {dimension_numbers = #tpu.dot_dimension_numbers<[1], [0], [0], [1], [0, 0, 1, 1], [], []>} : vector<2x32xbf16>, vector<32x128xbf16>, vector<2x128xf32> -> vector<2x128xf32>
    %c0_259 = arith.constant 0 : index
    %c5_260 = arith.constant 5 : index
    %c0_261 = arith.constant 0 : index
    %539 = vector.load %arg1[%c0_259, %c5_260, %c0_261] : memref<2x8x256xbf16, #tpu.memory_space<vmem>>, vector<2x1x128xbf16>
    %540 = vector.shape_cast %539 : vector<2x1x128xbf16> to vector<2x128xbf16>
    %541 = arith.extf %540 : vector<2x128xbf16> to vector<2x128xf32>
    %c0_262 = arith.constant 0 : index
    %c2_263 = arith.constant 2 : index
    %c128_264 = arith.constant 128 : index
    %542 = vector.load %arg1[%c0_262, %c2_263, %c128_264] : memref<2x8x256xbf16, #tpu.memory_space<vmem>>, vector<2x1x128xbf16>
    %543 = vector.shape_cast %542 : vector<2x1x128xbf16> to vector<2x128xbf16>
    %544 = arith.extf %543 : vector<2x128xbf16> to vector<2x128xf32>
    %545 = arith.addf %541, %534 : vector<2x128xf32>
    %c0_265 = arith.constant 0 : index
    %c0_266 = arith.constant 0 : index
    %546 = vector.load %arg7[%c0_265, %c0_266] : memref<2x32xf32, #tpu.memory_space<vmem>>, vector<2x32xf32>
    %547 = vector.extract_strided_slice %545 {offsets = [0, 0], sizes = [2, 32], strides = [1, 1]} : vector<2x128xf32> to vector<2x32xf32>
    %548 = arith.negf %547 : vector<2x32xf32>
    %549 = math.exp %548 : vector<2x32xf32>
    %cst_267 = arith.constant 1.000000e+00 : f32
    %550 = vector.broadcast %cst_267 : f32 to vector<2x32xf32>
    %551 = arith.addf %550, %549 : vector<2x32xf32>
    %552 = arith.divf %550, %551 : vector<2x32xf32>
    %553 = vector.extract_strided_slice %545 {offsets = [0, 32], sizes = [2, 32], strides = [1, 1]} : vector<2x128xf32> to vector<2x32xf32>
    %554 = arith.negf %553 : vector<2x32xf32>
    %555 = math.exp %554 : vector<2x32xf32>
    %cst_268 = arith.constant 1.000000e+00 : f32
    %556 = vector.broadcast %cst_268 : f32 to vector<2x32xf32>
    %557 = arith.addf %556, %555 : vector<2x32xf32>
    %558 = arith.divf %556, %557 : vector<2x32xf32>
    %559 = vector.extract_strided_slice %545 {offsets = [0, 64], sizes = [2, 32], strides = [1, 1]} : vector<2x128xf32> to vector<2x32xf32>
    %560 = math.tanh %559 : vector<2x32xf32>
    %561 = vector.extract_strided_slice %545 {offsets = [0, 96], sizes = [2, 32], strides = [1, 1]} : vector<2x128xf32> to vector<2x32xf32>
    %562 = arith.negf %561 : vector<2x32xf32>
    %563 = math.exp %562 : vector<2x32xf32>
    %cst_269 = arith.constant 1.000000e+00 : f32
    %564 = vector.broadcast %cst_269 : f32 to vector<2x32xf32>
    %565 = arith.addf %564, %563 : vector<2x32xf32>
    %566 = arith.divf %564, %565 : vector<2x32xf32>
    %567 = arith.mulf %558, %546 : vector<2x32xf32>
    %568 = arith.mulf %552, %560 : vector<2x32xf32>
    %569 = arith.addf %567, %568 : vector<2x32xf32>
    %570 = math.tanh %569 : vector<2x32xf32>
    %571 = arith.mulf %566, %570 : vector<2x32xf32>
    %572 = arith.addf %544, %538 : vector<2x128xf32>
    %c0_270 = arith.constant 0 : index
    %c0_271 = arith.constant 0 : index
    %573 = vector.load %arg9[%c0_270, %c0_271] : memref<2x32xf32, #tpu.memory_space<vmem>>, vector<2x32xf32>
    %574 = vector.extract_strided_slice %572 {offsets = [0, 0], sizes = [2, 32], strides = [1, 1]} : vector<2x128xf32> to vector<2x32xf32>
    %575 = arith.negf %574 : vector<2x32xf32>
    %576 = math.exp %575 : vector<2x32xf32>
    %cst_272 = arith.constant 1.000000e+00 : f32
    %577 = vector.broadcast %cst_272 : f32 to vector<2x32xf32>
    %578 = arith.addf %577, %576 : vector<2x32xf32>
    %579 = arith.divf %577, %578 : vector<2x32xf32>
    %580 = vector.extract_strided_slice %572 {offsets = [0, 32], sizes = [2, 32], strides = [1, 1]} : vector<2x128xf32> to vector<2x32xf32>
    %581 = arith.negf %580 : vector<2x32xf32>
    %582 = math.exp %581 : vector<2x32xf32>
    %cst_273 = arith.constant 1.000000e+00 : f32
    %583 = vector.broadcast %cst_273 : f32 to vector<2x32xf32>
    %584 = arith.addf %583, %582 : vector<2x32xf32>
    %585 = arith.divf %583, %584 : vector<2x32xf32>
    %586 = vector.extract_strided_slice %572 {offsets = [0, 64], sizes = [2, 32], strides = [1, 1]} : vector<2x128xf32> to vector<2x32xf32>
    %587 = math.tanh %586 : vector<2x32xf32>
    %588 = vector.extract_strided_slice %572 {offsets = [0, 96], sizes = [2, 32], strides = [1, 1]} : vector<2x128xf32> to vector<2x32xf32>
    %589 = arith.negf %588 : vector<2x32xf32>
    %590 = math.exp %589 : vector<2x32xf32>
    %cst_274 = arith.constant 1.000000e+00 : f32
    %591 = vector.broadcast %cst_274 : f32 to vector<2x32xf32>
    %592 = arith.addf %591, %590 : vector<2x32xf32>
    %593 = arith.divf %591, %592 : vector<2x32xf32>
    %594 = arith.mulf %585, %573 : vector<2x32xf32>
    %595 = arith.mulf %579, %587 : vector<2x32xf32>
    %596 = arith.addf %594, %595 : vector<2x32xf32>
    %597 = math.tanh %596 : vector<2x32xf32>
    %598 = arith.mulf %593, %597 : vector<2x32xf32>
    %c5_i32_275 = arith.constant 5 : i32
    %599 = vector.broadcast %c5_i32_275 : i32 to vector<2x1xi32>
    %600 = arith.cmpi sgt, %10, %599 : vector<2x1xi32>
    %c2_i32_276 = arith.constant 2 : i32
    %601 = vector.broadcast %c2_i32_276 : i32 to vector<2x1xi32>
    %602 = arith.cmpi sgt, %10, %601 : vector<2x1xi32>
    %c0_277 = arith.constant 0 : index
    %c0_278 = arith.constant 0 : index
    %603 = vector.load %arg6[%c0_277, %c0_278] : memref<2x32xf32, #tpu.memory_space<vmem>>, vector<2x32xf32>
    %604 = vector.shape_cast %600 : vector<2x1xi1> to vector<2x1xi1>
    %605 = vector.broadcast %604 : vector<2x1xi1> to vector<2x32xi1>
    %606 = arith.select %605, %571, %603 : vector<2x32xi1>, vector<2x32xf32>
    %c0_279 = arith.constant 0 : index
    %c0_280 = arith.constant 0 : index
    %607 = vector.load %arg6[%c0_279, %c0_280] : memref<2x32xf32, #tpu.memory_space<vmem>>, vector<2x32xf32>
    tpu.vector_store %arg6[%c0_279, %c0_280], %606 {strides = array<i32>} : memref<2x32xf32, #tpu.memory_space<vmem>>, vector<2x32xf32>,
    %c0_281 = arith.constant 0 : index
    %c0_282 = arith.constant 0 : index
    %608 = vector.load %arg7[%c0_281, %c0_282] : memref<2x32xf32, #tpu.memory_space<vmem>>, vector<2x32xf32>
    %609 = vector.shape_cast %600 : vector<2x1xi1> to vector<2x1xi1>
    %610 = vector.broadcast %609 : vector<2x1xi1> to vector<2x32xi1>
    %611 = arith.select %610, %569, %608 : vector<2x32xi1>, vector<2x32xf32>
    %c0_283 = arith.constant 0 : index
    %c0_284 = arith.constant 0 : index
    %612 = vector.load %arg7[%c0_283, %c0_284] : memref<2x32xf32, #tpu.memory_space<vmem>>, vector<2x32xf32>
    tpu.vector_store %arg7[%c0_283, %c0_284], %611 {strides = array<i32>} : memref<2x32xf32, #tpu.memory_space<vmem>>, vector<2x32xf32>,
    %c0_285 = arith.constant 0 : index
    %c0_286 = arith.constant 0 : index
    %613 = vector.load %arg8[%c0_285, %c0_286] : memref<2x32xf32, #tpu.memory_space<vmem>>, vector<2x32xf32>
    %614 = vector.shape_cast %602 : vector<2x1xi1> to vector<2x1xi1>
    %615 = vector.broadcast %614 : vector<2x1xi1> to vector<2x32xi1>
    %616 = arith.select %615, %598, %613 : vector<2x32xi1>, vector<2x32xf32>
    %c0_287 = arith.constant 0 : index
    %c0_288 = arith.constant 0 : index
    %617 = vector.load %arg8[%c0_287, %c0_288] : memref<2x32xf32, #tpu.memory_space<vmem>>, vector<2x32xf32>
    tpu.vector_store %arg8[%c0_287, %c0_288], %616 {strides = array<i32>} : memref<2x32xf32, #tpu.memory_space<vmem>>, vector<2x32xf32>,
    %c0_289 = arith.constant 0 : index
    %c0_290 = arith.constant 0 : index
    %618 = vector.load %arg9[%c0_289, %c0_290] : memref<2x32xf32, #tpu.memory_space<vmem>>, vector<2x32xf32>
    %619 = vector.shape_cast %602 : vector<2x1xi1> to vector<2x1xi1>
    %620 = vector.broadcast %619 : vector<2x1xi1> to vector<2x32xi1>
    %621 = arith.select %620, %596, %618 : vector<2x32xi1>, vector<2x32xf32>
    %c0_291 = arith.constant 0 : index
    %c0_292 = arith.constant 0 : index
    %622 = vector.load %arg9[%c0_291, %c0_292] : memref<2x32xf32, #tpu.memory_space<vmem>>, vector<2x32xf32>
    tpu.vector_store %arg9[%c0_291, %c0_292], %621 {strides = array<i32>} : memref<2x32xf32, #tpu.memory_space<vmem>>, vector<2x32xf32>,
    %cst_293 = arith.constant -1.000000e+30 : f32
    %623 = vector.shape_cast %600 : vector<2x1xi1> to vector<2x1xi1>
    %624 = vector.broadcast %623 : vector<2x1xi1> to vector<2x32xi1>
    %625 = vector.broadcast %cst_293 : f32 to vector<2x32xf32>
    %626 = arith.select %624, %571, %625 : vector<2x32xi1>, vector<2x32xf32>
    %cst_294 = arith.constant -1.000000e+30 : f32
    %627 = vector.shape_cast %602 : vector<2x1xi1> to vector<2x1xi1>
    %628 = vector.broadcast %627 : vector<2x1xi1> to vector<2x32xi1>
    %629 = vector.broadcast %cst_294 : f32 to vector<2x32xf32>
    %630 = arith.select %628, %598, %629 : vector<2x32xi1>, vector<2x32xf32>
    %631 = tpu.concatenate %626, %630 in 1 : vector<2x32xf32>, vector<2x32xf32> -> vector<2x64xf32>
    %c0_295 = arith.constant 0 : index
    %c0_296 = arith.constant 0 : index
    %632 = vector.load %arg5[%c0_295, %c0_296] : memref<2x64xf32, #tpu.memory_space<vmem>>, vector<2x64xf32>
    %633 = arith.maximumf %632, %631 : vector<2x64xf32>
    %c0_297 = arith.constant 0 : index
    %c0_298 = arith.constant 0 : index
    %634 = vector.load %arg5[%c0_297, %c0_298] : memref<2x64xf32, #tpu.memory_space<vmem>>, vector<2x64xf32>
    tpu.vector_store %arg5[%c0_297, %c0_298], %633 {strides = array<i32>} : memref<2x64xf32, #tpu.memory_space<vmem>>, vector<2x64xf32>,
    %c0_299 = arith.constant 0 : index
    %c0_300 = arith.constant 0 : index
    %635 = vector.load %arg6[%c0_299, %c0_300] : memref<2x32xf32, #tpu.memory_space<vmem>>, vector<2x32xf32>
    %636 = arith.truncf %635 : vector<2x32xf32> to vector<2x32xbf16>
    %c0_301 = arith.constant 0 : index
    %c0_302 = arith.constant 0 : index
    %637 = vector.load %arg2[%c0_301, %c0_302] : memref<32x128xbf16, #tpu.memory_space<vmem>>, vector<32x128xbf16>
    %cst_303 = arith.constant dense<0.000000e+00> : vector<2x128xf32>
    %638 = tpu.matmul %636, %637, %cst_303 {dimension_numbers = #tpu.dot_dimension_numbers<[1], [0], [0], [1], [0, 0, 1, 1], [], []>} : vector<2x32xbf16>, vector<32x128xbf16>, vector<2x128xf32> -> vector<2x128xf32>
    %c0_304 = arith.constant 0 : index
    %c0_305 = arith.constant 0 : index
    %639 = vector.load %arg8[%c0_304, %c0_305] : memref<2x32xf32, #tpu.memory_space<vmem>>, vector<2x32xf32>
    %640 = arith.truncf %639 : vector<2x32xf32> to vector<2x32xbf16>
    %c0_306 = arith.constant 0 : index
    %c0_307 = arith.constant 0 : index
    %641 = vector.load %arg3[%c0_306, %c0_307] : memref<32x128xbf16, #tpu.memory_space<vmem>>, vector<32x128xbf16>
    %cst_308 = arith.constant dense<0.000000e+00> : vector<2x128xf32>
    %642 = tpu.matmul %640, %641, %cst_308 {dimension_numbers = #tpu.dot_dimension_numbers<[1], [0], [0], [1], [0, 0, 1, 1], [], []>} : vector<2x32xbf16>, vector<32x128xbf16>, vector<2x128xf32> -> vector<2x128xf32>
    %c0_309 = arith.constant 0 : index
    %c6_310 = arith.constant 6 : index
    %c0_311 = arith.constant 0 : index
    %643 = vector.load %arg1[%c0_309, %c6_310, %c0_311] : memref<2x8x256xbf16, #tpu.memory_space<vmem>>, vector<2x1x128xbf16>
    %644 = vector.shape_cast %643 : vector<2x1x128xbf16> to vector<2x128xbf16>
    %645 = arith.extf %644 : vector<2x128xbf16> to vector<2x128xf32>
    %c0_312 = arith.constant 0 : index
    %c1_313 = arith.constant 1 : index
    %c128_314 = arith.constant 128 : index
    %646 = vector.load %arg1[%c0_312, %c1_313, %c128_314] : memref<2x8x256xbf16, #tpu.memory_space<vmem>>, vector<2x1x128xbf16>
    %647 = vector.shape_cast %646 : vector<2x1x128xbf16> to vector<2x128xbf16>
    %648 = arith.extf %647 : vector<2x128xbf16> to vector<2x128xf32>
    %649 = arith.addf %645, %638 : vector<2x128xf32>
    %c0_315 = arith.constant 0 : index
    %c0_316 = arith.constant 0 : index
    %650 = vector.load %arg7[%c0_315, %c0_316] : memref<2x32xf32, #tpu.memory_space<vmem>>, vector<2x32xf32>
    %651 = vector.extract_strided_slice %649 {offsets = [0, 0], sizes = [2, 32], strides = [1, 1]} : vector<2x128xf32> to vector<2x32xf32>
    %652 = arith.negf %651 : vector<2x32xf32>
    %653 = math.exp %652 : vector<2x32xf32>
    %cst_317 = arith.constant 1.000000e+00 : f32
    %654 = vector.broadcast %cst_317 : f32 to vector<2x32xf32>
    %655 = arith.addf %654, %653 : vector<2x32xf32>
    %656 = arith.divf %654, %655 : vector<2x32xf32>
    %657 = vector.extract_strided_slice %649 {offsets = [0, 32], sizes = [2, 32], strides = [1, 1]} : vector<2x128xf32> to vector<2x32xf32>
    %658 = arith.negf %657 : vector<2x32xf32>
    %659 = math.exp %658 : vector<2x32xf32>
    %cst_318 = arith.constant 1.000000e+00 : f32
    %660 = vector.broadcast %cst_318 : f32 to vector<2x32xf32>
    %661 = arith.addf %660, %659 : vector<2x32xf32>
    %662 = arith.divf %660, %661 : vector<2x32xf32>
    %663 = vector.extract_strided_slice %649 {offsets = [0, 64], sizes = [2, 32], strides = [1, 1]} : vector<2x128xf32> to vector<2x32xf32>
    %664 = math.tanh %663 : vector<2x32xf32>
    %665 = vector.extract_strided_slice %649 {offsets = [0, 96], sizes = [2, 32], strides = [1, 1]} : vector<2x128xf32> to vector<2x32xf32>
    %666 = arith.negf %665 : vector<2x32xf32>
    %667 = math.exp %666 : vector<2x32xf32>
    %cst_319 = arith.constant 1.000000e+00 : f32
    %668 = vector.broadcast %cst_319 : f32 to vector<2x32xf32>
    %669 = arith.addf %668, %667 : vector<2x32xf32>
    %670 = arith.divf %668, %669 : vector<2x32xf32>
    %671 = arith.mulf %662, %650 : vector<2x32xf32>
    %672 = arith.mulf %656, %664 : vector<2x32xf32>
    %673 = arith.addf %671, %672 : vector<2x32xf32>
    %674 = math.tanh %673 : vector<2x32xf32>
    %675 = arith.mulf %670, %674 : vector<2x32xf32>
    %676 = arith.addf %648, %642 : vector<2x128xf32>
    %c0_320 = arith.constant 0 : index
    %c0_321 = arith.constant 0 : index
    %677 = vector.load %arg9[%c0_320, %c0_321] : memref<2x32xf32, #tpu.memory_space<vmem>>, vector<2x32xf32>
    %678 = vector.extract_strided_slice %676 {offsets = [0, 0], sizes = [2, 32], strides = [1, 1]} : vector<2x128xf32> to vector<2x32xf32>
    %679 = arith.negf %678 : vector<2x32xf32>
    %680 = math.exp %679 : vector<2x32xf32>
    %cst_322 = arith.constant 1.000000e+00 : f32
    %681 = vector.broadcast %cst_322 : f32 to vector<2x32xf32>
    %682 = arith.addf %681, %680 : vector<2x32xf32>
    %683 = arith.divf %681, %682 : vector<2x32xf32>
    %684 = vector.extract_strided_slice %676 {offsets = [0, 32], sizes = [2, 32], strides = [1, 1]} : vector<2x128xf32> to vector<2x32xf32>
    %685 = arith.negf %684 : vector<2x32xf32>
    %686 = math.exp %685 : vector<2x32xf32>
    %cst_323 = arith.constant 1.000000e+00 : f32
    %687 = vector.broadcast %cst_323 : f32 to vector<2x32xf32>
    %688 = arith.addf %687, %686 : vector<2x32xf32>
    %689 = arith.divf %687, %688 : vector<2x32xf32>
    %690 = vector.extract_strided_slice %676 {offsets = [0, 64], sizes = [2, 32], strides = [1, 1]} : vector<2x128xf32> to vector<2x32xf32>
    %691 = math.tanh %690 : vector<2x32xf32>
    %692 = vector.extract_strided_slice %676 {offsets = [0, 96], sizes = [2, 32], strides = [1, 1]} : vector<2x128xf32> to vector<2x32xf32>
    %693 = arith.negf %692 : vector<2x32xf32>
    %694 = math.exp %693 : vector<2x32xf32>
    %cst_324 = arith.constant 1.000000e+00 : f32
    %695 = vector.broadcast %cst_324 : f32 to vector<2x32xf32>
    %696 = arith.addf %695, %694 : vector<2x32xf32>
    %697 = arith.divf %695, %696 : vector<2x32xf32>
    %698 = arith.mulf %689, %677 : vector<2x32xf32>
    %699 = arith.mulf %683, %691 : vector<2x32xf32>
    %700 = arith.addf %698, %699 : vector<2x32xf32>
    %701 = math.tanh %700 : vector<2x32xf32>
    %702 = arith.mulf %697, %701 : vector<2x32xf32>
    %c6_i32_325 = arith.constant 6 : i32
    %703 = vector.broadcast %c6_i32_325 : i32 to vector<2x1xi32>
    %704 = arith.cmpi sgt, %10, %703 : vector<2x1xi32>
    %c1_i32_326 = arith.constant 1 : i32
    %705 = vector.broadcast %c1_i32_326 : i32 to vector<2x1xi32>
    %706 = arith.cmpi sgt, %10, %705 : vector<2x1xi32>
    %c0_327 = arith.constant 0 : index
    %c0_328 = arith.constant 0 : index
    %707 = vector.load %arg6[%c0_327, %c0_328] : memref<2x32xf32, #tpu.memory_space<vmem>>, vector<2x32xf32>
    %708 = vector.shape_cast %704 : vector<2x1xi1> to vector<2x1xi1>
    %709 = vector.broadcast %708 : vector<2x1xi1> to vector<2x32xi1>
    %710 = arith.select %709, %675, %707 : vector<2x32xi1>, vector<2x32xf32>
    %c0_329 = arith.constant 0 : index
    %c0_330 = arith.constant 0 : index
    %711 = vector.load %arg6[%c0_329, %c0_330] : memref<2x32xf32, #tpu.memory_space<vmem>>, vector<2x32xf32>
    tpu.vector_store %arg6[%c0_329, %c0_330], %710 {strides = array<i32>} : memref<2x32xf32, #tpu.memory_space<vmem>>, vector<2x32xf32>,
    %c0_331 = arith.constant 0 : index
    %c0_332 = arith.constant 0 : index
    %712 = vector.load %arg7[%c0_331, %c0_332] : memref<2x32xf32, #tpu.memory_space<vmem>>, vector<2x32xf32>
    %713 = vector.shape_cast %704 : vector<2x1xi1> to vector<2x1xi1>
    %714 = vector.broadcast %713 : vector<2x1xi1> to vector<2x32xi1>
    %715 = arith.select %714, %673, %712 : vector<2x32xi1>, vector<2x32xf32>
    %c0_333 = arith.constant 0 : index
    %c0_334 = arith.constant 0 : index
    %716 = vector.load %arg7[%c0_333, %c0_334] : memref<2x32xf32, #tpu.memory_space<vmem>>, vector<2x32xf32>
    tpu.vector_store %arg7[%c0_333, %c0_334], %715 {strides = array<i32>} : memref<2x32xf32, #tpu.memory_space<vmem>>, vector<2x32xf32>,
    %c0_335 = arith.constant 0 : index
    %c0_336 = arith.constant 0 : index
    %717 = vector.load %arg8[%c0_335, %c0_336] : memref<2x32xf32, #tpu.memory_space<vmem>>, vector<2x32xf32>
    %718 = vector.shape_cast %706 : vector<2x1xi1> to vector<2x1xi1>
    %719 = vector.broadcast %718 : vector<2x1xi1> to vector<2x32xi1>
    %720 = arith.select %719, %702, %717 : vector<2x32xi1>, vector<2x32xf32>
    %c0_337 = arith.constant 0 : index
    %c0_338 = arith.constant 0 : index
    %721 = vector.load %arg8[%c0_337, %c0_338] : memref<2x32xf32, #tpu.memory_space<vmem>>, vector<2x32xf32>
    tpu.vector_store %arg8[%c0_337, %c0_338], %720 {strides = array<i32>} : memref<2x32xf32, #tpu.memory_space<vmem>>, vector<2x32xf32>,
    %c0_339 = arith.constant 0 : index
    %c0_340 = arith.constant 0 : index
    %722 = vector.load %arg9[%c0_339, %c0_340] : memref<2x32xf32, #tpu.memory_space<vmem>>, vector<2x32xf32>
    %723 = vector.shape_cast %706 : vector<2x1xi1> to vector<2x1xi1>
    %724 = vector.broadcast %723 : vector<2x1xi1> to vector<2x32xi1>
    %725 = arith.select %724, %700, %722 : vector<2x32xi1>, vector<2x32xf32>
    %c0_341 = arith.constant 0 : index
    %c0_342 = arith.constant 0 : index
    %726 = vector.load %arg9[%c0_341, %c0_342] : memref<2x32xf32, #tpu.memory_space<vmem>>, vector<2x32xf32>
    tpu.vector_store %arg9[%c0_341, %c0_342], %725 {strides = array<i32>} : memref<2x32xf32, #tpu.memory_space<vmem>>, vector<2x32xf32>,
    %cst_343 = arith.constant -1.000000e+30 : f32
    %727 = vector.shape_cast %704 : vector<2x1xi1> to vector<2x1xi1>
    %728 = vector.broadcast %727 : vector<2x1xi1> to vector<2x32xi1>
    %729 = vector.broadcast %cst_343 : f32 to vector<2x32xf32>
    %730 = arith.select %728, %675, %729 : vector<2x32xi1>, vector<2x32xf32>
    %cst_344 = arith.constant -1.000000e+30 : f32
    %731 = vector.shape_cast %706 : vector<2x1xi1> to vector<2x1xi1>
    %732 = vector.broadcast %731 : vector<2x1xi1> to vector<2x32xi1>
    %733 = vector.broadcast %cst_344 : f32 to vector<2x32xf32>
    %734 = arith.select %732, %702, %733 : vector<2x32xi1>, vector<2x32xf32>
    %735 = tpu.concatenate %730, %734 in 1 : vector<2x32xf32>, vector<2x32xf32> -> vector<2x64xf32>
    %c0_345 = arith.constant 0 : index
    %c0_346 = arith.constant 0 : index
    %736 = vector.load %arg5[%c0_345, %c0_346] : memref<2x64xf32, #tpu.memory_space<vmem>>, vector<2x64xf32>
    %737 = arith.maximumf %736, %735 : vector<2x64xf32>
    %c0_347 = arith.constant 0 : index
    %c0_348 = arith.constant 0 : index
    %738 = vector.load %arg5[%c0_347, %c0_348] : memref<2x64xf32, #tpu.memory_space<vmem>>, vector<2x64xf32>
    tpu.vector_store %arg5[%c0_347, %c0_348], %737 {strides = array<i32>} : memref<2x64xf32, #tpu.memory_space<vmem>>, vector<2x64xf32>,
    %c0_349 = arith.constant 0 : index
    %c0_350 = arith.constant 0 : index
    %739 = vector.load %arg6[%c0_349, %c0_350] : memref<2x32xf32, #tpu.memory_space<vmem>>, vector<2x32xf32>
    %740 = arith.truncf %739 : vector<2x32xf32> to vector<2x32xbf16>
    %c0_351 = arith.constant 0 : index
    %c0_352 = arith.constant 0 : index
    %741 = vector.load %arg2[%c0_351, %c0_352] : memref<32x128xbf16, #tpu.memory_space<vmem>>, vector<32x128xbf16>
    %cst_353 = arith.constant dense<0.000000e+00> : vector<2x128xf32>
    %742 = tpu.matmul %740, %741, %cst_353 {dimension_numbers = #tpu.dot_dimension_numbers<[1], [0], [0], [1], [0, 0, 1, 1], [], []>} : vector<2x32xbf16>, vector<32x128xbf16>, vector<2x128xf32> -> vector<2x128xf32>
    %c0_354 = arith.constant 0 : index
    %c0_355 = arith.constant 0 : index
    %743 = vector.load %arg8[%c0_354, %c0_355] : memref<2x32xf32, #tpu.memory_space<vmem>>, vector<2x32xf32>
    %744 = arith.truncf %743 : vector<2x32xf32> to vector<2x32xbf16>
    %c0_356 = arith.constant 0 : index
    %c0_357 = arith.constant 0 : index
    %745 = vector.load %arg3[%c0_356, %c0_357] : memref<32x128xbf16, #tpu.memory_space<vmem>>, vector<32x128xbf16>
    %cst_358 = arith.constant dense<0.000000e+00> : vector<2x128xf32>
    %746 = tpu.matmul %744, %745, %cst_358 {dimension_numbers = #tpu.dot_dimension_numbers<[1], [0], [0], [1], [0, 0, 1, 1], [], []>} : vector<2x32xbf16>, vector<32x128xbf16>, vector<2x128xf32> -> vector<2x128xf32>
    %c0_359 = arith.constant 0 : index
    %c7_360 = arith.constant 7 : index
    %c0_361 = arith.constant 0 : index
    %747 = vector.load %arg1[%c0_359, %c7_360, %c0_361] : memref<2x8x256xbf16, #tpu.memory_space<vmem>>, vector<2x1x128xbf16>
    %748 = vector.shape_cast %747 : vector<2x1x128xbf16> to vector<2x128xbf16>
    %749 = arith.extf %748 : vector<2x128xbf16> to vector<2x128xf32>
    %c0_362 = arith.constant 0 : index
    %c0_363 = arith.constant 0 : index
    %c128_364 = arith.constant 128 : index
    %750 = vector.load %arg1[%c0_362, %c0_363, %c128_364] : memref<2x8x256xbf16, #tpu.memory_space<vmem>>, vector<2x1x128xbf16>
    %751 = vector.shape_cast %750 : vector<2x1x128xbf16> to vector<2x128xbf16>
    %752 = arith.extf %751 : vector<2x128xbf16> to vector<2x128xf32>
    %753 = arith.addf %749, %742 : vector<2x128xf32>
    %c0_365 = arith.constant 0 : index
    %c0_366 = arith.constant 0 : index
    %754 = vector.load %arg7[%c0_365, %c0_366] : memref<2x32xf32, #tpu.memory_space<vmem>>, vector<2x32xf32>
    %755 = vector.extract_strided_slice %753 {offsets = [0, 0], sizes = [2, 32], strides = [1, 1]} : vector<2x128xf32> to vector<2x32xf32>
    %756 = arith.negf %755 : vector<2x32xf32>
    %757 = math.exp %756 : vector<2x32xf32>
    %cst_367 = arith.constant 1.000000e+00 : f32
    %758 = vector.broadcast %cst_367 : f32 to vector<2x32xf32>
    %759 = arith.addf %758, %757 : vector<2x32xf32>
    %760 = arith.divf %758, %759 : vector<2x32xf32>
    %761 = vector.extract_strided_slice %753 {offsets = [0, 32], sizes = [2, 32], strides = [1, 1]} : vector<2x128xf32> to vector<2x32xf32>
    %762 = arith.negf %761 : vector<2x32xf32>
    %763 = math.exp %762 : vector<2x32xf32>
    %cst_368 = arith.constant 1.000000e+00 : f32
    %764 = vector.broadcast %cst_368 : f32 to vector<2x32xf32>
    %765 = arith.addf %764, %763 : vector<2x32xf32>
    %766 = arith.divf %764, %765 : vector<2x32xf32>
    %767 = vector.extract_strided_slice %753 {offsets = [0, 64], sizes = [2, 32], strides = [1, 1]} : vector<2x128xf32> to vector<2x32xf32>
    %768 = math.tanh %767 : vector<2x32xf32>
    %769 = vector.extract_strided_slice %753 {offsets = [0, 96], sizes = [2, 32], strides = [1, 1]} : vector<2x128xf32> to vector<2x32xf32>
    %770 = arith.negf %769 : vector<2x32xf32>
    %771 = math.exp %770 : vector<2x32xf32>
    %cst_369 = arith.constant 1.000000e+00 : f32
    %772 = vector.broadcast %cst_369 : f32 to vector<2x32xf32>
    %773 = arith.addf %772, %771 : vector<2x32xf32>
    %774 = arith.divf %772, %773 : vector<2x32xf32>
    %775 = arith.mulf %766, %754 : vector<2x32xf32>
    %776 = arith.mulf %760, %768 : vector<2x32xf32>
    %777 = arith.addf %775, %776 : vector<2x32xf32>
    %778 = math.tanh %777 : vector<2x32xf32>
    %779 = arith.mulf %774, %778 : vector<2x32xf32>
    %780 = arith.addf %752, %746 : vector<2x128xf32>
    %c0_370 = arith.constant 0 : index
    %c0_371 = arith.constant 0 : index
    %781 = vector.load %arg9[%c0_370, %c0_371] : memref<2x32xf32, #tpu.memory_space<vmem>>, vector<2x32xf32>
    %782 = vector.extract_strided_slice %780 {offsets = [0, 0], sizes = [2, 32], strides = [1, 1]} : vector<2x128xf32> to vector<2x32xf32>
    %783 = arith.negf %782 : vector<2x32xf32>
    %784 = math.exp %783 : vector<2x32xf32>
    %cst_372 = arith.constant 1.000000e+00 : f32
    %785 = vector.broadcast %cst_372 : f32 to vector<2x32xf32>
    %786 = arith.addf %785, %784 : vector<2x32xf32>
    %787 = arith.divf %785, %786 : vector<2x32xf32>
    %788 = vector.extract_strided_slice %780 {offsets = [0, 32], sizes = [2, 32], strides = [1, 1]} : vector<2x128xf32> to vector<2x32xf32>
    %789 = arith.negf %788 : vector<2x32xf32>
    %790 = math.exp %789 : vector<2x32xf32>
    %cst_373 = arith.constant 1.000000e+00 : f32
    %791 = vector.broadcast %cst_373 : f32 to vector<2x32xf32>
    %792 = arith.addf %791, %790 : vector<2x32xf32>
    %793 = arith.divf %791, %792 : vector<2x32xf32>
    %794 = vector.extract_strided_slice %780 {offsets = [0, 64], sizes = [2, 32], strides = [1, 1]} : vector<2x128xf32> to vector<2x32xf32>
    %795 = math.tanh %794 : vector<2x32xf32>
    %796 = vector.extract_strided_slice %780 {offsets = [0, 96], sizes = [2, 32], strides = [1, 1]} : vector<2x128xf32> to vector<2x32xf32>
    %797 = arith.negf %796 : vector<2x32xf32>
    %798 = math.exp %797 : vector<2x32xf32>
    %cst_374 = arith.constant 1.000000e+00 : f32
    %799 = vector.broadcast %cst_374 : f32 to vector<2x32xf32>
    %800 = arith.addf %799, %798 : vector<2x32xf32>
    %801 = arith.divf %799, %800 : vector<2x32xf32>
    %802 = arith.mulf %793, %781 : vector<2x32xf32>
    %803 = arith.mulf %787, %795 : vector<2x32xf32>
    %804 = arith.addf %802, %803 : vector<2x32xf32>
    %805 = math.tanh %804 : vector<2x32xf32>
    %806 = arith.mulf %801, %805 : vector<2x32xf32>
    %c7_i32_375 = arith.constant 7 : i32
    %807 = vector.broadcast %c7_i32_375 : i32 to vector<2x1xi32>
    %808 = arith.cmpi sgt, %10, %807 : vector<2x1xi32>
    %c0_i32_376 = arith.constant 0 : i32
    %809 = vector.broadcast %c0_i32_376 : i32 to vector<2x1xi32>
    %810 = arith.cmpi sgt, %10, %809 : vector<2x1xi32>
    %c0_377 = arith.constant 0 : index
    %c0_378 = arith.constant 0 : index
    %811 = vector.load %arg6[%c0_377, %c0_378] : memref<2x32xf32, #tpu.memory_space<vmem>>, vector<2x32xf32>
    %812 = vector.shape_cast %808 : vector<2x1xi1> to vector<2x1xi1>
    %813 = vector.broadcast %812 : vector<2x1xi1> to vector<2x32xi1>
    %814 = arith.select %813, %779, %811 : vector<2x32xi1>, vector<2x32xf32>
    %c0_379 = arith.constant 0 : index
    %c0_380 = arith.constant 0 : index
    %815 = vector.load %arg6[%c0_379, %c0_380] : memref<2x32xf32, #tpu.memory_space<vmem>>, vector<2x32xf32>
    tpu.vector_store %arg6[%c0_379, %c0_380], %814 {strides = array<i32>} : memref<2x32xf32, #tpu.memory_space<vmem>>, vector<2x32xf32>,
    %c0_381 = arith.constant 0 : index
    %c0_382 = arith.constant 0 : index
    %816 = vector.load %arg7[%c0_381, %c0_382] : memref<2x32xf32, #tpu.memory_space<vmem>>, vector<2x32xf32>
    %817 = vector.shape_cast %808 : vector<2x1xi1> to vector<2x1xi1>
    %818 = vector.broadcast %817 : vector<2x1xi1> to vector<2x32xi1>
    %819 = arith.select %818, %777, %816 : vector<2x32xi1>, vector<2x32xf32>
    %c0_383 = arith.constant 0 : index
    %c0_384 = arith.constant 0 : index
    %820 = vector.load %arg7[%c0_383, %c0_384] : memref<2x32xf32, #tpu.memory_space<vmem>>, vector<2x32xf32>
    tpu.vector_store %arg7[%c0_383, %c0_384], %819 {strides = array<i32>} : memref<2x32xf32, #tpu.memory_space<vmem>>, vector<2x32xf32>,
    %c0_385 = arith.constant 0 : index
    %c0_386 = arith.constant 0 : index
    %821 = vector.load %arg8[%c0_385, %c0_386] : memref<2x32xf32, #tpu.memory_space<vmem>>, vector<2x32xf32>
    %822 = vector.shape_cast %810 : vector<2x1xi1> to vector<2x1xi1>
    %823 = vector.broadcast %822 : vector<2x1xi1> to vector<2x32xi1>
    %824 = arith.select %823, %806, %821 : vector<2x32xi1>, vector<2x32xf32>
    %c0_387 = arith.constant 0 : index
    %c0_388 = arith.constant 0 : index
    %825 = vector.load %arg8[%c0_387, %c0_388] : memref<2x32xf32, #tpu.memory_space<vmem>>, vector<2x32xf32>
    tpu.vector_store %arg8[%c0_387, %c0_388], %824 {strides = array<i32>} : memref<2x32xf32, #tpu.memory_space<vmem>>, vector<2x32xf32>,
    %c0_389 = arith.constant 0 : index
    %c0_390 = arith.constant 0 : index
    %826 = vector.load %arg9[%c0_389, %c0_390] : memref<2x32xf32, #tpu.memory_space<vmem>>, vector<2x32xf32>
    %827 = vector.shape_cast %810 : vector<2x1xi1> to vector<2x1xi1>
    %828 = vector.broadcast %827 : vector<2x1xi1> to vector<2x32xi1>
    %829 = arith.select %828, %804, %826 : vector<2x32xi1>, vector<2x32xf32>
    %c0_391 = arith.constant 0 : index
    %c0_392 = arith.constant 0 : index
    %830 = vector.load %arg9[%c0_391, %c0_392] : memref<2x32xf32, #tpu.memory_space<vmem>>, vector<2x32xf32>
    tpu.vector_store %arg9[%c0_391, %c0_392], %829 {strides = array<i32>} : memref<2x32xf32, #tpu.memory_space<vmem>>, vector<2x32xf32>,
    %cst_393 = arith.constant -1.000000e+30 : f32
    %831 = vector.shape_cast %808 : vector<2x1xi1> to vector<2x1xi1>
    %832 = vector.broadcast %831 : vector<2x1xi1> to vector<2x32xi1>
    %833 = vector.broadcast %cst_393 : f32 to vector<2x32xf32>
    %834 = arith.select %832, %779, %833 : vector<2x32xi1>, vector<2x32xf32>
    %cst_394 = arith.constant -1.000000e+30 : f32
    %835 = vector.shape_cast %810 : vector<2x1xi1> to vector<2x1xi1>
    %836 = vector.broadcast %835 : vector<2x1xi1> to vector<2x32xi1>
    %837 = vector.broadcast %cst_394 : f32 to vector<2x32xf32>
    %838 = arith.select %836, %806, %837 : vector<2x32xi1>, vector<2x32xf32>
    %839 = tpu.concatenate %834, %838 in 1 : vector<2x32xf32>, vector<2x32xf32> -> vector<2x64xf32>
    %c0_395 = arith.constant 0 : index
    %c0_396 = arith.constant 0 : index
    %840 = vector.load %arg5[%c0_395, %c0_396] : memref<2x64xf32, #tpu.memory_space<vmem>>, vector<2x64xf32>
    %841 = arith.maximumf %840, %839 : vector<2x64xf32>
    %c0_397 = arith.constant 0 : index
    %c0_398 = arith.constant 0 : index
    %842 = vector.load %arg5[%c0_397, %c0_398] : memref<2x64xf32, #tpu.memory_space<vmem>>, vector<2x64xf32>
    tpu.vector_store %arg5[%c0_397, %c0_398], %841 {strides = array<i32>} : memref<2x64xf32, #tpu.memory_space<vmem>>, vector<2x64xf32>,
    return
  }
  func.func @transform_0(%arg0: i32) -> (i32, i32, i32) {
    %c0_i32 = arith.constant 0 : i32
    %c0_i32_0 = arith.constant 0 : i32
    %c0_i32_1 = arith.constant 0 : i32
    return %arg0, %c0_i32, %c0_i32_0 : i32, i32, i32
  }
  func.func @transform_1(%arg0: i32) -> (i32, i32) {
    %c0_i32 = arith.constant 0 : i32
    %c0_i32_0 = arith.constant 0 : i32
    %c0_i32_1 = arith.constant 0 : i32
    return %c0_i32, %c0_i32_0 : i32, i32
  }
  func.func @transform_2(%arg0: i32) -> (i32, i32) {
    %c0_i32 = arith.constant 0 : i32
    %c0_i32_0 = arith.constant 0 : i32
    %c0_i32_1 = arith.constant 0 : i32
    return %c0_i32, %c0_i32_0 : i32, i32
  }
  func.func @transform_3(%arg0: i32) -> (i32, i32) {
    %c0_i32 = arith.constant 0 : i32
    %c0_i32_0 = arith.constant 0 : i32
    return %arg0, %c0_i32 : i32, i32
  }
  func.func @transform_4(%arg0: i32) -> (i32, i32) {
    %c0_i32 = arith.constant 0 : i32
    %c0_i32_0 = arith.constant 0 : i32
    return %arg0, %c0_i32 : i32, i32
  }
}

module attributes {stable_mosaic.version = 11 : i64} {
  func.func @classifier_kernel(%arg0: i32, %arg1: memref<2x64xf32, #tpu.memory_space<vmem>>, %arg2: memref<2x64xf32, #tpu.memory_space<vmem>>, %arg3: memref<256x32xbf16, #tpu.memory_space<vmem>>, %arg4: memref<1x32xf32, #tpu.memory_space<vmem>>, %arg5: memref<32x3xbf16, #tpu.memory_space<vmem>>, %arg6: memref<1x3xf32, #tpu.memory_space<vmem>>, %arg7: memref<2x3xf32, #tpu.memory_space<vmem>>) attributes {dimension_semantics = [#tpu.dimension_semantics<parallel>], iteration_bounds = array<i64: 1>, scalar_prefetch = 0 : i64, scratch_operands = 0 : i64, tpu.core_type = #tpu.core_type<tc>, window_params = [{transform_indices = @transform_0, window_bounds = array<i64: 2, 64>}, {transform_indices = @transform_1, window_bounds = array<i64: 2, 64>}, {pipeline_mode = #tpu.pipeline_mode<synchronous>, transform_indices = @transform_2, window_bounds = array<i64: 256, 32>}, {pipeline_mode = #tpu.pipeline_mode<synchronous>, transform_indices = @transform_3, window_bounds = array<i64: 1, 32>}, {pipeline_mode = #tpu.pipeline_mode<synchronous>, transform_indices = @transform_4, window_bounds = array<i64: 32, 3>}, {pipeline_mode = #tpu.pipeline_mode<synchronous>, transform_indices = @transform_5, window_bounds = array<i64: 1, 3>}, {transform_indices = @transform_6, window_bounds = array<i64: 2, 3>}]} {
    %c0 = arith.constant 0 : index
    %c0_0 = arith.constant 0 : index
    %0 = vector.load %arg1[%c0, %c0_0] : memref<2x64xf32, #tpu.memory_space<vmem>>, vector<2x64xf32>
    %c0_1 = arith.constant 0 : index
    %c0_2 = arith.constant 0 : index
    %1 = vector.load %arg2[%c0_1, %c0_2] : memref<2x64xf32, #tpu.memory_space<vmem>>, vector<2x64xf32>
    %2 = arith.subf %0, %1 : vector<2x64xf32>
    %3 = math.absf %2 : vector<2x64xf32>
    %4 = arith.mulf %0, %1 : vector<2x64xf32>
    %5 = tpu.concatenate %0, %1, %3, %4 in 1 : vector<2x64xf32>, vector<2x64xf32>, vector<2x64xf32>, vector<2x64xf32> -> vector<2x256xf32>
    %6 = arith.truncf %5 : vector<2x256xf32> to vector<2x256xbf16>
    %c0_3 = arith.constant 0 : index
    %c0_4 = arith.constant 0 : index
    %7 = vector.load %arg3[%c0_3, %c0_4] : memref<256x32xbf16, #tpu.memory_space<vmem>>, vector<256x32xbf16>
    %cst = arith.constant dense<0.000000e+00> : vector<2x32xf32>
    %8 = tpu.matmul %6, %7, %cst {dimension_numbers = #tpu.dot_dimension_numbers<[1], [0], [0], [1], [0, 0, 1, 1], [], []>} : vector<2x256xbf16>, vector<256x32xbf16>, vector<2x32xf32> -> vector<2x32xf32>
    %c0_5 = arith.constant 0 : index
    %c0_6 = arith.constant 0 : index
    %9 = vector.load %arg4[%c0_5, %c0_6] : memref<1x32xf32, #tpu.memory_space<vmem>>, vector<1x32xf32>
    %10 = vector.broadcast %9 : vector<1x32xf32> to vector<2x32xf32>
    %11 = arith.addf %8, %10 : vector<2x32xf32>
    %cst_7 = arith.constant 0.000000e+00 : f32
    %12 = vector.broadcast %cst_7 : f32 to vector<2x32xf32>
    %13 = arith.maximumf %11, %12 : vector<2x32xf32>
    %14 = arith.truncf %13 : vector<2x32xf32> to vector<2x32xbf16>
    %c0_8 = arith.constant 0 : index
    %c0_9 = arith.constant 0 : index
    %15 = vector.load %arg5[%c0_8, %c0_9] : memref<32x3xbf16, #tpu.memory_space<vmem>>, vector<32x3xbf16>
    %cst_10 = arith.constant dense<0.000000e+00> : vector<2x3xf32>
    %16 = tpu.matmul %14, %15, %cst_10 {dimension_numbers = #tpu.dot_dimension_numbers<[1], [0], [0], [1], [0, 0, 1, 1], [], []>} : vector<2x32xbf16>, vector<32x3xbf16>, vector<2x3xf32> -> vector<2x3xf32>
    %c0_11 = arith.constant 0 : index
    %c0_12 = arith.constant 0 : index
    %17 = vector.load %arg6[%c0_11, %c0_12] : memref<1x3xf32, #tpu.memory_space<vmem>>, vector<1x3xf32>
    %18 = vector.broadcast %17 : vector<1x3xf32> to vector<2x3xf32>
    %19 = arith.addf %16, %18 : vector<2x3xf32>
    %c0_13 = arith.constant 0 : index
    %c0_14 = arith.constant 0 : index
    %20 = vector.load %arg7[%c0_13, %c0_14] : memref<2x3xf32, #tpu.memory_space<vmem>>, vector<2x3xf32>
    tpu.vector_store %arg7[%c0_13, %c0_14], %19 {strides = array<i32>} : memref<2x3xf32, #tpu.memory_space<vmem>>, vector<2x3xf32>,
    return
  }
  func.func @transform_0(%arg0: i32) -> (i32, i32) {
    %c0_i32 = arith.constant 0 : i32
    %c0_i32_0 = arith.constant 0 : i32
    return %arg0, %c0_i32 : i32, i32
  }
  func.func @transform_1(%arg0: i32) -> (i32, i32) {
    %c0_i32 = arith.constant 0 : i32
    %c0_i32_0 = arith.constant 0 : i32
    return %arg0, %c0_i32 : i32, i32
  }
  func.func @transform_2(%arg0: i32) -> (i32, i32) {
    %c0_i32 = arith.constant 0 : i32
    %c0_i32_0 = arith.constant 0 : i32
    %c0_i32_1 = arith.constant 0 : i32
    return %c0_i32, %c0_i32_0 : i32, i32
  }
  func.func @transform_3(%arg0: i32) -> (i32, i32) {
    %c0_i32 = arith.constant 0 : i32
    %c0_i32_0 = arith.constant 0 : i32
    %c0_i32_1 = arith.constant 0 : i32
    return %c0_i32, %c0_i32_0 : i32, i32
  }
  func.func @transform_4(%arg0: i32) -> (i32, i32) {
    %c0_i32 = arith.constant 0 : i32
    %c0_i32_0 = arith.constant 0 : i32
    %c0_i32_1 = arith.constant 0 : i32
    return %c0_i32, %c0_i32_0 : i32, i32
  }
  func.func @transform_5(%arg0: i32) -> (i32, i32) {
    %c0_i32 = arith.constant 0 : i32
    %c0_i32_0 = arith.constant 0 : i32
    %c0_i32_1 = arith.constant 0 : i32
    return %c0_i32, %c0_i32_0 : i32, i32
  }
  func.func @transform_6(%arg0: i32) -> (i32, i32) {
    %c0_i32 = arith.constant 0 : i32
    %c0_i32_0 = arith.constant 0 : i32
    return %arg0, %c0_i32 : i32, i32
  }
}

</mosaic_0001>

<llo_original>
// kernel: model_forward.9
$region0: #{model_forward.9}
  #allocation0 [shape = 'u32[]', space=smem, size = 0x4, offset = 0x4, fixed_abs, tag = 'smem constant byte address 0x4 - core index']
  #allocation1 [shape = 'u32[144,128]{1,0:T(1,128)}', space=vmem, size = 0x12000, scoped, tag = 'internal scratch']
  %s0 = inlined_call_operand.vmem [shape: f32[32,64], index: 0, kind: input, shape index: {}]
  %s1 = inlined_call_operand.vmem [shape: bf16[64,256], index: 1, kind: input, shape index: {}]
  %s2 = inlined_call_operand.vmem [shape: f32[1,256], index: 2, kind: input, shape index: {}]
  %s3 = inlined_call_operand.vmem [shape: bf16[32,256], index: 3, kind: output, shape index: {}]
  %s4 = sld [smem:[#allocation0]]
  $region22: #{model_forward.9} parent=0
    _
  %s6 = ssub.s32 1, %s4
  %s7 = scalar_select 0, %s6, %s4
  // Predicated region
  $region2: #{model_forward.9} parent=0 // pred_check
    _
  $region3: #{model_forward.9} parent=0 // pred_check_branch
    %9 = sbr.rel (0) target = $region5
  $region4: #{model_forward.9} parent=0 // pred_region
    _
  $region5: #{model_forward.9} parent=0 // pred_fallthru
    _
  // Predicated region
  $region6: #{model_forward.9} parent=0 // pred_check
    _
  $region7: #{model_forward.9} parent=0 // pred_check_branch
    %11 = sbr.rel (0) target = $region9
  $region8: #{model_forward.9} parent=0 // pred_region
    _
  $region9: #{model_forward.9} parent=0 // pred_fallthru
    _
  // Predicated region
  $region10: #{model_forward.9} parent=0 // pred_check
    _
  $region11: #{model_forward.9} parent=0 // pred_check_branch
    %13 = sbr.rel (0) target = $region13
  $region12: #{model_forward.9} parent=0 // pred_region
    _
  $region13: #{model_forward.9} parent=0 // pred_fallthru
    _
  %v15 = vld [vmem:[%s0] sm:$0xff]
  %v16 = vld [vmem:[%s0 + $0x8] sm:$0xff]
  %v17 = vld [vmem:[%s0 + $0x10] sm:$0xff]
  %v18 = vld [vmem:[%s0 + $0x18] sm:$0xff]
  %v19 = vpack.c.bf16 %v16, %v15
  %v20 = vpack.c.bf16 %v18, %v17
  %v21 = vld [vmem:[%s1] sm:$0xff]
  %v22 = vld [vmem:[%s1 + $0x8] sm:$0xff]
  %v23 = vld [vmem:[%s1 + $0x10] sm:$0xff]
  %v24 = vld [vmem:[%s1 + $0x18] sm:$0xff]
  %v25 = vld [vmem:[%s1 + $0x20] sm:$0xff]
  %v26 = vld [vmem:[%s1 + $0x28] sm:$0xff]
  %v27 = vld [vmem:[%s1 + $0x30] sm:$0xff]
  %v28 = vld [vmem:[%s1 + $0x38] sm:$0xff]
  %v29 = vld [vmem:[%s2] sm:$0x3]
  %v31 = vlaneseq
  %v32 = vshrl.u32 %v31, 7
  %v33 = vsub.s32 0, %v32
  %v34 = vrot.slane %v29, %v33
  %v35 = vlaneseq
  %v36 = vshrl.u32 %v35, 7
  %v37 = vsub.s32 1, %v36
  %v38 = vrot.slane %v29, %v37
  %v49 = vunpack.c.l.b16 %v21
  %v50 = vunpack.c.h.b16 %v21
  %v51 = vunpack.c.l.b16 %v22
  %v52 = vunpack.c.h.b16 %v22
  %v53 = vunpack.c.l.b16 %v23
  %v54 = vunpack.c.h.b16 %v23
  %v55 = vunpack.c.l.b16 %v24
  %v56 = vunpack.c.h.b16 %v24
  %v57 = vunpack.c.l.b16 %v25
  %v58 = vunpack.c.h.b16 %v25
  %v59 = vunpack.c.l.b16 %v26
  %v60 = vunpack.c.h.b16 %v26
  %v61 = vunpack.c.l.b16 %v27
  %v62 = vunpack.c.h.b16 %v27
  %v63 = vunpack.c.l.b16 %v28
  %v64 = vunpack.c.h.b16 %v28
  %v65 = vpack.c.b16 %v51, %v49
  %v66 = vpack.c.b16 %v52, %v50
  %v67 = vpack.c.b16 %v55, %v53
  %v68 = vpack.c.b16 %v56, %v54
  %v69 = vpack.c.b16 %v59, %v57
  %v70 = vpack.c.b16 %v60, %v58
  %v71 = vpack.c.b16 %v63, %v61
  %v72 = vpack.c.b16 %v64, %v62
  %vm81 = vcmask 523264
  %v83 = vsel %vm81, %v19, 0
  %v86 = vsel %vm81, %v20, 0
  %88 = vmatprep.subr.bf16.mxu0 %v66
  %89 = vmatpush1.bf16.msra.mxu0 %v65
  %90 = vmatprep.subr.bf16.mxu0 %v68
  %91 = vmatpush1.bf16.msra.mxu0 %v67
  %92 = vmatprep.subr.bf16.mxu0 %v70
  %93 = vmatpush1.bf16.msra.mxu0 %v69
  %94 = vmatprep.subr.bf16.mxu0 %v72
  %95 = vmatpush1.bf16.msra.mxu0 %v71
  %96 = vmatprep.subr.bf16.mxu0 0
  %97 = vmatpush1.bf16.msra.mxu0 0
  %98 = vmatprep.subr.bf16.mxu0 0
  %99 = vmatpush1.bf16.msra.mxu0 0
  %100 = vmatprep.subr.bf16.mxu0 0
  %101 = vmatpush1.bf16.msra.mxu0 0
  %102 = vmatprep.subr.bf16.mxu0 0
  %103 = vmatpush1.bf16.msra.mxu0 0
  %104 = vmatprep.subr.bf16.mxu0 0
  %105 = vmatpush1.bf16.msra.mxu0 0
  %106 = vmatprep.subr.bf16.mxu0 0
  %107 = vmatpush1.bf16.msra.mxu0 0
  %108 = vmatprep.subr.bf16.mxu0 0
  %109 = vmatpush1.bf16.msra.mxu0 0
  %110 = vmatprep.subr.bf16.mxu0 0
  %111 = vmatpush1.bf16.msra.mxu0 0
  %112 = vmatprep.subr.bf16.mxu0 0
  %113 = vmatpush1.bf16.msra.mxu0 0
  %114 = vmatprep.subr.bf16.mxu0 0
  %115 = vmatpush1.bf16.msra.mxu0 0
  %116 = vmatprep.subr.bf16.mxu0 0
  %117 = vmatpush1.bf16.msra.mxu0 0
  %118 = vmatprep.subr.bf16.mxu0 0
  %119 = vmatpush1.bf16.msra.mxu0 0
  %120 = vmatprep.mubr.bf16.mxu0 0
  %121 = vmatmul.mubr.bf16.gmra.mrb[0].mxu0 %v83
  %v122 = vpop.f32.mrb[0].mxu0
  %v123 = vadd.f32 %v34, %v122
  %v124 = vpop.f32.mrb[0].mxu0
  %v125 = vadd.f32 %v38, %v124
  %v126 = vpop.f32.mrb[0].mxu0
  %v127 = vadd.f32 %v34, %v126
  %v128 = vpop.f32.mrb[0].mxu0
  %v129 = vadd.f32 %v38, %v128
  %130 = vmatprep.mubr.bf16.mxu0 0
  %131 = vmatmul.mubr.bf16.gmra.mrb[0].mxu0 %v86
  %v132 = vpop.f32.mrb[0].mxu0
  %v133 = vadd.f32 %v34, %v132
  %v134 = vpop.f32.mrb[0].mxu0
  %v135 = vadd.f32 %v38, %v134
  %v136 = vpop.f32.mrb[0].mxu0
  %v137 = vadd.f32 %v34, %v136
  %v138 = vpop.f32.mrb[0].mxu0
  %v139 = vadd.f32 %v38, %v138
  %140 = vdwg.mxu0
  %v141 = vpack.c.bf16 %v127, %v123
  %v142 = vpack.c.bf16 %v129, %v125
  %v143 = vpack.c.bf16 %v137, %v133
  %v144 = vpack.c.bf16 %v139, %v135
  %v149 = vunpack.c.l.b16 %v141
  %v150 = vunpack.c.l.b16 %v142
  %v151 = vunpack.c.h.b16 %v141
  %v152 = vunpack.c.h.b16 %v142
  %v153 = vunpack.c.l.b16 %v143
  %v154 = vunpack.c.l.b16 %v144
  %v155 = vunpack.c.h.b16 %v143
  %v156 = vunpack.c.h.b16 %v144
  %v157 = vpack.c.b16 %v150, %v149
  %v158 = vpack.c.b16 %v152, %v151
  %v159 = vpack.c.b16 %v154, %v153
  %v160 = vpack.c.b16 %v156, %v155
  %165 = vst [vmem:[%s3] sm:$0xff] %v157
  %166 = vst [vmem:[%s3 + $0x8] sm:$0xff] %v158
  %167 = vst [vmem:[%s3 + $0x10] sm:$0xff] %v159
  %168 = vst [vmem:[%s3 + $0x18] sm:$0xff] %v160
  // Predicated region
  $region14: #{model_forward.9} parent=0 // pred_check
    _
  $region15: #{model_forward.9} parent=0 // pred_check_branch
    %170 = sbr.rel (0) target = $region17
  $region16: #{model_forward.9} parent=0 // pred_region
    _
  $region17: #{model_forward.9} parent=0 // pred_fallthru
    _
  // Predicated region
  $region18: #{model_forward.9} parent=0 // pred_check
    _
  $region19: #{model_forward.9} parent=0 // pred_check_branch
    %172 = sbr.rel (0) target = $region21
  $region20: #{model_forward.9} parent=0 // pred_region
    _
  $region21: #{model_forward.9} parent=0 // pred_fallthru
    _

// kernel: model_forward.13
$region0: #{model_forward.13}
  #allocation0 [shape = 'u32[]', space=smem, size = 0x4, offset = 0x4, fixed_abs, tag = 'smem constant byte address 0x4 - core index']
  #allocation1 [shape = 'u32[144,128]{1,0:T(1,128)}', space=vmem, size = 0x12000, scoped, tag = 'internal scratch']
  %s0 = inlined_call_operand.vmem [shape: bf16[32,64], index: 0, kind: input, shape index: {}]
  %s1 = inlined_call_operand.vmem [shape: bf16[32,64], index: 1, kind: input, shape index: {}]
  %s2 = inlined_call_operand.vmem [shape: bf16[192,32], index: 2, kind: input, shape index: {}]
  %s3 = inlined_call_operand.vmem [shape: f32[1,32], index: 3, kind: input, shape index: {}]
  %s4 = inlined_call_operand.vmem [shape: bf16[32,32], index: 4, kind: output, shape index: {}]
  %s5 = sld [smem:[#allocation0]]
  $region26: #{model_forward.13} parent=0
    _
  %s7 = ssub.s32 1, %s5
  %s8 = scalar_select 0, %s7, %s5
  // Predicated region
  $region2: #{model_forward.13} parent=0 // pred_check
    _
  $region3: #{model_forward.13} parent=0 // pred_check_branch
    %10 = sbr.rel (0) target = $region5
  $region4: #{model_forward.13} parent=0 // pred_region
    _
  $region5: #{model_forward.13} parent=0 // pred_fallthru
    _
  // Predicated region
  $region6: #{model_forward.13} parent=0 // pred_check
    _
  $region7: #{model_forward.13} parent=0 // pred_check_branch
    %12 = sbr.rel (0) target = $region9
  $region8: #{model_forward.13} parent=0 // pred_region
    _
  $region9: #{model_forward.13} parent=0 // pred_fallthru
    _
  // Predicated region
  $region10: #{model_forward.13} parent=0 // pred_check
    _
  $region11: #{model_forward.13} parent=0 // pred_check_branch
    %14 = sbr.rel (0) target = $region13
  $region12: #{model_forward.13} parent=0 // pred_region
    _
  $region13: #{model_forward.13} parent=0 // pred_fallthru
    _
  // Predicated region
  $region14: #{model_forward.13} parent=0 // pred_check
    _
  $region15: #{model_forward.13} parent=0 // pred_check_branch
    %16 = sbr.rel (0) target = $region17
  $region16: #{model_forward.13} parent=0 // pred_region
    _
  $region17: #{model_forward.13} parent=0 // pred_fallthru
    _
  %v18 = vld [vmem:[%s0] sm:$0xf]
  %v19 = vld [vmem:[%s0 + $0x4] sm:$0xf]
  %v20 = vld [vmem:[%s0 + $0x8] sm:$0xf]
  %v21 = vld [vmem:[%s0 + $0xc] sm:$0xf]
  %v22 = vld [vmem:[%s1] sm:$0xf]
  %v23 = vld [vmem:[%s1 + $0x4] sm:$0xf]
  %v24 = vld [vmem:[%s1 + $0x8] sm:$0xf]
  %v25 = vld [vmem:[%s1 + $0xc] sm:$0xf]
  %v26 = vmul.bf16 %v18, %v22
  %v27 = vmul.bf16 %v19, %v23
  %v28 = vmul.bf16 %v20, %v24
  %v29 = vmul.bf16 %v21, %v25
  %v34 = vunpack.c.l.b16 %v18
  %v35 = vunpack.c.l.b16 %v19
  %v36 = vunpack.c.l.b16 %v20
  %v37 = vunpack.c.l.b16 %v21
  %v38 = vpack.c.b16 %v35, %v34
  %v39 = vpack.c.b16 %v37, %v36
  %v44 = vunpack.c.l.b16 %v22
  %v45 = vunpack.c.l.b16 %v23
  %v46 = vunpack.c.l.b16 %v24
  %v47 = vunpack.c.l.b16 %v25
  %v48 = vpack.c.b16 %v45, %v44
  %v49 = vpack.c.b16 %v47, %v46
  %50 = vrot.lane.b32.xlu0 %v48, 64
  %v51 = vpop.permute.xlu0 %50
  %52 = vrot.lane.b32.xlu0 %v49, 64
  %v53 = vpop.permute.xlu0 %52
  %v58 = vunpack.c.l.b16 %v26
  %v59 = vunpack.c.l.b16 %v27
  %v60 = vunpack.c.l.b16 %v28
  %v61 = vunpack.c.l.b16 %v29
  %v62 = vpack.c.b16 %v59, %v58
  %v63 = vpack.c.b16 %v61, %v60
  %vm64 = vcmask 523264
  %v67 = vsel %vm64, %v38, %v51
  %v71 = vsel %vm64, %v39, %v53
  %v73 = vld [vmem:[%s2] sm:$0xf]
  %v74 = vld [vmem:[%s2 + $0x4] sm:$0xf]
  %v75 = vld [vmem:[%s2 + $0x8] sm:$0xf]
  %v76 = vld [vmem:[%s2 + $0xc] sm:$0xf]
  %v77 = vld [vmem:[%s2 + $0x10] sm:$0xf]
  %v78 = vld [vmem:[%s2 + $0x14] sm:$0xf]
  %v79 = vld [vmem:[%s2 + $0x18] sm:$0xf]
  %v80 = vld [vmem:[%s2 + $0x1c] sm:$0xf]
  %v81 = vld [vmem:[%s2 + $0x20] sm:$0xf]
  %v82 = vld [vmem:[%s2 + $0x24] sm:$0xf]
  %v83 = vld [vmem:[%s2 + $0x28] sm:$0xf]
  %v84 = vld [vmem:[%s2 + $0x2c] sm:$0xf]
  %v85 = vld [vmem:[%s2 + $0x30] sm:$0xf]
  %v86 = vld [vmem:[%s2 + $0x34] sm:$0xf]
  %v87 = vld [vmem:[%s2 + $0x38] sm:$0xf]
  %v88 = vld [vmem:[%s2 + $0x3c] sm:$0xf]
  %v89 = vld [vmem:[%s2 + $0x40] sm:$0xf]
  %v90 = vld [vmem:[%s2 + $0x44] sm:$0xf]
  %v91 = vld [vmem:[%s2 + $0x48] sm:$0xf]
  %v92 = vld [vmem:[%s2 + $0x4c] sm:$0xf]
  %v93 = vld [vmem:[%s2 + $0x50] sm:$0xf]
  %v94 = vld [vmem:[%s2 + $0x54] sm:$0xf]
  %v95 = vld [vmem:[%s2 + $0x58] sm:$0xf]
  %v96 = vld [vmem:[%s2 + $0x5c] sm:$0xf]
  %v97 = vld [vmem:[%s3] sm:$0x1]
  %v99 = vlaneseq
  %v100 = vshrl.u32 %v99, 7
  %v101 = vsub.s32 0, %v100
  %v102 = vrot.slane %v97, %v101
  %v128 = vunpack.c.l.b16 %v73
  %v129 = vunpack.c.l.b16 %v74
  %v130 = vunpack.c.l.b16 %v75
  %v131 = vunpack.c.l.b16 %v76
  %v132 = vunpack.c.l.b16 %v77
  %v133 = vunpack.c.l.b16 %v78
  %v134 = vunpack.c.l.b16 %v79
  %v135 = vunpack.c.l.b16 %v80
  %v136 = vunpack.c.l.b16 %v81
  %v137 = vunpack.c.l.b16 %v82
  %v138 = vunpack.c.l.b16 %v83
  %v139 = vunpack.c.l.b16 %v84
  %v140 = vunpack.c.l.b16 %v85
  %v141 = vunpack.c.l.b16 %v86
  %v142 = vunpack.c.l.b16 %v87
  %v143 = vunpack.c.l.b16 %v88
  %v144 = vunpack.c.l.b16 %v89
  %v145 = vunpack.c.l.b16 %v90
  %v146 = vunpack.c.l.b16 %v91
  %v147 = vunpack.c.l.b16 %v92
  %v148 = vunpack.c.l.b16 %v93
  %v149 = vunpack.c.l.b16 %v94
  %v150 = vunpack.c.l.b16 %v95
  %v151 = vunpack.c.l.b16 %v96
  %v152 = vpack.c.b16 %v129, %v128
  %v153 = vpack.c.b16 %v131, %v130
  %v154 = vpack.c.b16 %v133, %v132
  %v155 = vpack.c.b16 %v135, %v134
  %v156 = vpack.c.b16 %v137, %v136
  %v157 = vpack.c.b16 %v139, %v138
  %v158 = vpack.c.b16 %v141, %v140
  %v159 = vpack.c.b16 %v143, %v142
  %v160 = vpack.c.b16 %v145, %v144
  %v161 = vpack.c.b16 %v147, %v146
  %v162 = vpack.c.b16 %v149, %v148
  %v163 = vpack.c.b16 %v151, %v150
  %v177 = vsel %vm64, %v62, 0
  %v180 = vsel %vm64, %v63, 0
  %182 = vmatprep.subr.bf16.mxu0 0
  %183 = vmatpush1.bf16.msra.mxu0 %v152
  %184 = vmatprep.subr.bf16.mxu0 0
  %185 = vmatpush1.bf16.msra.mxu0 %v153
  %186 = vmatprep.subr.bf16.mxu0 0
  %187 = vmatpush1.bf16.msra.mxu0 %v154
  %188 = vmatprep.subr.bf16.mxu0 0
  %189 = vmatpush1.bf16.msra.mxu0 %v155
  %190 = vmatprep.subr.bf16.mxu0 0
  %191 = vmatpush1.bf16.msra.mxu0 %v156
  %192 = vmatprep.subr.bf16.mxu0 0
  %193 = vmatpush1.bf16.msra.mxu0 %v157
  %194 = vmatprep.subr.bf16.mxu0 0
  %195 = vmatpush1.bf16.msra.mxu0 %v158
  %196 = vmatprep.subr.bf16.mxu0 0
  %197 = vmatpush1.bf16.msra.mxu0 %v159
  %198 = vmatprep.subr.bf16.mxu0 0
  %199 = vmatpush1.bf16.msra.mxu0 %v160
  %200 = vmatprep.subr.bf16.mxu0 0
  %201 = vmatpush1.bf16.msra.mxu0 %v161
  %202 = vmatprep.subr.bf16.mxu0 0
  %203 = vmatpush1.bf16.msra.mxu0 %v162
  %204 = vmatprep.subr.bf16.mxu0 0
  %205 = vmatpush1.bf16.msra.mxu0 %v163
  %206 = vmatprep.subr.bf16.mxu0 0
  %207 = vmatpush1.bf16.msra.mxu0 0
  %208 = vmatprep.subr.bf16.mxu0 0
  %209 = vmatpush1.bf16.msra.mxu0 0
  %210 = vmatprep.subr.bf16.mxu0 0
  %211 = vmatpush1.bf16.msra.mxu0 0
  %212 = vmatprep.subr.bf16.mxu0 0
  %213 = vmatpush1.bf16.msra.mxu0 0
  %214 = vmatprep.mubr.bf16.mxu0 %v177
  %215 = vmatmul.mubr.bf16.gmra.mrb[0].mxu0 %v67
  %v216 = vpop.f32.mrb[0].mxu0
  %v217 = vadd.f32 %v102, %v216
  %v218 = vpop.f32.mrb[0].mxu0
  %v219 = vpop.f32.mrb[0].mxu0
  %v220 = vadd.f32 %v102, %v219
  %v221 = vpop.f32.mrb[0].mxu0
  %222 = vmatprep.mubr.bf16.mxu0 %v180
  %223 = vmatmul.mubr.bf16.gmra.mrb[0].mxu0 %v71
  %v224 = vpop.f32.mrb[0].mxu0
  %v225 = vadd.f32 %v102, %v224
  %v226 = vpop.f32.mrb[0].mxu0
  %v227 = vpop.f32.mrb[0].mxu0
  %v228 = vadd.f32 %v102, %v227
  %v229 = vpop.f32.mrb[0].mxu0
  %230 = vdwg.mxu0
  %v231 = vmax.f32 %v217, 0.0
  %v232 = vmax.f32 %v220, 0.0
  %v233 = vmax.f32 %v225, 0.0
  %v234 = vmax.f32 %v228, 0.0
  %v235 = vpack.c.bf16 %v232, %v231
  %v236 = vpack.c.bf16 %v234, %v233
  %v239 = vunpack.c.l.b16 %v235
  %v240 = vunpack.c.h.b16 %v235
  %v241 = vunpack.c.l.b16 %v236
  %v242 = vunpack.c.h.b16 %v236
  %v243 = vpack.c.b16 %v239, %v239
  %v244 = vpack.c.b16 %v240, %v240
  %v245 = vpack.c.b16 %v241, %v241
  %v246 = vpack.c.b16 %v242, %v242
  %vm251 = vcmask 257024
  %252 = vst.msk [vmem:[%s4] sm:$0xf] %vm251, %v243
  %253 = vst.msk [vmem:[%s4 + $0x4] sm:$0xf] %vm251, %v244
  %254 = vst.msk [vmem:[%s4 + $0x8] sm:$0xf] %vm251, %v245
  %255 = vst.msk [vmem:[%s4 + $0xc] sm:$0xf] %vm251, %v246
  // Predicated region
  $region18: #{model_forward.13} parent=0 // pred_check
    _
  $region19: #{model_forward.13} parent=0 // pred_check_branch
    %257 = sbr.rel (0) target = $region21
  $region20: #{model_forward.13} parent=0 // pred_region
    _
  $region21: #{model_forward.13} parent=0 // pred_fallthru
    _
  // Predicated region
  $region22: #{model_forward.13} parent=0 // pred_check
    _
  $region23: #{model_forward.13} parent=0 // pred_check_branch
    %259 = sbr.rel (0) target = $region25
  $region24: #{model_forward.13} parent=0 // pred_region
    _
  $region25: #{model_forward.13} parent=0 // pred_fallthru
    _

// kernel: model_forward.12
$region0: #{model_forward.12}
  #allocation0 [shape = 'u32[]', space=smem, size = 0x4, offset = 0x4, fixed_abs, tag = 'smem constant byte address 0x4 - core index']
  #allocation1 [shape = 'u32[144,128]{1,0:T(1,128)}', space=vmem, size = 0x12000, scoped, tag = 'internal scratch']
  %s0 = inlined_call_operand.vmem [shape: bf16[2,8,64], index: 0, kind: input, shape index: {}]
  %s1 = inlined_call_operand.vmem [shape: bf16[2,8,64], index: 1, kind: input, shape index: {}]
  %s2 = inlined_call_operand.vmem [shape: s32[2,1], index: 2, kind: input, shape index: {}]
  %s3 = inlined_call_operand.vmem [shape: s32[2,1], index: 3, kind: input, shape index: {}]
  %s4 = inlined_call_operand.vmem [shape: bf16[2,8,64], index: 4, kind: output, shape index: {0}]
  %s5 = inlined_call_operand.vmem [shape: bf16[2,8,64], index: 5, kind: output, shape index: {1}]
  %6 = xla_tuple %s4, %s5
  %s7 = sld [smem:[#allocation0]]
  $region34: #{model_forward.12} parent=0
    _
  %s9 = ssub.s32 1, %s7
  %s10 = scalar_select 0, %s9, %s7
  // Predicated region
  $region2: #{model_forward.12} parent=0 // pred_check
    _
  $region3: #{model_forward.12} parent=0 // pred_check_branch
    %12 = sbr.rel (0) target = $region5
  $region4: #{model_forward.12} parent=0 // pred_region
    _
  $region5: #{model_forward.12} parent=0 // pred_fallthru
    _
  // Predicated region
  $region6: #{model_forward.12} parent=0 // pred_check
    _
  $region7: #{model_forward.12} parent=0 // pred_check_branch
    %14 = sbr.rel (0) target = $region9
  $region8: #{model_forward.12} parent=0 // pred_region
    _
  $region9: #{model_forward.12} parent=0 // pred_fallthru
    _
  // Predicated region
  $region10: #{model_forward.12} parent=0 // pred_check
    _
  $region11: #{model_forward.12} parent=0 // pred_check_branch
    %16 = sbr.rel (0) target = $region13
  $region12: #{model_forward.12} parent=0 // pred_region
    _
  $region13: #{model_forward.12} parent=0 // pred_fallthru
    _
  // Predicated region
  $region14: #{model_forward.12} parent=0 // pred_check
    _
  $region15: #{model_forward.12} parent=0 // pred_check_branch
    %18 = sbr.rel (0) target = $region17
  $region16: #{model_forward.12} parent=0 // pred_region
    _
  $region17: #{model_forward.12} parent=0 // pred_fallthru
    _
  %v20 = vld [vmem:[%s0] sm:$0xf]
  %v21 = vld [vmem:[%s0 + $0x4] sm:$0xf]
  %v22 = vld [vmem:[%s1] sm:$0xf]
  %v23 = vld [vmem:[%s1 + $0x4] sm:$0xf]
  %v24 = vld [vmem:[%s2] sm:$0x3]
  %v25 = vld [vmem:[%s3] sm:$0x3]
  %vm26 = vcmask 523264
  %v28 = vsel %vm26, %v20, 0
  %v31 = vsel %vm26, %v22, 0
  %33 = vmatprep.subr.bf16.mxu0 0
  %34 = vmatpush1.bf16.xpose.msra.mxu0 %v31
  %35 = vmatprep.subr.bf16.mxu0 0
  %36 = vmatpush1.bf16.xpose.msra.mxu0 0
  %37 = vmatprep.subr.bf16.mxu0 0
  %38 = vmatpush1.bf16.xpose.msra.mxu0 0
  %39 = vmatprep.subr.bf16.mxu0 0
  %40 = vmatpush1.bf16.xpose.msra.mxu0 0
  %41 = vmatprep.subr.bf16.mxu0 0
  %42 = vmatpush1.bf16.xpose.msra.mxu0 0
  %43 = vmatprep.subr.bf16.mxu0 0
  %44 = vmatpush1.bf16.xpose.msra.mxu0 0
  %45 = vmatprep.subr.bf16.mxu0 0
  %46 = vmatpush1.bf16.xpose.msra.mxu0 0
  %47 = vmatprep.subr.bf16.mxu0 0
  %48 = vmatpush1.bf16.xpose.msra.mxu0 0
  %49 = vmatprep.subr.bf16.mxu0 0
  %50 = vmatpush1.bf16.xpose.msra.mxu0 0
  %51 = vmatprep.subr.bf16.mxu0 0
  %52 = vmatpush1.bf16.xpose.msra.mxu0 0
  %53 = vmatprep.subr.bf16.mxu0 0
  %54 = vmatpush1.bf16.xpose.msra.mxu0 0
  %55 = vmatprep.subr.bf16.mxu0 0
  %56 = vmatpush1.bf16.xpose.msra.mxu0 0
  %57 = vmatprep.subr.bf16.mxu0 0
  %58 = vmatpush1.bf16.xpose.msra.mxu0 0
  %59 = vmatprep.subr.bf16.mxu0 0
  %60 = vmatpush1.bf16.xpose.msra.mxu0 0
  %61 = vmatprep.subr.bf16.mxu0 0
  %62 = vmatpush1.bf16.xpose.msra.mxu0 0
  %63 = vmatprep.subr.bf16.mxu0 0
  %64 = vmatpush1.bf16.xpose.msra.mxu0 0
  %65 = vmatprep.mubr.bf16.mxu0 0
  %66 = vmatmul.mubr.bf16.gmra.mrb[0].mxu0 %v28
  %v67 = vpop.f32.mrb[0].mxu0
  %v68 = vadd.f32 0.0, %v67
  %v69 = vpop.f32.mrb[0].mxu0
  %v70 = vpop.f32.mrb[0].mxu0
  %v71 = vpop.f32.mrb[0].mxu0
  %72 = vdwg.mxu0
  %v74 = vsel %vm26, %v21, 0
  %v77 = vsel %vm26, %v23, 0
  %79 = vmatprep.subr.bf16.mxu0 0
  %80 = vmatpush1.bf16.xpose.msra.mxu0 %v77
  %81 = vmatprep.subr.bf16.mxu0 0
  %82 = vmatpush1.bf16.xpose.msra.mxu0 0
  %83 = vmatprep.subr.bf16.mxu0 0
  %84 = vmatpush1.bf16.xpose.msra.mxu0 0
  %85 = vmatprep.subr.bf16.mxu0 0
  %86 = vmatpush1.bf16.xpose.msra.mxu0 0
  %87 = vmatprep.subr.bf16.mxu0 0
  %88 = vmatpush1.bf16.xpose.msra.mxu0 0
  %89 = vmatprep.subr.bf16.mxu0 0
  %90 = vmatpush1.bf16.xpose.msra.mxu0 0
  %91 = vmatprep.subr.bf16.mxu0 0
  %92 = vmatpush1.bf16.xpose.msra.mxu0 0
  %93 = vmatprep.subr.bf16.mxu0 0
  %94 = vmatpush1.bf16.xpose.msra.mxu0 0
  %95 = vmatprep.subr.bf16.mxu0 0
  %96 = vmatpush1.bf16.xpose.msra.mxu0 0
  %97 = vmatprep.subr.bf16.mxu0 0
  %98 = vmatpush1.bf16.xpose.msra.mxu0 0
  %99 = vmatprep.subr.bf16.mxu0 0
  %100 = vmatpush1.bf16.xpose.msra.mxu0 0
  %101 = vmatprep.subr.bf16.mxu0 0
  %102 = vmatpush1.bf16.xpose.msra.mxu0 0
  %103 = vmatprep.subr.bf16.mxu0 0
  %104 = vmatpush1.bf16.xpose.msra.mxu0 0
  %105 = vmatprep.subr.bf16.mxu0 0
  %106 = vmatpush1.bf16.xpose.msra.mxu0 0
  %107 = vmatprep.subr.bf16.mxu0 0
  %108 = vmatpush1.bf16.xpose.msra.mxu0 0
  %109 = vmatprep.subr.bf16.mxu0 0
  %110 = vmatpush1.bf16.xpose.msra.mxu0 0
  %111 = vmatprep.mubr.bf16.mxu0 0
  %112 = vmatmul.mubr.bf16.gmra.mrb[0].mxu0 %v74
  %v113 = vpop.f32.mrb[0].mxu0
  %v114 = vadd.f32 0.0, %v113
  %v115 = vpop.f32.mrb[0].mxu0
  %v116 = vpop.f32.mrb[0].mxu0
  %v117 = vpop.f32.mrb[0].mxu0
  %118 = vdwg.mxu0
  %v119 = vlaneseq
  %v120 = vand.u32 %v119, 127
  %v122 = vunpack.c.l.s4 1966171168
  %v123 = vunpack.c.0.s8 %v122
  %v124 = vlaneseq
  %v125 = vshrl.u32 %v124, 7
  %v126 = vsub.s32 %v123, %v125
  %v127 = vrot.slane %v25, %v126
  %v128 = vcombine.high %v127, %v127
  %v130 = vunpack.c.l.s4 1966171168
  %v131 = vunpack.c.0.s8 %v130
  %v132 = vlaneseq
  %v133 = vshrl.u32 %v132, 7
  %v134 = vsub.s32 %v131, %v133
  %v135 = vrot.slane %v127, %v134
  %v137 = vunpack.c.l.s4 1966171168
  %v138 = vunpack.c.0.s8 %v137
  %v139 = vlaneseq
  %v140 = vshrl.u32 %v139, 7
  %v141 = vsub.s32 %v138, %v140
  %v142 = vrot.slane %v128, %v141
  %v143 = vlaneseq
  %v144 = vshrl.u32 %v143, 7
  %v145 = vsub.s32 0, %v144
  %v146 = vrot.slane %v135, %v145
  %v147 = vlaneseq
  %v148 = vshrl.u32 %v147, 7
  %v149 = vsub.s32 0, %v148
  %v150 = vrot.slane %v142, %v149
  %151 = vset.pattern.permute.xlu0 0
  %152 = vperm.xlu0 %151, %v146
  %v153 = vpop.permute.xlu0 %152
  %154 = vset.pattern.permute.xlu0 0
  %155 = vperm.xlu0 %154, %v150
  %v156 = vpop.permute.xlu0 %155
  %vm157 = vcmp.lt.s32.totalorder %v120, %v153
  %vm158 = vcmp.lt.s32.totalorder %v120, %v156
  %v159 = vsel %vm157, %v68, -1e+30
  %v160 = vsel %vm158, %v114, -1e+30
  %vm161 = vcmask 64512
  %v162 = vsel %vm161, %v159, -inf
  %163 = vmax.xlane.f32.xlu0 %v162
  %v164 = vpop.xlane.xlu0 %163
  %v165 = vsel %vm161, %v160, -inf
  %166 = vmax.xlane.f32.xlu0 %v165
  %v167 = vpop.xlane.xlu0 %166
  %v168 = vsub.f32 %v159, %v164
  %v169 = vsub.f32 %v160, %v167
  %v170 = vmul.f32 %v168, 1.442695
  %v171 = vpow.pop %v170
  %v172 = vmul.f32 %v169, 1.442695
  %v173 = vpow.pop %v172
  %v174 = vsel %vm161, %v171, 0.0
  %175 = vadd.xlane.f32.xlu0 %v174
  %v176 = vpop.xlane.xlu0 %175
  %v177 = vsel %vm161, %v173, 0.0
  %178 = vadd.xlane.f32.xlu0 %v177
  %v179 = vpop.xlane.xlu0 %178
  %v180 = vrcp.pop %v176
  %v181 = vrcp.pop %v179
  %v182 = vmul.f32 %v171, %v180
  %v183 = vmul.f32 %v173, %v181
  %v184 = vpack.c.bf16 %v182, %v182
  %v185 = vpack.c.bf16 %v183, %v183
  %v187 = vsel %vm161, %v184, 0
  %vm189 = vcmask 1043456
  %v190 = vsel %vm189, %v22, 0
  %192 = vmatprep.subr.bf16.mxu0 0
  %193 = vmatpush1.bf16.msra.mxu0 %v190
  %194 = vmatprep.subr.bf16.mxu0 0
  %195 = vmatpush1.bf16.msra.mxu0 0
  %196 = vmatprep.subr.bf16.mxu0 0
  %197 = vmatpush1.bf16.msra.mxu0 0
  %198 = vmatprep.subr.bf16.mxu0 0
  %199 = vmatpush1.bf16.msra.mxu0 0
  %200 = vmatprep.subr.bf16.mxu0 0
  %201 = vmatpush1.bf16.msra.mxu0 0
  %202 = vmatprep.subr.bf16.mxu0 0
  %203 = vmatpush1.bf16.msra.mxu0 0
  %204 = vmatprep.subr.bf16.mxu0 0
  %205 = vmatpush1.bf16.msra.mxu0 0
  %206 = vmatprep.subr.bf16.mxu0 0
  %207 = vmatpush1.bf16.msra.mxu0 0
  %208 = vmatprep.subr.bf16.mxu0 0
  %209 = vmatpush1.bf16.msra.mxu0 0
  %210 = vmatprep.subr.bf16.mxu0 0
  %211 = vmatpush1.bf16.msra.mxu0 0
  %212 = vmatprep.subr.bf16.mxu0 0
  %213 = vmatpush1.bf16.msra.mxu0 0
  %214 = vmatprep.subr.bf16.mxu0 0
  %215 = vmatpush1.bf16.msra.mxu0 0
  %216 = vmatprep.subr.bf16.mxu0 0
  %217 = vmatpush1.bf16.msra.mxu0 0
  %218 = vmatprep.subr.bf16.mxu0 0
  %219 = vmatpush1.bf16.msra.mxu0 0
  %220 = vmatprep.subr.bf16.mxu0 0
  %221 = vmatpush1.bf16.msra.mxu0 0
  %222 = vmatprep.subr.bf16.mxu0 0
  %223 = vmatpush1.bf16.msra.mxu0 0
  %224 = vmatprep.mubr.bf16.mxu0 0
  %225 = vmatmul.mubr.bf16.gmra.mrb[0].mxu0 %v187
  %v226 = vpop.f32.mrb[0].mxu0
  %v227 = vadd.f32 0.0, %v226
  %v228 = vpop.f32.mrb[0].mxu0
  %v229 = vpop.f32.mrb[0].mxu0
  %v230 = vpop.f32.mrb[0].mxu0
  %231 = vdwg.mxu0
  %v233 = vsel %vm161, %v185, 0
  %v235 = vsel %vm189, %v23, 0
  %237 = vmatprep.subr.bf16.mxu0 0
  %238 = vmatpush1.bf16.msra.mxu0 %v235
  %239 = vmatprep.subr.bf16.mxu0 0
  %240 = vmatpush1.bf16.msra.mxu0 0
  %241 = vmatprep.subr.bf16.mxu0 0
  %242 = vmatpush1.bf16.msra.mxu0 0
  %243 = vmatprep.subr.bf16.mxu0 0
  %244 = vmatpush1.bf16.msra.mxu0 0
  %245 = vmatprep.subr.bf16.mxu0 0
  %246 = vmatpush1.bf16.msra.mxu0 0
  %247 = vmatprep.subr.bf16.mxu0 0
  %248 = vmatpush1.bf16.msra.mxu0 0
  %249 = vmatprep.subr.bf16.mxu0 0
  %250 = vmatpush1.bf16.msra.mxu0 0
  %251 = vmatprep.subr.bf16.mxu0 0
  %252 = vmatpush1.bf16.msra.mxu0 0
  %253 = vmatprep.subr.bf16.mxu0 0
  %254 = vmatpush1.bf16.msra.mxu0 0
  %255 = vmatprep.subr.bf16.mxu0 0
  %256 = vmatpush1.bf16.msra.mxu0 0
  %257 = vmatprep.subr.bf16.mxu0 0
  %258 = vmatpush1.bf16.msra.mxu0 0
  %259 = vmatprep.subr.bf16.mxu0 0
  %260 = vmatpush1.bf16.msra.mxu0 0
  %261 = vmatprep.subr.bf16.mxu0 0
  %262 = vmatpush1.bf16.msra.mxu0 0
  %263 = vmatprep.subr.bf16.mxu0 0
  %264 = vmatpush1.bf16.msra.mxu0 0
  %265 = vmatprep.subr.bf16.mxu0 0
  %266 = vmatpush1.bf16.msra.mxu0 0
  %267 = vmatprep.subr.bf16.mxu0 0
  %268 = vmatpush1.bf16.msra.mxu0 0
  %269 = vmatprep.mubr.bf16.mxu0 0
  %270 = vmatmul.mubr.bf16.gmra.mrb[0].mxu0 %v233
  %v271 = vpop.f32.mrb[0].mxu0
  %v272 = vadd.f32 0.0, %v271
  %v273 = vpop.f32.mrb[0].mxu0
  %v274 = vpop.f32.mrb[0].mxu0
  %v275 = vpop.f32.mrb[0].mxu0
  %276 = vdwg.mxu0
  %v277 = vpack.c.bf16 %v227, %v227
  %v278 = vpack.c.bf16 %v272, %v272
  %vm279 = vcmask 519168
  %280 = vst.msk [vmem:[%s4] sm:$0xf] %vm279, %v277
  %281 = vst.msk [vmem:[%s4 + $0x4] sm:$0xf] %vm279, %v278
  %282 = vmatprep.subr.bf16.mxu0 0
  %283 = vmatpush1.bf16.xpose.msra.mxu0 %v28
  %284 = vmatprep.subr.bf16.mxu0 0
  %285 = vmatpush1.bf16.xpose.msra.mxu0 0
  %286 = vmatprep.subr.bf16.mxu0 0
  %287 = vmatpush1.bf16.xpose.msra.mxu0 0
  %288 = vmatprep.subr.bf16.mxu0 0
  %289 = vmatpush1.bf16.xpose.msra.mxu0 0
  %290 = vmatprep.subr.bf16.mxu0 0
  %291 = vmatpush1.bf16.xpose.msra.mxu0 0
  %292 = vmatprep.subr.bf16.mxu0 0
  %293 = vmatpush1.bf16.xpose.msra.mxu0 0
  %294 = vmatprep.subr.bf16.mxu0 0
  %295 = vmatpush1.bf16.xpose.msra.mxu0 0
  %296 = vmatprep.subr.bf16.mxu0 0
  %297 = vmatpush1.bf16.xpose.msra.mxu0 0
  %298 = vmatprep.subr.bf16.mxu0 0
  %299 = vmatpush1.bf16.xpose.msra.mxu0 0
  %300 = vmatprep.subr.bf16.mxu0 0
  %301 = vmatpush1.bf16.xpose.msra.mxu0 0
  %302 = vmatprep.subr.bf16.mxu0 0
  %303 = vmatpush1.bf16.xpose.msra.mxu0 0
  %304 = vmatprep.subr.bf16.mxu0 0
  %305 = vmatpush1.bf16.xpose.msra.mxu0 0
  %306 = vmatprep.subr.bf16.mxu0 0
  %307 = vmatpush1.bf16.xpose.msra.mxu0 0
  %308 = vmatprep.subr.bf16.mxu0 0
  %309 = vmatpush1.bf16.xpose.msra.mxu0 0
  %310 = vmatprep.subr.bf16.mxu0 0
  %311 = vmatpush1.bf16.xpose.msra.mxu0 0
  %312 = vmatprep.subr.bf16.mxu0 0
  %313 = vmatpush1.bf16.xpose.msra.mxu0 0
  %314 = vmatprep.mubr.bf16.mxu0 0
  %315 = vmatmul.mubr.bf16.gmra.mrb[0].mxu0 %v31
  %v316 = vpop.f32.mrb[0].mxu0
  %v317 = vadd.f32 0.0, %v316
  %v318 = vpop.f32.mrb[0].mxu0
  %v319 = vpop.f32.mrb[0].mxu0
  %v320 = vpop.f32.mrb[0].mxu0
  %321 = vdwg.mxu0
  %322 = vmatprep.subr.bf16.mxu0 0
  %323 = vmatpush1.bf16.xpose.msra.mxu0 %v74
  %324 = vmatprep.subr.bf16.mxu0 0
  %325 = vmatpush1.bf16.xpose.msra.mxu0 0
  %326 = vmatprep.subr.bf16.mxu0 0
  %327 = vmatpush1.bf16.xpose.msra.mxu0 0
  %328 = vmatprep.subr.bf16.mxu0 0
  %329 = vmatpush1.bf16.xpose.msra.mxu0 0
  %330 = vmatprep.subr.bf16.mxu0 0
  %331 = vmatpush1.bf16.xpose.msra.mxu0 0
  %332 = vmatprep.subr.bf16.mxu0 0
  %333 = vmatpush1.bf16.xpose.msra.mxu0 0
  %334 = vmatprep.subr.bf16.mxu0 0
  %335 = vmatpush1.bf16.xpose.msra.mxu0 0
  %336 = vmatprep.subr.bf16.mxu0 0
  %337 = vmatpush1.bf16.xpose.msra.mxu0 0
  %338 = vmatprep.subr.bf16.mxu0 0
  %339 = vmatpush1.bf16.xpose.msra.mxu0 0
  %340 = vmatprep.subr.bf16.mxu0 0
  %341 = vmatpush1.bf16.xpose.msra.mxu0 0
  %342 = vmatprep.subr.bf16.mxu0 0
  %343 = vmatpush1.bf16.xpose.msra.mxu0 0
  %344 = vmatprep.subr.bf16.mxu0 0
  %345 = vmatpush1.bf16.xpose.msra.mxu0 0
  %346 = vmatprep.subr.bf16.mxu0 0
  %347 = vmatpush1.bf16.xpose.msra.mxu0 0
  %348 = vmatprep.subr.bf16.mxu0 0
  %349 = vmatpush1.bf16.xpose.msra.mxu0 0
  %350 = vmatprep.subr.bf16.mxu0 0
  %351 = vmatpush1.bf16.xpose.msra.mxu0 0
  %352 = vmatprep.subr.bf16.mxu0 0
  %353 = vmatpush1.bf16.xpose.msra.mxu0 0
  %354 = vmatprep.mubr.bf16.mxu0 0
  %355 = vmatmul.mubr.bf16.gmra.mrb[0].mxu0 %v77
  %v356 = vpop.f32.mrb[0].mxu0
  %v357 = vadd.f32 0.0, %v356
  %v358 = vpop.f32.mrb[0].mxu0
  %v359 = vpop.f32.mrb[0].mxu0
  %v360 = vpop.f32.mrb[0].mxu0
  %361 = vdwg.mxu0
  %v363 = vunpack.c.l.s4 1966171168
  %v364 = vunpack.c.0.s8 %v363
  %v365 = vlaneseq
  %v366 = vshrl.u32 %v365, 7
  %v367 = vsub.s32 %v364, %v366
  %v368 = vrot.slane %v24, %v367
  %v369 = vcombine.high %v368, %v368
  %v371 = vunpack.c.l.s4 1966171168
  %v372 = vunpack.c.0.s8 %v371
  %v373 = vlaneseq
  %v374 = vshrl.u32 %v373, 7
  %v375 = vsub.s32 %v372, %v374
  %v376 = vrot.slane %v368, %v375
  %v378 = vunpack.c.l.s4 1966171168
  %v379 = vunpack.c.0.s8 %v378
  %v380 = vlaneseq
  %v381 = vshrl.u32 %v380, 7
  %v382 = vsub.s32 %v379, %v381
  %v383 = vrot.slane %v369, %v382
  %v384 = vlaneseq
  %v385 = vshrl.u32 %v384, 7
  %v386 = vsub.s32 0, %v385
  %v387 = vrot.slane %v376, %v386
  %v388 = vlaneseq
  %v389 = vshrl.u32 %v388, 7
  %v390 = vsub.s32 0, %v389
  %v391 = vrot.slane %v383, %v390
  %392 = vset.pattern.permute.xlu0 0
  %393 = vperm.xlu0 %392, %v387
  %v394 = vpop.permute.xlu0 %393
  %395 = vset.pattern.permute.xlu0 0
  %396 = vperm.xlu0 %395, %v391
  %v397 = vpop.permute.xlu0 %396
  %vm398 = vcmp.lt.s32.totalorder %v120, %v394
  %vm399 = vcmp.lt.s32.totalorder %v120, %v397
  %v400 = vsel %vm398, %v317, -1e+30
  %v401 = vsel %vm399, %v357, -1e+30
  %v402 = vsel %vm161, %v400, -inf
  %403 = vmax.xlane.f32.xlu0 %v402
  %v404 = vpop.xlane.xlu0 %403
  %v405 = vsel %vm161, %v401, -inf
  %406 = vmax.xlane.f32.xlu0 %v405
  %v407 = vpop.xlane.xlu0 %406
  %v408 = vsub.f32 %v400, %v404
  %v409 = vsub.f32 %v401, %v407
  %v410 = vmul.f32 %v408, 1.442695
  %v411 = vpow.pop %v410
  %v412 = vmul.f32 %v409, 1.442695
  %v413 = vpow.pop %v412
  %v414 = vsel %vm161, %v411, 0.0
  %415 = vadd.xlane.f32.xlu0 %v414
  %v416 = vpop.xlane.xlu0 %415
  %v417 = vsel %vm161, %v413, 0.0
  %418 = vadd.xlane.f32.xlu0 %v417
  %v419 = vpop.xlane.xlu0 %418
  %v420 = vrcp.pop %v416
  %v421 = vrcp.pop %v419
  %v422 = vmul.f32 %v411, %v420
  %v423 = vmul.f32 %v413, %v421
  %v424 = vpack.c.bf16 %v422, %v422
  %v425 = vpack.c.bf16 %v423, %v423
  %v427 = vsel %vm161, %v424, 0
  %v429 = vsel %vm189, %v20, 0
  %431 = vmatprep.subr.bf16.mxu0 0
  %432 = vmatpush1.bf16.msra.mxu0 %v429
  %433 = vmatprep.subr.bf16.mxu0 0
  %434 = vmatpush1.bf16.msra.mxu0 0
  %435 = vmatprep.subr.bf16.mxu0 0
  %436 = vmatpush1.bf16.msra.mxu0 0
  %437 = vmatprep.subr.bf16.mxu0 0
  %438 = vmatpush1.bf16.msra.mxu0 0
  %439 = vmatprep.subr.bf16.mxu0 0
  %440 = vmatpush1.bf16.msra.mxu0 0
  %441 = vmatprep.subr.bf16.mxu0 0
  %442 = vmatpush1.bf16.msra.mxu0 0
  %443 = vmatprep.subr.bf16.mxu0 0
  %444 = vmatpush1.bf16.msra.mxu0 0
  %445 = vmatprep.subr.bf16.mxu0 0
  %446 = vmatpush1.bf16.msra.mxu0 0
  %447 = vmatprep.subr.bf16.mxu0 0
  %448 = vmatpush1.bf16.msra.mxu0 0
  %449 = vmatprep.subr.bf16.mxu0 0
  %450 = vmatpush1.bf16.msra.mxu0 0
  %451 = vmatprep.subr.bf16.mxu0 0
  %452 = vmatpush1.bf16.msra.mxu0 0
  %453 = vmatprep.subr.bf16.mxu0 0
  %454 = vmatpush1.bf16.msra.mxu0 0
  %455 = vmatprep.subr.bf16.mxu0 0
  %456 = vmatpush1.bf16.msra.mxu0 0
  %457 = vmatprep.subr.bf16.mxu0 0
  %458 = vmatpush1.bf16.msra.mxu0 0
  %459 = vmatprep.subr.bf16.mxu0 0
  %460 = vmatpush1.bf16.msra.mxu0 0
  %461 = vmatprep.subr.bf16.mxu0 0
  %462 = vmatpush1.bf16.msra.mxu0 0
  %463 = vmatprep.mubr.bf16.mxu0 0
  %464 = vmatmul.mubr.bf16.gmra.mrb[0].mxu0 %v427
  %v465 = vpop.f32.mrb[0].mxu0
  %v466 = vadd.f32 0.0, %v465
  %v467 = vpop.f32.mrb[0].mxu0
  %v468 = vpop.f32.mrb[0].mxu0
  %v469 = vpop.f32.mrb[0].mxu0
  %470 = vdwg.mxu0
  %v472 = vsel %vm161, %v425, 0
  %v474 = vsel %vm189, %v21, 0
  %476 = vmatprep.subr.bf16.mxu0 0
  %477 = vmatpush1.bf16.msra.mxu0 %v474
  %478 = vmatprep.subr.bf16.mxu0 0
  %479 = vmatpush1.bf16.msra.mxu0 0
  %480 = vmatprep.subr.bf16.mxu0 0
  %481 = vmatpush1.bf16.msra.mxu0 0
  %482 = vmatprep.subr.bf16.mxu0 0
  %483 = vmatpush1.bf16.msra.mxu0 0
  %484 = vmatprep.subr.bf16.mxu0 0
  %485 = vmatpush1.bf16.msra.mxu0 0
  %486 = vmatprep.subr.bf16.mxu0 0
  %487 = vmatpush1.bf16.msra.mxu0 0
  %488 = vmatprep.subr.bf16.mxu0 0
  %489 = vmatpush1.bf16.msra.mxu0 0
  %490 = vmatprep.subr.bf16.mxu0 0
  %491 = vmatpush1.bf16.msra.mxu0 0
  %492 = vmatprep.subr.bf16.mxu0 0
  %493 = vmatpush1.bf16.msra.mxu0 0
  %494 = vmatprep.subr.bf16.mxu0 0
  %495 = vmatpush1.bf16.msra.mxu0 0
  %496 = vmatprep.subr.bf16.mxu0 0
  %497 = vmatpush1.bf16.msra.mxu0 0
  %498 = vmatprep.subr.bf16.mxu0 0
  %499 = vmatpush1.bf16.msra.mxu0 0
  %500 = vmatprep.subr.bf16.mxu0 0
  %501 = vmatpush1.bf16.msra.mxu0 0
  %502 = vmatprep.subr.bf16.mxu0 0
  %503 = vmatpush1.bf16.msra.mxu0 0
  %504 = vmatprep.subr.bf16.mxu0 0
  %505 = vmatpush1.bf16.msra.mxu0 0
  %506 = vmatprep.subr.bf16.mxu0 0
  %507 = vmatpush1.bf16.msra.mxu0 0
  %508 = vmatprep.mubr.bf16.mxu0 0
  %509 = vmatmul.mubr.bf16.gmra.mrb[0].mxu0 %v472
  %v510 = vpop.f32.mrb[0].mxu0
  %v511 = vadd.f32 0.0, %v510
  %v512 = vpop.f32.mrb[0].mxu0
  %v513 = vpop.f32.mrb[0].mxu0
  %v514 = vpop.f32.mrb[0].mxu0
  %515 = vdwg.mxu0
  %v516 = vpack.c.bf16 %v466, %v466
  %v517 = vpack.c.bf16 %v511, %v511
  %518 = vst.msk [vmem:[%s5] sm:$0xf] %vm279, %v516
  %519 = vst.msk [vmem:[%s5 + $0x4] sm:$0xf] %vm279, %v517
  // Predicated region
  $region18: #{model_forward.12} parent=0 // pred_check
    _
  $region19: #{model_forward.12} parent=0 // pred_check_branch
    %521 = sbr.rel (0) target = $region21
  $region20: #{model_forward.12} parent=0 // pred_region
    _
  $region21: #{model_forward.12} parent=0 // pred_fallthru
    _
  // Predicated region
  $region22: #{model_forward.12} parent=0 // pred_check
    _
  $region23: #{model_forward.12} parent=0 // pred_check_branch
    %523 = sbr.rel (0) target = $region25
  $region24: #{model_forward.12} parent=0 // pred_region
    _
  $region25: #{model_forward.12} parent=0 // pred_fallthru
    _
  // Predicated region
  $region26: #{model_forward.12} parent=0 // pred_check
    _
  $region27: #{model_forward.12} parent=0 // pred_check_branch
    %525 = sbr.rel (0) target = $region29
  $region28: #{model_forward.12} parent=0 // pred_region
    _
  $region29: #{model_forward.12} parent=0 // pred_fallthru
    _
  // Predicated region
  $region30: #{model_forward.12} parent=0 // pred_check
    _
  $region31: #{model_forward.12} parent=0 // pred_check_branch
    %527 = sbr.rel (0) target = $region33
  $region32: #{model_forward.12} parent=0 // pred_region
    _
  $region33: #{model_forward.12} parent=0 // pred_fallthru
    _

// kernel: model_forward.14
$region0: #{model_forward.14}
  #allocation0 [shape = 'u32[]', space=smem, size = 0x4, offset = 0x4, fixed_abs, tag = 'smem constant byte address 0x4 - core index']
  #allocation1 [shape = 'u32[144,128]{1,0:T(1,128)}', space=vmem, size = 0x12000, scoped, tag = 'internal scratch']
  %s0 = inlined_call_operand.vmem [shape: bf16[32,80], index: 0, kind: input, shape index: {}]
  %s1 = inlined_call_operand.vmem [shape: bf16[80,256], index: 1, kind: input, shape index: {}]
  %s2 = inlined_call_operand.vmem [shape: f32[1,256], index: 2, kind: input, shape index: {}]
  %s3 = inlined_call_operand.vmem [shape: bf16[32,256], index: 3, kind: output, shape index: {}]
  %s4 = sld [smem:[#allocation0]]
  $region22: #{model_forward.14} parent=0
    _
  %s6 = ssub.s32 1, %s4
  %s7 = scalar_select 0, %s6, %s4
  // Predicated region
  $region2: #{model_forward.14} parent=0 // pred_check
    _
  $region3: #{model_forward.14} parent=0 // pred_check_branch
    %9 = sbr.rel (0) target = $region5
  $region4: #{model_forward.14} parent=0 // pred_region
    _
  $region5: #{model_forward.14} parent=0 // pred_fallthru
    _
  // Predicated region
  $region6: #{model_forward.14} parent=0 // pred_check
    _
  $region7: #{model_forward.14} parent=0 // pred_check_branch
    %11 = sbr.rel (0) target = $region9
  $region8: #{model_forward.14} parent=0 // pred_region
    _
  $region9: #{model_forward.14} parent=0 // pred_fallthru
    _
  // Predicated region
  $region10: #{model_forward.14} parent=0 // pred_check
    _
  $region11: #{model_forward.14} parent=0 // pred_check_branch
    %13 = sbr.rel (0) target = $region13
  $region12: #{model_forward.14} parent=0 // pred_region
    _
  $region13: #{model_forward.14} parent=0 // pred_fallthru
    _
  %v15 = vld [vmem:[%s0] sm:$0xf]
  %v16 = vld [vmem:[%s0 + $0x4] sm:$0xf]
  %v17 = vld [vmem:[%s0 + $0x8] sm:$0xf]
  %v18 = vld [vmem:[%s0 + $0xc] sm:$0xf]
  %v19 = vld [vmem:[%s1] sm:$0xff]
  %v20 = vld [vmem:[%s1 + $0x8] sm:$0xff]
  %v21 = vld [vmem:[%s1 + $0x10] sm:$0xff]
  %v22 = vld [vmem:[%s1 + $0x18] sm:$0xff]
  %v23 = vld [vmem:[%s1 + $0x20] sm:$0xff]
  %v24 = vld [vmem:[%s1 + $0x28] sm:$0xff]
  %v25 = vld [vmem:[%s1 + $0x30] sm:$0xff]
  %v26 = vld [vmem:[%s1 + $0x38] sm:$0xff]
  %v27 = vld [vmem:[%s1 + $0x40] sm:$0xff]
  %v28 = vld [vmem:[%s1 + $0x48] sm:$0xff]
  %v29 = vld [vmem:[%s2] sm:$0x3]
  %v31 = vlaneseq
  %v32 = vshrl.u32 %v31, 7
  %v33 = vsub.s32 0, %v32
  %v34 = vrot.slane %v29, %v33
  %v35 = vlaneseq
  %v36 = vshrl.u32 %v35, 7
  %v37 = vsub.s32 1, %v36
  %v38 = vrot.slane %v29, %v37
  %v45 = vunpack.c.l.b16 %v15
  %v46 = vunpack.c.l.b16 %v16
  %v47 = vunpack.c.l.b16 %v17
  %v48 = vunpack.c.l.b16 %v18
  %v49 = vpack.c.b16 %v46, %v45
  %v50 = vpack.c.b16 %v48, %v47
  %v61 = vunpack.c.l.b16 %v19
  %v62 = vunpack.c.h.b16 %v19
  %v63 = vunpack.c.l.b16 %v20
  %v64 = vunpack.c.h.b16 %v20
  %v65 = vunpack.c.l.b16 %v21
  %v66 = vunpack.c.h.b16 %v21
  %v67 = vunpack.c.l.b16 %v22
  %v68 = vunpack.c.h.b16 %v22
  %v69 = vunpack.c.l.b16 %v23
  %v70 = vunpack.c.h.b16 %v23
  %v71 = vunpack.c.l.b16 %v24
  %v72 = vunpack.c.h.b16 %v24
  %v73 = vunpack.c.l.b16 %v25
  %v74 = vunpack.c.h.b16 %v25
  %v75 = vunpack.c.l.b16 %v26
  %v76 = vunpack.c.h.b16 %v26
  %v77 = vunpack.c.l.b16 %v27
  %v78 = vunpack.c.h.b16 %v27
  %v79 = vunpack.c.l.b16 %v28
  %v80 = vunpack.c.h.b16 %v28
  %v81 = vpack.c.b16 %v63, %v61
  %v82 = vpack.c.b16 %v64, %v62
  %v83 = vpack.c.b16 %v67, %v65
  %v84 = vpack.c.b16 %v68, %v66
  %v85 = vpack.c.b16 %v71, %v69
  %v86 = vpack.c.b16 %v72, %v70
  %v87 = vpack.c.b16 %v75, %v73
  %v88 = vpack.c.b16 %v76, %v74
  %v89 = vpack.c.b16 %v79, %v77
  %v90 = vpack.c.b16 %v80, %v78
  %vm101 = vcmask 654336
  %v103 = vsel %vm101, %v49, 0
  %v106 = vsel %vm101, %v50, 0
  %108 = vmatprep.subr.bf16.mxu0 %v82
  %109 = vmatpush1.bf16.msra.mxu0 %v81
  %110 = vmatprep.subr.bf16.mxu0 %v84
  %111 = vmatpush1.bf16.msra.mxu0 %v83
  %112 = vmatprep.subr.bf16.mxu0 %v86
  %113 = vmatpush1.bf16.msra.mxu0 %v85
  %114 = vmatprep.subr.bf16.mxu0 %v88
  %115 = vmatpush1.bf16.msra.mxu0 %v87
  %116 = vmatprep.subr.bf16.mxu0 %v90
  %117 = vmatpush1.bf16.msra.mxu0 %v89
  %118 = vmatprep.subr.bf16.mxu0 0
  %119 = vmatpush1.bf16.msra.mxu0 0
  %120 = vmatprep.subr.bf16.mxu0 0
  %121 = vmatpush1.bf16.msra.mxu0 0
  %122 = vmatprep.subr.bf16.mxu0 0
  %123 = vmatpush1.bf16.msra.mxu0 0
  %124 = vmatprep.subr.bf16.mxu0 0
  %125 = vmatpush1.bf16.msra.mxu0 0
  %126 = vmatprep.subr.bf16.mxu0 0
  %127 = vmatpush1.bf16.msra.mxu0 0
  %128 = vmatprep.subr.bf16.mxu0 0
  %129 = vmatpush1.bf16.msra.mxu0 0
  %130 = vmatprep.subr.bf16.mxu0 0
  %131 = vmatpush1.bf16.msra.mxu0 0
  %132 = vmatprep.subr.bf16.mxu0 0
  %133 = vmatpush1.bf16.msra.mxu0 0
  %134 = vmatprep.subr.bf16.mxu0 0
  %135 = vmatpush1.bf16.msra.mxu0 0
  %136 = vmatprep.subr.bf16.mxu0 0
  %137 = vmatpush1.bf16.msra.mxu0 0
  %138 = vmatprep.subr.bf16.mxu0 0
  %139 = vmatpush1.bf16.msra.mxu0 0
  %140 = vmatprep.mubr.bf16.mxu0 0
  %141 = vmatmul.mubr.bf16.gmra.mrb[0].mxu0 %v103
  %v142 = vpop.f32.mrb[0].mxu0
  %v143 = vadd.f32 %v34, %v142
  %v144 = vpop.f32.mrb[0].mxu0
  %v145 = vadd.f32 %v38, %v144
  %v146 = vpop.f32.mrb[0].mxu0
  %v147 = vadd.f32 %v34, %v146
  %v148 = vpop.f32.mrb[0].mxu0
  %v149 = vadd.f32 %v38, %v148
  %150 = vmatprep.mubr.bf16.mxu0 0
  %151 = vmatmul.mubr.bf16.gmra.mrb[0].mxu0 %v106
  %v152 = vpop.f32.mrb[0].mxu0
  %v153 = vadd.f32 %v34, %v152
  %v154 = vpop.f32.mrb[0].mxu0
  %v155 = vadd.f32 %v38, %v154
  %v156 = vpop.f32.mrb[0].mxu0
  %v157 = vadd.f32 %v34, %v156
  %v158 = vpop.f32.mrb[0].mxu0
  %v159 = vadd.f32 %v38, %v158
  %160 = vdwg.mxu0
  %v161 = vpack.c.bf16 %v147, %v143
  %v162 = vpack.c.bf16 %v149, %v145
  %v163 = vpack.c.bf16 %v157, %v153
  %v164 = vpack.c.bf16 %v159, %v155
  %v169 = vunpack.c.l.b16 %v161
  %v170 = vunpack.c.l.b16 %v162
  %v171 = vunpack.c.h.b16 %v161
  %v172 = vunpack.c.h.b16 %v162
  %v173 = vunpack.c.l.b16 %v163
  %v174 = vunpack.c.l.b16 %v164
  %v175 = vunpack.c.h.b16 %v163
  %v176 = vunpack.c.h.b16 %v164
  %v177 = vpack.c.b16 %v170, %v169
  %v178 = vpack.c.b16 %v172, %v171
  %v179 = vpack.c.b16 %v174, %v173
  %v180 = vpack.c.b16 %v176, %v175
  %185 = vst [vmem:[%s3] sm:$0xff] %v177
  %186 = vst [vmem:[%s3 + $0x8] sm:$0xff] %v178
  %187 = vst [vmem:[%s3 + $0x10] sm:$0xff] %v179
  %188 = vst [vmem:[%s3 + $0x18] sm:$0xff] %v180
  // Predicated region
  $region14: #{model_forward.14} parent=0 // pred_check
    _
  $region15: #{model_forward.14} parent=0 // pred_check_branch
    %190 = sbr.rel (0) target = $region17
  $region16: #{model_forward.14} parent=0 // pred_region
    _
  $region17: #{model_forward.14} parent=0 // pred_fallthru
    _
  // Predicated region
  $region18: #{model_forward.14} parent=0 // pred_check
    _
  $region19: #{model_forward.14} parent=0 // pred_check_branch
    %192 = sbr.rel (0) target = $region21
  $region20: #{model_forward.14} parent=0 // pred_region
    _
  $region21: #{model_forward.14} parent=0 // pred_fallthru
    _

// kernel: model_forward.17
$region0: #{model_forward.17}
  #allocation0 [shape = 'u32[]', space=smem, size = 0x4, offset = 0x4, fixed_abs, tag = 'smem constant byte address 0x4 - core index']
  #allocation1 [shape = 'u32[144,128]{1,0:T(1,128)}', space=vmem, size = 0x12000, scoped, tag = 'internal scratch']
  %s0 = inlined_call_operand.vmem [shape: f32[2,64], index: 0, kind: input, shape index: {}]
  %s1 = inlined_call_operand.vmem [shape: f32[2,64], index: 1, kind: input, shape index: {}]
  %s2 = inlined_call_operand.vmem [shape: bf16[256,32], index: 2, kind: input, shape index: {}]
  %s3 = inlined_call_operand.vmem [shape: f32[1,32], index: 3, kind: input, shape index: {}]
  %s4 = inlined_call_operand.vmem [shape: bf16[32,3], index: 4, kind: input, shape index: {}]
  %s5 = inlined_call_operand.vmem [shape: f32[1,3], index: 5, kind: input, shape index: {}]
  %s6 = inlined_call_operand.hbm [shape: f32[2,3], index: 6, kind: output, shape index: {}]
  %s7 = sld [smem:[#allocation0]]
  $region34: #{model_forward.17} parent=0
    _
  %s9 = ssub.s32 1, %s7
  %s10 = scalar_select 0, %s9, %s7
  $region1: #{model_forward.17} parent=0
    #allocation2 [shape = 'u8[1024]{0}', space=vmem, size = 0x400, scoped, tag = 'output window, operand 0, single buffered']
    #allocation3 [shape = 's32[1]{0}', space=sflag, size = 0x4, scoped, tag = 'scoped memory for model_forward.17']
    %11 = vsyncpa [#allocation3], 0
    // Predicated region
    $region2: #{model_forward.17} parent=1 // pred_check
      _
    $region3: #{model_forward.17} parent=1 // pred_check_branch
      %13 = sbr.rel (0) target = $region5
    $region4: #{model_forward.17} parent=1 // pred_region
      _
    $region5: #{model_forward.17} parent=1 // pred_fallthru
      _
    // Predicated region
    $region6: #{model_forward.17} parent=1 // pred_check
      _
    $region7: #{model_forward.17} parent=1 // pred_check_branch
      %15 = sbr.rel (0) target = $region9
    $region8: #{model_forward.17} parent=1 // pred_region
      _
    $region9: #{model_forward.17} parent=1 // pred_fallthru
      _
    // Predicated region
    $region10: #{model_forward.17} parent=1 // pred_check
      _
    $region11: #{model_forward.17} parent=1 // pred_check_branch
      %17 = sbr.rel (0) target = $region13
    $region12: #{model_forward.17} parent=1 // pred_region
      _
    $region13: #{model_forward.17} parent=1 // pred_fallthru
      _
    // Predicated region
    $region14: #{model_forward.17} parent=1 // pred_check
      _
    $region15: #{model_forward.17} parent=1 // pred_check_branch
      %19 = sbr.rel (0) target = $region17
    $region16: #{model_forward.17} parent=1 // pred_region
      _
    $region17: #{model_forward.17} parent=1 // pred_fallthru
      _
    // Predicated region
    $region18: #{model_forward.17} parent=1 // pred_check
      _
    $region19: #{model_forward.17} parent=1 // pred_check_branch
      %21 = sbr.rel (0) target = $region21
    $region20: #{model_forward.17} parent=1 // pred_region
      _
    $region21: #{model_forward.17} parent=1 // pred_fallthru
      _
    // Predicated region
    $region22: #{model_forward.17} parent=1 // pred_check
      _
    $region23: #{model_forward.17} parent=1 // pred_check_branch
      %23 = sbr.rel (0) target = $region25
    $region24: #{model_forward.17} parent=1 // pred_region
      _
    $region25: #{model_forward.17} parent=1 // pred_fallthru
      _
    %v25 = vld [vmem:[%s0] sm:$0x3]
    %v26 = vld [vmem:[%s1] sm:$0x3]
    %v27 = vsub.f32 %v25, %v26
    %v28 = vand.u32 2147483647, %v27
    %v29 = vmul.f32 %v25, %v26
    %31 = vrot.lane.b32.xlu0 %v26, 64
    %v32 = vpop.permute.xlu0 %31
    %35 = vrot.lane.b32.xlu0 %v29, 64
    %v36 = vpop.permute.xlu0 %35
    %vm38 = vcmask 523264
    %v39 = vsel %vm38, %v25, %v32
    %v40 = vsel %vm38, %v28, %v36
    %v41 = vpack.c.bf16 %v39, %v39
    %v42 = vpack.c.bf16 %v40, %v40
    %v43 = vld [vmem:[%s2] sm:$0xf]
    %v44 = vld [vmem:[%s2 + $0x4] sm:$0xf]
    %v45 = vld [vmem:[%s2 + $0x8] sm:$0xf]
    %v46 = vld [vmem:[%s2 + $0xc] sm:$0xf]
    %v47 = vld [vmem:[%s2 + $0x10] sm:$0xf]
    %v48 = vld [vmem:[%s2 + $0x14] sm:$0xf]
    %v49 = vld [vmem:[%s2 + $0x18] sm:$0xf]
    %v50 = vld [vmem:[%s2 + $0x1c] sm:$0xf]
    %v51 = vld [vmem:[%s2 + $0x20] sm:$0xf]
    %v52 = vld [vmem:[%s2 + $0x24] sm:$0xf]
    %v53 = vld [vmem:[%s2 + $0x28] sm:$0xf]
    %v54 = vld [vmem:[%s2 + $0x2c] sm:$0xf]
    %v55 = vld [vmem:[%s2 + $0x30] sm:$0xf]
    %v56 = vld [vmem:[%s2 + $0x34] sm:$0xf]
    %v57 = vld [vmem:[%s2 + $0x38] sm:$0xf]
    %v58 = vld [vmem:[%s2 + $0x3c] sm:$0xf]
    %v59 = vld [vmem:[%s2 + $0x40] sm:$0xf]
    %v60 = vld [vmem:[%s2 + $0x44] sm:$0xf]
    %v61 = vld [vmem:[%s2 + $0x48] sm:$0xf]
    %v62 = vld [vmem:[%s2 + $0x4c] sm:$0xf]
    %v63 = vld [vmem:[%s2 + $0x50] sm:$0xf]
    %v64 = vld [vmem:[%s2 + $0x54] sm:$0xf]
    %v65 = vld [vmem:[%s2 + $0x58] sm:$0xf]
    %v66 = vld [vmem:[%s2 + $0x5c] sm:$0xf]
    %v67 = vld [vmem:[%s2 + $0x60] sm:$0xf]
    %v68 = vld [vmem:[%s2 + $0x64] sm:$0xf]
    %v69 = vld [vmem:[%s2 + $0x68] sm:$0xf]
    %v70 = vld [vmem:[%s2 + $0x6c] sm:$0xf]
    %v71 = vld [vmem:[%s2 + $0x70] sm:$0xf]
    %v72 = vld [vmem:[%s2 + $0x74] sm:$0xf]
    %v73 = vld [vmem:[%s2 + $0x78] sm:$0xf]
    %v74 = vld [vmem:[%s2 + $0x7c] sm:$0xf]
    %v75 = vld [vmem:[%s3] sm:$0x1]
    %v77 = vlaneseq
    %v78 = vshrl.u32 %v77, 7
    %v79 = vsub.s32 0, %v78
    %v80 = vrot.slane %v75, %v79
    %v114 = vunpack.c.l.b16 %v43
    %v115 = vunpack.c.l.b16 %v44
    %v116 = vunpack.c.l.b16 %v45
    %v117 = vunpack.c.l.b16 %v46
    %v118 = vunpack.c.l.b16 %v47
    %v119 = vunpack.c.l.b16 %v48
    %v120 = vunpack.c.l.b16 %v49
    %v121 = vunpack.c.l.b16 %v50
    %v122 = vunpack.c.l.b16 %v51
    %v123 = vunpack.c.l.b16 %v52
    %v124 = vunpack.c.l.b16 %v53
    %v125 = vunpack.c.l.b16 %v54
    %v126 = vunpack.c.l.b16 %v55
    %v127 = vunpack.c.l.b16 %v56
    %v128 = vunpack.c.l.b16 %v57
    %v129 = vunpack.c.l.b16 %v58
    %v130 = vunpack.c.l.b16 %v59
    %v131 = vunpack.c.l.b16 %v60
    %v132 = vunpack.c.l.b16 %v61
    %v133 = vunpack.c.l.b16 %v62
    %v134 = vunpack.c.l.b16 %v63
    %v135 = vunpack.c.l.b16 %v64
    %v136 = vunpack.c.l.b16 %v65
    %v137 = vunpack.c.l.b16 %v66
    %v138 = vunpack.c.l.b16 %v67
    %v139 = vunpack.c.l.b16 %v68
    %v140 = vunpack.c.l.b16 %v69
    %v141 = vunpack.c.l.b16 %v70
    %v142 = vunpack.c.l.b16 %v71
    %v143 = vunpack.c.l.b16 %v72
    %v144 = vunpack.c.l.b16 %v73
    %v145 = vunpack.c.l.b16 %v74
    %v146 = vpack.c.b16 %v115, %v114
    %v147 = vpack.c.b16 %v117, %v116
    %v148 = vpack.c.b16 %v119, %v118
    %v149 = vpack.c.b16 %v121, %v120
    %v150 = vpack.c.b16 %v123, %v122
    %v151 = vpack.c.b16 %v125, %v124
    %v152 = vpack.c.b16 %v127, %v126
    %v153 = vpack.c.b16 %v129, %v128
    %v154 = vpack.c.b16 %v131, %v130
    %v155 = vpack.c.b16 %v133, %v132
    %v156 = vpack.c.b16 %v135, %v134
    %v157 = vpack.c.b16 %v137, %v136
    %v158 = vpack.c.b16 %v139, %v138
    %v159 = vpack.c.b16 %v141, %v140
    %v160 = vpack.c.b16 %v143, %v142
    %v161 = vpack.c.b16 %v145, %v144
    %178 = vmatprep.subr.bf16.mxu0 0
    %179 = vmatpush1.bf16.msra.mxu0 %v146
    %180 = vmatprep.subr.bf16.mxu0 0
    %181 = vmatpush1.bf16.msra.mxu0 %v147
    %182 = vmatprep.subr.bf16.mxu0 0
    %183 = vmatpush1.bf16.msra.mxu0 %v148
    %184 = vmatprep.subr.bf16.mxu0 0
    %185 = vmatpush1.bf16.msra.mxu0 %v149
    %186 = vmatprep.subr.bf16.mxu0 0
    %187 = vmatpush1.bf16.msra.mxu0 %v150
    %188 = vmatprep.subr.bf16.mxu0 0
    %189 = vmatpush1.bf16.msra.mxu0 %v151
    %190 = vmatprep.subr.bf16.mxu0 0
    %191 = vmatpush1.bf16.msra.mxu0 %v152
    %192 = vmatprep.subr.bf16.mxu0 0
    %193 = vmatpush1.bf16.msra.mxu0 %v153
    %194 = vmatprep.subr.bf16.mxu0 0
    %195 = vmatpush1.bf16.msra.mxu0 %v154
    %196 = vmatprep.subr.bf16.mxu0 0
    %197 = vmatpush1.bf16.msra.mxu0 %v155
    %198 = vmatprep.subr.bf16.mxu0 0
    %199 = vmatpush1.bf16.msra.mxu0 %v156
    %200 = vmatprep.subr.bf16.mxu0 0
    %201 = vmatpush1.bf16.msra.mxu0 %v157
    %202 = vmatprep.subr.bf16.mxu0 0
    %203 = vmatpush1.bf16.msra.mxu0 %v158
    %204 = vmatprep.subr.bf16.mxu0 0
    %205 = vmatpush1.bf16.msra.mxu0 %v159
    %206 = vmatprep.subr.bf16.mxu0 0
    %207 = vmatpush1.bf16.msra.mxu0 %v160
    %208 = vmatprep.subr.bf16.mxu0 0
    %209 = vmatpush1.bf16.msra.mxu0 %v161
    %210 = vmatprep.mubr.bf16.mxu0 %v42
    %211 = vmatmul.mubr.bf16.gmra.mrb[0].mxu0 %v41
    %v212 = vpop.f32.mrb[0].mxu0
    %v213 = vadd.f32 %v80, %v212
    %v214 = vpop.f32.mrb[0].mxu0
    %v215 = vpop.f32.mrb[0].mxu0
    %v216 = vpop.f32.mrb[0].mxu0
    %217 = vdwg.mxu0
    %v218 = vmax.f32 %v213, 0.0
    %v219 = vpack.c.bf16 %v218, %v218
    %v220 = vld [vmem:[%s4] sm:$0xf]
    %v221 = vld [vmem:[%s4 + $0x4] sm:$0xf]
    %v222 = vld [vmem:[%s4 + $0x8] sm:$0xf]
    %v223 = vld [vmem:[%s4 + $0xc] sm:$0xf]
    %v224 = vld [vmem:[%s5] sm:$0x1]
    %v226 = vlaneseq
    %v227 = vshrl.u32 %v226, 7
    %v228 = vsub.s32 0, %v227
    %v229 = vrot.slane %v224, %v228
    %v235 = vunpack.c.l.b16 %v220
    %v236 = vunpack.c.l.b16 %v221
    %v237 = vunpack.c.l.b16 %v222
    %v238 = vunpack.c.l.b16 %v223
    %v239 = vpack.c.b16 %v236, %v235
    %v240 = vpack.c.b16 %v238, %v237
    %vm243 = vcmask 261120
    %v245 = vsel %vm243, %v219, 0
    %247 = vmatprep.subr.bf16.mxu0 0
    %248 = vmatpush1.bf16.msra.mxu0 %v239
    %249 = vmatprep.subr.bf16.mxu0 0
    %250 = vmatpush1.bf16.msra.mxu0 %v240
    %251 = vmatprep.subr.bf16.mxu0 0
    %252 = vmatpush1.bf16.msra.mxu0 0
    %253 = vmatprep.subr.bf16.mxu0 0
    %254 = vmatpush1.bf16.msra.mxu0 0
    %255 = vmatprep.subr.bf16.mxu0 0
    %256 = vmatpush1.bf16.msra.mxu0 0
    %257 = vmatprep.subr.bf16.mxu0 0
    %258 = vmatpush1.bf16.msra.mxu0 0
    %259 = vmatprep.subr.bf16.mxu0 0
    %260 = vmatpush1.bf16.msra.mxu0 0
    %261 = vmatprep.subr.bf16.mxu0 0
    %262 = vmatpush1.bf16.msra.mxu0 0
    %263 = vmatprep.subr.bf16.mxu0 0
    %264 = vmatpush1.bf16.msra.mxu0 0
    %265 = vmatprep.subr.bf16.mxu0 0
    %266 = vmatpush1.bf16.msra.mxu0 0
    %267 = vmatprep.subr.bf16.mxu0 0
    %268 = vmatpush1.bf16.msra.mxu0 0
    %269 = vmatprep.subr.bf16.mxu0 0
    %270 = vmatpush1.bf16.msra.mxu0 0
    %271 = vmatprep.subr.bf16.mxu0 0
    %272 = vmatpush1.bf16.msra.mxu0 0
    %273 = vmatprep.subr.bf16.mxu0 0
    %274 = vmatpush1.bf16.msra.mxu0 0
    %275 = vmatprep.subr.bf16.mxu0 0
    %276 = vmatpush1.bf16.msra.mxu0 0
    %277 = vmatprep.subr.bf16.mxu0 0
    %278 = vmatpush1.bf16.msra.mxu0 0
    %279 = vmatprep.mubr.bf16.mxu0 0
    %280 = vmatmul.mubr.bf16.gmra.mrb[0].mxu0 %v245
    %v281 = vpop.f32.mrb[0].mxu0
    %v282 = vadd.f32 %v229, %v281
    %v283 = vpop.f32.mrb[0].mxu0
    %v284 = vpop.f32.mrb[0].mxu0
    %v285 = vpop.f32.mrb[0].mxu0
    %286 = vdwg.mxu0
    %vm287 = vcmask 17408
    %288 = vst.msk [vmem:[#allocation2] sm:$0x3] %vm287, %v282
    // Predicated region
    $region26: #{model_forward.17} parent=1 // pred_check
      _
    $region27: #{model_forward.17} parent=1 // pred_check_branch
      %290 = sbr.rel (0) target = $region29
    $region28: #{model_forward.17} parent=1 // pred_region
      %s292 = ssub.s32 32, 32
      %293 = vsyncadd [#allocation3], %s292
      %s295 = sshll.u32 [#allocation2], 4
      %s296 = int_to_ptr.vmem [resolvable:$true] %s295
      %298 = dma.vmem_to_hbm [thread:$0]  %s296, 32, %s6, [#allocation3]
    $region29: #{model_forward.17} parent=1 // pred_fallthru
      _
    // Predicated region
    $region30: #{model_forward.17} parent=1 // pred_check
      _
    $region31: #{model_forward.17} parent=1 // pred_check_branch
      %300 = sbr.rel (0) target = $region33
    $region32: #{model_forward.17} parent=1 // pred_region
      %301 = dma.done [#allocation3], 32
    $region33: #{model_forward.17} parent=1 // pred_fallthru
      _
    %302 = vsyncpa [#allocation3], 1

// kernel: model_forward.11
$region0: #{model_forward.11}
  #allocation0 [shape = 'u32[]', space=smem, size = 0x4, offset = 0x4, fixed_abs, tag = 'smem constant byte address 0x4 - core index']
  #allocation1 [shape = 'u32[144,128]{1,0:T(1,128)}', space=vmem, size = 0x12000, scoped, tag = 'internal scratch']
  #allocation2 [shape = 'f32[2,32]{1,0:T(2,128)}', space=vmem, size = 0x400, scoped, tag = 'scratch operand']
  #allocation3 [shape = 'f32[2,32]{1,0:T(2,128)}', space=vmem, size = 0x400, scoped, tag = 'scratch operand']
  #allocation4 [shape = 'f32[2,32]{1,0:T(2,128)}', space=vmem, size = 0x400, scoped, tag = 'scratch operand']
  #allocation5 [shape = 'f32[2,32]{1,0:T(2,128)}', space=vmem, size = 0x400, scoped, tag = 'scratch operand']
  #allocation6 [shape = 'f32[2,8,64]{2,1,0:T(8,128)}', space=vmem, size = 0x2000, scoped, tag = 'scratch operand']
  %s0 = inlined_call_operand.vmem [shape: bf16[2,8,256], index: 0, kind: input, shape index: {}]
  %s1 = inlined_call_operand.vmem [shape: bf16[32,128], index: 1, kind: input, shape index: {}]
  %s2 = inlined_call_operand.vmem [shape: bf16[32,128], index: 2, kind: input, shape index: {}]
  %s3 = inlined_call_operand.vmem [shape: s32[2,1], index: 3, kind: input, shape index: {}]
  %s4 = inlined_call_operand.vmem [shape: bf16[2,8,64], index: 4, kind: output, shape index: {}]
  %s5 = sld [smem:[#allocation0]]
  $region26: #{model_forward.11} parent=0
    _
  %s7 = ssub.s32 1, %s5
  %s8 = scalar_select 0, %s7, %s5
  // Predicated region
  $region2: #{model_forward.11} parent=0 // pred_check
    _
  $region3: #{model_forward.11} parent=0 // pred_check_branch
    %10 = sbr.rel (0) target = $region5
  $region4: #{model_forward.11} parent=0 // pred_region
    _
  $region5: #{model_forward.11} parent=0 // pred_fallthru
    _
  // Predicated region
  $region6: #{model_forward.11} parent=0 // pred_check
    _
  $region7: #{model_forward.11} parent=0 // pred_check_branch
    %12 = sbr.rel (0) target = $region9
  $region8: #{model_forward.11} parent=0 // pred_region
    _
  $region9: #{model_forward.11} parent=0 // pred_fallthru
    _
  // Predicated region
  $region10: #{model_forward.11} parent=0 // pred_check
    _
  $region11: #{model_forward.11} parent=0 // pred_check_branch
    %14 = sbr.rel (0) target = $region13
  $region12: #{model_forward.11} parent=0 // pred_region
    _
  $region13: #{model_forward.11} parent=0 // pred_fallthru
    _
  // Predicated region
  $region14: #{model_forward.11} parent=0 // pred_check
    _
  $region15: #{model_forward.11} parent=0 // pred_check_branch
    %16 = sbr.rel (0) target = $region17
  $region16: #{model_forward.11} parent=0 // pred_region
    _
  $region17: #{model_forward.11} parent=0 // pred_fallthru
    _
  %vm18 = vcmask 254976
  %19 = vst.msk [vmem:[#allocation2] sm:$0x3] %vm18, 0.0
  %20 = vst.msk [vmem:[#allocation3] sm:$0x3] %vm18, 0.0
  %21 = vst.msk [vmem:[#allocation4] sm:$0x3] %vm18, 0.0
  %22 = vst.msk [vmem:[#allocation5] sm:$0x3] %vm18, 0.0
  %v23 = vld [vmem:[%s3] sm:$0x3]
  %v24 = vld [vmem:[#allocation2] sm:$0x3]
  %v25 = vpack.c.bf16 %v24, %v24
  %v26 = vld [vmem:[%s1] sm:$0xf]
  %v27 = vld [vmem:[%s1 + $0x4] sm:$0xf]
  %v28 = vld [vmem:[%s1 + $0x8] sm:$0xf]
  %v29 = vld [vmem:[%s1 + $0xc] sm:$0xf]
  %v34 = vunpack.c.l.b16 %v26
  %v35 = vunpack.c.l.b16 %v27
  %v36 = vunpack.c.l.b16 %v28
  %v37 = vunpack.c.l.b16 %v29
  %v38 = vpack.c.b16 %v35, %v34
  %v39 = vpack.c.b16 %v37, %v36
  %vm42 = vcmask 261120
  %v44 = vsel %vm42, %v25, 0
  %46 = vmatprep.subr.bf16.mxu0 0
  %47 = vmatpush1.bf16.msra.mxu0 %v38
  %48 = vmatprep.subr.bf16.mxu0 0
  %49 = vmatpush1.bf16.msra.mxu0 %v39
  %50 = vmatprep.subr.bf16.mxu0 0
  %51 = vmatpush1.bf16.msra.mxu0 0
  %52 = vmatprep.subr.bf16.mxu0 0
  %53 = vmatpush1.bf16.msra.mxu0 0
  %54 = vmatprep.subr.bf16.mxu0 0
  %55 = vmatpush1.bf16.msra.mxu0 0
  %56 = vmatprep.subr.bf16.mxu0 0
  %57 = vmatpush1.bf16.msra.mxu0 0
  %58 = vmatprep.subr.bf16.mxu0 0
  %59 = vmatpush1.bf16.msra.mxu0 0
  %60 = vmatprep.subr.bf16.mxu0 0
  %61 = vmatpush1.bf16.msra.mxu0 0
  %62 = vmatprep.subr.bf16.mxu0 0
  %63 = vmatpush1.bf16.msra.mxu0 0
  %64 = vmatprep.subr.bf16.mxu0 0
  %65 = vmatpush1.bf16.msra.mxu0 0
  %66 = vmatprep.subr.bf16.mxu0 0
  %67 = vmatpush1.bf16.msra.mxu0 0
  %68 = vmatprep.subr.bf16.mxu0 0
  %69 = vmatpush1.bf16.msra.mxu0 0
  %70 = vmatprep.subr.bf16.mxu0 0
  %71 = vmatpush1.bf16.msra.mxu0 0
  %72 = vmatprep.subr.bf16.mxu0 0
  %73 = vmatpush1.bf16.msra.mxu0 0
  %74 = vmatprep.subr.bf16.mxu0 0
  %75 = vmatpush1.bf16.msra.mxu0 0
  %76 = vmatprep.subr.bf16.mxu0 0
  %77 = vmatpush1.bf16.msra.mxu0 0
  %78 = vmatprep.mubr.bf16.mxu0 0
  %79 = vmatmul.mubr.bf16.gmra.mrb[0].mxu0 %v44
  %v80 = vpop.f32.mrb[0].mxu0
  %v81 = vadd.f32 0.0, %v80
  %v82 = vpop.f32.mrb[0].mxu0
  %v83 = vpop.f32.mrb[0].mxu0
  %v84 = vpop.f32.mrb[0].mxu0
  %85 = vdwg.mxu0
  %v86 = vld [vmem:[#allocation4] sm:$0x3]
  %v87 = vpack.c.bf16 %v86, %v86
  %v88 = vld [vmem:[%s2] sm:$0xf]
  %v89 = vld [vmem:[%s2 + $0x4] sm:$0xf]
  %v90 = vld [vmem:[%s2 + $0x8] sm:$0xf]
  %v91 = vld [vmem:[%s2 + $0xc] sm:$0xf]
  %v96 = vunpack.c.l.b16 %v88
  %v97 = vunpack.c.l.b16 %v89
  %v98 = vunpack.c.l.b16 %v90
  %v99 = vunpack.c.l.b16 %v91
  %v100 = vpack.c.b16 %v97, %v96
  %v101 = vpack.c.b16 %v99, %v98
  %v105 = vsel %vm42, %v87, 0
  %107 = vmatprep.subr.bf16.mxu0 0
  %108 = vmatpush1.bf16.msra.mxu0 %v100
  %109 = vmatprep.subr.bf16.mxu0 0
  %110 = vmatpush1.bf16.msra.mxu0 %v101
  %111 = vmatprep.subr.bf16.mxu0 0
  %112 = vmatpush1.bf16.msra.mxu0 0
  %113 = vmatprep.subr.bf16.mxu0 0
  %114 = vmatpush1.bf16.msra.mxu0 0
  %115 = vmatprep.subr.bf16.mxu0 0
  %116 = vmatpush1.bf16.msra.mxu0 0
  %117 = vmatprep.subr.bf16.mxu0 0
  %118 = vmatpush1.bf16.msra.mxu0 0
  %119 = vmatprep.subr.bf16.mxu0 0
  %120 = vmatpush1.bf16.msra.mxu0 0
  %121 = vmatprep.subr.bf16.mxu0 0
  %122 = vmatpush1.bf16.msra.mxu0 0
  %123 = vmatprep.subr.bf16.mxu0 0
  %124 = vmatpush1.bf16.msra.mxu0 0
  %125 = vmatprep.subr.bf16.mxu0 0
  %126 = vmatpush1.bf16.msra.mxu0 0
  %127 = vmatprep.subr.bf16.mxu0 0
  %128 = vmatpush1.bf16.msra.mxu0 0
  %129 = vmatprep.subr.bf16.mxu0 0
  %130 = vmatpush1.bf16.msra.mxu0 0
  %131 = vmatprep.subr.bf16.mxu0 0
  %132 = vmatpush1.bf16.msra.mxu0 0
  %133 = vmatprep.subr.bf16.mxu0 0
  %134 = vmatpush1.bf16.msra.mxu0 0
  %135 = vmatprep.subr.bf16.mxu0 0
  %136 = vmatpush1.bf16.msra.mxu0 0
  %137 = vmatprep.subr.bf16.mxu0 0
  %138 = vmatpush1.bf16.msra.mxu0 0
  %139 = vmatprep.mubr.bf16.mxu0 0
  %140 = vmatmul.mubr.bf16.gmra.mrb[0].mxu0 %v105
  %v141 = vpop.f32.mrb[0].mxu0
  %v142 = vadd.f32 0.0, %v141
  %v143 = vpop.f32.mrb[0].mxu0
  %v144 = vpop.f32.mrb[0].mxu0
  %v145 = vpop.f32.mrb[0].mxu0
  %146 = vdwg.mxu0
  %v147 = vld [vmem:[%s0] sm:$0x1]
  %v148 = vld [vmem:[%s0 + $0x8] sm:$0x1]
  %v149 = vunpack.c.l.bf16 %v147
  %v150 = vunpack.c.l.bf16 %v148
  %v151 = vld [vmem:[%s0 + $0x4] sm:$0x8]
  %v152 = vld [vmem:[%s0 + $0xc] sm:$0x8]
  %v153 = vunpack.c.l.bf16 %v151
  %v154 = vunpack.c.l.bf16 %v152
  %v156 = vrot.slane %v81, 1
  %v159 = vadd.f32 %v149, %v81
  %v160 = vadd.f32 %v150, %v156
  %v161 = vld [vmem:[#allocation3] sm:$0x3]
  %v162 = vxor.u32 %v159, 2147483648
  %v163 = vxor.u32 %v160, 2147483648
  %v164 = vmul.f32 %v162, 1.442695
  %v165 = vpow.pop %v164
  %v166 = vmul.f32 %v163, 1.442695
  %v167 = vpow.pop %v166
  %v168 = vadd.f32 %v165, 1.0
  %v169 = vadd.f32 %v167, 1.0
  %v170 = vrcp.pop %v168
  %v171 = vmul.f32 1.0, %v170
  %v172 = vrcp.pop %v169
  %v173 = vmul.f32 1.0, %v172
  %v174 = vtanh.pop %v159
  %v175 = vtanh.pop %v160
  %v177 = vrot.slane %v161, 1
  %178 = vrot.lane.b32.xlu0 %v161, 32
  %v179 = vpop.permute.xlu0 %178
  %180 = vrot.lane.b32.xlu0 %v177, 32
  %v181 = vpop.permute.xlu0 %180
  %v184 = vmul.f32 %v171, %v179
  %v185 = vmul.f32 %v173, %v181
  %188 = vrot.lane.b32.xlu0 %v174, 64
  %v189 = vpop.permute.xlu0 %188
  %190 = vrot.lane.b32.xlu0 %v175, 64
  %v191 = vpop.permute.xlu0 %190
  %v194 = vmul.f32 %v171, %v189
  %v195 = vmul.f32 %v173, %v191
  %198 = vrot.lane.b32.xlu0 %v194, 32
  %v199 = vpop.permute.xlu0 %198
  %200 = vrot.lane.b32.xlu0 %v195, 32
  %v201 = vpop.permute.xlu0 %200
  %v204 = vadd.f32 %v184, %v199
  %v205 = vadd.f32 %v185, %v201
  %v206 = vtanh.pop %v204
  %v207 = vtanh.pop %v205
  %210 = vrot.lane.b32.xlu0 %v206, 64
  %v211 = vpop.permute.xlu0 %210
  %212 = vrot.lane.b32.xlu0 %v207, 64
  %v213 = vpop.permute.xlu0 %212
  %v216 = vmul.f32 %v171, %v211
  %v217 = vmul.f32 %v173, %v213
  %v219 = vrot.slane %v142, 1
  %v220 = vrot.slane %v142, 2
  %v223 = vadd.f32 %v153, %v219
  %v224 = vadd.f32 %v154, %v220
  %v225 = vld [vmem:[#allocation5] sm:$0x3]
  %v226 = vxor.u32 %v223, 2147483648
  %v227 = vxor.u32 %v224, 2147483648
  %v228 = vmul.f32 %v226, 1.442695
  %v229 = vpow.pop %v228
  %v230 = vmul.f32 %v227, 1.442695
  %v231 = vpow.pop %v230
  %v232 = vadd.f32 %v229, 1.0
  %v233 = vadd.f32 %v231, 1.0
  %v234 = vrcp.pop %v232
  %v235 = vmul.f32 1.0, %v234
  %v236 = vrcp.pop %v233
  %v237 = vmul.f32 1.0, %v236
  %v238 = vtanh.pop %v223
  %v239 = vtanh.pop %v224
  %v241 = vrot.slane %v225, 1
  %v242 = vrot.slane %v225, 2
  %243 = vrot.lane.b32.xlu0 %v241, 32
  %v244 = vpop.permute.xlu0 %243
  %245 = vrot.lane.b32.xlu0 %v242, 32
  %v246 = vpop.permute.xlu0 %245
  %v249 = vmul.f32 %v235, %v244
  %v250 = vmul.f32 %v237, %v246
  %253 = vrot.lane.b32.xlu0 %v238, 64
  %v254 = vpop.permute.xlu0 %253
  %255 = vrot.lane.b32.xlu0 %v239, 64
  %v256 = vpop.permute.xlu0 %255
  %v259 = vmul.f32 %v235, %v254
  %v260 = vmul.f32 %v237, %v256
  %263 = vrot.lane.b32.xlu0 %v259, 32
  %v264 = vpop.permute.xlu0 %263
  %265 = vrot.lane.b32.xlu0 %v260, 32
  %v266 = vpop.permute.xlu0 %265
  %v269 = vadd.f32 %v249, %v264
  %v270 = vadd.f32 %v250, %v266
  %v271 = vtanh.pop %v269
  %v272 = vtanh.pop %v270
  %275 = vrot.lane.b32.xlu0 %v271, 64
  %v276 = vpop.permute.xlu0 %275
  %277 = vrot.lane.b32.xlu0 %v272, 64
  %v278 = vpop.permute.xlu0 %277
  %v281 = vmul.f32 %v235, %v276
  %v282 = vmul.f32 %v237, %v278
  %vm283 = vcmp.gt.s32.totalorder %v23, 0
  %vm284 = vcmp.gt.s32.totalorder %v23, 7
  %v285 = vsel %vm283, 1, 0
  %286 = vset.pattern.permute.xlu0 0
  %287 = vperm.xlu0 %286, %v285
  %v288 = vpop.permute.xlu0 %287
  %vm289 = vcmp.eq.s32.totalorder %v288, 1
  %v292 = vrot.slane %v217, 7
  %vm293 = vcmask 1041409
  %v294 = vsel %vm293, %v292, %v216
  %295 = vrot.lane.b32.xlu0 %v294, 32
  %v296 = vpop.permute.xlu0 %295
  %v298 = vsel %vm289, %v296, %v24
  %299 = vst.msk [vmem:[#allocation2] sm:$0x3] %vm18, %v298
  %v300 = vld [vmem:[#allocation3] sm:$0x3]
  %v303 = vrot.slane %v205, 7
  %v304 = vsel %vm293, %v303, %v204
  %305 = vrot.lane.b32.xlu0 %v304, 96
  %v306 = vpop.permute.xlu0 %305
  %v308 = vsel %vm289, %v306, %v300
  %309 = vst.msk [vmem:[#allocation3] sm:$0x3] %vm18, %v308
  %v310 = vld [vmem:[#allocation4] sm:$0x3]
  %v311 = vsel %vm284, 1, 0
  %312 = vset.pattern.permute.xlu0 0
  %313 = vperm.xlu0 %312, %v311
  %v314 = vpop.permute.xlu0 %313
  %vm315 = vcmp.eq.s32.totalorder %v314, 1
  %v318 = vrot.slane %v281, 7
  %v319 = vrot.slane %v282, 6
  %v320 = vsel %vm293, %v319, %v318
  %321 = vrot.lane.b32.xlu0 %v320, 32
  %v322 = vpop.permute.xlu0 %321
  %v324 = vsel %vm315, %v322, %v310
  %325 = vst.msk [vmem:[#allocation4] sm:$0x3] %vm18, %v324
  %v326 = vld [vmem:[#allocation5] sm:$0x3]
  %v329 = vrot.slane %v269, 7
  %v330 = vrot.slane %v270, 6
  %v331 = vsel %vm293, %v330, %v329
  %332 = vrot.lane.b32.xlu0 %v331, 96
  %v333 = vpop.permute.xlu0 %332
  %v335 = vsel %vm315, %v333, %v326
  %336 = vst.msk [vmem:[#allocation5] sm:$0x3] %vm18, %v335
  %v337 = vsel %vm289, %v296, 0.0
  %v340 = vunpack.c.l.s4 1966171168
  %v341 = vunpack.c.0.s8 %v340
  %v342 = vlaneseq
  %v343 = vshrl.u32 %v342, 7
  %v344 = vsub.s32 %v341, %v343
  %v345 = vrot.slane %v337, %v344
  %v346 = vcombine.high %v345, %v345
  %v348 = vunpack.c.l.s4 1966171168
  %v349 = vunpack.c.0.s8 %v348
  %v350 = vlaneseq
  %v351 = vshrl.u32 %v350, 7
  %v352 = vsub.s32 %v349, %v351
  %v353 = vrot.slane %v345, %v352
  %v355 = vunpack.c.l.s4 1966171168
  %v356 = vunpack.c.0.s8 %v355
  %v357 = vlaneseq
  %v358 = vshrl.u32 %v357, 7
  %v359 = vsub.s32 %v356, %v358
  %v360 = vrot.slane %v346, %v359
  %vm363 = vcmask 253952
  %364 = vst.msk [vmem:[#allocation6] sm:$0x1] %vm363, %v353
  %365 = vst.msk [vmem:[#allocation6 + $0x8] sm:$0x1] %vm363, %v360
  %v366 = vsel %vm315, %v322, 0.0
  %v369 = vunpack.c.l.s4 1966171168
  %v370 = vunpack.c.0.s8 %v369
  %v371 = vlaneseq
  %v372 = vshrl.u32 %v371, 7
  %v373 = vsub.s32 %v370, %v372
  %v374 = vrot.slane %v366, %v373
  %v375 = vcombine.high %v374, %v374
  %v377 = vunpack.c.l.s4 1966171168
  %v378 = vunpack.c.0.s8 %v377
  %v379 = vlaneseq
  %v380 = vshrl.u32 %v379, 7
  %v381 = vsub.s32 %v378, %v380
  %v382 = vrot.slane %v374, %v381
  %v384 = vunpack.c.l.s4 1966171168
  %v385 = vunpack.c.0.s8 %v384
  %v386 = vlaneseq
  %v387 = vshrl.u32 %v386, 7
  %v388 = vsub.s32 %v385, %v387
  %v389 = vrot.slane %v375, %v388
  %v390 = vlaneseq
  %v391 = vshrl.u32 %v390, 7
  %v392 = vsub.s32 0, %v391
  %v393 = vrot.slane %v382, %v392
  %v394 = vlaneseq
  %v395 = vshrl.u32 %v394, 7
  %v396 = vsub.s32 0, %v395
  %v397 = vrot.slane %v389, %v396
  %398 = vrot.lane.b32.xlu0 %v393, 32
  %v399 = vpop.permute.xlu0 %398
  %400 = vrot.lane.b32.xlu0 %v397, 32
  %v401 = vpop.permute.xlu0 %400
  %vm404 = vcmask 516352
  %405 = vst.msk [vmem:[#allocation6 + $0x7] sm:$0x1] %vm404, %v399
  %406 = vst.msk [vmem:[#allocation6 + $0xf] sm:$0x1] %vm404, %v401
  %v407 = vld [vmem:[#allocation2] sm:$0x3]
  %v408 = vpack.c.bf16 %v407, %v407
  %v409 = vld [vmem:[%s1] sm:$0xf]
  %v410 = vld [vmem:[%s1 + $0x4] sm:$0xf]
  %v411 = vld [vmem:[%s1 + $0x8] sm:$0xf]
  %v412 = vld [vmem:[%s1 + $0xc] sm:$0xf]
  %v417 = vunpack.c.l.b16 %v409
  %v418 = vunpack.c.l.b16 %v410
  %v419 = vunpack.c.l.b16 %v411
  %v420 = vunpack.c.l.b16 %v412
  %v421 = vpack.c.b16 %v418, %v417
  %v422 = vpack.c.b16 %v420, %v419
  %v426 = vsel %vm42, %v408, 0
  %428 = vmatprep.subr.bf16.mxu0 0
  %429 = vmatpush1.bf16.msra.mxu0 %v421
  %430 = vmatprep.subr.bf16.mxu0 0
  %431 = vmatpush1.bf16.msra.mxu0 %v422
  %432 = vmatprep.subr.bf16.mxu0 0
  %433 = vmatpush1.bf16.msra.mxu0 0
  %434 = vmatprep.subr.bf16.mxu0 0
  %435 = vmatpush1.bf16.msra.mxu0 0
  %436 = vmatprep.subr.bf16.mxu0 0
  %437 = vmatpush1.bf16.msra.mxu0 0
  %438 = vmatprep.subr.bf16.mxu0 0
  %439 = vmatpush1.bf16.msra.mxu0 0
  %440 = vmatprep.subr.bf16.mxu0 0
  %441 = vmatpush1.bf16.msra.mxu0 0
  %442 = vmatprep.subr.bf16.mxu0 0
  %443 = vmatpush1.bf16.msra.mxu0 0
  %444 = vmatprep.subr.bf16.mxu0 0
  %445 = vmatpush1.bf16.msra.mxu0 0
  %446 = vmatprep.subr.bf16.mxu0 0
  %447 = vmatpush1.bf16.msra.mxu0 0
  %448 = vmatprep.subr.bf16.mxu0 0
  %449 = vmatpush1.bf16.msra.mxu0 0
  %450 = vmatprep.subr.bf16.mxu0 0
  %451 = vmatpush1.bf16.msra.mxu0 0
  %452 = vmatprep.subr.bf16.mxu0 0
  %453 = vmatpush1.bf16.msra.mxu0 0
  %454 = vmatprep.subr.bf16.mxu0 0
  %455 = vmatpush1.bf16.msra.mxu0 0
  %456 = vmatprep.subr.bf16.mxu0 0
  %457 = vmatpush1.bf16.msra.mxu0 0
  %458 = vmatprep.subr.bf16.mxu0 0
  %459 = vmatpush1.bf16.msra.mxu0 0
  %460 = vmatprep.mubr.bf16.mxu0 0
  %461 = vmatmul.mubr.bf16.gmra.mrb[0].mxu0 %v426
  %v462 = vpop.f32.mrb[0].mxu0
  %v463 = vadd.f32 0.0, %v462
  %v464 = vpop.f32.mrb[0].mxu0
  %v465 = vpop.f32.mrb[0].mxu0
  %v466 = vpop.f32.mrb[0].mxu0
  %467 = vdwg.mxu0
  %v468 = vld [vmem:[#allocation4] sm:$0x3]
  %v469 = vpack.c.bf16 %v468, %v468
  %v470 = vld [vmem:[%s2] sm:$0xf]
  %v471 = vld [vmem:[%s2 + $0x4] sm:$0xf]
  %v472 = vld [vmem:[%s2 + $0x8] sm:$0xf]
  %v473 = vld [vmem:[%s2 + $0xc] sm:$0xf]
  %v478 = vunpack.c.l.b16 %v470
  %v479 = vunpack.c.l.b16 %v471
  %v480 = vunpack.c.l.b16 %v472
  %v481 = vunpack.c.l.b16 %v473
  %v482 = vpack.c.b16 %v479, %v478
  %v483 = vpack.c.b16 %v481, %v480
  %v487 = vsel %vm42, %v469, 0
  %489 = vmatprep.subr.bf16.mxu0 0
  %490 = vmatpush1.bf16.msra.mxu0 %v482
  %491 = vmatprep.subr.bf16.mxu0 0
  %492 = vmatpush1.bf16.msra.mxu0 %v483
  %493 = vmatprep.subr.bf16.mxu0 0
  %494 = vmatpush1.bf16.msra.mxu0 0
  %495 = vmatprep.subr.bf16.mxu0 0
  %496 = vmatpush1.bf16.msra.mxu0 0
  %497 = vmatprep.subr.bf16.mxu0 0
  %498 = vmatpush1.bf16.msra.mxu0 0
  %499 = vmatprep.subr.bf16.mxu0 0
  %500 = vmatpush1.bf16.msra.mxu0 0
  %501 = vmatprep.subr.bf16.mxu0 0
  %502 = vmatpush1.bf16.msra.mxu0 0
  %503 = vmatprep.subr.bf16.mxu0 0
  %504 = vmatpush1.bf16.msra.mxu0 0
  %505 = vmatprep.subr.bf16.mxu0 0
  %506 = vmatpush1.bf16.msra.mxu0 0
  %507 = vmatprep.subr.bf16.mxu0 0
  %508 = vmatpush1.bf16.msra.mxu0 0
  %509 = vmatprep.subr.bf16.mxu0 0
  %510 = vmatpush1.bf16.msra.mxu0 0
  %511 = vmatprep.subr.bf16.mxu0 0
  %512 = vmatpush1.bf16.msra.mxu0 0
  %513 = vmatprep.subr.bf16.mxu0 0
  %514 = vmatpush1.bf16.msra.mxu0 0
  %515 = vmatprep.subr.bf16.mxu0 0
  %516 = vmatpush1.bf16.msra.mxu0 0
  %517 = vmatprep.subr.bf16.mxu0 0
  %518 = vmatpush1.bf16.msra.mxu0 0
  %519 = vmatprep.subr.bf16.mxu0 0
  %520 = vmatpush1.bf16.msra.mxu0 0
  %521 = vmatprep.mubr.bf16.mxu0 0
  %522 = vmatmul.mubr.bf16.gmra.mrb[0].mxu0 %v487
  %v523 = vpop.f32.mrb[0].mxu0
  %v524 = vadd.f32 0.0, %v523
  %v525 = vpop.f32.mrb[0].mxu0
  %v526 = vpop.f32.mrb[0].mxu0
  %v527 = vpop.f32.mrb[0].mxu0
  %528 = vdwg.mxu0
  %v529 = vld [vmem:[%s0] sm:$0x1]
  %v530 = vld [vmem:[%s0 + $0x8] sm:$0x1]
  %v531 = vunpack.c.l.bf16 %v529
  %v532 = vunpack.c.l.bf16 %v530
  %v533 = vld [vmem:[%s0 + $0x4] sm:$0x8]
  %v534 = vld [vmem:[%s0 + $0xc] sm:$0x8]
  %v535 = vunpack.c.l.bf16 %v533
  %v536 = vunpack.c.l.bf16 %v534
  %v538 = vrot.slane %v463, 7
  %v541 = vadd.f32 %v531, %v538
  %v542 = vadd.f32 %v532, %v463
  %v543 = vld [vmem:[#allocation3] sm:$0x3]
  %v544 = vxor.u32 %v541, 2147483648
  %v545 = vxor.u32 %v542, 2147483648
  %v546 = vmul.f32 %v544, 1.442695
  %v547 = vpow.pop %v546
  %v548 = vmul.f32 %v545, 1.442695
  %v549 = vpow.pop %v548
  %v550 = vadd.f32 %v547, 1.0
  %v551 = vadd.f32 %v549, 1.0
  %v552 = vrcp.pop %v550
  %v553 = vmul.f32 1.0, %v552
  %v554 = vrcp.pop %v551
  %v555 = vmul.f32 1.0, %v554
  %v556 = vtanh.pop %v541
  %v557 = vtanh.pop %v542
  %v559 = vrot.slane %v543, 7
  %560 = vrot.lane.b32.xlu0 %v559, 32
  %v561 = vpop.permute.xlu0 %560
  %562 = vrot.lane.b32.xlu0 %v543, 32
  %v563 = vpop.permute.xlu0 %562
  %v566 = vmul.f32 %v553, %v561
  %v567 = vmul.f32 %v555, %v563
  %570 = vrot.lane.b32.xlu0 %v556, 64
  %v571 = vpop.permute.xlu0 %570
  %572 = vrot.lane.b32.xlu0 %v557, 64
  %v573 = vpop.permute.xlu0 %572
  %v576 = vmul.f32 %v553, %v571
  %v577 = vmul.f32 %v555, %v573
  %580 = vrot.lane.b32.xlu0 %v576, 32
  %v581 = vpop.permute.xlu0 %580
  %582 = vrot.lane.b32.xlu0 %v577, 32
  %v583 = vpop.permute.xlu0 %582
  %v586 = vadd.f32 %v566, %v581
  %v587 = vadd.f32 %v567, %v583
  %v588 = vtanh.pop %v586
  %v589 = vtanh.pop %v587
  %592 = vrot.lane.b32.xlu0 %v588, 64
  %v593 = vpop.permute.xlu0 %592
  %594 = vrot.lane.b32.xlu0 %v589, 64
  %v595 = vpop.permute.xlu0 %594
  %v598 = vmul.f32 %v553, %v593
  %v599 = vmul.f32 %v555, %v595
  %v601 = vrot.slane %v524, 2
  %v602 = vrot.slane %v524, 3
  %v605 = vadd.f32 %v535, %v601
  %v606 = vadd.f32 %v536, %v602
  %v607 = vld [vmem:[#allocation5] sm:$0x3]
  %v608 = vxor.u32 %v605, 2147483648
  %v609 = vxor.u32 %v606, 2147483648
  %v610 = vmul.f32 %v608, 1.442695
  %v611 = vpow.pop %v610
  %v612 = vmul.f32 %v609, 1.442695
  %v613 = vpow.pop %v612
  %v614 = vadd.f32 %v611, 1.0
  %v615 = vadd.f32 %v613, 1.0
  %v616 = vrcp.pop %v614
  %v617 = vmul.f32 1.0, %v616
  %v618 = vrcp.pop %v615
  %v619 = vmul.f32 1.0, %v618
  %v620 = vtanh.pop %v605
  %v621 = vtanh.pop %v606
  %v623 = vrot.slane %v607, 2
  %v624 = vrot.slane %v607, 3
  %625 = vrot.lane.b32.xlu0 %v623, 32
  %v626 = vpop.permute.xlu0 %625
  %627 = vrot.lane.b32.xlu0 %v624, 32
  %v628 = vpop.permute.xlu0 %627
  %v631 = vmul.f32 %v617, %v626
  %v632 = vmul.f32 %v619, %v628
  %635 = vrot.lane.b32.xlu0 %v620, 64
  %v636 = vpop.permute.xlu0 %635
  %637 = vrot.lane.b32.xlu0 %v621, 64
  %v638 = vpop.permute.xlu0 %637
  %v641 = vmul.f32 %v617, %v636
  %v642 = vmul.f32 %v619, %v638
  %645 = vrot.lane.b32.xlu0 %v641, 32
  %v646 = vpop.permute.xlu0 %645
  %647 = vrot.lane.b32.xlu0 %v642, 32
  %v648 = vpop.permute.xlu0 %647
  %v651 = vadd.f32 %v631, %v646
  %v652 = vadd.f32 %v632, %v648
  %v653 = vtanh.pop %v651
  %v654 = vtanh.pop %v652
  %657 = vrot.lane.b32.xlu0 %v653, 64
  %v658 = vpop.permute.xlu0 %657
  %659 = vrot.lane.b32.xlu0 %v654, 64
  %v660 = vpop.permute.xlu0 %659
  %v663 = vmul.f32 %v617, %v658
  %v664 = vmul.f32 %v619, %v660
  %vm665 = vcmp.gt.s32.totalorder %v23, 1
  %vm666 = vcmp.gt.s32.totalorder %v23, 6
  %v667 = vsel %vm665, 1, 0
  %668 = vset.pattern.permute.xlu0 0
  %669 = vperm.xlu0 %668, %v667
  %v670 = vpop.permute.xlu0 %669
  %vm671 = vcmp.eq.s32.totalorder %v670, 1
  %v674 = vrot.slane %v598, 1
  %v675 = vsel %vm293, %v599, %v674
  %676 = vrot.lane.b32.xlu0 %v675, 32
  %v677 = vpop.permute.xlu0 %676
  %v679 = vsel %vm671, %v677, %v407
  %680 = vst.msk [vmem:[#allocation2] sm:$0x3] %vm18, %v679
  %v681 = vld [vmem:[#allocation3] sm:$0x3]
  %v684 = vrot.slane %v586, 1
  %v685 = vsel %vm293, %v587, %v684
  %686 = vrot.lane.b32.xlu0 %v685, 96
  %v687 = vpop.permute.xlu0 %686
  %v689 = vsel %vm671, %v687, %v681
  %690 = vst.msk [vmem:[#allocation3] sm:$0x3] %vm18, %v689
  %v691 = vld [vmem:[#allocation4] sm:$0x3]
  %v692 = vsel %vm666, 1, 0
  %693 = vset.pattern.permute.xlu0 0
  %694 = vperm.xlu0 %693, %v692
  %v695 = vpop.permute.xlu0 %694
  %vm696 = vcmp.eq.s32.totalorder %v695, 1
  %v699 = vrot.slane %v663, 6
  %v700 = vrot.slane %v664, 5
  %v701 = vsel %vm293, %v700, %v699
  %702 = vrot.lane.b32.xlu0 %v701, 32
  %v703 = vpop.permute.xlu0 %702
  %v705 = vsel %vm696, %v703, %v691
  %706 = vst.msk [vmem:[#allocation4] sm:$0x3] %vm18, %v705
  %v707 = vld [vmem:[#allocation5] sm:$0x3]
  %v710 = vrot.slane %v651, 6
  %v711 = vrot.slane %v652, 5
  %v712 = vsel %vm293, %v711, %v710
  %713 = vrot.lane.b32.xlu0 %v712, 96
  %v714 = vpop.permute.xlu0 %713
  %v716 = vsel %vm696, %v714, %v707
  %717 = vst.msk [vmem:[#allocation5] sm:$0x3] %vm18, %v716
  %v718 = vsel %vm671, %v677, 0.0
  %v721 = vunpack.c.l.s4 1966171168
  %v722 = vunpack.c.0.s8 %v721
  %v723 = vlaneseq
  %v724 = vshrl.u32 %v723, 7
  %v725 = vsub.s32 %v722, %v724
  %v726 = vrot.slane %v718, %v725
  %v727 = vcombine.high %v726, %v726
  %v729 = vunpack.c.l.s4 1966171168
  %v730 = vunpack.c.0.s8 %v729
  %v731 = vlaneseq
  %v732 = vshrl.u32 %v731, 7
  %v733 = vsub.s32 %v730, %v732
  %v734 = vrot.slane %v726, %v733
  %v736 = vunpack.c.l.s4 1966171168
  %v737 = vunpack.c.0.s8 %v736
  %v738 = vlaneseq
  %v739 = vshrl.u32 %v738, 7
  %v740 = vsub.s32 %v737, %v739
  %v741 = vrot.slane %v727, %v740
  %744 = vst.msk [vmem:[#allocation6 + $0x1] sm:$0x1] %vm363, %v734
  %745 = vst.msk [vmem:[#allocation6 + $0x9] sm:$0x1] %vm363, %v741
  %v746 = vsel %vm696, %v703, 0.0
  %v749 = vunpack.c.l.s4 1966171168
  %v750 = vunpack.c.0.s8 %v749
  %v751 = vlaneseq
  %v752 = vshrl.u32 %v751, 7
  %v753 = vsub.s32 %v750, %v752
  %v754 = vrot.slane %v746, %v753
  %v755 = vcombine.high %v754, %v754
  %v757 = vunpack.c.l.s4 1966171168
  %v758 = vunpack.c.0.s8 %v757
  %v759 = vlaneseq
  %v760 = vshrl.u32 %v759, 7
  %v761 = vsub.s32 %v758, %v760
  %v762 = vrot.slane %v754, %v761
  %v764 = vunpack.c.l.s4 1966171168
  %v765 = vunpack.c.0.s8 %v764
  %v766 = vlaneseq
  %v767 = vshrl.u32 %v766, 7
  %v768 = vsub.s32 %v765, %v767
  %v769 = vrot.slane %v755, %v768
  %v770 = vlaneseq
  %v771 = vshrl.u32 %v770, 7
  %v772 = vsub.s32 0, %v771
  %v773 = vrot.slane %v762, %v772
  %v774 = vlaneseq
  %v775 = vshrl.u32 %v774, 7
  %v776 = vsub.s32 0, %v775
  %v777 = vrot.slane %v769, %v776
  %778 = vrot.lane.b32.xlu0 %v773, 32
  %v779 = vpop.permute.xlu0 %778
  %780 = vrot.lane.b32.xlu0 %v777, 32
  %v781 = vpop.permute.xlu0 %780
  %784 = vst.msk [vmem:[#allocation6 + $0x6] sm:$0x1] %vm404, %v779
  %785 = vst.msk [vmem:[#allocation6 + $0xe] sm:$0x1] %vm404, %v781
  %v786 = vld [vmem:[#allocation2] sm:$0x3]
  %v787 = vpack.c.bf16 %v786, %v786
  %v788 = vld [vmem:[%s1] sm:$0xf]
  %v789 = vld [vmem:[%s1 + $0x4] sm:$0xf]
  %v790 = vld [vmem:[%s1 + $0x8] sm:$0xf]
  %v791 = vld [vmem:[%s1 + $0xc] sm:$0xf]
  %v796 = vunpack.c.l.b16 %v788
  %v797 = vunpack.c.l.b16 %v789
  %v798 = vunpack.c.l.b16 %v790
  %v799 = vunpack.c.l.b16 %v791
  %v800 = vpack.c.b16 %v797, %v796
  %v801 = vpack.c.b16 %v799, %v798
  %v805 = vsel %vm42, %v787, 0
  %807 = vmatprep.subr.bf16.mxu0 0
  %808 = vmatpush1.bf16.msra.mxu0 %v800
  %809 = vmatprep.subr.bf16.mxu0 0
  %810 = vmatpush1.bf16.msra.mxu0 %v801
  %811 = vmatprep.subr.bf16.mxu0 0
  %812 = vmatpush1.bf16.msra.mxu0 0
  %813 = vmatprep.subr.bf16.mxu0 0
  %814 = vmatpush1.bf16.msra.mxu0 0
  %815 = vmatprep.subr.bf16.mxu0 0
  %816 = vmatpush1.bf16.msra.mxu0 0
  %817 = vmatprep.subr.bf16.mxu0 0
  %818 = vmatpush1.bf16.msra.mxu0 0
  %819 = vmatprep.subr.bf16.mxu0 0
  %820 = vmatpush1.bf16.msra.mxu0 0
  %821 = vmatprep.subr.bf16.mxu0 0
  %822 = vmatpush1.bf16.msra.mxu0 0
  %823 = vmatprep.subr.bf16.mxu0 0
  %824 = vmatpush1.bf16.msra.mxu0 0
  %825 = vmatprep.subr.bf16.mxu0 0
  %826 = vmatpush1.bf16.msra.mxu0 0
  %827 = vmatprep.subr.bf16.mxu0 0
  %828 = vmatpush1.bf16.msra.mxu0 0
  %829 = vmatprep.subr.bf16.mxu0 0
  %830 = vmatpush1.bf16.msra.mxu0 0
  %831 = vmatprep.subr.bf16.mxu0 0
  %832 = vmatpush1.bf16.msra.mxu0 0
  %833 = vmatprep.subr.bf16.mxu0 0
  %834 = vmatpush1.bf16.msra.mxu0 0
  %835 = vmatprep.subr.bf16.mxu0 0
  %836 = vmatpush1.bf16.msra.mxu0 0
  %837 = vmatprep.subr.bf16.mxu0 0
  %838 = vmatpush1.bf16.msra.mxu0 0
  %839 = vmatprep.mubr.bf16.mxu0 0
  %840 = vmatmul.mubr.bf16.gmra.mrb[0].mxu0 %v805
  %v841 = vpop.f32.mrb[0].mxu0
  %v842 = vadd.f32 0.0, %v841
  %v843 = vpop.f32.mrb[0].mxu0
  %v844 = vpop.f32.mrb[0].mxu0
  %v845 = vpop.f32.mrb[0].mxu0
  %846 = vdwg.mxu0
  %v847 = vld [vmem:[#allocation4] sm:$0x3]
  %v848 = vpack.c.bf16 %v847, %v847
  %v849 = vld [vmem:[%s2] sm:$0xf]
  %v850 = vld [vmem:[%s2 + $0x4] sm:$0xf]
  %v851 = vld [vmem:[%s2 + $0x8] sm:$0xf]
  %v852 = vld [vmem:[%s2 + $0xc] sm:$0xf]
  %v857 = vunpack.c.l.b16 %v849
  %v858 = vunpack.c.l.b16 %v850
  %v859 = vunpack.c.l.b16 %v851
  %v860 = vunpack.c.l.b16 %v852
  %v861 = vpack.c.b16 %v858, %v857
  %v862 = vpack.c.b16 %v860, %v859
  %v866 = vsel %vm42, %v848, 0
  %868 = vmatprep.subr.bf16.mxu0 0
  %869 = vmatpush1.bf16.msra.mxu0 %v861
  %870 = vmatprep.subr.bf16.mxu0 0
  %871 = vmatpush1.bf16.msra.mxu0 %v862
  %872 = vmatprep.subr.bf16.mxu0 0
  %873 = vmatpush1.bf16.msra.mxu0 0
  %874 = vmatprep.subr.bf16.mxu0 0
  %875 = vmatpush1.bf16.msra.mxu0 0
  %876 = vmatprep.subr.bf16.mxu0 0
  %877 = vmatpush1.bf16.msra.mxu0 0
  %878 = vmatprep.subr.bf16.mxu0 0
  %879 = vmatpush1.bf16.msra.mxu0 0
  %880 = vmatprep.subr.bf16.mxu0 0
  %881 = vmatpush1.bf16.msra.mxu0 0
  %882 = vmatprep.subr.bf16.mxu0 0
  %883 = vmatpush1.bf16.msra.mxu0 0
  %884 = vmatprep.subr.bf16.mxu0 0
  %885 = vmatpush1.bf16.msra.mxu0 0
  %886 = vmatprep.subr.bf16.mxu0 0
  %887 = vmatpush1.bf16.msra.mxu0 0
  %888 = vmatprep.subr.bf16.mxu0 0
  %889 = vmatpush1.bf16.msra.mxu0 0
  %890 = vmatprep.subr.bf16.mxu0 0
  %891 = vmatpush1.bf16.msra.mxu0 0
  %892 = vmatprep.subr.bf16.mxu0 0
  %893 = vmatpush1.bf16.msra.mxu0 0
  %894 = vmatprep.subr.bf16.mxu0 0
  %895 = vmatpush1.bf16.msra.mxu0 0
  %896 = vmatprep.subr.bf16.mxu0 0
  %897 = vmatpush1.bf16.msra.mxu0 0
  %898 = vmatprep.subr.bf16.mxu0 0
  %899 = vmatpush1.bf16.msra.mxu0 0
  %900 = vmatprep.mubr.bf16.mxu0 0
  %901 = vmatmul.mubr.bf16.gmra.mrb[0].mxu0 %v866
  %v902 = vpop.f32.mrb[0].mxu0
  %v903 = vadd.f32 0.0, %v902
  %v904 = vpop.f32.mrb[0].mxu0
  %v905 = vpop.f32.mrb[0].mxu0
  %v906 = vpop.f32.mrb[0].mxu0
  %907 = vdwg.mxu0
  %v908 = vld [vmem:[%s0] sm:$0x2]
  %v909 = vld [vmem:[%s0 + $0x8] sm:$0x2]
  %v910 = vunpack.c.l.bf16 %v908
  %v911 = vunpack.c.l.bf16 %v909
  %v912 = vld [vmem:[%s0 + $0x4] sm:$0x4]
  %v913 = vld [vmem:[%s0 + $0xc] sm:$0x4]
  %v914 = vunpack.c.l.bf16 %v912
  %v915 = vunpack.c.l.bf16 %v913
  %v917 = vrot.slane %v842, 6
  %v918 = vrot.slane %v842, 7
  %v921 = vadd.f32 %v910, %v917
  %v922 = vadd.f32 %v911, %v918
  %v923 = vld [vmem:[#allocation3] sm:$0x3]
  %v924 = vxor.u32 %v921, 2147483648
  %v925 = vxor.u32 %v922, 2147483648
  %v926 = vmul.f32 %v924, 1.442695
  %v927 = vpow.pop %v926
  %v928 = vmul.f32 %v925, 1.442695
  %v929 = vpow.pop %v928
  %v930 = vadd.f32 %v927, 1.0
  %v931 = vadd.f32 %v929, 1.0
  %v932 = vrcp.pop %v930
  %v933 = vmul.f32 1.0, %v932
  %v934 = vrcp.pop %v931
  %v935 = vmul.f32 1.0, %v934
  %v936 = vtanh.pop %v921
  %v937 = vtanh.pop %v922
  %v939 = vrot.slane %v923, 6
  %v940 = vrot.slane %v923, 7
  %941 = vrot.lane.b32.xlu0 %v939, 32
  %v942 = vpop.permute.xlu0 %941
  %943 = vrot.lane.b32.xlu0 %v940, 32
  %v944 = vpop.permute.xlu0 %943
  %v947 = vmul.f32 %v933, %v942
  %v948 = vmul.f32 %v935, %v944
  %951 = vrot.lane.b32.xlu0 %v936, 64
  %v952 = vpop.permute.xlu0 %951
  %953 = vrot.lane.b32.xlu0 %v937, 64
  %v954 = vpop.permute.xlu0 %953
  %v957 = vmul.f32 %v933, %v952
  %v958 = vmul.f32 %v935, %v954
  %961 = vrot.lane.b32.xlu0 %v957, 32
  %v962 = vpop.permute.xlu0 %961
  %963 = vrot.lane.b32.xlu0 %v958, 32
  %v964 = vpop.permute.xlu0 %963
  %v967 = vadd.f32 %v947, %v962
  %v968 = vadd.f32 %v948, %v964
  %v969 = vtanh.pop %v967
  %v970 = vtanh.pop %v968
  %973 = vrot.lane.b32.xlu0 %v969, 64
  %v974 = vpop.permute.xlu0 %973
  %975 = vrot.lane.b32.xlu0 %v970, 64
  %v976 = vpop.permute.xlu0 %975
  %v979 = vmul.f32 %v933, %v974
  %v980 = vmul.f32 %v935, %v976
  %v982 = vrot.slane %v903, 3
  %v983 = vrot.slane %v903, 4
  %v986 = vadd.f32 %v914, %v982
  %v987 = vadd.f32 %v915, %v983
  %v988 = vld [vmem:[#allocation5] sm:$0x3]
  %v989 = vxor.u32 %v986, 2147483648
  %v990 = vxor.u32 %v987, 2147483648
  %v991 = vmul.f32 %v989, 1.442695
  %v992 = vpow.pop %v991
  %v993 = vmul.f32 %v990, 1.442695
  %v994 = vpow.pop %v993
  %v995 = vadd.f32 %v992, 1.0
  %v996 = vadd.f32 %v994, 1.0
  %v997 = vrcp.pop %v995
  %v998 = vmul.f32 1.0, %v997
  %v999 = vrcp.pop %v996
  %v1000 = vmul.f32 1.0, %v999
  %v1001 = vtanh.pop %v986
  %v1002 = vtanh.pop %v987
  %v1004 = vrot.slane %v988, 3
  %v1005 = vrot.slane %v988, 4
  %1006 = vrot.lane.b32.xlu0 %v1004, 32
  %v1007 = vpop.permute.xlu0 %1006
  %1008 = vrot.lane.b32.xlu0 %v1005, 32
  %v1009 = vpop.permute.xlu0 %1008
  %v1012 = vmul.f32 %v998, %v1007
  %v1013 = vmul.f32 %v1000, %v1009
  %1016 = vrot.lane.b32.xlu0 %v1001, 64
  %v1017 = vpop.permute.xlu0 %1016
  %1018 = vrot.lane.b32.xlu0 %v1002, 64
  %v1019 = vpop.permute.xlu0 %1018
  %v1022 = vmul.f32 %v998, %v1017
  %v1023 = vmul.f32 %v1000, %v1019
  %1026 = vrot.lane.b32.xlu0 %v1022, 32
  %v1027 = vpop.permute.xlu0 %1026
  %1028 = vrot.lane.b32.xlu0 %v1023, 32
  %v1029 = vpop.permute.xlu0 %1028
  %v1032 = vadd.f32 %v1012, %v1027
  %v1033 = vadd.f32 %v1013, %v1029
  %v1034 = vtanh.pop %v1032
  %v1035 = vtanh.pop %v1033
  %1038 = vrot.lane.b32.xlu0 %v1034, 64
  %v1039 = vpop.permute.xlu0 %1038
  %1040 = vrot.lane.b32.xlu0 %v1035, 64
  %v1041 = vpop.permute.xlu0 %1040
  %v1044 = vmul.f32 %v998, %v1039
  %v1045 = vmul.f32 %v1000, %v1041
  %vm1046 = vcmp.gt.s32.totalorder %v23, 2
  %vm1047 = vcmp.gt.s32.totalorder %v23, 5
  %v1048 = vsel %vm1046, 1, 0
  %1049 = vset.pattern.permute.xlu0 0
  %1050 = vperm.xlu0 %1049, %v1048
  %v1051 = vpop.permute.xlu0 %1050
  %vm1052 = vcmp.eq.s32.totalorder %v1051, 1
  %v1055 = vrot.slane %v979, 2
  %v1056 = vrot.slane %v980, 1
  %v1057 = vsel %vm293, %v1056, %v1055
  %1058 = vrot.lane.b32.xlu0 %v1057, 32
  %v1059 = vpop.permute.xlu0 %1058
  %v1061 = vsel %vm1052, %v1059, %v786
  %1062 = vst.msk [vmem:[#allocation2] sm:$0x3] %vm18, %v1061
  %v1063 = vld [vmem:[#allocation3] sm:$0x3]
  %v1066 = vrot.slane %v967, 2
  %v1067 = vrot.slane %v968, 1
  %v1068 = vsel %vm293, %v1067, %v1066
  %1069 = vrot.lane.b32.xlu0 %v1068, 96
  %v1070 = vpop.permute.xlu0 %1069
  %v1072 = vsel %vm1052, %v1070, %v1063
  %1073 = vst.msk [vmem:[#allocation3] sm:$0x3] %vm18, %v1072
  %v1074 = vld [vmem:[#allocation4] sm:$0x3]
  %v1075 = vsel %vm1047, 1, 0
  %1076 = vset.pattern.permute.xlu0 0
  %1077 = vperm.xlu0 %1076, %v1075
  %v1078 = vpop.permute.xlu0 %1077
  %vm1079 = vcmp.eq.s32.totalorder %v1078, 1
  %v1082 = vrot.slane %v1044, 5
  %v1083 = vrot.slane %v1045, 4
  %v1084 = vsel %vm293, %v1083, %v1082
  %1085 = vrot.lane.b32.xlu0 %v1084, 32
  %v1086 = vpop.permute.xlu0 %1085
  %v1088 = vsel %vm1079, %v1086, %v1074
  %1089 = vst.msk [vmem:[#allocation4] sm:$0x3] %vm18, %v1088
  %v1090 = vld [vmem:[#allocation5] sm:$0x3]
  %v1093 = vrot.slane %v1032, 5
  %v1094 = vrot.slane %v1033, 4
  %v1095 = vsel %vm293, %v1094, %v1093
  %1096 = vrot.lane.b32.xlu0 %v1095, 96
  %v1097 = vpop.permute.xlu0 %1096
  %v1099 = vsel %vm1079, %v1097, %v1090
  %1100 = vst.msk [vmem:[#allocation5] sm:$0x3] %vm18, %v1099
  %v1101 = vsel %vm1052, %v1059, 0.0
  %v1104 = vunpack.c.l.s4 1966171168
  %v1105 = vunpack.c.0.s8 %v1104
  %v1106 = vlaneseq
  %v1107 = vshrl.u32 %v1106, 7
  %v1108 = vsub.s32 %v1105, %v1107
  %v1109 = vrot.slane %v1101, %v1108
  %v1110 = vcombine.high %v1109, %v1109
  %v1112 = vunpack.c.l.s4 1966171168
  %v1113 = vunpack.c.0.s8 %v1112
  %v1114 = vlaneseq
  %v1115 = vshrl.u32 %v1114, 7
  %v1116 = vsub.s32 %v1113, %v1115
  %v1117 = vrot.slane %v1109, %v1116
  %v1119 = vunpack.c.l.s4 1966171168
  %v1120 = vunpack.c.0.s8 %v1119
  %v1121 = vlaneseq
  %v1122 = vshrl.u32 %v1121, 7
  %v1123 = vsub.s32 %v1120, %v1122
  %v1124 = vrot.slane %v1110, %v1123
  %1127 = vst.msk [vmem:[#allocation6 + $0x2] sm:$0x1] %vm363, %v1117
  %1128 = vst.msk [vmem:[#allocation6 + $0xa] sm:$0x1] %vm363, %v1124
  %v1129 = vsel %vm1079, %v1086, 0.0
  %v1132 = vunpack.c.l.s4 1966171168
  %v1133 = vunpack.c.0.s8 %v1132
  %v1134 = vlaneseq
  %v1135 = vshrl.u32 %v1134, 7
  %v1136 = vsub.s32 %v1133, %v1135
  %v1137 = vrot.slane %v1129, %v1136
  %v1138 = vcombine.high %v1137, %v1137
  %v1140 = vunpack.c.l.s4 1966171168
  %v1141 = vunpack.c.0.s8 %v1140
  %v1142 = vlaneseq
  %v1143 = vshrl.u32 %v1142, 7
  %v1144 = vsub.s32 %v1141, %v1143
  %v1145 = vrot.slane %v1137, %v1144
  %v1147 = vunpack.c.l.s4 1966171168
  %v1148 = vunpack.c.0.s8 %v1147
  %v1149 = vlaneseq
  %v1150 = vshrl.u32 %v1149, 7
  %v1151 = vsub.s32 %v1148, %v1150
  %v1152 = vrot.slane %v1138, %v1151
  %v1153 = vlaneseq
  %v1154 = vshrl.u32 %v1153, 7
  %v1155 = vsub.s32 0, %v1154
  %v1156 = vrot.slane %v1145, %v1155
  %v1157 = vlaneseq
  %v1158 = vshrl.u32 %v1157, 7
  %v1159 = vsub.s32 0, %v1158
  %v1160 = vrot.slane %v1152, %v1159
  %1161 = vrot.lane.b32.xlu0 %v1156, 32
  %v1162 = vpop.permute.xlu0 %1161
  %1163 = vrot.lane.b32.xlu0 %v1160, 32
  %v1164 = vpop.permute.xlu0 %1163
  %1167 = vst.msk [vmem:[#allocation6 + $0x5] sm:$0x1] %vm404, %v1162
  %1168 = vst.msk [vmem:[#allocation6 + $0xd] sm:$0x1] %vm404, %v1164
  %v1169 = vld [vmem:[#allocation2] sm:$0x3]
  %v1170 = vpack.c.bf16 %v1169, %v1169
  %v1171 = vld [vmem:[%s1] sm:$0xf]
  %v1172 = vld [vmem:[%s1 + $0x4] sm:$0xf]
  %v1173 = vld [vmem:[%s1 + $0x8] sm:$0xf]
  %v1174 = vld [vmem:[%s1 + $0xc] sm:$0xf]
  %v1179 = vunpack.c.l.b16 %v1171
  %v1180 = vunpack.c.l.b16 %v1172
  %v1181 = vunpack.c.l.b16 %v1173
  %v1182 = vunpack.c.l.b16 %v1174
  %v1183 = vpack.c.b16 %v1180, %v1179
  %v1184 = vpack.c.b16 %v1182, %v1181
  %v1188 = vsel %vm42, %v1170, 0
  %1190 = vmatprep.subr.bf16.mxu0 0
  %1191 = vmatpush1.bf16.msra.mxu0 %v1183
  %1192 = vmatprep.subr.bf16.mxu0 0
  %1193 = vmatpush1.bf16.msra.mxu0 %v1184
  %1194 = vmatprep.subr.bf16.mxu0 0
  %1195 = vmatpush1.bf16.msra.mxu0 0
  %1196 = vmatprep.subr.bf16.mxu0 0
  %1197 = vmatpush1.bf16.msra.mxu0 0
  %1198 = vmatprep.subr.bf16.mxu0 0
  %1199 = vmatpush1.bf16.msra.mxu0 0
  %1200 = vmatprep.subr.bf16.mxu0 0
  %1201 = vmatpush1.bf16.msra.mxu0 0
  %1202 = vmatprep.subr.bf16.mxu0 0
  %1203 = vmatpush1.bf16.msra.mxu0 0
  %1204 = vmatprep.subr.bf16.mxu0 0
  %1205 = vmatpush1.bf16.msra.mxu0 0
  %1206 = vmatprep.subr.bf16.mxu0 0
  %1207 = vmatpush1.bf16.msra.mxu0 0
  %1208 = vmatprep.subr.bf16.mxu0 0
  %1209 = vmatpush1.bf16.msra.mxu0 0
  %1210 = vmatprep.subr.bf16.mxu0 0
  %1211 = vmatpush1.bf16.msra.mxu0 0
  %1212 = vmatprep.subr.bf16.mxu0 0
  %1213 = vmatpush1.bf16.msra.mxu0 0
  %1214 = vmatprep.subr.bf16.mxu0 0
  %1215 = vmatpush1.bf16.msra.mxu0 0
  %1216 = vmatprep.subr.bf16.mxu0 0
  %1217 = vmatpush1.bf16.msra.mxu0 0
  %1218 = vmatprep.subr.bf16.mxu0 0
  %1219 = vmatpush1.bf16.msra.mxu0 0
  %1220 = vmatprep.subr.bf16.mxu0 0
  %1221 = vmatpush1.bf16.msra.mxu0 0
  %1222 = vmatprep.mubr.bf16.mxu0 0
  %1223 = vmatmul.mubr.bf16.gmra.mrb[0].mxu0 %v1188
  %v1224 = vpop.f32.mrb[0].mxu0
  %v1225 = vadd.f32 0.0, %v1224
  %v1226 = vpop.f32.mrb[0].mxu0
  %v1227 = vpop.f32.mrb[0].mxu0
  %v1228 = vpop.f32.mrb[0].mxu0
  %1229 = vdwg.mxu0
  %v1230 = vld [vmem:[#allocation4] sm:$0x3]
  %v1231 = vpack.c.bf16 %v1230, %v1230
  %v1232 = vld [vmem:[%s2] sm:$0xf]
  %v1233 = vld [vmem:[%s2 + $0x4] sm:$0xf]
  %v1234 = vld [vmem:[%s2 + $0x8] sm:$0xf]
  %v1235 = vld [vmem:[%s2 + $0xc] sm:$0xf]
  %v1240 = vunpack.c.l.b16 %v1232
  %v1241 = vunpack.c.l.b16 %v1233
  %v1242 = vunpack.c.l.b16 %v1234
  %v1243 = vunpack.c.l.b16 %v1235
  %v1244 = vpack.c.b16 %v1241, %v1240
  %v1245 = vpack.c.b16 %v1243, %v1242
  %v1249 = vsel %vm42, %v1231, 0
  %1251 = vmatprep.subr.bf16.mxu0 0
  %1252 = vmatpush1.bf16.msra.mxu0 %v1244
  %1253 = vmatprep.subr.bf16.mxu0 0
  %1254 = vmatpush1.bf16.msra.mxu0 %v1245
  %1255 = vmatprep.subr.bf16.mxu0 0
  %1256 = vmatpush1.bf16.msra.mxu0 0
  %1257 = vmatprep.subr.bf16.mxu0 0
  %1258 = vmatpush1.bf16.msra.mxu0 0
  %1259 = vmatprep.subr.bf16.mxu0 0
  %1260 = vmatpush1.bf16.msra.mxu0 0
  %1261 = vmatprep.subr.bf16.mxu0 0
  %1262 = vmatpush1.bf16.msra.mxu0 0
  %1263 = vmatprep.subr.bf16.mxu0 0
  %1264 = vmatpush1.bf16.msra.mxu0 0
  %1265 = vmatprep.subr.bf16.mxu0 0
  %1266 = vmatpush1.bf16.msra.mxu0 0
  %1267 = vmatprep.subr.bf16.mxu0 0
  %1268 = vmatpush1.bf16.msra.mxu0 0
  %1269 = vmatprep.subr.bf16.mxu0 0
  %1270 = vmatpush1.bf16.msra.mxu0 0
  %1271 = vmatprep.subr.bf16.mxu0 0
  %1272 = vmatpush1.bf16.msra.mxu0 0
  %1273 = vmatprep.subr.bf16.mxu0 0
  %1274 = vmatpush1.bf16.msra.mxu0 0
  %1275 = vmatprep.subr.bf16.mxu0 0
  %1276 = vmatpush1.bf16.msra.mxu0 0
  %1277 = vmatprep.subr.bf16.mxu0 0
  %1278 = vmatpush1.bf16.msra.mxu0 0
  %1279 = vmatprep.subr.bf16.mxu0 0
  %1280 = vmatpush1.bf16.msra.mxu0 0
  %1281 = vmatprep.subr.bf16.mxu0 0
  %1282 = vmatpush1.bf16.msra.mxu0 0
  %1283 = vmatprep.mubr.bf16.mxu0 0
  %1284 = vmatmul.mubr.bf16.gmra.mrb[0].mxu0 %v1249
  %v1285 = vpop.f32.mrb[0].mxu0
  %v1286 = vadd.f32 0.0, %v1285
  %v1287 = vpop.f32.mrb[0].mxu0
  %v1288 = vpop.f32.mrb[0].mxu0
  %v1289 = vpop.f32.mrb[0].mxu0
  %1290 = vdwg.mxu0
  %v1291 = vld [vmem:[%s0] sm:$0x2]
  %v1292 = vld [vmem:[%s0 + $0x8] sm:$0x2]
  %v1293 = vunpack.c.l.bf16 %v1291
  %v1294 = vunpack.c.l.bf16 %v1292
  %v1295 = vld [vmem:[%s0 + $0x4] sm:$0x4]
  %v1296 = vld [vmem:[%s0 + $0xc] sm:$0x4]
  %v1297 = vunpack.c.l.bf16 %v1295
  %v1298 = vunpack.c.l.bf16 %v1296
  %v1300 = vrot.slane %v1225, 5
  %v1301 = vrot.slane %v1225, 6
  %v1304 = vadd.f32 %v1293, %v1300
  %v1305 = vadd.f32 %v1294, %v1301
  %v1306 = vld [vmem:[#allocation3] sm:$0x3]
  %v1307 = vxor.u32 %v1304, 2147483648
  %v1308 = vxor.u32 %v1305, 2147483648
  %v1309 = vmul.f32 %v1307, 1.442695
  %v1310 = vpow.pop %v1309
  %v1311 = vmul.f32 %v1308, 1.442695
  %v1312 = vpow.pop %v1311
  %v1313 = vadd.f32 %v1310, 1.0
  %v1314 = vadd.f32 %v1312, 1.0
  %v1315 = vrcp.pop %v1313
  %v1316 = vmul.f32 1.0, %v1315
  %v1317 = vrcp.pop %v1314
  %v1318 = vmul.f32 1.0, %v1317
  %v1319 = vtanh.pop %v1304
  %v1320 = vtanh.pop %v1305
  %v1322 = vrot.slane %v1306, 5
  %v1323 = vrot.slane %v1306, 6
  %1324 = vrot.lane.b32.xlu0 %v1322, 32
  %v1325 = vpop.permute.xlu0 %1324
  %1326 = vrot.lane.b32.xlu0 %v1323, 32
  %v1327 = vpop.permute.xlu0 %1326
  %v1330 = vmul.f32 %v1316, %v1325
  %v1331 = vmul.f32 %v1318, %v1327
  %1334 = vrot.lane.b32.xlu0 %v1319, 64
  %v1335 = vpop.permute.xlu0 %1334
  %1336 = vrot.lane.b32.xlu0 %v1320, 64
  %v1337 = vpop.permute.xlu0 %1336
  %v1340 = vmul.f32 %v1316, %v1335
  %v1341 = vmul.f32 %v1318, %v1337
  %1344 = vrot.lane.b32.xlu0 %v1340, 32
  %v1345 = vpop.permute.xlu0 %1344
  %1346 = vrot.lane.b32.xlu0 %v1341, 32
  %v1347 = vpop.permute.xlu0 %1346
  %v1350 = vadd.f32 %v1330, %v1345
  %v1351 = vadd.f32 %v1331, %v1347
  %v1352 = vtanh.pop %v1350
  %v1353 = vtanh.pop %v1351
  %1356 = vrot.lane.b32.xlu0 %v1352, 64
  %v1357 = vpop.permute.xlu0 %1356
  %1358 = vrot.lane.b32.xlu0 %v1353, 64
  %v1359 = vpop.permute.xlu0 %1358
  %v1362 = vmul.f32 %v1316, %v1357
  %v1363 = vmul.f32 %v1318, %v1359
  %v1365 = vrot.slane %v1286, 4
  %v1366 = vrot.slane %v1286, 5
  %v1369 = vadd.f32 %v1297, %v1365
  %v1370 = vadd.f32 %v1298, %v1366
  %v1371 = vld [vmem:[#allocation5] sm:$0x3]
  %v1372 = vxor.u32 %v1369, 2147483648
  %v1373 = vxor.u32 %v1370, 2147483648
  %v1374 = vmul.f32 %v1372, 1.442695
  %v1375 = vpow.pop %v1374
  %v1376 = vmul.f32 %v1373, 1.442695
  %v1377 = vpow.pop %v1376
  %v1378 = vadd.f32 %v1375, 1.0
  %v1379 = vadd.f32 %v1377, 1.0
  %v1380 = vrcp.pop %v1378
  %v1381 = vmul.f32 1.0, %v1380
  %v1382 = vrcp.pop %v1379
  %v1383 = vmul.f32 1.0, %v1382
  %v1384 = vtanh.pop %v1369
  %v1385 = vtanh.pop %v1370
  %v1387 = vrot.slane %v1371, 4
  %v1388 = vrot.slane %v1371, 5
  %1389 = vrot.lane.b32.xlu0 %v1387, 32
  %v1390 = vpop.permute.xlu0 %1389
  %1391 = vrot.lane.b32.xlu0 %v1388, 32
  %v1392 = vpop.permute.xlu0 %1391
  %v1395 = vmul.f32 %v1381, %v1390
  %v1396 = vmul.f32 %v1383, %v1392
  %1399 = vrot.lane.b32.xlu0 %v1384, 64
  %v1400 = vpop.permute.xlu0 %1399
  %1401 = vrot.lane.b32.xlu0 %v1385, 64
  %v1402 = vpop.permute.xlu0 %1401
  %v1405 = vmul.f32 %v1381, %v1400
  %v1406 = vmul.f32 %v1383, %v1402
  %1409 = vrot.lane.b32.xlu0 %v1405, 32
  %v1410 = vpop.permute.xlu0 %1409
  %1411 = vrot.lane.b32.xlu0 %v1406, 32
  %v1412 = vpop.permute.xlu0 %1411
  %v1415 = vadd.f32 %v1395, %v1410
  %v1416 = vadd.f32 %v1396, %v1412
  %v1417 = vtanh.pop %v1415
  %v1418 = vtanh.pop %v1416
  %1421 = vrot.lane.b32.xlu0 %v1417, 64
  %v1422 = vpop.permute.xlu0 %1421
  %1423 = vrot.lane.b32.xlu0 %v1418, 64
  %v1424 = vpop.permute.xlu0 %1423
  %v1427 = vmul.f32 %v1381, %v1422
  %v1428 = vmul.f32 %v1383, %v1424
  %vm1429 = vcmp.gt.s32.totalorder %v23, 3
  %vm1430 = vcmp.gt.s32.totalorder %v23, 4
  %v1431 = vsel %vm1429, 1, 0
  %1432 = vset.pattern.permute.xlu0 0
  %1433 = vperm.xlu0 %1432, %v1431
  %v1434 = vpop.permute.xlu0 %1433
  %vm1435 = vcmp.eq.s32.totalorder %v1434, 1
  %v1438 = vrot.slane %v1362, 3
  %v1439 = vrot.slane %v1363, 2
  %v1440 = vsel %vm293, %v1439, %v1438
  %1441 = vrot.lane.b32.xlu0 %v1440, 32
  %v1442 = vpop.permute.xlu0 %1441
  %v1444 = vsel %vm1435, %v1442, %v1169
  %1445 = vst.msk [vmem:[#allocation2] sm:$0x3] %vm18, %v1444
  %v1446 = vld [vmem:[#allocation3] sm:$0x3]
  %v1449 = vrot.slane %v1350, 3
  %v1450 = vrot.slane %v1351, 2
  %v1451 = vsel %vm293, %v1450, %v1449
  %1452 = vrot.lane.b32.xlu0 %v1451, 96
  %v1453 = vpop.permute.xlu0 %1452
  %v1455 = vsel %vm1435, %v1453, %v1446
  %1456 = vst.msk [vmem:[#allocation3] sm:$0x3] %vm18, %v1455
  %v1457 = vld [vmem:[#allocation4] sm:$0x3]
  %v1458 = vsel %vm1430, 1, 0
  %1459 = vset.pattern.permute.xlu0 0
  %1460 = vperm.xlu0 %1459, %v1458
  %v1461 = vpop.permute.xlu0 %1460
  %vm1462 = vcmp.eq.s32.totalorder %v1461, 1
  %v1465 = vrot.slane %v1427, 4
  %v1466 = vrot.slane %v1428, 3
  %v1467 = vsel %vm293, %v1466, %v1465
  %1468 = vrot.lane.b32.xlu0 %v1467, 32
  %v1469 = vpop.permute.xlu0 %1468
  %v1471 = vsel %vm1462, %v1469, %v1457
  %1472 = vst.msk [vmem:[#allocation4] sm:$0x3] %vm18, %v1471
  %v1473 = vld [vmem:[#allocation5] sm:$0x3]
  %v1476 = vrot.slane %v1415, 4
  %v1477 = vrot.slane %v1416, 3
  %v1478 = vsel %vm293, %v1477, %v1476
  %1479 = vrot.lane.b32.xlu0 %v1478, 96
  %v1480 = vpop.permute.xlu0 %1479
  %v1482 = vsel %vm1462, %v1480, %v1473
  %1483 = vst.msk [vmem:[#allocation5] sm:$0x3] %vm18, %v1482
  %v1484 = vsel %vm1435, %v1442, 0.0
  %v1487 = vunpack.c.l.s4 1966171168
  %v1488 = vunpack.c.0.s8 %v1487
  %v1489 = vlaneseq
  %v1490 = vshrl.u32 %v1489, 7
  %v1491 = vsub.s32 %v1488, %v1490
  %v1492 = vrot.slane %v1484, %v1491
  %v1493 = vcombine.high %v1492, %v1492
  %v1495 = vunpack.c.l.s4 1966171168
  %v1496 = vunpack.c.0.s8 %v1495
  %v1497 = vlaneseq
  %v1498 = vshrl.u32 %v1497, 7
  %v1499 = vsub.s32 %v1496, %v1498
  %v1500 = vrot.slane %v1492, %v1499
  %v1502 = vunpack.c.l.s4 1966171168
  %v1503 = vunpack.c.0.s8 %v1502
  %v1504 = vlaneseq
  %v1505 = vshrl.u32 %v1504, 7
  %v1506 = vsub.s32 %v1503, %v1505
  %v1507 = vrot.slane %v1493, %v1506
  %1510 = vst.msk [vmem:[#allocation6 + $0x3] sm:$0x1] %vm363, %v1500
  %1511 = vst.msk [vmem:[#allocation6 + $0xb] sm:$0x1] %vm363, %v1507
  %v1512 = vsel %vm1462, %v1469, 0.0
  %v1515 = vunpack.c.l.s4 1966171168
  %v1516 = vunpack.c.0.s8 %v1515
  %v1517 = vlaneseq
  %v1518 = vshrl.u32 %v1517, 7
  %v1519 = vsub.s32 %v1516, %v1518
  %v1520 = vrot.slane %v1512, %v1519
  %v1521 = vcombine.high %v1520, %v1520
  %v1523 = vunpack.c.l.s4 1966171168
  %v1524 = vunpack.c.0.s8 %v1523
  %v1525 = vlaneseq
  %v1526 = vshrl.u32 %v1525, 7
  %v1527 = vsub.s32 %v1524, %v1526
  %v1528 = vrot.slane %v1520, %v1527
  %v1530 = vunpack.c.l.s4 1966171168
  %v1531 = vunpack.c.0.s8 %v1530
  %v1532 = vlaneseq
  %v1533 = vshrl.u32 %v1532, 7
  %v1534 = vsub.s32 %v1531, %v1533
  %v1535 = vrot.slane %v1521, %v1534
  %v1536 = vlaneseq
  %v1537 = vshrl.u32 %v1536, 7
  %v1538 = vsub.s32 0, %v1537
  %v1539 = vrot.slane %v1528, %v1538
  %v1540 = vlaneseq
  %v1541 = vshrl.u32 %v1540, 7
  %v1542 = vsub.s32 0, %v1541
  %v1543 = vrot.slane %v1535, %v1542
  %1544 = vrot.lane.b32.xlu0 %v1539, 32
  %v1545 = vpop.permute.xlu0 %1544
  %1546 = vrot.lane.b32.xlu0 %v1543, 32
  %v1547 = vpop.permute.xlu0 %1546
  %1550 = vst.msk [vmem:[#allocation6 + $0x4] sm:$0x1] %vm404, %v1545
  %1551 = vst.msk [vmem:[#allocation6 + $0xc] sm:$0x1] %vm404, %v1547
  %v1552 = vld [vmem:[#allocation2] sm:$0x3]
  %v1553 = vpack.c.bf16 %v1552, %v1552
  %v1554 = vld [vmem:[%s1] sm:$0xf]
  %v1555 = vld [vmem:[%s1 + $0x4] sm:$0xf]
  %v1556 = vld [vmem:[%s1 + $0x8] sm:$0xf]
  %v1557 = vld [vmem:[%s1 + $0xc] sm:$0xf]
  %v1562 = vunpack.c.l.b16 %v1554
  %v1563 = vunpack.c.l.b16 %v1555
  %v1564 = vunpack.c.l.b16 %v1556
  %v1565 = vunpack.c.l.b16 %v1557
  %v1566 = vpack.c.b16 %v1563, %v1562
  %v1567 = vpack.c.b16 %v1565, %v1564
  %v1571 = vsel %vm42, %v1553, 0
  %1573 = vmatprep.subr.bf16.mxu0 0
  %1574 = vmatpush1.bf16.msra.mxu0 %v1566
  %1575 = vmatprep.subr.bf16.mxu0 0
  %1576 = vmatpush1.bf16.msra.mxu0 %v1567
  %1577 = vmatprep.subr.bf16.mxu0 0
  %1578 = vmatpush1.bf16.msra.mxu0 0
  %1579 = vmatprep.subr.bf16.mxu0 0
  %1580 = vmatpush1.bf16.msra.mxu0 0
  %1581 = vmatprep.subr.bf16.mxu0 0
  %1582 = vmatpush1.bf16.msra.mxu0 0
  %1583 = vmatprep.subr.bf16.mxu0 0
  %1584 = vmatpush1.bf16.msra.mxu0 0
  %1585 = vmatprep.subr.bf16.mxu0 0
  %1586 = vmatpush1.bf16.msra.mxu0 0
  %1587 = vmatprep.subr.bf16.mxu0 0
  %1588 = vmatpush1.bf16.msra.mxu0 0
  %1589 = vmatprep.subr.bf16.mxu0 0
  %1590 = vmatpush1.bf16.msra.mxu0 0
  %1591 = vmatprep.subr.bf16.mxu0 0
  %1592 = vmatpush1.bf16.msra.mxu0 0
  %1593 = vmatprep.subr.bf16.mxu0 0
  %1594 = vmatpush1.bf16.msra.mxu0 0
  %1595 = vmatprep.subr.bf16.mxu0 0
  %1596 = vmatpush1.bf16.msra.mxu0 0
  %1597 = vmatprep.subr.bf16.mxu0 0
  %1598 = vmatpush1.bf16.msra.mxu0 0
  %1599 = vmatprep.subr.bf16.mxu0 0
  %1600 = vmatpush1.bf16.msra.mxu0 0
  %1601 = vmatprep.subr.bf16.mxu0 0
  %1602 = vmatpush1.bf16.msra.mxu0 0
  %1603 = vmatprep.subr.bf16.mxu0 0
  %1604 = vmatpush1.bf16.msra.mxu0 0
  %1605 = vmatprep.mubr.bf16.mxu0 0
  %1606 = vmatmul.mubr.bf16.gmra.mrb[0].mxu0 %v1571
  %v1607 = vpop.f32.mrb[0].mxu0
  %v1608 = vadd.f32 0.0, %v1607
  %v1609 = vpop.f32.mrb[0].mxu0
  %v1610 = vpop.f32.mrb[0].mxu0
  %v1611 = vpop.f32.mrb[0].mxu0
  %1612 = vdwg.mxu0
  %v1613 = vld [vmem:[#allocation4] sm:$0x3]
  %v1614 = vpack.c.bf16 %v1613, %v1613
  %v1615 = vld [vmem:[%s2] sm:$0xf]
  %v1616 = vld [vmem:[%s2 + $0x4] sm:$0xf]
  %v1617 = vld [vmem:[%s2 + $0x8] sm:$0xf]
  %v1618 = vld [vmem:[%s2 + $0xc] sm:$0xf]
  %v1623 = vunpack.c.l.b16 %v1615
  %v1624 = vunpack.c.l.b16 %v1616
  %v1625 = vunpack.c.l.b16 %v1617
  %v1626 = vunpack.c.l.b16 %v1618
  %v1627 = vpack.c.b16 %v1624, %v1623
  %v1628 = vpack.c.b16 %v1626, %v1625
  %v1632 = vsel %vm42, %v1614, 0
  %1634 = vmatprep.subr.bf16.mxu0 0
  %1635 = vmatpush1.bf16.msra.mxu0 %v1627
  %1636 = vmatprep.subr.bf16.mxu0 0
  %1637 = vmatpush1.bf16.msra.mxu0 %v1628
  %1638 = vmatprep.subr.bf16.mxu0 0
  %1639 = vmatpush1.bf16.msra.mxu0 0
  %1640 = vmatprep.subr.bf16.mxu0 0
  %1641 = vmatpush1.bf16.msra.mxu0 0
  %1642 = vmatprep.subr.bf16.mxu0 0
  %1643 = vmatpush1.bf16.msra.mxu0 0
  %1644 = vmatprep.subr.bf16.mxu0 0
  %1645 = vmatpush1.bf16.msra.mxu0 0
  %1646 = vmatprep.subr.bf16.mxu0 0
  %1647 = vmatpush1.bf16.msra.mxu0 0
  %1648 = vmatprep.subr.bf16.mxu0 0
  %1649 = vmatpush1.bf16.msra.mxu0 0
  %1650 = vmatprep.subr.bf16.mxu0 0
  %1651 = vmatpush1.bf16.msra.mxu0 0
  %1652 = vmatprep.subr.bf16.mxu0 0
  %1653 = vmatpush1.bf16.msra.mxu0 0
  %1654 = vmatprep.subr.bf16.mxu0 0
  %1655 = vmatpush1.bf16.msra.mxu0 0
  %1656 = vmatprep.subr.bf16.mxu0 0
  %1657 = vmatpush1.bf16.msra.mxu0 0
  %1658 = vmatprep.subr.bf16.mxu0 0
  %1659 = vmatpush1.bf16.msra.mxu0 0
  %1660 = vmatprep.subr.bf16.mxu0 0
  %1661 = vmatpush1.bf16.msra.mxu0 0
  %1662 = vmatprep.subr.bf16.mxu0 0
  %1663 = vmatpush1.bf16.msra.mxu0 0
  %1664 = vmatprep.subr.bf16.mxu0 0
  %1665 = vmatpush1.bf16.msra.mxu0 0
  %1666 = vmatprep.mubr.bf16.mxu0 0
  %1667 = vmatmul.mubr.bf16.gmra.mrb[0].mxu0 %v1632
  %v1668 = vpop.f32.mrb[0].mxu0
  %v1669 = vadd.f32 0.0, %v1668
  %v1670 = vpop.f32.mrb[0].mxu0
  %v1671 = vpop.f32.mrb[0].mxu0
  %v1672 = vpop.f32.mrb[0].mxu0
  %1673 = vdwg.mxu0
  %v1674 = vld [vmem:[%s0] sm:$0x4]
  %v1675 = vld [vmem:[%s0 + $0x8] sm:$0x4]
  %v1676 = vunpack.c.l.bf16 %v1674
  %v1677 = vunpack.c.l.bf16 %v1675
  %v1678 = vld [vmem:[%s0 + $0x4] sm:$0x2]
  %v1679 = vld [vmem:[%s0 + $0xc] sm:$0x2]
  %v1680 = vunpack.c.l.bf16 %v1678
  %v1681 = vunpack.c.l.bf16 %v1679
  %v1683 = vrot.slane %v1608, 4
  %v1684 = vrot.slane %v1608, 5
  %v1687 = vadd.f32 %v1676, %v1683
  %v1688 = vadd.f32 %v1677, %v1684
  %v1689 = vld [vmem:[#allocation3] sm:$0x3]
  %v1690 = vxor.u32 %v1687, 2147483648
  %v1691 = vxor.u32 %v1688, 2147483648
  %v1692 = vmul.f32 %v1690, 1.442695
  %v1693 = vpow.pop %v1692
  %v1694 = vmul.f32 %v1691, 1.442695
  %v1695 = vpow.pop %v1694
  %v1696 = vadd.f32 %v1693, 1.0
  %v1697 = vadd.f32 %v1695, 1.0
  %v1698 = vrcp.pop %v1696
  %v1699 = vmul.f32 1.0, %v1698
  %v1700 = vrcp.pop %v1697
  %v1701 = vmul.f32 1.0, %v1700
  %v1702 = vtanh.pop %v1687
  %v1703 = vtanh.pop %v1688
  %v1705 = vrot.slane %v1689, 4
  %v1706 = vrot.slane %v1689, 5
  %1707 = vrot.lane.b32.xlu0 %v1705, 32
  %v1708 = vpop.permute.xlu0 %1707
  %1709 = vrot.lane.b32.xlu0 %v1706, 32
  %v1710 = vpop.permute.xlu0 %1709
  %v1713 = vmul.f32 %v1699, %v1708
  %v1714 = vmul.f32 %v1701, %v1710
  %1717 = vrot.lane.b32.xlu0 %v1702, 64
  %v1718 = vpop.permute.xlu0 %1717
  %1719 = vrot.lane.b32.xlu0 %v1703, 64
  %v1720 = vpop.permute.xlu0 %1719
  %v1723 = vmul.f32 %v1699, %v1718
  %v1724 = vmul.f32 %v1701, %v1720
  %1727 = vrot.lane.b32.xlu0 %v1723, 32
  %v1728 = vpop.permute.xlu0 %1727
  %1729 = vrot.lane.b32.xlu0 %v1724, 32
  %v1730 = vpop.permute.xlu0 %1729
  %v1733 = vadd.f32 %v1713, %v1728
  %v1734 = vadd.f32 %v1714, %v1730
  %v1735 = vtanh.pop %v1733
  %v1736 = vtanh.pop %v1734
  %1739 = vrot.lane.b32.xlu0 %v1735, 64
  %v1740 = vpop.permute.xlu0 %1739
  %1741 = vrot.lane.b32.xlu0 %v1736, 64
  %v1742 = vpop.permute.xlu0 %1741
  %v1745 = vmul.f32 %v1699, %v1740
  %v1746 = vmul.f32 %v1701, %v1742
  %v1748 = vrot.slane %v1669, 5
  %v1749 = vrot.slane %v1669, 6
  %v1752 = vadd.f32 %v1680, %v1748
  %v1753 = vadd.f32 %v1681, %v1749
  %v1754 = vld [vmem:[#allocation5] sm:$0x3]
  %v1755 = vxor.u32 %v1752, 2147483648
  %v1756 = vxor.u32 %v1753, 2147483648
  %v1757 = vmul.f32 %v1755, 1.442695
  %v1758 = vpow.pop %v1757
  %v1759 = vmul.f32 %v1756, 1.442695
  %v1760 = vpow.pop %v1759
  %v1761 = vadd.f32 %v1758, 1.0
  %v1762 = vadd.f32 %v1760, 1.0
  %v1763 = vrcp.pop %v1761
  %v1764 = vmul.f32 1.0, %v1763
  %v1765 = vrcp.pop %v1762
  %v1766 = vmul.f32 1.0, %v1765
  %v1767 = vtanh.pop %v1752
  %v1768 = vtanh.pop %v1753
  %v1770 = vrot.slane %v1754, 5
  %v1771 = vrot.slane %v1754, 6
  %1772 = vrot.lane.b32.xlu0 %v1770, 32
  %v1773 = vpop.permute.xlu0 %1772
  %1774 = vrot.lane.b32.xlu0 %v1771, 32
  %v1775 = vpop.permute.xlu0 %1774
  %v1778 = vmul.f32 %v1764, %v1773
  %v1779 = vmul.f32 %v1766, %v1775
  %1782 = vrot.lane.b32.xlu0 %v1767, 64
  %v1783 = vpop.permute.xlu0 %1782
  %1784 = vrot.lane.b32.xlu0 %v1768, 64
  %v1785 = vpop.permute.xlu0 %1784
  %v1788 = vmul.f32 %v1764, %v1783
  %v1789 = vmul.f32 %v1766, %v1785
  %1792 = vrot.lane.b32.xlu0 %v1788, 32
  %v1793 = vpop.permute.xlu0 %1792
  %1794 = vrot.lane.b32.xlu0 %v1789, 32
  %v1795 = vpop.permute.xlu0 %1794
  %v1798 = vadd.f32 %v1778, %v1793
  %v1799 = vadd.f32 %v1779, %v1795
  %v1800 = vtanh.pop %v1798
  %v1801 = vtanh.pop %v1799
  %1804 = vrot.lane.b32.xlu0 %v1800, 64
  %v1805 = vpop.permute.xlu0 %1804
  %1806 = vrot.lane.b32.xlu0 %v1801, 64
  %v1807 = vpop.permute.xlu0 %1806
  %v1810 = vmul.f32 %v1764, %v1805
  %v1811 = vmul.f32 %v1766, %v1807
  %v1814 = vrot.slane %v1745, 4
  %v1815 = vrot.slane %v1746, 3
  %v1816 = vsel %vm293, %v1815, %v1814
  %1817 = vrot.lane.b32.xlu0 %v1816, 32
  %v1818 = vpop.permute.xlu0 %1817
  %v1820 = vsel %vm1462, %v1818, %v1552
  %1821 = vst.msk [vmem:[#allocation2] sm:$0x3] %vm18, %v1820
  %v1822 = vld [vmem:[#allocation3] sm:$0x3]
  %v1825 = vrot.slane %v1733, 4
  %v1826 = vrot.slane %v1734, 3
  %v1827 = vsel %vm293, %v1826, %v1825
  %1828 = vrot.lane.b32.xlu0 %v1827, 96
  %v1829 = vpop.permute.xlu0 %1828
  %v1831 = vsel %vm1462, %v1829, %v1822
  %1832 = vst.msk [vmem:[#allocation3] sm:$0x3] %vm18, %v1831
  %v1833 = vld [vmem:[#allocation4] sm:$0x3]
  %v1836 = vrot.slane %v1810, 3
  %v1837 = vrot.slane %v1811, 2
  %v1838 = vsel %vm293, %v1837, %v1836
  %1839 = vrot.lane.b32.xlu0 %v1838, 32
  %v1840 = vpop.permute.xlu0 %1839
  %v1842 = vsel %vm1435, %v1840, %v1833
  %1843 = vst.msk [vmem:[#allocation4] sm:$0x3] %vm18, %v1842
  %v1844 = vld [vmem:[#allocation5] sm:$0x3]
  %v1847 = vrot.slane %v1798, 3
  %v1848 = vrot.slane %v1799, 2
  %v1849 = vsel %vm293, %v1848, %v1847
  %1850 = vrot.lane.b32.xlu0 %v1849, 96
  %v1851 = vpop.permute.xlu0 %1850
  %v1853 = vsel %vm1435, %v1851, %v1844
  %1854 = vst.msk [vmem:[#allocation5] sm:$0x3] %vm18, %v1853
  %v1855 = vsel %vm1462, %v1818, 0.0
  %v1858 = vunpack.c.l.s4 1966171168
  %v1859 = vunpack.c.0.s8 %v1858
  %v1860 = vlaneseq
  %v1861 = vshrl.u32 %v1860, 7
  %v1862 = vsub.s32 %v1859, %v1861
  %v1863 = vrot.slane %v1855, %v1862
  %v1864 = vcombine.high %v1863, %v1863
  %v1866 = vunpack.c.l.s4 1966171168
  %v1867 = vunpack.c.0.s8 %v1866
  %v1868 = vlaneseq
  %v1869 = vshrl.u32 %v1868, 7
  %v1870 = vsub.s32 %v1867, %v1869
  %v1871 = vrot.slane %v1863, %v1870
  %v1873 = vunpack.c.l.s4 1966171168
  %v1874 = vunpack.c.0.s8 %v1873
  %v1875 = vlaneseq
  %v1876 = vshrl.u32 %v1875, 7
  %v1877 = vsub.s32 %v1874, %v1876
  %v1878 = vrot.slane %v1864, %v1877
  %1881 = vst.msk [vmem:[#allocation6 + $0x4] sm:$0x1] %vm363, %v1871
  %1882 = vst.msk [vmem:[#allocation6 + $0xc] sm:$0x1] %vm363, %v1878
  %v1883 = vsel %vm1435, %v1840, 0.0
  %v1886 = vunpack.c.l.s4 1966171168
  %v1887 = vunpack.c.0.s8 %v1886
  %v1888 = vlaneseq
  %v1889 = vshrl.u32 %v1888, 7
  %v1890 = vsub.s32 %v1887, %v1889
  %v1891 = vrot.slane %v1883, %v1890
  %v1892 = vcombine.high %v1891, %v1891
  %v1894 = vunpack.c.l.s4 1966171168
  %v1895 = vunpack.c.0.s8 %v1894
  %v1896 = vlaneseq
  %v1897 = vshrl.u32 %v1896, 7
  %v1898 = vsub.s32 %v1895, %v1897
  %v1899 = vrot.slane %v1891, %v1898
  %v1901 = vunpack.c.l.s4 1966171168
  %v1902 = vunpack.c.0.s8 %v1901
  %v1903 = vlaneseq
  %v1904 = vshrl.u32 %v1903, 7
  %v1905 = vsub.s32 %v1902, %v1904
  %v1906 = vrot.slane %v1892, %v1905
  %v1907 = vlaneseq
  %v1908 = vshrl.u32 %v1907, 7
  %v1909 = vsub.s32 0, %v1908
  %v1910 = vrot.slane %v1899, %v1909
  %v1911 = vlaneseq
  %v1912 = vshrl.u32 %v1911, 7
  %v1913 = vsub.s32 0, %v1912
  %v1914 = vrot.slane %v1906, %v1913
  %1915 = vrot.lane.b32.xlu0 %v1910, 32
  %v1916 = vpop.permute.xlu0 %1915
  %1917 = vrot.lane.b32.xlu0 %v1914, 32
  %v1918 = vpop.permute.xlu0 %1917
  %1921 = vst.msk [vmem:[#allocation6 + $0x3] sm:$0x1] %vm404, %v1916
  %1922 = vst.msk [vmem:[#allocation6 + $0xb] sm:$0x1] %vm404, %v1918
  %v1923 = vld [vmem:[#allocation2] sm:$0x3]
  %v1924 = vpack.c.bf16 %v1923, %v1923
  %v1925 = vld [vmem:[%s1] sm:$0xf]
  %v1926 = vld [vmem:[%s1 + $0x4] sm:$0xf]
  %v1927 = vld [vmem:[%s1 + $0x8] sm:$0xf]
  %v1928 = vld [vmem:[%s1 + $0xc] sm:$0xf]
  %v1933 = vunpack.c.l.b16 %v1925
  %v1934 = vunpack.c.l.b16 %v1926
  %v1935 = vunpack.c.l.b16 %v1927
  %v1936 = vunpack.c.l.b16 %v1928
  %v1937 = vpack.c.b16 %v1934, %v1933
  %v1938 = vpack.c.b16 %v1936, %v1935
  %v1942 = vsel %vm42, %v1924, 0
  %1944 = vmatprep.subr.bf16.mxu0 0
  %1945 = vmatpush1.bf16.msra.mxu0 %v1937
  %1946 = vmatprep.subr.bf16.mxu0 0
  %1947 = vmatpush1.bf16.msra.mxu0 %v1938
  %1948 = vmatprep.subr.bf16.mxu0 0
  %1949 = vmatpush1.bf16.msra.mxu0 0
  %1950 = vmatprep.subr.bf16.mxu0 0
  %1951 = vmatpush1.bf16.msra.mxu0 0
  %1952 = vmatprep.subr.bf16.mxu0 0
  %1953 = vmatpush1.bf16.msra.mxu0 0
  %1954 = vmatprep.subr.bf16.mxu0 0
  %1955 = vmatpush1.bf16.msra.mxu0 0
  %1956 = vmatprep.subr.bf16.mxu0 0
  %1957 = vmatpush1.bf16.msra.mxu0 0
  %1958 = vmatprep.subr.bf16.mxu0 0
  %1959 = vmatpush1.bf16.msra.mxu0 0
  %1960 = vmatprep.subr.bf16.mxu0 0
  %1961 = vmatpush1.bf16.msra.mxu0 0
  %1962 = vmatprep.subr.bf16.mxu0 0
  %1963 = vmatpush1.bf16.msra.mxu0 0
  %1964 = vmatprep.subr.bf16.mxu0 0
  %1965 = vmatpush1.bf16.msra.mxu0 0
  %1966 = vmatprep.subr.bf16.mxu0 0
  %1967 = vmatpush1.bf16.msra.mxu0 0
  %1968 = vmatprep.subr.bf16.mxu0 0
  %1969 = vmatpush1.bf16.msra.mxu0 0
  %1970 = vmatprep.subr.bf16.mxu0 0
  %1971 = vmatpush1.bf16.msra.mxu0 0
  %1972 = vmatprep.subr.bf16.mxu0 0
  %1973 = vmatpush1.bf16.msra.mxu0 0
  %1974 = vmatprep.subr.bf16.mxu0 0
  %1975 = vmatpush1.bf16.msra.mxu0 0
  %1976 = vmatprep.mubr.bf16.mxu0 0
  %1977 = vmatmul.mubr.bf16.gmra.mrb[0].mxu0 %v1942
  %v1978 = vpop.f32.mrb[0].mxu0
  %v1979 = vadd.f32 0.0, %v1978
  %v1980 = vpop.f32.mrb[0].mxu0
  %v1981 = vpop.f32.mrb[0].mxu0
  %v1982 = vpop.f32.mrb[0].mxu0
  %1983 = vdwg.mxu0
  %v1984 = vld [vmem:[#allocation4] sm:$0x3]
  %v1985 = vpack.c.bf16 %v1984, %v1984
  %v1986 = vld [vmem:[%s2] sm:$0xf]
  %v1987 = vld [vmem:[%s2 + $0x4] sm:$0xf]
  %v1988 = vld [vmem:[%s2 + $0x8] sm:$0xf]
  %v1989 = vld [vmem:[%s2 + $0xc] sm:$0xf]
  %v1994 = vunpack.c.l.b16 %v1986
  %v1995 = vunpack.c.l.b16 %v1987
  %v1996 = vunpack.c.l.b16 %v1988
  %v1997 = vunpack.c.l.b16 %v1989
  %v1998 = vpack.c.b16 %v1995, %v1994
  %v1999 = vpack.c.b16 %v1997, %v1996
  %v2003 = vsel %vm42, %v1985, 0
  %2005 = vmatprep.subr.bf16.mxu0 0
  %2006 = vmatpush1.bf16.msra.mxu0 %v1998
  %2007 = vmatprep.subr.bf16.mxu0 0
  %2008 = vmatpush1.bf16.msra.mxu0 %v1999
  %2009 = vmatprep.subr.bf16.mxu0 0
  %2010 = vmatpush1.bf16.msra.mxu0 0
  %2011 = vmatprep.subr.bf16.mxu0 0
  %2012 = vmatpush1.bf16.msra.mxu0 0
  %2013 = vmatprep.subr.bf16.mxu0 0
  %2014 = vmatpush1.bf16.msra.mxu0 0
  %2015 = vmatprep.subr.bf16.mxu0 0
  %2016 = vmatpush1.bf16.msra.mxu0 0
  %2017 = vmatprep.subr.bf16.mxu0 0
  %2018 = vmatpush1.bf16.msra.mxu0 0
  %2019 = vmatprep.subr.bf16.mxu0 0
  %2020 = vmatpush1.bf16.msra.mxu0 0
  %2021 = vmatprep.subr.bf16.mxu0 0
  %2022 = vmatpush1.bf16.msra.mxu0 0
  %2023 = vmatprep.subr.bf16.mxu0 0
  %2024 = vmatpush1.bf16.msra.mxu0 0
  %2025 = vmatprep.subr.bf16.mxu0 0
  %2026 = vmatpush1.bf16.msra.mxu0 0
  %2027 = vmatprep.subr.bf16.mxu0 0
  %2028 = vmatpush1.bf16.msra.mxu0 0
  %2029 = vmatprep.subr.bf16.mxu0 0
  %2030 = vmatpush1.bf16.msra.mxu0 0
  %2031 = vmatprep.subr.bf16.mxu0 0
  %2032 = vmatpush1.bf16.msra.mxu0 0
  %2033 = vmatprep.subr.bf16.mxu0 0
  %2034 = vmatpush1.bf16.msra.mxu0 0
  %2035 = vmatprep.subr.bf16.mxu0 0
  %2036 = vmatpush1.bf16.msra.mxu0 0
  %2037 = vmatprep.mubr.bf16.mxu0 0
  %2038 = vmatmul.mubr.bf16.gmra.mrb[0].mxu0 %v2003
  %v2039 = vpop.f32.mrb[0].mxu0
  %v2040 = vadd.f32 0.0, %v2039
  %v2041 = vpop.f32.mrb[0].mxu0
  %v2042 = vpop.f32.mrb[0].mxu0
  %v2043 = vpop.f32.mrb[0].mxu0
  %2044 = vdwg.mxu0
  %v2045 = vld [vmem:[%s0] sm:$0x4]
  %v2046 = vld [vmem:[%s0 + $0x8] sm:$0x4]
  %v2047 = vunpack.c.l.bf16 %v2045
  %v2048 = vunpack.c.l.bf16 %v2046
  %v2049 = vld [vmem:[%s0 + $0x4] sm:$0x2]
  %v2050 = vld [vmem:[%s0 + $0xc] sm:$0x2]
  %v2051 = vunpack.c.l.bf16 %v2049
  %v2052 = vunpack.c.l.bf16 %v2050
  %v2054 = vrot.slane %v1979, 3
  %v2055 = vrot.slane %v1979, 4
  %v2058 = vadd.f32 %v2047, %v2054
  %v2059 = vadd.f32 %v2048, %v2055
  %v2060 = vld [vmem:[#allocation3] sm:$0x3]
  %v2061 = vxor.u32 %v2058, 2147483648
  %v2062 = vxor.u32 %v2059, 2147483648
  %v2063 = vmul.f32 %v2061, 1.442695
  %v2064 = vpow.pop %v2063
  %v2065 = vmul.f32 %v2062, 1.442695
  %v2066 = vpow.pop %v2065
  %v2067 = vadd.f32 %v2064, 1.0
  %v2068 = vadd.f32 %v2066, 1.0
  %v2069 = vrcp.pop %v2067
  %v2070 = vmul.f32 1.0, %v2069
  %v2071 = vrcp.pop %v2068
  %v2072 = vmul.f32 1.0, %v2071
  %v2073 = vtanh.pop %v2058
  %v2074 = vtanh.pop %v2059
  %v2076 = vrot.slane %v2060, 3
  %v2077 = vrot.slane %v2060, 4
  %2078 = vrot.lane.b32.xlu0 %v2076, 32
  %v2079 = vpop.permute.xlu0 %2078
  %2080 = vrot.lane.b32.xlu0 %v2077, 32
  %v2081 = vpop.permute.xlu0 %2080
  %v2084 = vmul.f32 %v2070, %v2079
  %v2085 = vmul.f32 %v2072, %v2081
  %2088 = vrot.lane.b32.xlu0 %v2073, 64
  %v2089 = vpop.permute.xlu0 %2088
  %2090 = vrot.lane.b32.xlu0 %v2074, 64
  %v2091 = vpop.permute.xlu0 %2090
  %v2094 = vmul.f32 %v2070, %v2089
  %v2095 = vmul.f32 %v2072, %v2091
  %2098 = vrot.lane.b32.xlu0 %v2094, 32
  %v2099 = vpop.permute.xlu0 %2098
  %2100 = vrot.lane.b32.xlu0 %v2095, 32
  %v2101 = vpop.permute.xlu0 %2100
  %v2104 = vadd.f32 %v2084, %v2099
  %v2105 = vadd.f32 %v2085, %v2101
  %v2106 = vtanh.pop %v2104
  %v2107 = vtanh.pop %v2105
  %2110 = vrot.lane.b32.xlu0 %v2106, 64
  %v2111 = vpop.permute.xlu0 %2110
  %2112 = vrot.lane.b32.xlu0 %v2107, 64
  %v2113 = vpop.permute.xlu0 %2112
  %v2116 = vmul.f32 %v2070, %v2111
  %v2117 = vmul.f32 %v2072, %v2113
  %v2119 = vrot.slane %v2040, 6
  %v2120 = vrot.slane %v2040, 7
  %v2123 = vadd.f32 %v2051, %v2119
  %v2124 = vadd.f32 %v2052, %v2120
  %v2125 = vld [vmem:[#allocation5] sm:$0x3]
  %v2126 = vxor.u32 %v2123, 2147483648
  %v2127 = vxor.u32 %v2124, 2147483648
  %v2128 = vmul.f32 %v2126, 1.442695
  %v2129 = vpow.pop %v2128
  %v2130 = vmul.f32 %v2127, 1.442695
  %v2131 = vpow.pop %v2130
  %v2132 = vadd.f32 %v2129, 1.0
  %v2133 = vadd.f32 %v2131, 1.0
  %v2134 = vrcp.pop %v2132
  %v2135 = vmul.f32 1.0, %v2134
  %v2136 = vrcp.pop %v2133
  %v2137 = vmul.f32 1.0, %v2136
  %v2138 = vtanh.pop %v2123
  %v2139 = vtanh.pop %v2124
  %v2141 = vrot.slane %v2125, 6
  %v2142 = vrot.slane %v2125, 7
  %2143 = vrot.lane.b32.xlu0 %v2141, 32
  %v2144 = vpop.permute.xlu0 %2143
  %2145 = vrot.lane.b32.xlu0 %v2142, 32
  %v2146 = vpop.permute.xlu0 %2145
  %v2149 = vmul.f32 %v2135, %v2144
  %v2150 = vmul.f32 %v2137, %v2146
  %2153 = vrot.lane.b32.xlu0 %v2138, 64
  %v2154 = vpop.permute.xlu0 %2153
  %2155 = vrot.lane.b32.xlu0 %v2139, 64
  %v2156 = vpop.permute.xlu0 %2155
  %v2159 = vmul.f32 %v2135, %v2154
  %v2160 = vmul.f32 %v2137, %v2156
  %2163 = vrot.lane.b32.xlu0 %v2159, 32
  %v2164 = vpop.permute.xlu0 %2163
  %2165 = vrot.lane.b32.xlu0 %v2160, 32
  %v2166 = vpop.permute.xlu0 %2165
  %v2169 = vadd.f32 %v2149, %v2164
  %v2170 = vadd.f32 %v2150, %v2166
  %v2171 = vtanh.pop %v2169
  %v2172 = vtanh.pop %v2170
  %2175 = vrot.lane.b32.xlu0 %v2171, 64
  %v2176 = vpop.permute.xlu0 %2175
  %2177 = vrot.lane.b32.xlu0 %v2172, 64
  %v2178 = vpop.permute.xlu0 %2177
  %v2181 = vmul.f32 %v2135, %v2176
  %v2182 = vmul.f32 %v2137, %v2178
  %v2185 = vrot.slane %v2116, 5
  %v2186 = vrot.slane %v2117, 4
  %v2187 = vsel %vm293, %v2186, %v2185
  %2188 = vrot.lane.b32.xlu0 %v2187, 32
  %v2189 = vpop.permute.xlu0 %2188
  %v2191 = vsel %vm1079, %v2189, %v1923
  %2192 = vst.msk [vmem:[#allocation2] sm:$0x3] %vm18, %v2191
  %v2193 = vld [vmem:[#allocation3] sm:$0x3]
  %v2196 = vrot.slane %v2104, 5
  %v2197 = vrot.slane %v2105, 4
  %v2198 = vsel %vm293, %v2197, %v2196
  %2199 = vrot.lane.b32.xlu0 %v2198, 96
  %v2200 = vpop.permute.xlu0 %2199
  %v2202 = vsel %vm1079, %v2200, %v2193
  %2203 = vst.msk [vmem:[#allocation3] sm:$0x3] %vm18, %v2202
  %v2204 = vld [vmem:[#allocation4] sm:$0x3]
  %v2207 = vrot.slane %v2181, 2
  %v2208 = vrot.slane %v2182, 1
  %v2209 = vsel %vm293, %v2208, %v2207
  %2210 = vrot.lane.b32.xlu0 %v2209, 32
  %v2211 = vpop.permute.xlu0 %2210
  %v2213 = vsel %vm1052, %v2211, %v2204
  %2214 = vst.msk [vmem:[#allocation4] sm:$0x3] %vm18, %v2213
  %v2215 = vld [vmem:[#allocation5] sm:$0x3]
  %v2218 = vrot.slane %v2169, 2
  %v2219 = vrot.slane %v2170, 1
  %v2220 = vsel %vm293, %v2219, %v2218
  %2221 = vrot.lane.b32.xlu0 %v2220, 96
  %v2222 = vpop.permute.xlu0 %2221
  %v2224 = vsel %vm1052, %v2222, %v2215
  %2225 = vst.msk [vmem:[#allocation5] sm:$0x3] %vm18, %v2224
  %v2226 = vsel %vm1079, %v2189, 0.0
  %v2229 = vunpack.c.l.s4 1966171168
  %v2230 = vunpack.c.0.s8 %v2229
  %v2231 = vlaneseq
  %v2232 = vshrl.u32 %v2231, 7
  %v2233 = vsub.s32 %v2230, %v2232
  %v2234 = vrot.slane %v2226, %v2233
  %v2235 = vcombine.high %v2234, %v2234
  %v2237 = vunpack.c.l.s4 1966171168
  %v2238 = vunpack.c.0.s8 %v2237
  %v2239 = vlaneseq
  %v2240 = vshrl.u32 %v2239, 7
  %v2241 = vsub.s32 %v2238, %v2240
  %v2242 = vrot.slane %v2234, %v2241
  %v2244 = vunpack.c.l.s4 1966171168
  %v2245 = vunpack.c.0.s8 %v2244
  %v2246 = vlaneseq
  %v2247 = vshrl.u32 %v2246, 7
  %v2248 = vsub.s32 %v2245, %v2247
  %v2249 = vrot.slane %v2235, %v2248
  %2252 = vst.msk [vmem:[#allocation6 + $0x5] sm:$0x1] %vm363, %v2242
  %2253 = vst.msk [vmem:[#allocation6 + $0xd] sm:$0x1] %vm363, %v2249
  %v2254 = vsel %vm1052, %v2211, 0.0
  %v2257 = vunpack.c.l.s4 1966171168
  %v2258 = vunpack.c.0.s8 %v2257
  %v2259 = vlaneseq
  %v2260 = vshrl.u32 %v2259, 7
  %v2261 = vsub.s32 %v2258, %v2260
  %v2262 = vrot.slane %v2254, %v2261
  %v2263 = vcombine.high %v2262, %v2262
  %v2265 = vunpack.c.l.s4 1966171168
  %v2266 = vunpack.c.0.s8 %v2265
  %v2267 = vlaneseq
  %v2268 = vshrl.u32 %v2267, 7
  %v2269 = vsub.s32 %v2266, %v2268
  %v2270 = vrot.slane %v2262, %v2269
  %v2272 = vunpack.c.l.s4 1966171168
  %v2273 = vunpack.c.0.s8 %v2272
  %v2274 = vlaneseq
  %v2275 = vshrl.u32 %v2274, 7
  %v2276 = vsub.s32 %v2273, %v2275
  %v2277 = vrot.slane %v2263, %v2276
  %v2278 = vlaneseq
  %v2279 = vshrl.u32 %v2278, 7
  %v2280 = vsub.s32 0, %v2279
  %v2281 = vrot.slane %v2270, %v2280
  %v2282 = vlaneseq
  %v2283 = vshrl.u32 %v2282, 7
  %v2284 = vsub.s32 0, %v2283
  %v2285 = vrot.slane %v2277, %v2284
  %2286 = vrot.lane.b32.xlu0 %v2281, 32
  %v2287 = vpop.permute.xlu0 %2286
  %2288 = vrot.lane.b32.xlu0 %v2285, 32
  %v2289 = vpop.permute.xlu0 %2288
  %2292 = vst.msk [vmem:[#allocation6 + $0x2] sm:$0x1] %vm404, %v2287
  %2293 = vst.msk [vmem:[#allocation6 + $0xa] sm:$0x1] %vm404, %v2289
  %v2294 = vld [vmem:[#allocation2] sm:$0x3]
  %v2295 = vpack.c.bf16 %v2294, %v2294
  %v2296 = vld [vmem:[%s1] sm:$0xf]
  %v2297 = vld [vmem:[%s1 + $0x4] sm:$0xf]
  %v2298 = vld [vmem:[%s1 + $0x8] sm:$0xf]
  %v2299 = vld [vmem:[%s1 + $0xc] sm:$0xf]
  %v2304 = vunpack.c.l.b16 %v2296
  %v2305 = vunpack.c.l.b16 %v2297
  %v2306 = vunpack.c.l.b16 %v2298
  %v2307 = vunpack.c.l.b16 %v2299
  %v2308 = vpack.c.b16 %v2305, %v2304
  %v2309 = vpack.c.b16 %v2307, %v2306
  %v2313 = vsel %vm42, %v2295, 0
  %2315 = vmatprep.subr.bf16.mxu0 0
  %2316 = vmatpush1.bf16.msra.mxu0 %v2308
  %2317 = vmatprep.subr.bf16.mxu0 0
  %2318 = vmatpush1.bf16.msra.mxu0 %v2309
  %2319 = vmatprep.subr.bf16.mxu0 0
  %2320 = vmatpush1.bf16.msra.mxu0 0
  %2321 = vmatprep.subr.bf16.mxu0 0
  %2322 = vmatpush1.bf16.msra.mxu0 0
  %2323 = vmatprep.subr.bf16.mxu0 0
  %2324 = vmatpush1.bf16.msra.mxu0 0
  %2325 = vmatprep.subr.bf16.mxu0 0
  %2326 = vmatpush1.bf16.msra.mxu0 0
  %2327 = vmatprep.subr.bf16.mxu0 0
  %2328 = vmatpush1.bf16.msra.mxu0 0
  %2329 = vmatprep.subr.bf16.mxu0 0
  %2330 = vmatpush1.bf16.msra.mxu0 0
  %2331 = vmatprep.subr.bf16.mxu0 0
  %2332 = vmatpush1.bf16.msra.mxu0 0
  %2333 = vmatprep.subr.bf16.mxu0 0
  %2334 = vmatpush1.bf16.msra.mxu0 0
  %2335 = vmatprep.subr.bf16.mxu0 0
  %2336 = vmatpush1.bf16.msra.mxu0 0
  %2337 = vmatprep.subr.bf16.mxu0 0
  %2338 = vmatpush1.bf16.msra.mxu0 0
  %2339 = vmatprep.subr.bf16.mxu0 0
  %2340 = vmatpush1.bf16.msra.mxu0 0
  %2341 = vmatprep.subr.bf16.mxu0 0
  %2342 = vmatpush1.bf16.msra.mxu0 0
  %2343 = vmatprep.subr.bf16.mxu0 0
  %2344 = vmatpush1.bf16.msra.mxu0 0
  %2345 = vmatprep.subr.bf16.mxu0 0
  %2346 = vmatpush1.bf16.msra.mxu0 0
  %2347 = vmatprep.mubr.bf16.mxu0 0
  %2348 = vmatmul.mubr.bf16.gmra.mrb[0].mxu0 %v2313
  %v2349 = vpop.f32.mrb[0].mxu0
  %v2350 = vadd.f32 0.0, %v2349
  %v2351 = vpop.f32.mrb[0].mxu0
  %v2352 = vpop.f32.mrb[0].mxu0
  %v2353 = vpop.f32.mrb[0].mxu0
  %2354 = vdwg.mxu0
  %v2355 = vld [vmem:[#allocation4] sm:$0x3]
  %v2356 = vpack.c.bf16 %v2355, %v2355
  %v2357 = vld [vmem:[%s2] sm:$0xf]
  %v2358 = vld [vmem:[%s2 + $0x4] sm:$0xf]
  %v2359 = vld [vmem:[%s2 + $0x8] sm:$0xf]
  %v2360 = vld [vmem:[%s2 + $0xc] sm:$0xf]
  %v2365 = vunpack.c.l.b16 %v2357
  %v2366 = vunpack.c.l.b16 %v2358
  %v2367 = vunpack.c.l.b16 %v2359
  %v2368 = vunpack.c.l.b16 %v2360
  %v2369 = vpack.c.b16 %v2366, %v2365
  %v2370 = vpack.c.b16 %v2368, %v2367
  %v2374 = vsel %vm42, %v2356, 0
  %2376 = vmatprep.subr.bf16.mxu0 0
  %2377 = vmatpush1.bf16.msra.mxu0 %v2369
  %2378 = vmatprep.subr.bf16.mxu0 0
  %2379 = vmatpush1.bf16.msra.mxu0 %v2370
  %2380 = vmatprep.subr.bf16.mxu0 0
  %2381 = vmatpush1.bf16.msra.mxu0 0
  %2382 = vmatprep.subr.bf16.mxu0 0
  %2383 = vmatpush1.bf16.msra.mxu0 0
  %2384 = vmatprep.subr.bf16.mxu0 0
  %2385 = vmatpush1.bf16.msra.mxu0 0
  %2386 = vmatprep.subr.bf16.mxu0 0
  %2387 = vmatpush1.bf16.msra.mxu0 0
  %2388 = vmatprep.subr.bf16.mxu0 0
  %2389 = vmatpush1.bf16.msra.mxu0 0
  %2390 = vmatprep.subr.bf16.mxu0 0
  %2391 = vmatpush1.bf16.msra.mxu0 0
  %2392 = vmatprep.subr.bf16.mxu0 0
  %2393 = vmatpush1.bf16.msra.mxu0 0
  %2394 = vmatprep.subr.bf16.mxu0 0
  %2395 = vmatpush1.bf16.msra.mxu0 0
  %2396 = vmatprep.subr.bf16.mxu0 0
  %2397 = vmatpush1.bf16.msra.mxu0 0
  %2398 = vmatprep.subr.bf16.mxu0 0
  %2399 = vmatpush1.bf16.msra.mxu0 0
  %2400 = vmatprep.subr.bf16.mxu0 0
  %2401 = vmatpush1.bf16.msra.mxu0 0
  %2402 = vmatprep.subr.bf16.mxu0 0
  %2403 = vmatpush1.bf16.msra.mxu0 0
  %2404 = vmatprep.subr.bf16.mxu0 0
  %2405 = vmatpush1.bf16.msra.mxu0 0
  %2406 = vmatprep.subr.bf16.mxu0 0
  %2407 = vmatpush1.bf16.msra.mxu0 0
  %2408 = vmatprep.mubr.bf16.mxu0 0
  %2409 = vmatmul.mubr.bf16.gmra.mrb[0].mxu0 %v2374
  %v2410 = vpop.f32.mrb[0].mxu0
  %v2411 = vadd.f32 0.0, %v2410
  %v2412 = vpop.f32.mrb[0].mxu0
  %v2413 = vpop.f32.mrb[0].mxu0
  %v2414 = vpop.f32.mrb[0].mxu0
  %2415 = vdwg.mxu0
  %v2416 = vld [vmem:[%s0] sm:$0x8]
  %v2417 = vld [vmem:[%s0 + $0x8] sm:$0x8]
  %v2418 = vunpack.c.l.bf16 %v2416
  %v2419 = vunpack.c.l.bf16 %v2417
  %v2420 = vld [vmem:[%s0 + $0x4] sm:$0x1]
  %v2421 = vld [vmem:[%s0 + $0xc] sm:$0x1]
  %v2422 = vunpack.c.l.bf16 %v2420
  %v2423 = vunpack.c.l.bf16 %v2421
  %v2425 = vrot.slane %v2350, 2
  %v2426 = vrot.slane %v2350, 3
  %v2429 = vadd.f32 %v2418, %v2425
  %v2430 = vadd.f32 %v2419, %v2426
  %v2431 = vld [vmem:[#allocation3] sm:$0x3]
  %v2432 = vxor.u32 %v2429, 2147483648
  %v2433 = vxor.u32 %v2430, 2147483648
  %v2434 = vmul.f32 %v2432, 1.442695
  %v2435 = vpow.pop %v2434
  %v2436 = vmul.f32 %v2433, 1.442695
  %v2437 = vpow.pop %v2436
  %v2438 = vadd.f32 %v2435, 1.0
  %v2439 = vadd.f32 %v2437, 1.0
  %v2440 = vrcp.pop %v2438
  %v2441 = vmul.f32 1.0, %v2440
  %v2442 = vrcp.pop %v2439
  %v2443 = vmul.f32 1.0, %v2442
  %v2444 = vtanh.pop %v2429
  %v2445 = vtanh.pop %v2430
  %v2447 = vrot.slane %v2431, 2
  %v2448 = vrot.slane %v2431, 3
  %2449 = vrot.lane.b32.xlu0 %v2447, 32
  %v2450 = vpop.permute.xlu0 %2449
  %2451 = vrot.lane.b32.xlu0 %v2448, 32
  %v2452 = vpop.permute.xlu0 %2451
  %v2455 = vmul.f32 %v2441, %v2450
  %v2456 = vmul.f32 %v2443, %v2452
  %2459 = vrot.lane.b32.xlu0 %v2444, 64
  %v2460 = vpop.permute.xlu0 %2459
  %2461 = vrot.lane.b32.xlu0 %v2445, 64
  %v2462 = vpop.permute.xlu0 %2461
  %v2465 = vmul.f32 %v2441, %v2460
  %v2466 = vmul.f32 %v2443, %v2462
  %2469 = vrot.lane.b32.xlu0 %v2465, 32
  %v2470 = vpop.permute.xlu0 %2469
  %2471 = vrot.lane.b32.xlu0 %v2466, 32
  %v2472 = vpop.permute.xlu0 %2471
  %v2475 = vadd.f32 %v2455, %v2470
  %v2476 = vadd.f32 %v2456, %v2472
  %v2477 = vtanh.pop %v2475
  %v2478 = vtanh.pop %v2476
  %2481 = vrot.lane.b32.xlu0 %v2477, 64
  %v2482 = vpop.permute.xlu0 %2481
  %2483 = vrot.lane.b32.xlu0 %v2478, 64
  %v2484 = vpop.permute.xlu0 %2483
  %v2487 = vmul.f32 %v2441, %v2482
  %v2488 = vmul.f32 %v2443, %v2484
  %v2490 = vrot.slane %v2411, 7
  %v2493 = vadd.f32 %v2422, %v2490
  %v2494 = vadd.f32 %v2423, %v2411
  %v2495 = vld [vmem:[#allocation5] sm:$0x3]
  %v2496 = vxor.u32 %v2493, 2147483648
  %v2497 = vxor.u32 %v2494, 2147483648
  %v2498 = vmul.f32 %v2496, 1.442695
  %v2499 = vpow.pop %v2498
  %v2500 = vmul.f32 %v2497, 1.442695
  %v2501 = vpow.pop %v2500
  %v2502 = vadd.f32 %v2499, 1.0
  %v2503 = vadd.f32 %v2501, 1.0
  %v2504 = vrcp.pop %v2502
  %v2505 = vmul.f32 1.0, %v2504
  %v2506 = vrcp.pop %v2503
  %v2507 = vmul.f32 1.0, %v2506
  %v2508 = vtanh.pop %v2493
  %v2509 = vtanh.pop %v2494
  %v2511 = vrot.slane %v2495, 7
  %2512 = vrot.lane.b32.xlu0 %v2511, 32
  %v2513 = vpop.permute.xlu0 %2512
  %2514 = vrot.lane.b32.xlu0 %v2495, 32
  %v2515 = vpop.permute.xlu0 %2514
  %v2518 = vmul.f32 %v2505, %v2513
  %v2519 = vmul.f32 %v2507, %v2515
  %2522 = vrot.lane.b32.xlu0 %v2508, 64
  %v2523 = vpop.permute.xlu0 %2522
  %2524 = vrot.lane.b32.xlu0 %v2509, 64
  %v2525 = vpop.permute.xlu0 %2524
  %v2528 = vmul.f32 %v2505, %v2523
  %v2529 = vmul.f32 %v2507, %v2525
  %2532 = vrot.lane.b32.xlu0 %v2528, 32
  %v2533 = vpop.permute.xlu0 %2532
  %2534 = vrot.lane.b32.xlu0 %v2529, 32
  %v2535 = vpop.permute.xlu0 %2534
  %v2538 = vadd.f32 %v2518, %v2533
  %v2539 = vadd.f32 %v2519, %v2535
  %v2540 = vtanh.pop %v2538
  %v2541 = vtanh.pop %v2539
  %2544 = vrot.lane.b32.xlu0 %v2540, 64
  %v2545 = vpop.permute.xlu0 %2544
  %2546 = vrot.lane.b32.xlu0 %v2541, 64
  %v2547 = vpop.permute.xlu0 %2546
  %v2550 = vmul.f32 %v2505, %v2545
  %v2551 = vmul.f32 %v2507, %v2547
  %v2554 = vrot.slane %v2487, 6
  %v2555 = vrot.slane %v2488, 5
  %v2556 = vsel %vm293, %v2555, %v2554
  %2557 = vrot.lane.b32.xlu0 %v2556, 32
  %v2558 = vpop.permute.xlu0 %2557
  %v2560 = vsel %vm696, %v2558, %v2294
  %2561 = vst.msk [vmem:[#allocation2] sm:$0x3] %vm18, %v2560
  %v2562 = vld [vmem:[#allocation3] sm:$0x3]
  %v2565 = vrot.slane %v2475, 6
  %v2566 = vrot.slane %v2476, 5
  %v2567 = vsel %vm293, %v2566, %v2565
  %2568 = vrot.lane.b32.xlu0 %v2567, 96
  %v2569 = vpop.permute.xlu0 %2568
  %v2571 = vsel %vm696, %v2569, %v2562
  %2572 = vst.msk [vmem:[#allocation3] sm:$0x3] %vm18, %v2571
  %v2573 = vld [vmem:[#allocation4] sm:$0x3]
  %v2576 = vrot.slane %v2550, 1
  %v2577 = vsel %vm293, %v2551, %v2576
  %2578 = vrot.lane.b32.xlu0 %v2577, 32
  %v2579 = vpop.permute.xlu0 %2578
  %v2581 = vsel %vm671, %v2579, %v2573
  %2582 = vst.msk [vmem:[#allocation4] sm:$0x3] %vm18, %v2581
  %v2583 = vld [vmem:[#allocation5] sm:$0x3]
  %v2586 = vrot.slane %v2538, 1
  %v2587 = vsel %vm293, %v2539, %v2586
  %2588 = vrot.lane.b32.xlu0 %v2587, 96
  %v2589 = vpop.permute.xlu0 %2588
  %v2591 = vsel %vm671, %v2589, %v2583
  %2592 = vst.msk [vmem:[#allocation5] sm:$0x3] %vm18, %v2591
  %v2593 = vsel %vm696, %v2558, 0.0
  %v2596 = vunpack.c.l.s4 1966171168
  %v2597 = vunpack.c.0.s8 %v2596
  %v2598 = vlaneseq
  %v2599 = vshrl.u32 %v2598, 7
  %v2600 = vsub.s32 %v2597, %v2599
  %v2601 = vrot.slane %v2593, %v2600
  %v2602 = vcombine.high %v2601, %v2601
  %v2604 = vunpack.c.l.s4 1966171168
  %v2605 = vunpack.c.0.s8 %v2604
  %v2606 = vlaneseq
  %v2607 = vshrl.u32 %v2606, 7
  %v2608 = vsub.s32 %v2605, %v2607
  %v2609 = vrot.slane %v2601, %v2608
  %v2611 = vunpack.c.l.s4 1966171168
  %v2612 = vunpack.c.0.s8 %v2611
  %v2613 = vlaneseq
  %v2614 = vshrl.u32 %v2613, 7
  %v2615 = vsub.s32 %v2612, %v2614
  %v2616 = vrot.slane %v2602, %v2615
  %2619 = vst.msk [vmem:[#allocation6 + $0x6] sm:$0x1] %vm363, %v2609
  %2620 = vst.msk [vmem:[#allocation6 + $0xe] sm:$0x1] %vm363, %v2616
  %v2621 = vsel %vm671, %v2579, 0.0
  %v2624 = vunpack.c.l.s4 1966171168
  %v2625 = vunpack.c.0.s8 %v2624
  %v2626 = vlaneseq
  %v2627 = vshrl.u32 %v2626, 7
  %v2628 = vsub.s32 %v2625, %v2627
  %v2629 = vrot.slane %v2621, %v2628
  %v2630 = vcombine.high %v2629, %v2629
  %v2632 = vunpack.c.l.s4 1966171168
  %v2633 = vunpack.c.0.s8 %v2632
  %v2634 = vlaneseq
  %v2635 = vshrl.u32 %v2634, 7
  %v2636 = vsub.s32 %v2633, %v2635
  %v2637 = vrot.slane %v2629, %v2636
  %v2639 = vunpack.c.l.s4 1966171168
  %v2640 = vunpack.c.0.s8 %v2639
  %v2641 = vlaneseq
  %v2642 = vshrl.u32 %v2641, 7
  %v2643 = vsub.s32 %v2640, %v2642
  %v2644 = vrot.slane %v2630, %v2643
  %v2645 = vlaneseq
  %v2646 = vshrl.u32 %v2645, 7
  %v2647 = vsub.s32 0, %v2646
  %v2648 = vrot.slane %v2637, %v2647
  %v2649 = vlaneseq
  %v2650 = vshrl.u32 %v2649, 7
  %v2651 = vsub.s32 0, %v2650
  %v2652 = vrot.slane %v2644, %v2651
  %2653 = vrot.lane.b32.xlu0 %v2648, 32
  %v2654 = vpop.permute.xlu0 %2653
  %2655 = vrot.lane.b32.xlu0 %v2652, 32
  %v2656 = vpop.permute.xlu0 %2655
  %2659 = vst.msk [vmem:[#allocation6 + $0x1] sm:$0x1] %vm404, %v2654
  %2660 = vst.msk [vmem:[#allocation6 + $0x9] sm:$0x1] %vm404, %v2656
  %v2661 = vld [vmem:[#allocation2] sm:$0x3]
  %v2662 = vpack.c.bf16 %v2661, %v2661
  %v2663 = vld [vmem:[%s1] sm:$0xf]
  %v2664 = vld [vmem:[%s1 + $0x4] sm:$0xf]
  %v2665 = vld [vmem:[%s1 + $0x8] sm:$0xf]
  %v2666 = vld [vmem:[%s1 + $0xc] sm:$0xf]
  %v2671 = vunpack.c.l.b16 %v2663
  %v2672 = vunpack.c.l.b16 %v2664
  %v2673 = vunpack.c.l.b16 %v2665
  %v2674 = vunpack.c.l.b16 %v2666
  %v2675 = vpack.c.b16 %v2672, %v2671
  %v2676 = vpack.c.b16 %v2674, %v2673
  %v2680 = vsel %vm42, %v2662, 0
  %2682 = vmatprep.subr.bf16.mxu0 0
  %2683 = vmatpush1.bf16.msra.mxu0 %v2675
  %2684 = vmatprep.subr.bf16.mxu0 0
  %2685 = vmatpush1.bf16.msra.mxu0 %v2676
  %2686 = vmatprep.subr.bf16.mxu0 0
  %2687 = vmatpush1.bf16.msra.mxu0 0
  %2688 = vmatprep.subr.bf16.mxu0 0
  %2689 = vmatpush1.bf16.msra.mxu0 0
  %2690 = vmatprep.subr.bf16.mxu0 0
  %2691 = vmatpush1.bf16.msra.mxu0 0
  %2692 = vmatprep.subr.bf16.mxu0 0
  %2693 = vmatpush1.bf16.msra.mxu0 0
  %2694 = vmatprep.subr.bf16.mxu0 0
  %2695 = vmatpush1.bf16.msra.mxu0 0
  %2696 = vmatprep.subr.bf16.mxu0 0
  %2697 = vmatpush1.bf16.msra.mxu0 0
  %2698 = vmatprep.subr.bf16.mxu0 0
  %2699 = vmatpush1.bf16.msra.mxu0 0
  %2700 = vmatprep.subr.bf16.mxu0 0
  %2701 = vmatpush1.bf16.msra.mxu0 0
  %2702 = vmatprep.subr.bf16.mxu0 0
  %2703 = vmatpush1.bf16.msra.mxu0 0
  %2704 = vmatprep.subr.bf16.mxu0 0
  %2705 = vmatpush1.bf16.msra.mxu0 0
  %2706 = vmatprep.subr.bf16.mxu0 0
  %2707 = vmatpush1.bf16.msra.mxu0 0
  %2708 = vmatprep.subr.bf16.mxu0 0
  %2709 = vmatpush1.bf16.msra.mxu0 0
  %2710 = vmatprep.subr.bf16.mxu0 0
  %2711 = vmatpush1.bf16.msra.mxu0 0
  %2712 = vmatprep.subr.bf16.mxu0 0
  %2713 = vmatpush1.bf16.msra.mxu0 0
  %2714 = vmatprep.mubr.bf16.mxu0 0
  %2715 = vmatmul.mubr.bf16.gmra.mrb[0].mxu0 %v2680
  %v2716 = vpop.f32.mrb[0].mxu0
  %v2717 = vadd.f32 0.0, %v2716
  %v2718 = vpop.f32.mrb[0].mxu0
  %v2719 = vpop.f32.mrb[0].mxu0
  %v2720 = vpop.f32.mrb[0].mxu0
  %2721 = vdwg.mxu0
  %v2722 = vld [vmem:[#allocation4] sm:$0x3]
  %v2723 = vpack.c.bf16 %v2722, %v2722
  %v2724 = vld [vmem:[%s2] sm:$0xf]
  %v2725 = vld [vmem:[%s2 + $0x4] sm:$0xf]
  %v2726 = vld [vmem:[%s2 + $0x8] sm:$0xf]
  %v2727 = vld [vmem:[%s2 + $0xc] sm:$0xf]
  %v2732 = vunpack.c.l.b16 %v2724
  %v2733 = vunpack.c.l.b16 %v2725
  %v2734 = vunpack.c.l.b16 %v2726
  %v2735 = vunpack.c.l.b16 %v2727
  %v2736 = vpack.c.b16 %v2733, %v2732
  %v2737 = vpack.c.b16 %v2735, %v2734
  %v2741 = vsel %vm42, %v2723, 0
  %2743 = vmatprep.subr.bf16.mxu0 0
  %2744 = vmatpush1.bf16.msra.mxu0 %v2736
  %2745 = vmatprep.subr.bf16.mxu0 0
  %2746 = vmatpush1.bf16.msra.mxu0 %v2737
  %2747 = vmatprep.subr.bf16.mxu0 0
  %2748 = vmatpush1.bf16.msra.mxu0 0
  %2749 = vmatprep.subr.bf16.mxu0 0
  %2750 = vmatpush1.bf16.msra.mxu0 0
  %2751 = vmatprep.subr.bf16.mxu0 0
  %2752 = vmatpush1.bf16.msra.mxu0 0
  %2753 = vmatprep.subr.bf16.mxu0 0
  %2754 = vmatpush1.bf16.msra.mxu0 0
  %2755 = vmatprep.subr.bf16.mxu0 0
  %2756 = vmatpush1.bf16.msra.mxu0 0
  %2757 = vmatprep.subr.bf16.mxu0 0
  %2758 = vmatpush1.bf16.msra.mxu0 0
  %2759 = vmatprep.subr.bf16.mxu0 0
  %2760 = vmatpush1.bf16.msra.mxu0 0
  %2761 = vmatprep.subr.bf16.mxu0 0
  %2762 = vmatpush1.bf16.msra.mxu0 0
  %2763 = vmatprep.subr.bf16.mxu0 0
  %2764 = vmatpush1.bf16.msra.mxu0 0
  %2765 = vmatprep.subr.bf16.mxu0 0
  %2766 = vmatpush1.bf16.msra.mxu0 0
  %2767 = vmatprep.subr.bf16.mxu0 0
  %2768 = vmatpush1.bf16.msra.mxu0 0
  %2769 = vmatprep.subr.bf16.mxu0 0
  %2770 = vmatpush1.bf16.msra.mxu0 0
  %2771 = vmatprep.subr.bf16.mxu0 0
  %2772 = vmatpush1.bf16.msra.mxu0 0
  %2773 = vmatprep.subr.bf16.mxu0 0
  %2774 = vmatpush1.bf16.msra.mxu0 0
  %2775 = vmatprep.mubr.bf16.mxu0 0
  %2776 = vmatmul.mubr.bf16.gmra.mrb[0].mxu0 %v2741
  %v2777 = vpop.f32.mrb[0].mxu0
  %v2778 = vadd.f32 0.0, %v2777
  %v2779 = vpop.f32.mrb[0].mxu0
  %v2780 = vpop.f32.mrb[0].mxu0
  %v2781 = vpop.f32.mrb[0].mxu0
  %2782 = vdwg.mxu0
  %v2783 = vld [vmem:[%s0] sm:$0x8]
  %v2784 = vld [vmem:[%s0 + $0x8] sm:$0x8]
  %v2785 = vunpack.c.l.bf16 %v2783
  %v2786 = vunpack.c.l.bf16 %v2784
  %v2787 = vld [vmem:[%s0 + $0x4] sm:$0x1]
  %v2788 = vld [vmem:[%s0 + $0xc] sm:$0x1]
  %v2789 = vunpack.c.l.bf16 %v2787
  %v2790 = vunpack.c.l.bf16 %v2788
  %v2792 = vrot.slane %v2717, 1
  %v2793 = vrot.slane %v2717, 2
  %v2796 = vadd.f32 %v2785, %v2792
  %v2797 = vadd.f32 %v2786, %v2793
  %v2798 = vld [vmem:[#allocation3] sm:$0x3]
  %v2799 = vxor.u32 %v2796, 2147483648
  %v2800 = vxor.u32 %v2797, 2147483648
  %v2801 = vmul.f32 %v2799, 1.442695
  %v2802 = vpow.pop %v2801
  %v2803 = vmul.f32 %v2800, 1.442695
  %v2804 = vpow.pop %v2803
  %v2805 = vadd.f32 %v2802, 1.0
  %v2806 = vadd.f32 %v2804, 1.0
  %v2807 = vrcp.pop %v2805
  %v2808 = vmul.f32 1.0, %v2807
  %v2809 = vrcp.pop %v2806
  %v2810 = vmul.f32 1.0, %v2809
  %v2811 = vtanh.pop %v2796
  %v2812 = vtanh.pop %v2797
  %v2814 = vrot.slane %v2798, 1
  %v2815 = vrot.slane %v2798, 2
  %2816 = vrot.lane.b32.xlu0 %v2814, 32
  %v2817 = vpop.permute.xlu0 %2816
  %2818 = vrot.lane.b32.xlu0 %v2815, 32
  %v2819 = vpop.permute.xlu0 %2818
  %v2822 = vmul.f32 %v2808, %v2817
  %v2823 = vmul.f32 %v2810, %v2819
  %2826 = vrot.lane.b32.xlu0 %v2811, 64
  %v2827 = vpop.permute.xlu0 %2826
  %2828 = vrot.lane.b32.xlu0 %v2812, 64
  %v2829 = vpop.permute.xlu0 %2828
  %v2832 = vmul.f32 %v2808, %v2827
  %v2833 = vmul.f32 %v2810, %v2829
  %2836 = vrot.lane.b32.xlu0 %v2832, 32
  %v2837 = vpop.permute.xlu0 %2836
  %2838 = vrot.lane.b32.xlu0 %v2833, 32
  %v2839 = vpop.permute.xlu0 %2838
  %v2842 = vadd.f32 %v2822, %v2837
  %v2843 = vadd.f32 %v2823, %v2839
  %v2844 = vtanh.pop %v2842
  %v2845 = vtanh.pop %v2843
  %2848 = vrot.lane.b32.xlu0 %v2844, 64
  %v2849 = vpop.permute.xlu0 %2848
  %2850 = vrot.lane.b32.xlu0 %v2845, 64
  %v2851 = vpop.permute.xlu0 %2850
  %v2854 = vmul.f32 %v2808, %v2849
  %v2855 = vmul.f32 %v2810, %v2851
  %v2857 = vrot.slane %v2778, 1
  %v2860 = vadd.f32 %v2789, %v2778
  %v2861 = vadd.f32 %v2790, %v2857
  %v2862 = vld [vmem:[#allocation5] sm:$0x3]
  %v2863 = vxor.u32 %v2860, 2147483648
  %v2864 = vxor.u32 %v2861, 2147483648
  %v2865 = vmul.f32 %v2863, 1.442695
  %v2866 = vpow.pop %v2865
  %v2867 = vmul.f32 %v2864, 1.442695
  %v2868 = vpow.pop %v2867
  %v2869 = vadd.f32 %v2866, 1.0
  %v2870 = vadd.f32 %v2868, 1.0
  %v2871 = vrcp.pop %v2869
  %v2872 = vmul.f32 1.0, %v2871
  %v2873 = vrcp.pop %v2870
  %v2874 = vmul.f32 1.0, %v2873
  %v2875 = vtanh.pop %v2860
  %v2876 = vtanh.pop %v2861
  %v2878 = vrot.slane %v2862, 1
  %2879 = vrot.lane.b32.xlu0 %v2862, 32
  %v2880 = vpop.permute.xlu0 %2879
  %2881 = vrot.lane.b32.xlu0 %v2878, 32
  %v2882 = vpop.permute.xlu0 %2881
  %v2885 = vmul.f32 %v2872, %v2880
  %v2886 = vmul.f32 %v2874, %v2882
  %2889 = vrot.lane.b32.xlu0 %v2875, 64
  %v2890 = vpop.permute.xlu0 %2889
  %2891 = vrot.lane.b32.xlu0 %v2876, 64
  %v2892 = vpop.permute.xlu0 %2891
  %v2895 = vmul.f32 %v2872, %v2890
  %v2896 = vmul.f32 %v2874, %v2892
  %2899 = vrot.lane.b32.xlu0 %v2895, 32
  %v2900 = vpop.permute.xlu0 %2899
  %2901 = vrot.lane.b32.xlu0 %v2896, 32
  %v2902 = vpop.permute.xlu0 %2901
  %v2905 = vadd.f32 %v2885, %v2900
  %v2906 = vadd.f32 %v2886, %v2902
  %v2907 = vtanh.pop %v2905
  %v2908 = vtanh.pop %v2906
  %2911 = vrot.lane.b32.xlu0 %v2907, 64
  %v2912 = vpop.permute.xlu0 %2911
  %2913 = vrot.lane.b32.xlu0 %v2908, 64
  %v2914 = vpop.permute.xlu0 %2913
  %v2917 = vmul.f32 %v2872, %v2912
  %v2918 = vmul.f32 %v2874, %v2914
  %v2921 = vrot.slane %v2854, 7
  %v2922 = vrot.slane %v2855, 6
  %v2923 = vsel %vm293, %v2922, %v2921
  %2924 = vrot.lane.b32.xlu0 %v2923, 32
  %v2925 = vpop.permute.xlu0 %2924
  %v2927 = vsel %vm315, %v2925, %v2661
  %2928 = vst.msk [vmem:[#allocation2] sm:$0x3] %vm18, %v2927
  %v2929 = vld [vmem:[#allocation3] sm:$0x3]
  %v2932 = vrot.slane %v2842, 7
  %v2933 = vrot.slane %v2843, 6
  %v2934 = vsel %vm293, %v2933, %v2932
  %2935 = vrot.lane.b32.xlu0 %v2934, 96
  %v2936 = vpop.permute.xlu0 %2935
  %v2938 = vsel %vm315, %v2936, %v2929
  %2939 = vst.msk [vmem:[#allocation3] sm:$0x3] %vm18, %v2938
  %v2940 = vld [vmem:[#allocation4] sm:$0x3]
  %v2943 = vrot.slane %v2918, 7
  %v2944 = vsel %vm293, %v2943, %v2917
  %2945 = vrot.lane.b32.xlu0 %v2944, 32
  %v2946 = vpop.permute.xlu0 %2945
  %v2948 = vsel %vm289, %v2946, %v2940
  %2949 = vst.msk [vmem:[#allocation4] sm:$0x3] %vm18, %v2948
  %v2950 = vld [vmem:[#allocation5] sm:$0x3]
  %v2953 = vrot.slane %v2906, 7
  %v2954 = vsel %vm293, %v2953, %v2905
  %2955 = vrot.lane.b32.xlu0 %v2954, 96
  %v2956 = vpop.permute.xlu0 %2955
  %v2958 = vsel %vm289, %v2956, %v2950
  %2959 = vst.msk [vmem:[#allocation5] sm:$0x3] %vm18, %v2958
  %v2960 = vsel %vm315, %v2925, 0.0
  %v2963 = vunpack.c.l.s4 1966171168
  %v2964 = vunpack.c.0.s8 %v2963
  %v2965 = vlaneseq
  %v2966 = vshrl.u32 %v2965, 7
  %v2967 = vsub.s32 %v2964, %v2966
  %v2968 = vrot.slane %v2960, %v2967
  %v2969 = vcombine.high %v2968, %v2968
  %v2971 = vunpack.c.l.s4 1966171168
  %v2972 = vunpack.c.0.s8 %v2971
  %v2973 = vlaneseq
  %v2974 = vshrl.u32 %v2973, 7
  %v2975 = vsub.s32 %v2972, %v2974
  %v2976 = vrot.slane %v2968, %v2975
  %v2978 = vunpack.c.l.s4 1966171168
  %v2979 = vunpack.c.0.s8 %v2978
  %v2980 = vlaneseq
  %v2981 = vshrl.u32 %v2980, 7
  %v2982 = vsub.s32 %v2979, %v2981
  %v2983 = vrot.slane %v2969, %v2982
  %2986 = vst.msk [vmem:[#allocation6 + $0x7] sm:$0x1] %vm363, %v2976
  %2987 = vst.msk [vmem:[#allocation6 + $0xf] sm:$0x1] %vm363, %v2983
  %v2988 = vsel %vm289, %v2946, 0.0
  %v2991 = vunpack.c.l.s4 1966171168
  %v2992 = vunpack.c.0.s8 %v2991
  %v2993 = vlaneseq
  %v2994 = vshrl.u32 %v2993, 7
  %v2995 = vsub.s32 %v2992, %v2994
  %v2996 = vrot.slane %v2988, %v2995
  %v2997 = vcombine.high %v2996, %v2996
  %v2999 = vunpack.c.l.s4 1966171168
  %v3000 = vunpack.c.0.s8 %v2999
  %v3001 = vlaneseq
  %v3002 = vshrl.u32 %v3001, 7
  %v3003 = vsub.s32 %v3000, %v3002
  %v3004 = vrot.slane %v2996, %v3003
  %v3006 = vunpack.c.l.s4 1966171168
  %v3007 = vunpack.c.0.s8 %v3006
  %v3008 = vlaneseq
  %v3009 = vshrl.u32 %v3008, 7
  %v3010 = vsub.s32 %v3007, %v3009
  %v3011 = vrot.slane %v2997, %v3010
  %v3012 = vlaneseq
  %v3013 = vshrl.u32 %v3012, 7
  %v3014 = vsub.s32 0, %v3013
  %v3015 = vrot.slane %v3004, %v3014
  %v3016 = vlaneseq
  %v3017 = vshrl.u32 %v3016, 7
  %v3018 = vsub.s32 0, %v3017
  %v3019 = vrot.slane %v3011, %v3018
  %3020 = vrot.lane.b32.xlu0 %v3015, 32
  %v3021 = vpop.permute.xlu0 %3020
  %3022 = vrot.lane.b32.xlu0 %v3019, 32
  %v3023 = vpop.permute.xlu0 %3022
  %3026 = vst.msk [vmem:[#allocation6] sm:$0x1] %vm404, %v3021
  %3027 = vst.msk [vmem:[#allocation6 + $0x8] sm:$0x1] %vm404, %v3023
  %v3028 = vld [vmem:[#allocation6] sm:$0xff]
  %v3029 = vld [vmem:[#allocation6 + $0x8] sm:$0xff]
  %v3030 = vpack.c.bf16 %v3028, %v3028
  %v3031 = vpack.c.bf16 %v3029, %v3029
  %vm3032 = vcmask 519168
  %3033 = vst.msk [vmem:[%s4] sm:$0xf] %vm3032, %v3030
  %3034 = vst.msk [vmem:[%s4 + $0x4] sm:$0xf] %vm3032, %v3031
  // Predicated region
  $region18: #{model_forward.11} parent=0 // pred_check
    _
  $region19: #{model_forward.11} parent=0 // pred_check_branch
    %3036 = sbr.rel (0) target = $region21
  $region20: #{model_forward.11} parent=0 // pred_region
    _
  $region21: #{model_forward.11} parent=0 // pred_fallthru
    _
  // Predicated region
  $region22: #{model_forward.11} parent=0 // pred_check
    _
  $region23: #{model_forward.11} parent=0 // pred_check_branch
    %3038 = sbr.rel (0) target = $region25
  $region24: #{model_forward.11} parent=0 // pred_region
    _
  $region25: #{model_forward.11} parent=0 // pred_fallthru
    _

// kernel: model_forward.15
$region0: #{model_forward.15}
  #allocation0 [shape = 'u32[]', space=smem, size = 0x4, offset = 0x4, fixed_abs, tag = 'smem constant byte address 0x4 - core index']
  #allocation1 [shape = 'u32[144,128]{1,0:T(1,128)}', space=vmem, size = 0x12000, scoped, tag = 'internal scratch']
  #allocation2 [shape = 'f32[2,32]{1,0:T(2,128)}', space=vmem, size = 0x400, scoped, tag = 'scratch operand']
  #allocation3 [shape = 'f32[2,32]{1,0:T(2,128)}', space=vmem, size = 0x400, scoped, tag = 'scratch operand']
  #allocation4 [shape = 'f32[2,32]{1,0:T(2,128)}', space=vmem, size = 0x400, scoped, tag = 'scratch operand']
  #allocation5 [shape = 'f32[2,32]{1,0:T(2,128)}', space=vmem, size = 0x400, scoped, tag = 'scratch operand']
  %s0 = inlined_call_operand.vmem [shape: bf16[2,8,256], index: 0, kind: input, shape index: {}]
  %s1 = inlined_call_operand.vmem [shape: bf16[32,128], index: 1, kind: input, shape index: {}]
  %s2 = inlined_call_operand.vmem [shape: bf16[32,128], index: 2, kind: input, shape index: {}]
  %s3 = inlined_call_operand.vmem [shape: s32[2,1], index: 3, kind: input, shape index: {}]
  %s4 = inlined_call_operand.vmem [shape: f32[2,64], index: 4, kind: output, shape index: {}]
  %s5 = sld [smem:[#allocation0]]
  $region26: #{model_forward.15} parent=0
    _
  %s7 = ssub.s32 1, %s5
  %s8 = scalar_select 0, %s7, %s5
  // Predicated region
  $region2: #{model_forward.15} parent=0 // pred_check
    _
  $region3: #{model_forward.15} parent=0 // pred_check_branch
    %10 = sbr.rel (0) target = $region5
  $region4: #{model_forward.15} parent=0 // pred_region
    _
  $region5: #{model_forward.15} parent=0 // pred_fallthru
    _
  // Predicated region
  $region6: #{model_forward.15} parent=0 // pred_check
    _
  $region7: #{model_forward.15} parent=0 // pred_check_branch
    %12 = sbr.rel (0) target = $region9
  $region8: #{model_forward.15} parent=0 // pred_region
    _
  $region9: #{model_forward.15} parent=0 // pred_fallthru
    _
  // Predicated region
  $region10: #{model_forward.15} parent=0 // pred_check
    _
  $region11: #{model_forward.15} parent=0 // pred_check_branch
    %14 = sbr.rel (0) target = $region13
  $region12: #{model_forward.15} parent=0 // pred_region
    _
  $region13: #{model_forward.15} parent=0 // pred_fallthru
    _
  // Predicated region
  $region14: #{model_forward.15} parent=0 // pred_check
    _
  $region15: #{model_forward.15} parent=0 // pred_check_branch
    %16 = sbr.rel (0) target = $region17
  $region16: #{model_forward.15} parent=0 // pred_region
    _
  $region17: #{model_forward.15} parent=0 // pred_fallthru
    _
  %vm18 = vcmask 254976
  %19 = vst.msk [vmem:[#allocation2] sm:$0x3] %vm18, 0.0
  %20 = vst.msk [vmem:[#allocation3] sm:$0x3] %vm18, 0.0
  %21 = vst.msk [vmem:[#allocation4] sm:$0x3] %vm18, 0.0
  %22 = vst.msk [vmem:[#allocation5] sm:$0x3] %vm18, 0.0
  %vm23 = vcmask 517120
  %24 = vst.msk [vmem:[%s4] sm:$0x3] %vm23, -1e+30
  %v25 = vld [vmem:[%s3] sm:$0x3]
  %v26 = vld [vmem:[#allocation2] sm:$0x3]
  %v27 = vpack.c.bf16 %v26, %v26
  %v28 = vld [vmem:[%s1] sm:$0xf]
  %v29 = vld [vmem:[%s1 + $0x4] sm:$0xf]
  %v30 = vld [vmem:[%s1 + $0x8] sm:$0xf]
  %v31 = vld [vmem:[%s1 + $0xc] sm:$0xf]
  %v36 = vunpack.c.l.b16 %v28
  %v37 = vunpack.c.l.b16 %v29
  %v38 = vunpack.c.l.b16 %v30
  %v39 = vunpack.c.l.b16 %v31
  %v40 = vpack.c.b16 %v37, %v36
  %v41 = vpack.c.b16 %v39, %v38
  %vm44 = vcmask 261120
  %v46 = vsel %vm44, %v27, 0
  %48 = vmatprep.subr.bf16.mxu0 0
  %49 = vmatpush1.bf16.msra.mxu0 %v40
  %50 = vmatprep.subr.bf16.mxu0 0
  %51 = vmatpush1.bf16.msra.mxu0 %v41
  %52 = vmatprep.subr.bf16.mxu0 0
  %53 = vmatpush1.bf16.msra.mxu0 0
  %54 = vmatprep.subr.bf16.mxu0 0
  %55 = vmatpush1.bf16.msra.mxu0 0
  %56 = vmatprep.subr.bf16.mxu0 0
  %57 = vmatpush1.bf16.msra.mxu0 0
  %58 = vmatprep.subr.bf16.mxu0 0
  %59 = vmatpush1.bf16.msra.mxu0 0
  %60 = vmatprep.subr.bf16.mxu0 0
  %61 = vmatpush1.bf16.msra.mxu0 0
  %62 = vmatprep.subr.bf16.mxu0 0
  %63 = vmatpush1.bf16.msra.mxu0 0
  %64 = vmatprep.subr.bf16.mxu0 0
  %65 = vmatpush1.bf16.msra.mxu0 0
  %66 = vmatprep.subr.bf16.mxu0 0
  %67 = vmatpush1.bf16.msra.mxu0 0
  %68 = vmatprep.subr.bf16.mxu0 0
  %69 = vmatpush1.bf16.msra.mxu0 0
  %70 = vmatprep.subr.bf16.mxu0 0
  %71 = vmatpush1.bf16.msra.mxu0 0
  %72 = vmatprep.subr.bf16.mxu0 0
  %73 = vmatpush1.bf16.msra.mxu0 0
  %74 = vmatprep.subr.bf16.mxu0 0
  %75 = vmatpush1.bf16.msra.mxu0 0
  %76 = vmatprep.subr.bf16.mxu0 0
  %77 = vmatpush1.bf16.msra.mxu0 0
  %78 = vmatprep.subr.bf16.mxu0 0
  %79 = vmatpush1.bf16.msra.mxu0 0
  %80 = vmatprep.mubr.bf16.mxu0 0
  %81 = vmatmul.mubr.bf16.gmra.mrb[0].mxu0 %v46
  %v82 = vpop.f32.mrb[0].mxu0
  %v83 = vadd.f32 0.0, %v82
  %v84 = vpop.f32.mrb[0].mxu0
  %v85 = vpop.f32.mrb[0].mxu0
  %v86 = vpop.f32.mrb[0].mxu0
  %87 = vdwg.mxu0
  %v88 = vld [vmem:[#allocation4] sm:$0x3]
  %v89 = vpack.c.bf16 %v88, %v88
  %v90 = vld [vmem:[%s2] sm:$0xf]
  %v91 = vld [vmem:[%s2 + $0x4] sm:$0xf]
  %v92 = vld [vmem:[%s2 + $0x8] sm:$0xf]
  %v93 = vld [vmem:[%s2 + $0xc] sm:$0xf]
  %v98 = vunpack.c.l.b16 %v90
  %v99 = vunpack.c.l.b16 %v91
  %v100 = vunpack.c.l.b16 %v92
  %v101 = vunpack.c.l.b16 %v93
  %v102 = vpack.c.b16 %v99, %v98
  %v103 = vpack.c.b16 %v101, %v100
  %v107 = vsel %vm44, %v89, 0
  %109 = vmatprep.subr.bf16.mxu0 0
  %110 = vmatpush1.bf16.msra.mxu0 %v102
  %111 = vmatprep.subr.bf16.mxu0 0
  %112 = vmatpush1.bf16.msra.mxu0 %v103
  %113 = vmatprep.subr.bf16.mxu0 0
  %114 = vmatpush1.bf16.msra.mxu0 0
  %115 = vmatprep.subr.bf16.mxu0 0
  %116 = vmatpush1.bf16.msra.mxu0 0
  %117 = vmatprep.subr.bf16.mxu0 0
  %118 = vmatpush1.bf16.msra.mxu0 0
  %119 = vmatprep.subr.bf16.mxu0 0
  %120 = vmatpush1.bf16.msra.mxu0 0
  %121 = vmatprep.subr.bf16.mxu0 0
  %122 = vmatpush1.bf16.msra.mxu0 0
  %123 = vmatprep.subr.bf16.mxu0 0
  %124 = vmatpush1.bf16.msra.mxu0 0
  %125 = vmatprep.subr.bf16.mxu0 0
  %126 = vmatpush1.bf16.msra.mxu0 0
  %127 = vmatprep.subr.bf16.mxu0 0
  %128 = vmatpush1.bf16.msra.mxu0 0
  %129 = vmatprep.subr.bf16.mxu0 0
  %130 = vmatpush1.bf16.msra.mxu0 0
  %131 = vmatprep.subr.bf16.mxu0 0
  %132 = vmatpush1.bf16.msra.mxu0 0
  %133 = vmatprep.subr.bf16.mxu0 0
  %134 = vmatpush1.bf16.msra.mxu0 0
  %135 = vmatprep.subr.bf16.mxu0 0
  %136 = vmatpush1.bf16.msra.mxu0 0
  %137 = vmatprep.subr.bf16.mxu0 0
  %138 = vmatpush1.bf16.msra.mxu0 0
  %139 = vmatprep.subr.bf16.mxu0 0
  %140 = vmatpush1.bf16.msra.mxu0 0
  %141 = vmatprep.mubr.bf16.mxu0 0
  %142 = vmatmul.mubr.bf16.gmra.mrb[0].mxu0 %v107
  %v143 = vpop.f32.mrb[0].mxu0
  %v144 = vadd.f32 0.0, %v143
  %v145 = vpop.f32.mrb[0].mxu0
  %v146 = vpop.f32.mrb[0].mxu0
  %v147 = vpop.f32.mrb[0].mxu0
  %148 = vdwg.mxu0
  %v149 = vld [vmem:[%s0] sm:$0x1]
  %v150 = vld [vmem:[%s0 + $0x8] sm:$0x1]
  %v151 = vunpack.c.l.bf16 %v149
  %v152 = vunpack.c.l.bf16 %v150
  %v153 = vld [vmem:[%s0 + $0x4] sm:$0x8]
  %v154 = vld [vmem:[%s0 + $0xc] sm:$0x8]
  %v155 = vunpack.c.l.bf16 %v153
  %v156 = vunpack.c.l.bf16 %v154
  %v158 = vrot.slane %v83, 1
  %v161 = vadd.f32 %v151, %v83
  %v162 = vadd.f32 %v152, %v158
  %v163 = vld [vmem:[#allocation3] sm:$0x3]
  %v164 = vxor.u32 %v161, 2147483648
  %v165 = vxor.u32 %v162, 2147483648
  %v166 = vmul.f32 %v164, 1.442695
  %v167 = vpow.pop %v166
  %v168 = vmul.f32 %v165, 1.442695
  %v169 = vpow.pop %v168
  %v170 = vadd.f32 %v167, 1.0
  %v171 = vadd.f32 %v169, 1.0
  %v172 = vrcp.pop %v170
  %v173 = vmul.f32 1.0, %v172
  %v174 = vrcp.pop %v171
  %v175 = vmul.f32 1.0, %v174
  %v176 = vtanh.pop %v161
  %v177 = vtanh.pop %v162
  %v179 = vrot.slane %v163, 1
  %180 = vrot.lane.b32.xlu0 %v163, 32
  %v181 = vpop.permute.xlu0 %180
  %182 = vrot.lane.b32.xlu0 %v179, 32
  %v183 = vpop.permute.xlu0 %182
  %v186 = vmul.f32 %v173, %v181
  %v187 = vmul.f32 %v175, %v183
  %190 = vrot.lane.b32.xlu0 %v176, 64
  %v191 = vpop.permute.xlu0 %190
  %192 = vrot.lane.b32.xlu0 %v177, 64
  %v193 = vpop.permute.xlu0 %192
  %v196 = vmul.f32 %v173, %v191
  %v197 = vmul.f32 %v175, %v193
  %200 = vrot.lane.b32.xlu0 %v196, 32
  %v201 = vpop.permute.xlu0 %200
  %202 = vrot.lane.b32.xlu0 %v197, 32
  %v203 = vpop.permute.xlu0 %202
  %v206 = vadd.f32 %v186, %v201
  %v207 = vadd.f32 %v187, %v203
  %v208 = vtanh.pop %v206
  %v209 = vtanh.pop %v207
  %212 = vrot.lane.b32.xlu0 %v208, 64
  %v213 = vpop.permute.xlu0 %212
  %214 = vrot.lane.b32.xlu0 %v209, 64
  %v215 = vpop.permute.xlu0 %214
  %v218 = vmul.f32 %v173, %v213
  %v219 = vmul.f32 %v175, %v215
  %v221 = vrot.slane %v144, 1
  %v222 = vrot.slane %v144, 2
  %v225 = vadd.f32 %v155, %v221
  %v226 = vadd.f32 %v156, %v222
  %v227 = vld [vmem:[#allocation5] sm:$0x3]
  %v228 = vxor.u32 %v225, 2147483648
  %v229 = vxor.u32 %v226, 2147483648
  %v230 = vmul.f32 %v228, 1.442695
  %v231 = vpow.pop %v230
  %v232 = vmul.f32 %v229, 1.442695
  %v233 = vpow.pop %v232
  %v234 = vadd.f32 %v231, 1.0
  %v235 = vadd.f32 %v233, 1.0
  %v236 = vrcp.pop %v234
  %v237 = vmul.f32 1.0, %v236
  %v238 = vrcp.pop %v235
  %v239 = vmul.f32 1.0, %v238
  %v240 = vtanh.pop %v225
  %v241 = vtanh.pop %v226
  %v243 = vrot.slane %v227, 1
  %v244 = vrot.slane %v227, 2
  %245 = vrot.lane.b32.xlu0 %v243, 32
  %v246 = vpop.permute.xlu0 %245
  %247 = vrot.lane.b32.xlu0 %v244, 32
  %v248 = vpop.permute.xlu0 %247
  %v251 = vmul.f32 %v237, %v246
  %v252 = vmul.f32 %v239, %v248
  %255 = vrot.lane.b32.xlu0 %v240, 64
  %v256 = vpop.permute.xlu0 %255
  %257 = vrot.lane.b32.xlu0 %v241, 64
  %v258 = vpop.permute.xlu0 %257
  %v261 = vmul.f32 %v237, %v256
  %v262 = vmul.f32 %v239, %v258
  %265 = vrot.lane.b32.xlu0 %v261, 32
  %v266 = vpop.permute.xlu0 %265
  %267 = vrot.lane.b32.xlu0 %v262, 32
  %v268 = vpop.permute.xlu0 %267
  %v271 = vadd.f32 %v251, %v266
  %v272 = vadd.f32 %v252, %v268
  %v273 = vtanh.pop %v271
  %v274 = vtanh.pop %v272
  %277 = vrot.lane.b32.xlu0 %v273, 64
  %v278 = vpop.permute.xlu0 %277
  %279 = vrot.lane.b32.xlu0 %v274, 64
  %v280 = vpop.permute.xlu0 %279
  %v283 = vmul.f32 %v237, %v278
  %v284 = vmul.f32 %v239, %v280
  %vm285 = vcmp.gt.s32.totalorder %v25, 0
  %vm286 = vcmp.gt.s32.totalorder %v25, 7
  %v287 = vsel %vm285, 1, 0
  %288 = vset.pattern.permute.xlu0 0
  %289 = vperm.xlu0 %288, %v287
  %v290 = vpop.permute.xlu0 %289
  %vm291 = vcmp.eq.s32.totalorder %v290, 1
  %v294 = vrot.slane %v219, 7
  %vm295 = vcmask 1041409
  %v296 = vsel %vm295, %v294, %v218
  %297 = vrot.lane.b32.xlu0 %v296, 32
  %v298 = vpop.permute.xlu0 %297
  %v300 = vsel %vm291, %v298, %v26
  %301 = vst.msk [vmem:[#allocation2] sm:$0x3] %vm18, %v300
  %v302 = vld [vmem:[#allocation3] sm:$0x3]
  %v305 = vrot.slane %v207, 7
  %v306 = vsel %vm295, %v305, %v206
  %307 = vrot.lane.b32.xlu0 %v306, 96
  %v308 = vpop.permute.xlu0 %307
  %v310 = vsel %vm291, %v308, %v302
  %311 = vst.msk [vmem:[#allocation3] sm:$0x3] %vm18, %v310
  %v312 = vld [vmem:[#allocation4] sm:$0x3]
  %v313 = vsel %vm286, 1, 0
  %314 = vset.pattern.permute.xlu0 0
  %315 = vperm.xlu0 %314, %v313
  %v316 = vpop.permute.xlu0 %315
  %vm317 = vcmp.eq.s32.totalorder %v316, 1
  %v320 = vrot.slane %v283, 7
  %v321 = vrot.slane %v284, 6
  %v322 = vsel %vm295, %v321, %v320
  %323 = vrot.lane.b32.xlu0 %v322, 32
  %v324 = vpop.permute.xlu0 %323
  %v326 = vsel %vm317, %v324, %v312
  %327 = vst.msk [vmem:[#allocation4] sm:$0x3] %vm18, %v326
  %v328 = vld [vmem:[#allocation5] sm:$0x3]
  %v331 = vrot.slane %v271, 7
  %v332 = vrot.slane %v272, 6
  %v333 = vsel %vm295, %v332, %v331
  %334 = vrot.lane.b32.xlu0 %v333, 96
  %v335 = vpop.permute.xlu0 %334
  %v337 = vsel %vm317, %v335, %v328
  %338 = vst.msk [vmem:[#allocation5] sm:$0x3] %vm18, %v337
  %v339 = vsel %vm291, %v298, -1e+30
  %v340 = vsel %vm317, %v324, -1e+30
  %342 = vrot.lane.b32.xlu0 %v340, 32
  %v343 = vpop.permute.xlu0 %342
  %v345 = vsel %vm44, %v339, %v343
  %v346 = vld [vmem:[%s4] sm:$0x3]
  %v347 = vmax.f32 %v346, %v345
  %348 = vst.msk [vmem:[%s4] sm:$0x3] %vm23, %v347
  %v349 = vld [vmem:[#allocation2] sm:$0x3]
  %v350 = vpack.c.bf16 %v349, %v349
  %v351 = vld [vmem:[%s1] sm:$0xf]
  %v352 = vld [vmem:[%s1 + $0x4] sm:$0xf]
  %v353 = vld [vmem:[%s1 + $0x8] sm:$0xf]
  %v354 = vld [vmem:[%s1 + $0xc] sm:$0xf]
  %v359 = vunpack.c.l.b16 %v351
  %v360 = vunpack.c.l.b16 %v352
  %v361 = vunpack.c.l.b16 %v353
  %v362 = vunpack.c.l.b16 %v354
  %v363 = vpack.c.b16 %v360, %v359
  %v364 = vpack.c.b16 %v362, %v361
  %v368 = vsel %vm44, %v350, 0
  %370 = vmatprep.subr.bf16.mxu0 0
  %371 = vmatpush1.bf16.msra.mxu0 %v363
  %372 = vmatprep.subr.bf16.mxu0 0
  %373 = vmatpush1.bf16.msra.mxu0 %v364
  %374 = vmatprep.subr.bf16.mxu0 0
  %375 = vmatpush1.bf16.msra.mxu0 0
  %376 = vmatprep.subr.bf16.mxu0 0
  %377 = vmatpush1.bf16.msra.mxu0 0
  %378 = vmatprep.subr.bf16.mxu0 0
  %379 = vmatpush1.bf16.msra.mxu0 0
  %380 = vmatprep.subr.bf16.mxu0 0
  %381 = vmatpush1.bf16.msra.mxu0 0
  %382 = vmatprep.subr.bf16.mxu0 0
  %383 = vmatpush1.bf16.msra.mxu0 0
  %384 = vmatprep.subr.bf16.mxu0 0
  %385 = vmatpush1.bf16.msra.mxu0 0
  %386 = vmatprep.subr.bf16.mxu0 0
  %387 = vmatpush1.bf16.msra.mxu0 0
  %388 = vmatprep.subr.bf16.mxu0 0
  %389 = vmatpush1.bf16.msra.mxu0 0
  %390 = vmatprep.subr.bf16.mxu0 0
  %391 = vmatpush1.bf16.msra.mxu0 0
  %392 = vmatprep.subr.bf16.mxu0 0
  %393 = vmatpush1.bf16.msra.mxu0 0
  %394 = vmatprep.subr.bf16.mxu0 0
  %395 = vmatpush1.bf16.msra.mxu0 0
  %396 = vmatprep.subr.bf16.mxu0 0
  %397 = vmatpush1.bf16.msra.mxu0 0
  %398 = vmatprep.subr.bf16.mxu0 0
  %399 = vmatpush1.bf16.msra.mxu0 0
  %400 = vmatprep.subr.bf16.mxu0 0
  %401 = vmatpush1.bf16.msra.mxu0 0
  %402 = vmatprep.mubr.bf16.mxu0 0
  %403 = vmatmul.mubr.bf16.gmra.mrb[0].mxu0 %v368
  %v404 = vpop.f32.mrb[0].mxu0
  %v405 = vadd.f32 0.0, %v404
  %v406 = vpop.f32.mrb[0].mxu0
  %v407 = vpop.f32.mrb[0].mxu0
  %v408 = vpop.f32.mrb[0].mxu0
  %409 = vdwg.mxu0
  %v410 = vld [vmem:[#allocation4] sm:$0x3]
  %v411 = vpack.c.bf16 %v410, %v410
  %v412 = vld [vmem:[%s2] sm:$0xf]
  %v413 = vld [vmem:[%s2 + $0x4] sm:$0xf]
  %v414 = vld [vmem:[%s2 + $0x8] sm:$0xf]
  %v415 = vld [vmem:[%s2 + $0xc] sm:$0xf]
  %v420 = vunpack.c.l.b16 %v412
  %v421 = vunpack.c.l.b16 %v413
  %v422 = vunpack.c.l.b16 %v414
  %v423 = vunpack.c.l.b16 %v415
  %v424 = vpack.c.b16 %v421, %v420
  %v425 = vpack.c.b16 %v423, %v422
  %v429 = vsel %vm44, %v411, 0
  %431 = vmatprep.subr.bf16.mxu0 0
  %432 = vmatpush1.bf16.msra.mxu0 %v424
  %433 = vmatprep.subr.bf16.mxu0 0
  %434 = vmatpush1.bf16.msra.mxu0 %v425
  %435 = vmatprep.subr.bf16.mxu0 0
  %436 = vmatpush1.bf16.msra.mxu0 0
  %437 = vmatprep.subr.bf16.mxu0 0
  %438 = vmatpush1.bf16.msra.mxu0 0
  %439 = vmatprep.subr.bf16.mxu0 0
  %440 = vmatpush1.bf16.msra.mxu0 0
  %441 = vmatprep.subr.bf16.mxu0 0
  %442 = vmatpush1.bf16.msra.mxu0 0
  %443 = vmatprep.subr.bf16.mxu0 0
  %444 = vmatpush1.bf16.msra.mxu0 0
  %445 = vmatprep.subr.bf16.mxu0 0
  %446 = vmatpush1.bf16.msra.mxu0 0
  %447 = vmatprep.subr.bf16.mxu0 0
  %448 = vmatpush1.bf16.msra.mxu0 0
  %449 = vmatprep.subr.bf16.mxu0 0
  %450 = vmatpush1.bf16.msra.mxu0 0
  %451 = vmatprep.subr.bf16.mxu0 0
  %452 = vmatpush1.bf16.msra.mxu0 0
  %453 = vmatprep.subr.bf16.mxu0 0
  %454 = vmatpush1.bf16.msra.mxu0 0
  %455 = vmatprep.subr.bf16.mxu0 0
  %456 = vmatpush1.bf16.msra.mxu0 0
  %457 = vmatprep.subr.bf16.mxu0 0
  %458 = vmatpush1.bf16.msra.mxu0 0
  %459 = vmatprep.subr.bf16.mxu0 0
  %460 = vmatpush1.bf16.msra.mxu0 0
  %461 = vmatprep.subr.bf16.mxu0 0
  %462 = vmatpush1.bf16.msra.mxu0 0
  %463 = vmatprep.mubr.bf16.mxu0 0
  %464 = vmatmul.mubr.bf16.gmra.mrb[0].mxu0 %v429
  %v465 = vpop.f32.mrb[0].mxu0
  %v466 = vadd.f32 0.0, %v465
  %v467 = vpop.f32.mrb[0].mxu0
  %v468 = vpop.f32.mrb[0].mxu0
  %v469 = vpop.f32.mrb[0].mxu0
  %470 = vdwg.mxu0
  %v471 = vld [vmem:[%s0] sm:$0x1]
  %v472 = vld [vmem:[%s0 + $0x8] sm:$0x1]
  %v473 = vunpack.c.l.bf16 %v471
  %v474 = vunpack.c.l.bf16 %v472
  %v475 = vld [vmem:[%s0 + $0x4] sm:$0x8]
  %v476 = vld [vmem:[%s0 + $0xc] sm:$0x8]
  %v477 = vunpack.c.l.bf16 %v475
  %v478 = vunpack.c.l.bf16 %v476
  %v480 = vrot.slane %v405, 7
  %v483 = vadd.f32 %v473, %v480
  %v484 = vadd.f32 %v474, %v405
  %v485 = vld [vmem:[#allocation3] sm:$0x3]
  %v486 = vxor.u32 %v483, 2147483648
  %v487 = vxor.u32 %v484, 2147483648
  %v488 = vmul.f32 %v486, 1.442695
  %v489 = vpow.pop %v488
  %v490 = vmul.f32 %v487, 1.442695
  %v491 = vpow.pop %v490
  %v492 = vadd.f32 %v489, 1.0
  %v493 = vadd.f32 %v491, 1.0
  %v494 = vrcp.pop %v492
  %v495 = vmul.f32 1.0, %v494
  %v496 = vrcp.pop %v493
  %v497 = vmul.f32 1.0, %v496
  %v498 = vtanh.pop %v483
  %v499 = vtanh.pop %v484
  %v501 = vrot.slane %v485, 7
  %502 = vrot.lane.b32.xlu0 %v501, 32
  %v503 = vpop.permute.xlu0 %502
  %504 = vrot.lane.b32.xlu0 %v485, 32
  %v505 = vpop.permute.xlu0 %504
  %v508 = vmul.f32 %v495, %v503
  %v509 = vmul.f32 %v497, %v505
  %512 = vrot.lane.b32.xlu0 %v498, 64
  %v513 = vpop.permute.xlu0 %512
  %514 = vrot.lane.b32.xlu0 %v499, 64
  %v515 = vpop.permute.xlu0 %514
  %v518 = vmul.f32 %v495, %v513
  %v519 = vmul.f32 %v497, %v515
  %522 = vrot.lane.b32.xlu0 %v518, 32
  %v523 = vpop.permute.xlu0 %522
  %524 = vrot.lane.b32.xlu0 %v519, 32
  %v525 = vpop.permute.xlu0 %524
  %v528 = vadd.f32 %v508, %v523
  %v529 = vadd.f32 %v509, %v525
  %v530 = vtanh.pop %v528
  %v531 = vtanh.pop %v529
  %534 = vrot.lane.b32.xlu0 %v530, 64
  %v535 = vpop.permute.xlu0 %534
  %536 = vrot.lane.b32.xlu0 %v531, 64
  %v537 = vpop.permute.xlu0 %536
  %v540 = vmul.f32 %v495, %v535
  %v541 = vmul.f32 %v497, %v537
  %v543 = vrot.slane %v466, 2
  %v544 = vrot.slane %v466, 3
  %v547 = vadd.f32 %v477, %v543
  %v548 = vadd.f32 %v478, %v544
  %v549 = vld [vmem:[#allocation5] sm:$0x3]
  %v550 = vxor.u32 %v547, 2147483648
  %v551 = vxor.u32 %v548, 2147483648
  %v552 = vmul.f32 %v550, 1.442695
  %v553 = vpow.pop %v552
  %v554 = vmul.f32 %v551, 1.442695
  %v555 = vpow.pop %v554
  %v556 = vadd.f32 %v553, 1.0
  %v557 = vadd.f32 %v555, 1.0
  %v558 = vrcp.pop %v556
  %v559 = vmul.f32 1.0, %v558
  %v560 = vrcp.pop %v557
  %v561 = vmul.f32 1.0, %v560
  %v562 = vtanh.pop %v547
  %v563 = vtanh.pop %v548
  %v565 = vrot.slane %v549, 2
  %v566 = vrot.slane %v549, 3
  %567 = vrot.lane.b32.xlu0 %v565, 32
  %v568 = vpop.permute.xlu0 %567
  %569 = vrot.lane.b32.xlu0 %v566, 32
  %v570 = vpop.permute.xlu0 %569
  %v573 = vmul.f32 %v559, %v568
  %v574 = vmul.f32 %v561, %v570
  %577 = vrot.lane.b32.xlu0 %v562, 64
  %v578 = vpop.permute.xlu0 %577
  %579 = vrot.lane.b32.xlu0 %v563, 64
  %v580 = vpop.permute.xlu0 %579
  %v583 = vmul.f32 %v559, %v578
  %v584 = vmul.f32 %v561, %v580
  %587 = vrot.lane.b32.xlu0 %v583, 32
  %v588 = vpop.permute.xlu0 %587
  %589 = vrot.lane.b32.xlu0 %v584, 32
  %v590 = vpop.permute.xlu0 %589
  %v593 = vadd.f32 %v573, %v588
  %v594 = vadd.f32 %v574, %v590
  %v595 = vtanh.pop %v593
  %v596 = vtanh.pop %v594
  %599 = vrot.lane.b32.xlu0 %v595, 64
  %v600 = vpop.permute.xlu0 %599
  %601 = vrot.lane.b32.xlu0 %v596, 64
  %v602 = vpop.permute.xlu0 %601
  %v605 = vmul.f32 %v559, %v600
  %v606 = vmul.f32 %v561, %v602
  %vm607 = vcmp.gt.s32.totalorder %v25, 1
  %vm608 = vcmp.gt.s32.totalorder %v25, 6
  %v609 = vsel %vm607, 1, 0
  %610 = vset.pattern.permute.xlu0 0
  %611 = vperm.xlu0 %610, %v609
  %v612 = vpop.permute.xlu0 %611
  %vm613 = vcmp.eq.s32.totalorder %v612, 1
  %v616 = vrot.slane %v540, 1
  %v617 = vsel %vm295, %v541, %v616
  %618 = vrot.lane.b32.xlu0 %v617, 32
  %v619 = vpop.permute.xlu0 %618
  %v621 = vsel %vm613, %v619, %v349
  %622 = vst.msk [vmem:[#allocation2] sm:$0x3] %vm18, %v621
  %v623 = vld [vmem:[#allocation3] sm:$0x3]
  %v626 = vrot.slane %v528, 1
  %v627 = vsel %vm295, %v529, %v626
  %628 = vrot.lane.b32.xlu0 %v627, 96
  %v629 = vpop.permute.xlu0 %628
  %v631 = vsel %vm613, %v629, %v623
  %632 = vst.msk [vmem:[#allocation3] sm:$0x3] %vm18, %v631
  %v633 = vld [vmem:[#allocation4] sm:$0x3]
  %v634 = vsel %vm608, 1, 0
  %635 = vset.pattern.permute.xlu0 0
  %636 = vperm.xlu0 %635, %v634
  %v637 = vpop.permute.xlu0 %636
  %vm638 = vcmp.eq.s32.totalorder %v637, 1
  %v641 = vrot.slane %v605, 6
  %v642 = vrot.slane %v606, 5
  %v643 = vsel %vm295, %v642, %v641
  %644 = vrot.lane.b32.xlu0 %v643, 32
  %v645 = vpop.permute.xlu0 %644
  %v647 = vsel %vm638, %v645, %v633
  %648 = vst.msk [vmem:[#allocation4] sm:$0x3] %vm18, %v647
  %v649 = vld [vmem:[#allocation5] sm:$0x3]
  %v652 = vrot.slane %v593, 6
  %v653 = vrot.slane %v594, 5
  %v654 = vsel %vm295, %v653, %v652
  %655 = vrot.lane.b32.xlu0 %v654, 96
  %v656 = vpop.permute.xlu0 %655
  %v658 = vsel %vm638, %v656, %v649
  %659 = vst.msk [vmem:[#allocation5] sm:$0x3] %vm18, %v658
  %v660 = vsel %vm613, %v619, -1e+30
  %v661 = vsel %vm638, %v645, -1e+30
  %663 = vrot.lane.b32.xlu0 %v661, 32
  %v664 = vpop.permute.xlu0 %663
  %v666 = vsel %vm44, %v660, %v664
  %v667 = vld [vmem:[%s4] sm:$0x3]
  %v668 = vmax.f32 %v667, %v666
  %669 = vst.msk [vmem:[%s4] sm:$0x3] %vm23, %v668
  %v670 = vld [vmem:[#allocation2] sm:$0x3]
  %v671 = vpack.c.bf16 %v670, %v670
  %v672 = vld [vmem:[%s1] sm:$0xf]
  %v673 = vld [vmem:[%s1 + $0x4] sm:$0xf]
  %v674 = vld [vmem:[%s1 + $0x8] sm:$0xf]
  %v675 = vld [vmem:[%s1 + $0xc] sm:$0xf]
  %v680 = vunpack.c.l.b16 %v672
  %v681 = vunpack.c.l.b16 %v673
  %v682 = vunpack.c.l.b16 %v674
  %v683 = vunpack.c.l.b16 %v675
  %v684 = vpack.c.b16 %v681, %v680
  %v685 = vpack.c.b16 %v683, %v682
  %v689 = vsel %vm44, %v671, 0
  %691 = vmatprep.subr.bf16.mxu0 0
  %692 = vmatpush1.bf16.msra.mxu0 %v684
  %693 = vmatprep.subr.bf16.mxu0 0
  %694 = vmatpush1.bf16.msra.mxu0 %v685
  %695 = vmatprep.subr.bf16.mxu0 0
  %696 = vmatpush1.bf16.msra.mxu0 0
  %697 = vmatprep.subr.bf16.mxu0 0
  %698 = vmatpush1.bf16.msra.mxu0 0
  %699 = vmatprep.subr.bf16.mxu0 0
  %700 = vmatpush1.bf16.msra.mxu0 0
  %701 = vmatprep.subr.bf16.mxu0 0
  %702 = vmatpush1.bf16.msra.mxu0 0
  %703 = vmatprep.subr.bf16.mxu0 0
  %704 = vmatpush1.bf16.msra.mxu0 0
  %705 = vmatprep.subr.bf16.mxu0 0
  %706 = vmatpush1.bf16.msra.mxu0 0
  %707 = vmatprep.subr.bf16.mxu0 0
  %708 = vmatpush1.bf16.msra.mxu0 0
  %709 = vmatprep.subr.bf16.mxu0 0
  %710 = vmatpush1.bf16.msra.mxu0 0
  %711 = vmatprep.subr.bf16.mxu0 0
  %712 = vmatpush1.bf16.msra.mxu0 0
  %713 = vmatprep.subr.bf16.mxu0 0
  %714 = vmatpush1.bf16.msra.mxu0 0
  %715 = vmatprep.subr.bf16.mxu0 0
  %716 = vmatpush1.bf16.msra.mxu0 0
  %717 = vmatprep.subr.bf16.mxu0 0
  %718 = vmatpush1.bf16.msra.mxu0 0
  %719 = vmatprep.subr.bf16.mxu0 0
  %720 = vmatpush1.bf16.msra.mxu0 0
  %721 = vmatprep.subr.bf16.mxu0 0
  %722 = vmatpush1.bf16.msra.mxu0 0
  %723 = vmatprep.mubr.bf16.mxu0 0
  %724 = vmatmul.mubr.bf16.gmra.mrb[0].mxu0 %v689
  %v725 = vpop.f32.mrb[0].mxu0
  %v726 = vadd.f32 0.0, %v725
  %v727 = vpop.f32.mrb[0].mxu0
  %v728 = vpop.f32.mrb[0].mxu0
  %v729 = vpop.f32.mrb[0].mxu0
  %730 = vdwg.mxu0
  %v731 = vld [vmem:[#allocation4] sm:$0x3]
  %v732 = vpack.c.bf16 %v731, %v731
  %v733 = vld [vmem:[%s2] sm:$0xf]
  %v734 = vld [vmem:[%s2 + $0x4] sm:$0xf]
  %v735 = vld [vmem:[%s2 + $0x8] sm:$0xf]
  %v736 = vld [vmem:[%s2 + $0xc] sm:$0xf]
  %v741 = vunpack.c.l.b16 %v733
  %v742 = vunpack.c.l.b16 %v734
  %v743 = vunpack.c.l.b16 %v735
  %v744 = vunpack.c.l.b16 %v736
  %v745 = vpack.c.b16 %v742, %v741
  %v746 = vpack.c.b16 %v744, %v743
  %v750 = vsel %vm44, %v732, 0
  %752 = vmatprep.subr.bf16.mxu0 0
  %753 = vmatpush1.bf16.msra.mxu0 %v745
  %754 = vmatprep.subr.bf16.mxu0 0
  %755 = vmatpush1.bf16.msra.mxu0 %v746
  %756 = vmatprep.subr.bf16.mxu0 0
  %757 = vmatpush1.bf16.msra.mxu0 0
  %758 = vmatprep.subr.bf16.mxu0 0
  %759 = vmatpush1.bf16.msra.mxu0 0
  %760 = vmatprep.subr.bf16.mxu0 0
  %761 = vmatpush1.bf16.msra.mxu0 0
  %762 = vmatprep.subr.bf16.mxu0 0
  %763 = vmatpush1.bf16.msra.mxu0 0
  %764 = vmatprep.subr.bf16.mxu0 0
  %765 = vmatpush1.bf16.msra.mxu0 0
  %766 = vmatprep.subr.bf16.mxu0 0
  %767 = vmatpush1.bf16.msra.mxu0 0
  %768 = vmatprep.subr.bf16.mxu0 0
  %769 = vmatpush1.bf16.msra.mxu0 0
  %770 = vmatprep.subr.bf16.mxu0 0
  %771 = vmatpush1.bf16.msra.mxu0 0
  %772 = vmatprep.subr.bf16.mxu0 0
  %773 = vmatpush1.bf16.msra.mxu0 0
  %774 = vmatprep.subr.bf16.mxu0 0
  %775 = vmatpush1.bf16.msra.mxu0 0
  %776 = vmatprep.subr.bf16.mxu0 0
  %777 = vmatpush1.bf16.msra.mxu0 0
  %778 = vmatprep.subr.bf16.mxu0 0
  %779 = vmatpush1.bf16.msra.mxu0 0
  %780 = vmatprep.subr.bf16.mxu0 0
  %781 = vmatpush1.bf16.msra.mxu0 0
  %782 = vmatprep.subr.bf16.mxu0 0
  %783 = vmatpush1.bf16.msra.mxu0 0
  %784 = vmatprep.mubr.bf16.mxu0 0
  %785 = vmatmul.mubr.bf16.gmra.mrb[0].mxu0 %v750
  %v786 = vpop.f32.mrb[0].mxu0
  %v787 = vadd.f32 0.0, %v786
  %v788 = vpop.f32.mrb[0].mxu0
  %v789 = vpop.f32.mrb[0].mxu0
  %v790 = vpop.f32.mrb[0].mxu0
  %791 = vdwg.mxu0
  %v792 = vld [vmem:[%s0] sm:$0x2]
  %v793 = vld [vmem:[%s0 + $0x8] sm:$0x2]
  %v794 = vunpack.c.l.bf16 %v792
  %v795 = vunpack.c.l.bf16 %v793
  %v796 = vld [vmem:[%s0 + $0x4] sm:$0x4]
  %v797 = vld [vmem:[%s0 + $0xc] sm:$0x4]
  %v798 = vunpack.c.l.bf16 %v796
  %v799 = vunpack.c.l.bf16 %v797
  %v801 = vrot.slane %v726, 6
  %v802 = vrot.slane %v726, 7
  %v805 = vadd.f32 %v794, %v801
  %v806 = vadd.f32 %v795, %v802
  %v807 = vld [vmem:[#allocation3] sm:$0x3]
  %v808 = vxor.u32 %v805, 2147483648
  %v809 = vxor.u32 %v806, 2147483648
  %v810 = vmul.f32 %v808, 1.442695
  %v811 = vpow.pop %v810
  %v812 = vmul.f32 %v809, 1.442695
  %v813 = vpow.pop %v812
  %v814 = vadd.f32 %v811, 1.0
  %v815 = vadd.f32 %v813, 1.0
  %v816 = vrcp.pop %v814
  %v817 = vmul.f32 1.0, %v816
  %v818 = vrcp.pop %v815
  %v819 = vmul.f32 1.0, %v818
  %v820 = vtanh.pop %v805
  %v821 = vtanh.pop %v806
  %v823 = vrot.slane %v807, 6
  %v824 = vrot.slane %v807, 7
  %825 = vrot.lane.b32.xlu0 %v823, 32
  %v826 = vpop.permute.xlu0 %825
  %827 = vrot.lane.b32.xlu0 %v824, 32
  %v828 = vpop.permute.xlu0 %827
  %v831 = vmul.f32 %v817, %v826
  %v832 = vmul.f32 %v819, %v828
  %835 = vrot.lane.b32.xlu0 %v820, 64
  %v836 = vpop.permute.xlu0 %835
  %837 = vrot.lane.b32.xlu0 %v821, 64
  %v838 = vpop.permute.xlu0 %837
  %v841 = vmul.f32 %v817, %v836
  %v842 = vmul.f32 %v819, %v838
  %845 = vrot.lane.b32.xlu0 %v841, 32
  %v846 = vpop.permute.xlu0 %845
  %847 = vrot.lane.b32.xlu0 %v842, 32
  %v848 = vpop.permute.xlu0 %847
  %v851 = vadd.f32 %v831, %v846
  %v852 = vadd.f32 %v832, %v848
  %v853 = vtanh.pop %v851
  %v854 = vtanh.pop %v852
  %857 = vrot.lane.b32.xlu0 %v853, 64
  %v858 = vpop.permute.xlu0 %857
  %859 = vrot.lane.b32.xlu0 %v854, 64
  %v860 = vpop.permute.xlu0 %859
  %v863 = vmul.f32 %v817, %v858
  %v864 = vmul.f32 %v819, %v860
  %v866 = vrot.slane %v787, 3
  %v867 = vrot.slane %v787, 4
  %v870 = vadd.f32 %v798, %v866
  %v871 = vadd.f32 %v799, %v867
  %v872 = vld [vmem:[#allocation5] sm:$0x3]
  %v873 = vxor.u32 %v870, 2147483648
  %v874 = vxor.u32 %v871, 2147483648
  %v875 = vmul.f32 %v873, 1.442695
  %v876 = vpow.pop %v875
  %v877 = vmul.f32 %v874, 1.442695
  %v878 = vpow.pop %v877
  %v879 = vadd.f32 %v876, 1.0
  %v880 = vadd.f32 %v878, 1.0
  %v881 = vrcp.pop %v879
  %v882 = vmul.f32 1.0, %v881
  %v883 = vrcp.pop %v880
  %v884 = vmul.f32 1.0, %v883
  %v885 = vtanh.pop %v870
  %v886 = vtanh.pop %v871
  %v888 = vrot.slane %v872, 3
  %v889 = vrot.slane %v872, 4
  %890 = vrot.lane.b32.xlu0 %v888, 32
  %v891 = vpop.permute.xlu0 %890
  %892 = vrot.lane.b32.xlu0 %v889, 32
  %v893 = vpop.permute.xlu0 %892
  %v896 = vmul.f32 %v882, %v891
  %v897 = vmul.f32 %v884, %v893
  %900 = vrot.lane.b32.xlu0 %v885, 64
  %v901 = vpop.permute.xlu0 %900
  %902 = vrot.lane.b32.xlu0 %v886, 64
  %v903 = vpop.permute.xlu0 %902
  %v906 = vmul.f32 %v882, %v901
  %v907 = vmul.f32 %v884, %v903
  %910 = vrot.lane.b32.xlu0 %v906, 32
  %v911 = vpop.permute.xlu0 %910
  %912 = vrot.lane.b32.xlu0 %v907, 32
  %v913 = vpop.permute.xlu0 %912
  %v916 = vadd.f32 %v896, %v911
  %v917 = vadd.f32 %v897, %v913
  %v918 = vtanh.pop %v916
  %v919 = vtanh.pop %v917
  %922 = vrot.lane.b32.xlu0 %v918, 64
  %v923 = vpop.permute.xlu0 %922
  %924 = vrot.lane.b32.xlu0 %v919, 64
  %v925 = vpop.permute.xlu0 %924
  %v928 = vmul.f32 %v882, %v923
  %v929 = vmul.f32 %v884, %v925
  %vm930 = vcmp.gt.s32.totalorder %v25, 2
  %vm931 = vcmp.gt.s32.totalorder %v25, 5
  %v932 = vsel %vm930, 1, 0
  %933 = vset.pattern.permute.xlu0 0
  %934 = vperm.xlu0 %933, %v932
  %v935 = vpop.permute.xlu0 %934
  %vm936 = vcmp.eq.s32.totalorder %v935, 1
  %v939 = vrot.slane %v863, 2
  %v940 = vrot.slane %v864, 1
  %v941 = vsel %vm295, %v940, %v939
  %942 = vrot.lane.b32.xlu0 %v941, 32
  %v943 = vpop.permute.xlu0 %942
  %v945 = vsel %vm936, %v943, %v670
  %946 = vst.msk [vmem:[#allocation2] sm:$0x3] %vm18, %v945
  %v947 = vld [vmem:[#allocation3] sm:$0x3]
  %v950 = vrot.slane %v851, 2
  %v951 = vrot.slane %v852, 1
  %v952 = vsel %vm295, %v951, %v950
  %953 = vrot.lane.b32.xlu0 %v952, 96
  %v954 = vpop.permute.xlu0 %953
  %v956 = vsel %vm936, %v954, %v947
  %957 = vst.msk [vmem:[#allocation3] sm:$0x3] %vm18, %v956
  %v958 = vld [vmem:[#allocation4] sm:$0x3]
  %v959 = vsel %vm931, 1, 0
  %960 = vset.pattern.permute.xlu0 0
  %961 = vperm.xlu0 %960, %v959
  %v962 = vpop.permute.xlu0 %961
  %vm963 = vcmp.eq.s32.totalorder %v962, 1
  %v966 = vrot.slane %v928, 5
  %v967 = vrot.slane %v929, 4
  %v968 = vsel %vm295, %v967, %v966
  %969 = vrot.lane.b32.xlu0 %v968, 32
  %v970 = vpop.permute.xlu0 %969
  %v972 = vsel %vm963, %v970, %v958
  %973 = vst.msk [vmem:[#allocation4] sm:$0x3] %vm18, %v972
  %v974 = vld [vmem:[#allocation5] sm:$0x3]
  %v977 = vrot.slane %v916, 5
  %v978 = vrot.slane %v917, 4
  %v979 = vsel %vm295, %v978, %v977
  %980 = vrot.lane.b32.xlu0 %v979, 96
  %v981 = vpop.permute.xlu0 %980
  %v983 = vsel %vm963, %v981, %v974
  %984 = vst.msk [vmem:[#allocation5] sm:$0x3] %vm18, %v983
  %v985 = vsel %vm936, %v943, -1e+30
  %v986 = vsel %vm963, %v970, -1e+30
  %988 = vrot.lane.b32.xlu0 %v986, 32
  %v989 = vpop.permute.xlu0 %988
  %v991 = vsel %vm44, %v985, %v989
  %v992 = vld [vmem:[%s4] sm:$0x3]
  %v993 = vmax.f32 %v992, %v991
  %994 = vst.msk [vmem:[%s4] sm:$0x3] %vm23, %v993
  %v995 = vld [vmem:[#allocation2] sm:$0x3]
  %v996 = vpack.c.bf16 %v995, %v995
  %v997 = vld [vmem:[%s1] sm:$0xf]
  %v998 = vld [vmem:[%s1 + $0x4] sm:$0xf]
  %v999 = vld [vmem:[%s1 + $0x8] sm:$0xf]
  %v1000 = vld [vmem:[%s1 + $0xc] sm:$0xf]
  %v1005 = vunpack.c.l.b16 %v997
  %v1006 = vunpack.c.l.b16 %v998
  %v1007 = vunpack.c.l.b16 %v999
  %v1008 = vunpack.c.l.b16 %v1000
  %v1009 = vpack.c.b16 %v1006, %v1005
  %v1010 = vpack.c.b16 %v1008, %v1007
  %v1014 = vsel %vm44, %v996, 0
  %1016 = vmatprep.subr.bf16.mxu0 0
  %1017 = vmatpush1.bf16.msra.mxu0 %v1009
  %1018 = vmatprep.subr.bf16.mxu0 0
  %1019 = vmatpush1.bf16.msra.mxu0 %v1010
  %1020 = vmatprep.subr.bf16.mxu0 0
  %1021 = vmatpush1.bf16.msra.mxu0 0
  %1022 = vmatprep.subr.bf16.mxu0 0
  %1023 = vmatpush1.bf16.msra.mxu0 0
  %1024 = vmatprep.subr.bf16.mxu0 0
  %1025 = vmatpush1.bf16.msra.mxu0 0
  %1026 = vmatprep.subr.bf16.mxu0 0
  %1027 = vmatpush1.bf16.msra.mxu0 0
  %1028 = vmatprep.subr.bf16.mxu0 0
  %1029 = vmatpush1.bf16.msra.mxu0 0
  %1030 = vmatprep.subr.bf16.mxu0 0
  %1031 = vmatpush1.bf16.msra.mxu0 0
  %1032 = vmatprep.subr.bf16.mxu0 0
  %1033 = vmatpush1.bf16.msra.mxu0 0
  %1034 = vmatprep.subr.bf16.mxu0 0
  %1035 = vmatpush1.bf16.msra.mxu0 0
  %1036 = vmatprep.subr.bf16.mxu0 0
  %1037 = vmatpush1.bf16.msra.mxu0 0
  %1038 = vmatprep.subr.bf16.mxu0 0
  %1039 = vmatpush1.bf16.msra.mxu0 0
  %1040 = vmatprep.subr.bf16.mxu0 0
  %1041 = vmatpush1.bf16.msra.mxu0 0
  %1042 = vmatprep.subr.bf16.mxu0 0
  %1043 = vmatpush1.bf16.msra.mxu0 0
  %1044 = vmatprep.subr.bf16.mxu0 0
  %1045 = vmatpush1.bf16.msra.mxu0 0
  %1046 = vmatprep.subr.bf16.mxu0 0
  %1047 = vmatpush1.bf16.msra.mxu0 0
  %1048 = vmatprep.mubr.bf16.mxu0 0
  %1049 = vmatmul.mubr.bf16.gmra.mrb[0].mxu0 %v1014
  %v1050 = vpop.f32.mrb[0].mxu0
  %v1051 = vadd.f32 0.0, %v1050
  %v1052 = vpop.f32.mrb[0].mxu0
  %v1053 = vpop.f32.mrb[0].mxu0
  %v1054 = vpop.f32.mrb[0].mxu0
  %1055 = vdwg.mxu0
  %v1056 = vld [vmem:[#allocation4] sm:$0x3]
  %v1057 = vpack.c.bf16 %v1056, %v1056
  %v1058 = vld [vmem:[%s2] sm:$0xf]
  %v1059 = vld [vmem:[%s2 + $0x4] sm:$0xf]
  %v1060 = vld [vmem:[%s2 + $0x8] sm:$0xf]
  %v1061 = vld [vmem:[%s2 + $0xc] sm:$0xf]
  %v1066 = vunpack.c.l.b16 %v1058
  %v1067 = vunpack.c.l.b16 %v1059
  %v1068 = vunpack.c.l.b16 %v1060
  %v1069 = vunpack.c.l.b16 %v1061
  %v1070 = vpack.c.b16 %v1067, %v1066
  %v1071 = vpack.c.b16 %v1069, %v1068
  %v1075 = vsel %vm44, %v1057, 0
  %1077 = vmatprep.subr.bf16.mxu0 0
  %1078 = vmatpush1.bf16.msra.mxu0 %v1070
  %1079 = vmatprep.subr.bf16.mxu0 0
  %1080 = vmatpush1.bf16.msra.mxu0 %v1071
  %1081 = vmatprep.subr.bf16.mxu0 0
  %1082 = vmatpush1.bf16.msra.mxu0 0
  %1083 = vmatprep.subr.bf16.mxu0 0
  %1084 = vmatpush1.bf16.msra.mxu0 0
  %1085 = vmatprep.subr.bf16.mxu0 0
  %1086 = vmatpush1.bf16.msra.mxu0 0
  %1087 = vmatprep.subr.bf16.mxu0 0
  %1088 = vmatpush1.bf16.msra.mxu0 0
  %1089 = vmatprep.subr.bf16.mxu0 0
  %1090 = vmatpush1.bf16.msra.mxu0 0
  %1091 = vmatprep.subr.bf16.mxu0 0
  %1092 = vmatpush1.bf16.msra.mxu0 0
  %1093 = vmatprep.subr.bf16.mxu0 0
  %1094 = vmatpush1.bf16.msra.mxu0 0
  %1095 = vmatprep.subr.bf16.mxu0 0
  %1096 = vmatpush1.bf16.msra.mxu0 0
  %1097 = vmatprep.subr.bf16.mxu0 0
  %1098 = vmatpush1.bf16.msra.mxu0 0
  %1099 = vmatprep.subr.bf16.mxu0 0
  %1100 = vmatpush1.bf16.msra.mxu0 0
  %1101 = vmatprep.subr.bf16.mxu0 0
  %1102 = vmatpush1.bf16.msra.mxu0 0
  %1103 = vmatprep.subr.bf16.mxu0 0
  %1104 = vmatpush1.bf16.msra.mxu0 0
  %1105 = vmatprep.subr.bf16.mxu0 0
  %1106 = vmatpush1.bf16.msra.mxu0 0
  %1107 = vmatprep.subr.bf16.mxu0 0
  %1108 = vmatpush1.bf16.msra.mxu0 0
  %1109 = vmatprep.mubr.bf16.mxu0 0
  %1110 = vmatmul.mubr.bf16.gmra.mrb[0].mxu0 %v1075
  %v1111 = vpop.f32.mrb[0].mxu0
  %v1112 = vadd.f32 0.0, %v1111
  %v1113 = vpop.f32.mrb[0].mxu0
  %v1114 = vpop.f32.mrb[0].mxu0
  %v1115 = vpop.f32.mrb[0].mxu0
  %1116 = vdwg.mxu0
  %v1117 = vld [vmem:[%s0] sm:$0x2]
  %v1118 = vld [vmem:[%s0 + $0x8] sm:$0x2]
  %v1119 = vunpack.c.l.bf16 %v1117
  %v1120 = vunpack.c.l.bf16 %v1118
  %v1121 = vld [vmem:[%s0 + $0x4] sm:$0x4]
  %v1122 = vld [vmem:[%s0 + $0xc] sm:$0x4]
  %v1123 = vunpack.c.l.bf16 %v1121
  %v1124 = vunpack.c.l.bf16 %v1122
  %v1126 = vrot.slane %v1051, 5
  %v1127 = vrot.slane %v1051, 6
  %v1130 = vadd.f32 %v1119, %v1126
  %v1131 = vadd.f32 %v1120, %v1127
  %v1132 = vld [vmem:[#allocation3] sm:$0x3]
  %v1133 = vxor.u32 %v1130, 2147483648
  %v1134 = vxor.u32 %v1131, 2147483648
  %v1135 = vmul.f32 %v1133, 1.442695
  %v1136 = vpow.pop %v1135
  %v1137 = vmul.f32 %v1134, 1.442695
  %v1138 = vpow.pop %v1137
  %v1139 = vadd.f32 %v1136, 1.0
  %v1140 = vadd.f32 %v1138, 1.0
  %v1141 = vrcp.pop %v1139
  %v1142 = vmul.f32 1.0, %v1141
  %v1143 = vrcp.pop %v1140
  %v1144 = vmul.f32 1.0, %v1143
  %v1145 = vtanh.pop %v1130
  %v1146 = vtanh.pop %v1131
  %v1148 = vrot.slane %v1132, 5
  %v1149 = vrot.slane %v1132, 6
  %1150 = vrot.lane.b32.xlu0 %v1148, 32
  %v1151 = vpop.permute.xlu0 %1150
  %1152 = vrot.lane.b32.xlu0 %v1149, 32
  %v1153 = vpop.permute.xlu0 %1152
  %v1156 = vmul.f32 %v1142, %v1151
  %v1157 = vmul.f32 %v1144, %v1153
  %1160 = vrot.lane.b32.xlu0 %v1145, 64
  %v1161 = vpop.permute.xlu0 %1160
  %1162 = vrot.lane.b32.xlu0 %v1146, 64
  %v1163 = vpop.permute.xlu0 %1162
  %v1166 = vmul.f32 %v1142, %v1161
  %v1167 = vmul.f32 %v1144, %v1163
  %1170 = vrot.lane.b32.xlu0 %v1166, 32
  %v1171 = vpop.permute.xlu0 %1170
  %1172 = vrot.lane.b32.xlu0 %v1167, 32
  %v1173 = vpop.permute.xlu0 %1172
  %v1176 = vadd.f32 %v1156, %v1171
  %v1177 = vadd.f32 %v1157, %v1173
  %v1178 = vtanh.pop %v1176
  %v1179 = vtanh.pop %v1177
  %1182 = vrot.lane.b32.xlu0 %v1178, 64
  %v1183 = vpop.permute.xlu0 %1182
  %1184 = vrot.lane.b32.xlu0 %v1179, 64
  %v1185 = vpop.permute.xlu0 %1184
  %v1188 = vmul.f32 %v1142, %v1183
  %v1189 = vmul.f32 %v1144, %v1185
  %v1191 = vrot.slane %v1112, 4
  %v1192 = vrot.slane %v1112, 5
  %v1195 = vadd.f32 %v1123, %v1191
  %v1196 = vadd.f32 %v1124, %v1192
  %v1197 = vld [vmem:[#allocation5] sm:$0x3]
  %v1198 = vxor.u32 %v1195, 2147483648
  %v1199 = vxor.u32 %v1196, 2147483648
  %v1200 = vmul.f32 %v1198, 1.442695
  %v1201 = vpow.pop %v1200
  %v1202 = vmul.f32 %v1199, 1.442695
  %v1203 = vpow.pop %v1202
  %v1204 = vadd.f32 %v1201, 1.0
  %v1205 = vadd.f32 %v1203, 1.0
  %v1206 = vrcp.pop %v1204
  %v1207 = vmul.f32 1.0, %v1206
  %v1208 = vrcp.pop %v1205
  %v1209 = vmul.f32 1.0, %v1208
  %v1210 = vtanh.pop %v1195
  %v1211 = vtanh.pop %v1196
  %v1213 = vrot.slane %v1197, 4
  %v1214 = vrot.slane %v1197, 5
  %1215 = vrot.lane.b32.xlu0 %v1213, 32
  %v1216 = vpop.permute.xlu0 %1215
  %1217 = vrot.lane.b32.xlu0 %v1214, 32
  %v1218 = vpop.permute.xlu0 %1217
  %v1221 = vmul.f32 %v1207, %v1216
  %v1222 = vmul.f32 %v1209, %v1218
  %1225 = vrot.lane.b32.xlu0 %v1210, 64
  %v1226 = vpop.permute.xlu0 %1225
  %1227 = vrot.lane.b32.xlu0 %v1211, 64
  %v1228 = vpop.permute.xlu0 %1227
  %v1231 = vmul.f32 %v1207, %v1226
  %v1232 = vmul.f32 %v1209, %v1228
  %1235 = vrot.lane.b32.xlu0 %v1231, 32
  %v1236 = vpop.permute.xlu0 %1235
  %1237 = vrot.lane.b32.xlu0 %v1232, 32
  %v1238 = vpop.permute.xlu0 %1237
  %v1241 = vadd.f32 %v1221, %v1236
  %v1242 = vadd.f32 %v1222, %v1238
  %v1243 = vtanh.pop %v1241
  %v1244 = vtanh.pop %v1242
  %1247 = vrot.lane.b32.xlu0 %v1243, 64
  %v1248 = vpop.permute.xlu0 %1247
  %1249 = vrot.lane.b32.xlu0 %v1244, 64
  %v1250 = vpop.permute.xlu0 %1249
  %v1253 = vmul.f32 %v1207, %v1248
  %v1254 = vmul.f32 %v1209, %v1250
  %vm1255 = vcmp.gt.s32.totalorder %v25, 3
  %vm1256 = vcmp.gt.s32.totalorder %v25, 4
  %v1257 = vsel %vm1255, 1, 0
  %1258 = vset.pattern.permute.xlu0 0
  %1259 = vperm.xlu0 %1258, %v1257
  %v1260 = vpop.permute.xlu0 %1259
  %vm1261 = vcmp.eq.s32.totalorder %v1260, 1
  %v1264 = vrot.slane %v1188, 3
  %v1265 = vrot.slane %v1189, 2
  %v1266 = vsel %vm295, %v1265, %v1264
  %1267 = vrot.lane.b32.xlu0 %v1266, 32
  %v1268 = vpop.permute.xlu0 %1267
  %v1270 = vsel %vm1261, %v1268, %v995
  %1271 = vst.msk [vmem:[#allocation2] sm:$0x3] %vm18, %v1270
  %v1272 = vld [vmem:[#allocation3] sm:$0x3]
  %v1275 = vrot.slane %v1176, 3
  %v1276 = vrot.slane %v1177, 2
  %v1277 = vsel %vm295, %v1276, %v1275
  %1278 = vrot.lane.b32.xlu0 %v1277, 96
  %v1279 = vpop.permute.xlu0 %1278
  %v1281 = vsel %vm1261, %v1279, %v1272
  %1282 = vst.msk [vmem:[#allocation3] sm:$0x3] %vm18, %v1281
  %v1283 = vld [vmem:[#allocation4] sm:$0x3]
  %v1284 = vsel %vm1256, 1, 0
  %1285 = vset.pattern.permute.xlu0 0
  %1286 = vperm.xlu0 %1285, %v1284
  %v1287 = vpop.permute.xlu0 %1286
  %vm1288 = vcmp.eq.s32.totalorder %v1287, 1
  %v1291 = vrot.slane %v1253, 4
  %v1292 = vrot.slane %v1254, 3
  %v1293 = vsel %vm295, %v1292, %v1291
  %1294 = vrot.lane.b32.xlu0 %v1293, 32
  %v1295 = vpop.permute.xlu0 %1294
  %v1297 = vsel %vm1288, %v1295, %v1283
  %1298 = vst.msk [vmem:[#allocation4] sm:$0x3] %vm18, %v1297
  %v1299 = vld [vmem:[#allocation5] sm:$0x3]
  %v1302 = vrot.slane %v1241, 4
  %v1303 = vrot.slane %v1242, 3
  %v1304 = vsel %vm295, %v1303, %v1302
  %1305 = vrot.lane.b32.xlu0 %v1304, 96
  %v1306 = vpop.permute.xlu0 %1305
  %v1308 = vsel %vm1288, %v1306, %v1299
  %1309 = vst.msk [vmem:[#allocation5] sm:$0x3] %vm18, %v1308
  %v1310 = vsel %vm1261, %v1268, -1e+30
  %v1311 = vsel %vm1288, %v1295, -1e+30
  %1313 = vrot.lane.b32.xlu0 %v1311, 32
  %v1314 = vpop.permute.xlu0 %1313
  %v1316 = vsel %vm44, %v1310, %v1314
  %v1317 = vld [vmem:[%s4] sm:$0x3]
  %v1318 = vmax.f32 %v1317, %v1316
  %1319 = vst.msk [vmem:[%s4] sm:$0x3] %vm23, %v1318
  %v1320 = vld [vmem:[#allocation2] sm:$0x3]
  %v1321 = vpack.c.bf16 %v1320, %v1320
  %v1322 = vld [vmem:[%s1] sm:$0xf]
  %v1323 = vld [vmem:[%s1 + $0x4] sm:$0xf]
  %v1324 = vld [vmem:[%s1 + $0x8] sm:$0xf]
  %v1325 = vld [vmem:[%s1 + $0xc] sm:$0xf]
  %v1330 = vunpack.c.l.b16 %v1322
  %v1331 = vunpack.c.l.b16 %v1323
  %v1332 = vunpack.c.l.b16 %v1324
  %v1333 = vunpack.c.l.b16 %v1325
  %v1334 = vpack.c.b16 %v1331, %v1330
  %v1335 = vpack.c.b16 %v1333, %v1332
  %v1339 = vsel %vm44, %v1321, 0
  %1341 = vmatprep.subr.bf16.mxu0 0
  %1342 = vmatpush1.bf16.msra.mxu0 %v1334
  %1343 = vmatprep.subr.bf16.mxu0 0
  %1344 = vmatpush1.bf16.msra.mxu0 %v1335
  %1345 = vmatprep.subr.bf16.mxu0 0
  %1346 = vmatpush1.bf16.msra.mxu0 0
  %1347 = vmatprep.subr.bf16.mxu0 0
  %1348 = vmatpush1.bf16.msra.mxu0 0
  %1349 = vmatprep.subr.bf16.mxu0 0
  %1350 = vmatpush1.bf16.msra.mxu0 0
  %1351 = vmatprep.subr.bf16.mxu0 0
  %1352 = vmatpush1.bf16.msra.mxu0 0
  %1353 = vmatprep.subr.bf16.mxu0 0
  %1354 = vmatpush1.bf16.msra.mxu0 0
  %1355 = vmatprep.subr.bf16.mxu0 0
  %1356 = vmatpush1.bf16.msra.mxu0 0
  %1357 = vmatprep.subr.bf16.mxu0 0
  %1358 = vmatpush1.bf16.msra.mxu0 0
  %1359 = vmatprep.subr.bf16.mxu0 0
  %1360 = vmatpush1.bf16.msra.mxu0 0
  %1361 = vmatprep.subr.bf16.mxu0 0
  %1362 = vmatpush1.bf16.msra.mxu0 0
  %1363 = vmatprep.subr.bf16.mxu0 0
  %1364 = vmatpush1.bf16.msra.mxu0 0
  %1365 = vmatprep.subr.bf16.mxu0 0
  %1366 = vmatpush1.bf16.msra.mxu0 0
  %1367 = vmatprep.subr.bf16.mxu0 0
  %1368 = vmatpush1.bf16.msra.mxu0 0
  %1369 = vmatprep.subr.bf16.mxu0 0
  %1370 = vmatpush1.bf16.msra.mxu0 0
  %1371 = vmatprep.subr.bf16.mxu0 0
  %1372 = vmatpush1.bf16.msra.mxu0 0
  %1373 = vmatprep.mubr.bf16.mxu0 0
  %1374 = vmatmul.mubr.bf16.gmra.mrb[0].mxu0 %v1339
  %v1375 = vpop.f32.mrb[0].mxu0
  %v1376 = vadd.f32 0.0, %v1375
  %v1377 = vpop.f32.mrb[0].mxu0
  %v1378 = vpop.f32.mrb[0].mxu0
  %v1379 = vpop.f32.mrb[0].mxu0
  %1380 = vdwg.mxu0
  %v1381 = vld [vmem:[#allocation4] sm:$0x3]
  %v1382 = vpack.c.bf16 %v1381, %v1381
  %v1383 = vld [vmem:[%s2] sm:$0xf]
  %v1384 = vld [vmem:[%s2 + $0x4] sm:$0xf]
  %v1385 = vld [vmem:[%s2 + $0x8] sm:$0xf]
  %v1386 = vld [vmem:[%s2 + $0xc] sm:$0xf]
  %v1391 = vunpack.c.l.b16 %v1383
  %v1392 = vunpack.c.l.b16 %v1384
  %v1393 = vunpack.c.l.b16 %v1385
  %v1394 = vunpack.c.l.b16 %v1386
  %v1395 = vpack.c.b16 %v1392, %v1391
  %v1396 = vpack.c.b16 %v1394, %v1393
  %v1400 = vsel %vm44, %v1382, 0
  %1402 = vmatprep.subr.bf16.mxu0 0
  %1403 = vmatpush1.bf16.msra.mxu0 %v1395
  %1404 = vmatprep.subr.bf16.mxu0 0
  %1405 = vmatpush1.bf16.msra.mxu0 %v1396
  %1406 = vmatprep.subr.bf16.mxu0 0
  %1407 = vmatpush1.bf16.msra.mxu0 0
  %1408 = vmatprep.subr.bf16.mxu0 0
  %1409 = vmatpush1.bf16.msra.mxu0 0
  %1410 = vmatprep.subr.bf16.mxu0 0
  %1411 = vmatpush1.bf16.msra.mxu0 0
  %1412 = vmatprep.subr.bf16.mxu0 0
  %1413 = vmatpush1.bf16.msra.mxu0 0
  %1414 = vmatprep.subr.bf16.mxu0 0
  %1415 = vmatpush1.bf16.msra.mxu0 0
  %1416 = vmatprep.subr.bf16.mxu0 0
  %1417 = vmatpush1.bf16.msra.mxu0 0
  %1418 = vmatprep.subr.bf16.mxu0 0
  %1419 = vmatpush1.bf16.msra.mxu0 0
  %1420 = vmatprep.subr.bf16.mxu0 0
  %1421 = vmatpush1.bf16.msra.mxu0 0
  %1422 = vmatprep.subr.bf16.mxu0 0
  %1423 = vmatpush1.bf16.msra.mxu0 0
  %1424 = vmatprep.subr.bf16.mxu0 0
  %1425 = vmatpush1.bf16.msra.mxu0 0
  %1426 = vmatprep.subr.bf16.mxu0 0
  %1427 = vmatpush1.bf16.msra.mxu0 0
  %1428 = vmatprep.subr.bf16.mxu0 0
  %1429 = vmatpush1.bf16.msra.mxu0 0
  %1430 = vmatprep.subr.bf16.mxu0 0
  %1431 = vmatpush1.bf16.msra.mxu0 0
  %1432 = vmatprep.subr.bf16.mxu0 0
  %1433 = vmatpush1.bf16.msra.mxu0 0
  %1434 = vmatprep.mubr.bf16.mxu0 0
  %1435 = vmatmul.mubr.bf16.gmra.mrb[0].mxu0 %v1400
  %v1436 = vpop.f32.mrb[0].mxu0
  %v1437 = vadd.f32 0.0, %v1436
  %v1438 = vpop.f32.mrb[0].mxu0
  %v1439 = vpop.f32.mrb[0].mxu0
  %v1440 = vpop.f32.mrb[0].mxu0
  %1441 = vdwg.mxu0
  %v1442 = vld [vmem:[%s0] sm:$0x4]
  %v1443 = vld [vmem:[%s0 + $0x8] sm:$0x4]
  %v1444 = vunpack.c.l.bf16 %v1442
  %v1445 = vunpack.c.l.bf16 %v1443
  %v1446 = vld [vmem:[%s0 + $0x4] sm:$0x2]
  %v1447 = vld [vmem:[%s0 + $0xc] sm:$0x2]
  %v1448 = vunpack.c.l.bf16 %v1446
  %v1449 = vunpack.c.l.bf16 %v1447
  %v1451 = vrot.slane %v1376, 4
  %v1452 = vrot.slane %v1376, 5
  %v1455 = vadd.f32 %v1444, %v1451
  %v1456 = vadd.f32 %v1445, %v1452
  %v1457 = vld [vmem:[#allocation3] sm:$0x3]
  %v1458 = vxor.u32 %v1455, 2147483648
  %v1459 = vxor.u32 %v1456, 2147483648
  %v1460 = vmul.f32 %v1458, 1.442695
  %v1461 = vpow.pop %v1460
  %v1462 = vmul.f32 %v1459, 1.442695
  %v1463 = vpow.pop %v1462
  %v1464 = vadd.f32 %v1461, 1.0
  %v1465 = vadd.f32 %v1463, 1.0
  %v1466 = vrcp.pop %v1464
  %v1467 = vmul.f32 1.0, %v1466
  %v1468 = vrcp.pop %v1465
  %v1469 = vmul.f32 1.0, %v1468
  %v1470 = vtanh.pop %v1455
  %v1471 = vtanh.pop %v1456
  %v1473 = vrot.slane %v1457, 4
  %v1474 = vrot.slane %v1457, 5
  %1475 = vrot.lane.b32.xlu0 %v1473, 32
  %v1476 = vpop.permute.xlu0 %1475
  %1477 = vrot.lane.b32.xlu0 %v1474, 32
  %v1478 = vpop.permute.xlu0 %1477
  %v1481 = vmul.f32 %v1467, %v1476
  %v1482 = vmul.f32 %v1469, %v1478
  %1485 = vrot.lane.b32.xlu0 %v1470, 64
  %v1486 = vpop.permute.xlu0 %1485
  %1487 = vrot.lane.b32.xlu0 %v1471, 64
  %v1488 = vpop.permute.xlu0 %1487
  %v1491 = vmul.f32 %v1467, %v1486
  %v1492 = vmul.f32 %v1469, %v1488
  %1495 = vrot.lane.b32.xlu0 %v1491, 32
  %v1496 = vpop.permute.xlu0 %1495
  %1497 = vrot.lane.b32.xlu0 %v1492, 32
  %v1498 = vpop.permute.xlu0 %1497
  %v1501 = vadd.f32 %v1481, %v1496
  %v1502 = vadd.f32 %v1482, %v1498
  %v1503 = vtanh.pop %v1501
  %v1504 = vtanh.pop %v1502
  %1507 = vrot.lane.b32.xlu0 %v1503, 64
  %v1508 = vpop.permute.xlu0 %1507
  %1509 = vrot.lane.b32.xlu0 %v1504, 64
  %v1510 = vpop.permute.xlu0 %1509
  %v1513 = vmul.f32 %v1467, %v1508
  %v1514 = vmul.f32 %v1469, %v1510
  %v1516 = vrot.slane %v1437, 5
  %v1517 = vrot.slane %v1437, 6
  %v1520 = vadd.f32 %v1448, %v1516
  %v1521 = vadd.f32 %v1449, %v1517
  %v1522 = vld [vmem:[#allocation5] sm:$0x3]
  %v1523 = vxor.u32 %v1520, 2147483648
  %v1524 = vxor.u32 %v1521, 2147483648
  %v1525 = vmul.f32 %v1523, 1.442695
  %v1526 = vpow.pop %v1525
  %v1527 = vmul.f32 %v1524, 1.442695
  %v1528 = vpow.pop %v1527
  %v1529 = vadd.f32 %v1526, 1.0
  %v1530 = vadd.f32 %v1528, 1.0
  %v1531 = vrcp.pop %v1529
  %v1532 = vmul.f32 1.0, %v1531
  %v1533 = vrcp.pop %v1530
  %v1534 = vmul.f32 1.0, %v1533
  %v1535 = vtanh.pop %v1520
  %v1536 = vtanh.pop %v1521
  %v1538 = vrot.slane %v1522, 5
  %v1539 = vrot.slane %v1522, 6
  %1540 = vrot.lane.b32.xlu0 %v1538, 32
  %v1541 = vpop.permute.xlu0 %1540
  %1542 = vrot.lane.b32.xlu0 %v1539, 32
  %v1543 = vpop.permute.xlu0 %1542
  %v1546 = vmul.f32 %v1532, %v1541
  %v1547 = vmul.f32 %v1534, %v1543
  %1550 = vrot.lane.b32.xlu0 %v1535, 64
  %v1551 = vpop.permute.xlu0 %1550
  %1552 = vrot.lane.b32.xlu0 %v1536, 64
  %v1553 = vpop.permute.xlu0 %1552
  %v1556 = vmul.f32 %v1532, %v1551
  %v1557 = vmul.f32 %v1534, %v1553
  %1560 = vrot.lane.b32.xlu0 %v1556, 32
  %v1561 = vpop.permute.xlu0 %1560
  %1562 = vrot.lane.b32.xlu0 %v1557, 32
  %v1563 = vpop.permute.xlu0 %1562
  %v1566 = vadd.f32 %v1546, %v1561
  %v1567 = vadd.f32 %v1547, %v1563
  %v1568 = vtanh.pop %v1566
  %v1569 = vtanh.pop %v1567
  %1572 = vrot.lane.b32.xlu0 %v1568, 64
  %v1573 = vpop.permute.xlu0 %1572
  %1574 = vrot.lane.b32.xlu0 %v1569, 64
  %v1575 = vpop.permute.xlu0 %1574
  %v1578 = vmul.f32 %v1532, %v1573
  %v1579 = vmul.f32 %v1534, %v1575
  %v1582 = vrot.slane %v1513, 4
  %v1583 = vrot.slane %v1514, 3
  %v1584 = vsel %vm295, %v1583, %v1582
  %1585 = vrot.lane.b32.xlu0 %v1584, 32
  %v1586 = vpop.permute.xlu0 %1585
  %v1588 = vsel %vm1288, %v1586, %v1320
  %1589 = vst.msk [vmem:[#allocation2] sm:$0x3] %vm18, %v1588
  %v1590 = vld [vmem:[#allocation3] sm:$0x3]
  %v1593 = vrot.slane %v1501, 4
  %v1594 = vrot.slane %v1502, 3
  %v1595 = vsel %vm295, %v1594, %v1593
  %1596 = vrot.lane.b32.xlu0 %v1595, 96
  %v1597 = vpop.permute.xlu0 %1596
  %v1599 = vsel %vm1288, %v1597, %v1590
  %1600 = vst.msk [vmem:[#allocation3] sm:$0x3] %vm18, %v1599
  %v1601 = vld [vmem:[#allocation4] sm:$0x3]
  %v1604 = vrot.slane %v1578, 3
  %v1605 = vrot.slane %v1579, 2
  %v1606 = vsel %vm295, %v1605, %v1604
  %1607 = vrot.lane.b32.xlu0 %v1606, 32
  %v1608 = vpop.permute.xlu0 %1607
  %v1610 = vsel %vm1261, %v1608, %v1601
  %1611 = vst.msk [vmem:[#allocation4] sm:$0x3] %vm18, %v1610
  %v1612 = vld [vmem:[#allocation5] sm:$0x3]
  %v1615 = vrot.slane %v1566, 3
  %v1616 = vrot.slane %v1567, 2
  %v1617 = vsel %vm295, %v1616, %v1615
  %1618 = vrot.lane.b32.xlu0 %v1617, 96
  %v1619 = vpop.permute.xlu0 %1618
  %v1621 = vsel %vm1261, %v1619, %v1612
  %1622 = vst.msk [vmem:[#allocation5] sm:$0x3] %vm18, %v1621
  %v1623 = vsel %vm1288, %v1586, -1e+30
  %v1624 = vsel %vm1261, %v1608, -1e+30
  %1626 = vrot.lane.b32.xlu0 %v1624, 32
  %v1627 = vpop.permute.xlu0 %1626
  %v1629 = vsel %vm44, %v1623, %v1627
  %v1630 = vld [vmem:[%s4] sm:$0x3]
  %v1631 = vmax.f32 %v1630, %v1629
  %1632 = vst.msk [vmem:[%s4] sm:$0x3] %vm23, %v1631
  %v1633 = vld [vmem:[#allocation2] sm:$0x3]
  %v1634 = vpack.c.bf16 %v1633, %v1633
  %v1635 = vld [vmem:[%s1] sm:$0xf]
  %v1636 = vld [vmem:[%s1 + $0x4] sm:$0xf]
  %v1637 = vld [vmem:[%s1 + $0x8] sm:$0xf]
  %v1638 = vld [vmem:[%s1 + $0xc] sm:$0xf]
  %v1643 = vunpack.c.l.b16 %v1635
  %v1644 = vunpack.c.l.b16 %v1636
  %v1645 = vunpack.c.l.b16 %v1637
  %v1646 = vunpack.c.l.b16 %v1638
  %v1647 = vpack.c.b16 %v1644, %v1643
  %v1648 = vpack.c.b16 %v1646, %v1645
  %v1652 = vsel %vm44, %v1634, 0
  %1654 = vmatprep.subr.bf16.mxu0 0
  %1655 = vmatpush1.bf16.msra.mxu0 %v1647
  %1656 = vmatprep.subr.bf16.mxu0 0
  %1657 = vmatpush1.bf16.msra.mxu0 %v1648
  %1658 = vmatprep.subr.bf16.mxu0 0
  %1659 = vmatpush1.bf16.msra.mxu0 0
  %1660 = vmatprep.subr.bf16.mxu0 0
  %1661 = vmatpush1.bf16.msra.mxu0 0
  %1662 = vmatprep.subr.bf16.mxu0 0
  %1663 = vmatpush1.bf16.msra.mxu0 0
  %1664 = vmatprep.subr.bf16.mxu0 0
  %1665 = vmatpush1.bf16.msra.mxu0 0
  %1666 = vmatprep.subr.bf16.mxu0 0
  %1667 = vmatpush1.bf16.msra.mxu0 0
  %1668 = vmatprep.subr.bf16.mxu0 0
  %1669 = vmatpush1.bf16.msra.mxu0 0
  %1670 = vmatprep.subr.bf16.mxu0 0
  %1671 = vmatpush1.bf16.msra.mxu0 0
  %1672 = vmatprep.subr.bf16.mxu0 0
  %1673 = vmatpush1.bf16.msra.mxu0 0
  %1674 = vmatprep.subr.bf16.mxu0 0
  %1675 = vmatpush1.bf16.msra.mxu0 0
  %1676 = vmatprep.subr.bf16.mxu0 0
  %1677 = vmatpush1.bf16.msra.mxu0 0
  %1678 = vmatprep.subr.bf16.mxu0 0
  %1679 = vmatpush1.bf16.msra.mxu0 0
  %1680 = vmatprep.subr.bf16.mxu0 0
  %1681 = vmatpush1.bf16.msra.mxu0 0
  %1682 = vmatprep.subr.bf16.mxu0 0
  %1683 = vmatpush1.bf16.msra.mxu0 0
  %1684 = vmatprep.subr.bf16.mxu0 0
  %1685 = vmatpush1.bf16.msra.mxu0 0
  %1686 = vmatprep.mubr.bf16.mxu0 0
  %1687 = vmatmul.mubr.bf16.gmra.mrb[0].mxu0 %v1652
  %v1688 = vpop.f32.mrb[0].mxu0
  %v1689 = vadd.f32 0.0, %v1688
  %v1690 = vpop.f32.mrb[0].mxu0
  %v1691 = vpop.f32.mrb[0].mxu0
  %v1692 = vpop.f32.mrb[0].mxu0
  %1693 = vdwg.mxu0
  %v1694 = vld [vmem:[#allocation4] sm:$0x3]
  %v1695 = vpack.c.bf16 %v1694, %v1694
  %v1696 = vld [vmem:[%s2] sm:$0xf]
  %v1697 = vld [vmem:[%s2 + $0x4] sm:$0xf]
  %v1698 = vld [vmem:[%s2 + $0x8] sm:$0xf]
  %v1699 = vld [vmem:[%s2 + $0xc] sm:$0xf]
  %v1704 = vunpack.c.l.b16 %v1696
  %v1705 = vunpack.c.l.b16 %v1697
  %v1706 = vunpack.c.l.b16 %v1698
  %v1707 = vunpack.c.l.b16 %v1699
  %v1708 = vpack.c.b16 %v1705, %v1704
  %v1709 = vpack.c.b16 %v1707, %v1706
  %v1713 = vsel %vm44, %v1695, 0
  %1715 = vmatprep.subr.bf16.mxu0 0
  %1716 = vmatpush1.bf16.msra.mxu0 %v1708
  %1717 = vmatprep.subr.bf16.mxu0 0
  %1718 = vmatpush1.bf16.msra.mxu0 %v1709
  %1719 = vmatprep.subr.bf16.mxu0 0
  %1720 = vmatpush1.bf16.msra.mxu0 0
  %1721 = vmatprep.subr.bf16.mxu0 0
  %1722 = vmatpush1.bf16.msra.mxu0 0
  %1723 = vmatprep.subr.bf16.mxu0 0
  %1724 = vmatpush1.bf16.msra.mxu0 0
  %1725 = vmatprep.subr.bf16.mxu0 0
  %1726 = vmatpush1.bf16.msra.mxu0 0
  %1727 = vmatprep.subr.bf16.mxu0 0
  %1728 = vmatpush1.bf16.msra.mxu0 0
  %1729 = vmatprep.subr.bf16.mxu0 0
  %1730 = vmatpush1.bf16.msra.mxu0 0
  %1731 = vmatprep.subr.bf16.mxu0 0
  %1732 = vmatpush1.bf16.msra.mxu0 0
  %1733 = vmatprep.subr.bf16.mxu0 0
  %1734 = vmatpush1.bf16.msra.mxu0 0
  %1735 = vmatprep.subr.bf16.mxu0 0
  %1736 = vmatpush1.bf16.msra.mxu0 0
  %1737 = vmatprep.subr.bf16.mxu0 0
  %1738 = vmatpush1.bf16.msra.mxu0 0
  %1739 = vmatprep.subr.bf16.mxu0 0
  %1740 = vmatpush1.bf16.msra.mxu0 0
  %1741 = vmatprep.subr.bf16.mxu0 0
  %1742 = vmatpush1.bf16.msra.mxu0 0
  %1743 = vmatprep.subr.bf16.mxu0 0
  %1744 = vmatpush1.bf16.msra.mxu0 0
  %1745 = vmatprep.subr.bf16.mxu0 0
  %1746 = vmatpush1.bf16.msra.mxu0 0
  %1747 = vmatprep.mubr.bf16.mxu0 0
  %1748 = vmatmul.mubr.bf16.gmra.mrb[0].mxu0 %v1713
  %v1749 = vpop.f32.mrb[0].mxu0
  %v1750 = vadd.f32 0.0, %v1749
  %v1751 = vpop.f32.mrb[0].mxu0
  %v1752 = vpop.f32.mrb[0].mxu0
  %v1753 = vpop.f32.mrb[0].mxu0
  %1754 = vdwg.mxu0
  %v1755 = vld [vmem:[%s0] sm:$0x4]
  %v1756 = vld [vmem:[%s0 + $0x8] sm:$0x4]
  %v1757 = vunpack.c.l.bf16 %v1755
  %v1758 = vunpack.c.l.bf16 %v1756
  %v1759 = vld [vmem:[%s0 + $0x4] sm:$0x2]
  %v1760 = vld [vmem:[%s0 + $0xc] sm:$0x2]
  %v1761 = vunpack.c.l.bf16 %v1759
  %v1762 = vunpack.c.l.bf16 %v1760
  %v1764 = vrot.slane %v1689, 3
  %v1765 = vrot.slane %v1689, 4
  %v1768 = vadd.f32 %v1757, %v1764
  %v1769 = vadd.f32 %v1758, %v1765
  %v1770 = vld [vmem:[#allocation3] sm:$0x3]
  %v1771 = vxor.u32 %v1768, 2147483648
  %v1772 = vxor.u32 %v1769, 2147483648
  %v1773 = vmul.f32 %v1771, 1.442695
  %v1774 = vpow.pop %v1773
  %v1775 = vmul.f32 %v1772, 1.442695
  %v1776 = vpow.pop %v1775
  %v1777 = vadd.f32 %v1774, 1.0
  %v1778 = vadd.f32 %v1776, 1.0
  %v1779 = vrcp.pop %v1777
  %v1780 = vmul.f32 1.0, %v1779
  %v1781 = vrcp.pop %v1778
  %v1782 = vmul.f32 1.0, %v1781
  %v1783 = vtanh.pop %v1768
  %v1784 = vtanh.pop %v1769
  %v1786 = vrot.slane %v1770, 3
  %v1787 = vrot.slane %v1770, 4
  %1788 = vrot.lane.b32.xlu0 %v1786, 32
  %v1789 = vpop.permute.xlu0 %1788
  %1790 = vrot.lane.b32.xlu0 %v1787, 32
  %v1791 = vpop.permute.xlu0 %1790
  %v1794 = vmul.f32 %v1780, %v1789
  %v1795 = vmul.f32 %v1782, %v1791
  %1798 = vrot.lane.b32.xlu0 %v1783, 64
  %v1799 = vpop.permute.xlu0 %1798
  %1800 = vrot.lane.b32.xlu0 %v1784, 64
  %v1801 = vpop.permute.xlu0 %1800
  %v1804 = vmul.f32 %v1780, %v1799
  %v1805 = vmul.f32 %v1782, %v1801
  %1808 = vrot.lane.b32.xlu0 %v1804, 32
  %v1809 = vpop.permute.xlu0 %1808
  %1810 = vrot.lane.b32.xlu0 %v1805, 32
  %v1811 = vpop.permute.xlu0 %1810
  %v1814 = vadd.f32 %v1794, %v1809
  %v1815 = vadd.f32 %v1795, %v1811
  %v1816 = vtanh.pop %v1814
  %v1817 = vtanh.pop %v1815
  %1820 = vrot.lane.b32.xlu0 %v1816, 64
  %v1821 = vpop.permute.xlu0 %1820
  %1822 = vrot.lane.b32.xlu0 %v1817, 64
  %v1823 = vpop.permute.xlu0 %1822
  %v1826 = vmul.f32 %v1780, %v1821
  %v1827 = vmul.f32 %v1782, %v1823
  %v1829 = vrot.slane %v1750, 6
  %v1830 = vrot.slane %v1750, 7
  %v1833 = vadd.f32 %v1761, %v1829
  %v1834 = vadd.f32 %v1762, %v1830
  %v1835 = vld [vmem:[#allocation5] sm:$0x3]
  %v1836 = vxor.u32 %v1833, 2147483648
  %v1837 = vxor.u32 %v1834, 2147483648
  %v1838 = vmul.f32 %v1836, 1.442695
  %v1839 = vpow.pop %v1838
  %v1840 = vmul.f32 %v1837, 1.442695
  %v1841 = vpow.pop %v1840
  %v1842 = vadd.f32 %v1839, 1.0
  %v1843 = vadd.f32 %v1841, 1.0
  %v1844 = vrcp.pop %v1842
  %v1845 = vmul.f32 1.0, %v1844
  %v1846 = vrcp.pop %v1843
  %v1847 = vmul.f32 1.0, %v1846
  %v1848 = vtanh.pop %v1833
  %v1849 = vtanh.pop %v1834
  %v1851 = vrot.slane %v1835, 6
  %v1852 = vrot.slane %v1835, 7
  %1853 = vrot.lane.b32.xlu0 %v1851, 32
  %v1854 = vpop.permute.xlu0 %1853
  %1855 = vrot.lane.b32.xlu0 %v1852, 32
  %v1856 = vpop.permute.xlu0 %1855
  %v1859 = vmul.f32 %v1845, %v1854
  %v1860 = vmul.f32 %v1847, %v1856
  %1863 = vrot.lane.b32.xlu0 %v1848, 64
  %v1864 = vpop.permute.xlu0 %1863
  %1865 = vrot.lane.b32.xlu0 %v1849, 64
  %v1866 = vpop.permute.xlu0 %1865
  %v1869 = vmul.f32 %v1845, %v1864
  %v1870 = vmul.f32 %v1847, %v1866
  %1873 = vrot.lane.b32.xlu0 %v1869, 32
  %v1874 = vpop.permute.xlu0 %1873
  %1875 = vrot.lane.b32.xlu0 %v1870, 32
  %v1876 = vpop.permute.xlu0 %1875
  %v1879 = vadd.f32 %v1859, %v1874
  %v1880 = vadd.f32 %v1860, %v1876
  %v1881 = vtanh.pop %v1879
  %v1882 = vtanh.pop %v1880
  %1885 = vrot.lane.b32.xlu0 %v1881, 64
  %v1886 = vpop.permute.xlu0 %1885
  %1887 = vrot.lane.b32.xlu0 %v1882, 64
  %v1888 = vpop.permute.xlu0 %1887
  %v1891 = vmul.f32 %v1845, %v1886
  %v1892 = vmul.f32 %v1847, %v1888
  %v1895 = vrot.slane %v1826, 5
  %v1896 = vrot.slane %v1827, 4
  %v1897 = vsel %vm295, %v1896, %v1895
  %1898 = vrot.lane.b32.xlu0 %v1897, 32
  %v1899 = vpop.permute.xlu0 %1898
  %v1901 = vsel %vm963, %v1899, %v1633
  %1902 = vst.msk [vmem:[#allocation2] sm:$0x3] %vm18, %v1901
  %v1903 = vld [vmem:[#allocation3] sm:$0x3]
  %v1906 = vrot.slane %v1814, 5
  %v1907 = vrot.slane %v1815, 4
  %v1908 = vsel %vm295, %v1907, %v1906
  %1909 = vrot.lane.b32.xlu0 %v1908, 96
  %v1910 = vpop.permute.xlu0 %1909
  %v1912 = vsel %vm963, %v1910, %v1903
  %1913 = vst.msk [vmem:[#allocation3] sm:$0x3] %vm18, %v1912
  %v1914 = vld [vmem:[#allocation4] sm:$0x3]
  %v1917 = vrot.slane %v1891, 2
  %v1918 = vrot.slane %v1892, 1
  %v1919 = vsel %vm295, %v1918, %v1917
  %1920 = vrot.lane.b32.xlu0 %v1919, 32
  %v1921 = vpop.permute.xlu0 %1920
  %v1923 = vsel %vm936, %v1921, %v1914
  %1924 = vst.msk [vmem:[#allocation4] sm:$0x3] %vm18, %v1923
  %v1925 = vld [vmem:[#allocation5] sm:$0x3]
  %v1928 = vrot.slane %v1879, 2
  %v1929 = vrot.slane %v1880, 1
  %v1930 = vsel %vm295, %v1929, %v1928
  %1931 = vrot.lane.b32.xlu0 %v1930, 96
  %v1932 = vpop.permute.xlu0 %1931
  %v1934 = vsel %vm936, %v1932, %v1925
  %1935 = vst.msk [vmem:[#allocation5] sm:$0x3] %vm18, %v1934
  %v1936 = vsel %vm963, %v1899, -1e+30
  %v1937 = vsel %vm936, %v1921, -1e+30
  %1939 = vrot.lane.b32.xlu0 %v1937, 32
  %v1940 = vpop.permute.xlu0 %1939
  %v1942 = vsel %vm44, %v1936, %v1940
  %v1943 = vld [vmem:[%s4] sm:$0x3]
  %v1944 = vmax.f32 %v1943, %v1942
  %1945 = vst.msk [vmem:[%s4] sm:$0x3] %vm23, %v1944
  %v1946 = vld [vmem:[#allocation2] sm:$0x3]
  %v1947 = vpack.c.bf16 %v1946, %v1946
  %v1948 = vld [vmem:[%s1] sm:$0xf]
  %v1949 = vld [vmem:[%s1 + $0x4] sm:$0xf]
  %v1950 = vld [vmem:[%s1 + $0x8] sm:$0xf]
  %v1951 = vld [vmem:[%s1 + $0xc] sm:$0xf]
  %v1956 = vunpack.c.l.b16 %v1948
  %v1957 = vunpack.c.l.b16 %v1949
  %v1958 = vunpack.c.l.b16 %v1950
  %v1959 = vunpack.c.l.b16 %v1951
  %v1960 = vpack.c.b16 %v1957, %v1956
  %v1961 = vpack.c.b16 %v1959, %v1958
  %v1965 = vsel %vm44, %v1947, 0
  %1967 = vmatprep.subr.bf16.mxu0 0
  %1968 = vmatpush1.bf16.msra.mxu0 %v1960
  %1969 = vmatprep.subr.bf16.mxu0 0
  %1970 = vmatpush1.bf16.msra.mxu0 %v1961
  %1971 = vmatprep.subr.bf16.mxu0 0
  %1972 = vmatpush1.bf16.msra.mxu0 0
  %1973 = vmatprep.subr.bf16.mxu0 0
  %1974 = vmatpush1.bf16.msra.mxu0 0
  %1975 = vmatprep.subr.bf16.mxu0 0
  %1976 = vmatpush1.bf16.msra.mxu0 0
  %1977 = vmatprep.subr.bf16.mxu0 0
  %1978 = vmatpush1.bf16.msra.mxu0 0
  %1979 = vmatprep.subr.bf16.mxu0 0
  %1980 = vmatpush1.bf16.msra.mxu0 0
  %1981 = vmatprep.subr.bf16.mxu0 0
  %1982 = vmatpush1.bf16.msra.mxu0 0
  %1983 = vmatprep.subr.bf16.mxu0 0
  %1984 = vmatpush1.bf16.msra.mxu0 0
  %1985 = vmatprep.subr.bf16.mxu0 0
  %1986 = vmatpush1.bf16.msra.mxu0 0
  %1987 = vmatprep.subr.bf16.mxu0 0
  %1988 = vmatpush1.bf16.msra.mxu0 0
  %1989 = vmatprep.subr.bf16.mxu0 0
  %1990 = vmatpush1.bf16.msra.mxu0 0
  %1991 = vmatprep.subr.bf16.mxu0 0
  %1992 = vmatpush1.bf16.msra.mxu0 0
  %1993 = vmatprep.subr.bf16.mxu0 0
  %1994 = vmatpush1.bf16.msra.mxu0 0
  %1995 = vmatprep.subr.bf16.mxu0 0
  %1996 = vmatpush1.bf16.msra.mxu0 0
  %1997 = vmatprep.subr.bf16.mxu0 0
  %1998 = vmatpush1.bf16.msra.mxu0 0
  %1999 = vmatprep.mubr.bf16.mxu0 0
  %2000 = vmatmul.mubr.bf16.gmra.mrb[0].mxu0 %v1965
  %v2001 = vpop.f32.mrb[0].mxu0
  %v2002 = vadd.f32 0.0, %v2001
  %v2003 = vpop.f32.mrb[0].mxu0
  %v2004 = vpop.f32.mrb[0].mxu0
  %v2005 = vpop.f32.mrb[0].mxu0
  %2006 = vdwg.mxu0
  %v2007 = vld [vmem:[#allocation4] sm:$0x3]
  %v2008 = vpack.c.bf16 %v2007, %v2007
  %v2009 = vld [vmem:[%s2] sm:$0xf]
  %v2010 = vld [vmem:[%s2 + $0x4] sm:$0xf]
  %v2011 = vld [vmem:[%s2 + $0x8] sm:$0xf]
  %v2012 = vld [vmem:[%s2 + $0xc] sm:$0xf]
  %v2017 = vunpack.c.l.b16 %v2009
  %v2018 = vunpack.c.l.b16 %v2010
  %v2019 = vunpack.c.l.b16 %v2011
  %v2020 = vunpack.c.l.b16 %v2012
  %v2021 = vpack.c.b16 %v2018, %v2017
  %v2022 = vpack.c.b16 %v2020, %v2019
  %v2026 = vsel %vm44, %v2008, 0
  %2028 = vmatprep.subr.bf16.mxu0 0
  %2029 = vmatpush1.bf16.msra.mxu0 %v2021
  %2030 = vmatprep.subr.bf16.mxu0 0
  %2031 = vmatpush1.bf16.msra.mxu0 %v2022
  %2032 = vmatprep.subr.bf16.mxu0 0
  %2033 = vmatpush1.bf16.msra.mxu0 0
  %2034 = vmatprep.subr.bf16.mxu0 0
  %2035 = vmatpush1.bf16.msra.mxu0 0
  %2036 = vmatprep.subr.bf16.mxu0 0
  %2037 = vmatpush1.bf16.msra.mxu0 0
  %2038 = vmatprep.subr.bf16.mxu0 0
  %2039 = vmatpush1.bf16.msra.mxu0 0
  %2040 = vmatprep.subr.bf16.mxu0 0
  %2041 = vmatpush1.bf16.msra.mxu0 0
  %2042 = vmatprep.subr.bf16.mxu0 0
  %2043 = vmatpush1.bf16.msra.mxu0 0
  %2044 = vmatprep.subr.bf16.mxu0 0
  %2045 = vmatpush1.bf16.msra.mxu0 0
  %2046 = vmatprep.subr.bf16.mxu0 0
  %2047 = vmatpush1.bf16.msra.mxu0 0
  %2048 = vmatprep.subr.bf16.mxu0 0
  %2049 = vmatpush1.bf16.msra.mxu0 0
  %2050 = vmatprep.subr.bf16.mxu0 0
  %2051 = vmatpush1.bf16.msra.mxu0 0
  %2052 = vmatprep.subr.bf16.mxu0 0
  %2053 = vmatpush1.bf16.msra.mxu0 0
  %2054 = vmatprep.subr.bf16.mxu0 0
  %2055 = vmatpush1.bf16.msra.mxu0 0
  %2056 = vmatprep.subr.bf16.mxu0 0
  %2057 = vmatpush1.bf16.msra.mxu0 0
  %2058 = vmatprep.subr.bf16.mxu0 0
  %2059 = vmatpush1.bf16.msra.mxu0 0
  %2060 = vmatprep.mubr.bf16.mxu0 0
  %2061 = vmatmul.mubr.bf16.gmra.mrb[0].mxu0 %v2026
  %v2062 = vpop.f32.mrb[0].mxu0
  %v2063 = vadd.f32 0.0, %v2062
  %v2064 = vpop.f32.mrb[0].mxu0
  %v2065 = vpop.f32.mrb[0].mxu0
  %v2066 = vpop.f32.mrb[0].mxu0
  %2067 = vdwg.mxu0
  %v2068 = vld [vmem:[%s0] sm:$0x8]
  %v2069 = vld [vmem:[%s0 + $0x8] sm:$0x8]
  %v2070 = vunpack.c.l.bf16 %v2068
  %v2071 = vunpack.c.l.bf16 %v2069
  %v2072 = vld [vmem:[%s0 + $0x4] sm:$0x1]
  %v2073 = vld [vmem:[%s0 + $0xc] sm:$0x1]
  %v2074 = vunpack.c.l.bf16 %v2072
  %v2075 = vunpack.c.l.bf16 %v2073
  %v2077 = vrot.slane %v2002, 2
  %v2078 = vrot.slane %v2002, 3
  %v2081 = vadd.f32 %v2070, %v2077
  %v2082 = vadd.f32 %v2071, %v2078
  %v2083 = vld [vmem:[#allocation3] sm:$0x3]
  %v2084 = vxor.u32 %v2081, 2147483648
  %v2085 = vxor.u32 %v2082, 2147483648
  %v2086 = vmul.f32 %v2084, 1.442695
  %v2087 = vpow.pop %v2086
  %v2088 = vmul.f32 %v2085, 1.442695
  %v2089 = vpow.pop %v2088
  %v2090 = vadd.f32 %v2087, 1.0
  %v2091 = vadd.f32 %v2089, 1.0
  %v2092 = vrcp.pop %v2090
  %v2093 = vmul.f32 1.0, %v2092
  %v2094 = vrcp.pop %v2091
  %v2095 = vmul.f32 1.0, %v2094
  %v2096 = vtanh.pop %v2081
  %v2097 = vtanh.pop %v2082
  %v2099 = vrot.slane %v2083, 2
  %v2100 = vrot.slane %v2083, 3
  %2101 = vrot.lane.b32.xlu0 %v2099, 32
  %v2102 = vpop.permute.xlu0 %2101
  %2103 = vrot.lane.b32.xlu0 %v2100, 32
  %v2104 = vpop.permute.xlu0 %2103
  %v2107 = vmul.f32 %v2093, %v2102
  %v2108 = vmul.f32 %v2095, %v2104
  %2111 = vrot.lane.b32.xlu0 %v2096, 64
  %v2112 = vpop.permute.xlu0 %2111
  %2113 = vrot.lane.b32.xlu0 %v2097, 64
  %v2114 = vpop.permute.xlu0 %2113
  %v2117 = vmul.f32 %v2093, %v2112
  %v2118 = vmul.f32 %v2095, %v2114
  %2121 = vrot.lane.b32.xlu0 %v2117, 32
  %v2122 = vpop.permute.xlu0 %2121
  %2123 = vrot.lane.b32.xlu0 %v2118, 32
  %v2124 = vpop.permute.xlu0 %2123
  %v2127 = vadd.f32 %v2107, %v2122
  %v2128 = vadd.f32 %v2108, %v2124
  %v2129 = vtanh.pop %v2127
  %v2130 = vtanh.pop %v2128
  %2133 = vrot.lane.b32.xlu0 %v2129, 64
  %v2134 = vpop.permute.xlu0 %2133
  %2135 = vrot.lane.b32.xlu0 %v2130, 64
  %v2136 = vpop.permute.xlu0 %2135
  %v2139 = vmul.f32 %v2093, %v2134
  %v2140 = vmul.f32 %v2095, %v2136
  %v2142 = vrot.slane %v2063, 7
  %v2145 = vadd.f32 %v2074, %v2142
  %v2146 = vadd.f32 %v2075, %v2063
  %v2147 = vld [vmem:[#allocation5] sm:$0x3]
  %v2148 = vxor.u32 %v2145, 2147483648
  %v2149 = vxor.u32 %v2146, 2147483648
  %v2150 = vmul.f32 %v2148, 1.442695
  %v2151 = vpow.pop %v2150
  %v2152 = vmul.f32 %v2149, 1.442695
  %v2153 = vpow.pop %v2152
  %v2154 = vadd.f32 %v2151, 1.0
  %v2155 = vadd.f32 %v2153, 1.0
  %v2156 = vrcp.pop %v2154
  %v2157 = vmul.f32 1.0, %v2156
  %v2158 = vrcp.pop %v2155
  %v2159 = vmul.f32 1.0, %v2158
  %v2160 = vtanh.pop %v2145
  %v2161 = vtanh.pop %v2146
  %v2163 = vrot.slane %v2147, 7
  %2164 = vrot.lane.b32.xlu0 %v2163, 32
  %v2165 = vpop.permute.xlu0 %2164
  %2166 = vrot.lane.b32.xlu0 %v2147, 32
  %v2167 = vpop.permute.xlu0 %2166
  %v2170 = vmul.f32 %v2157, %v2165
  %v2171 = vmul.f32 %v2159, %v2167
  %2174 = vrot.lane.b32.xlu0 %v2160, 64
  %v2175 = vpop.permute.xlu0 %2174
  %2176 = vrot.lane.b32.xlu0 %v2161, 64
  %v2177 = vpop.permute.xlu0 %2176
  %v2180 = vmul.f32 %v2157, %v2175
  %v2181 = vmul.f32 %v2159, %v2177
  %2184 = vrot.lane.b32.xlu0 %v2180, 32
  %v2185 = vpop.permute.xlu0 %2184
  %2186 = vrot.lane.b32.xlu0 %v2181, 32
  %v2187 = vpop.permute.xlu0 %2186
  %v2190 = vadd.f32 %v2170, %v2185
  %v2191 = vadd.f32 %v2171, %v2187
  %v2192 = vtanh.pop %v2190
  %v2193 = vtanh.pop %v2191
  %2196 = vrot.lane.b32.xlu0 %v2192, 64
  %v2197 = vpop.permute.xlu0 %2196
  %2198 = vrot.lane.b32.xlu0 %v2193, 64
  %v2199 = vpop.permute.xlu0 %2198
  %v2202 = vmul.f32 %v2157, %v2197
  %v2203 = vmul.f32 %v2159, %v2199
  %v2206 = vrot.slane %v2139, 6
  %v2207 = vrot.slane %v2140, 5
  %v2208 = vsel %vm295, %v2207, %v2206
  %2209 = vrot.lane.b32.xlu0 %v2208, 32
  %v2210 = vpop.permute.xlu0 %2209
  %v2212 = vsel %vm638, %v2210, %v1946
  %2213 = vst.msk [vmem:[#allocation2] sm:$0x3] %vm18, %v2212
  %v2214 = vld [vmem:[#allocation3] sm:$0x3]
  %v2217 = vrot.slane %v2127, 6
  %v2218 = vrot.slane %v2128, 5
  %v2219 = vsel %vm295, %v2218, %v2217
  %2220 = vrot.lane.b32.xlu0 %v2219, 96
  %v2221 = vpop.permute.xlu0 %2220
  %v2223 = vsel %vm638, %v2221, %v2214
  %2224 = vst.msk [vmem:[#allocation3] sm:$0x3] %vm18, %v2223
  %v2225 = vld [vmem:[#allocation4] sm:$0x3]
  %v2228 = vrot.slane %v2202, 1
  %v2229 = vsel %vm295, %v2203, %v2228
  %2230 = vrot.lane.b32.xlu0 %v2229, 32
  %v2231 = vpop.permute.xlu0 %2230
  %v2233 = vsel %vm613, %v2231, %v2225
  %2234 = vst.msk [vmem:[#allocation4] sm:$0x3] %vm18, %v2233
  %v2235 = vld [vmem:[#allocation5] sm:$0x3]
  %v2238 = vrot.slane %v2190, 1
  %v2239 = vsel %vm295, %v2191, %v2238
  %2240 = vrot.lane.b32.xlu0 %v2239, 96
  %v2241 = vpop.permute.xlu0 %2240
  %v2243 = vsel %vm613, %v2241, %v2235
  %2244 = vst.msk [vmem:[#allocation5] sm:$0x3] %vm18, %v2243
  %v2245 = vsel %vm638, %v2210, -1e+30
  %v2246 = vsel %vm613, %v2231, -1e+30
  %2248 = vrot.lane.b32.xlu0 %v2246, 32
  %v2249 = vpop.permute.xlu0 %2248
  %v2251 = vsel %vm44, %v2245, %v2249
  %v2252 = vld [vmem:[%s4] sm:$0x3]
  %v2253 = vmax.f32 %v2252, %v2251
  %2254 = vst.msk [vmem:[%s4] sm:$0x3] %vm23, %v2253
  %v2255 = vld [vmem:[#allocation2] sm:$0x3]
  %v2256 = vpack.c.bf16 %v2255, %v2255
  %v2257 = vld [vmem:[%s1] sm:$0xf]
  %v2258 = vld [vmem:[%s1 + $0x4] sm:$0xf]
  %v2259 = vld [vmem:[%s1 + $0x8] sm:$0xf]
  %v2260 = vld [vmem:[%s1 + $0xc] sm:$0xf]
  %v2265 = vunpack.c.l.b16 %v2257
  %v2266 = vunpack.c.l.b16 %v2258
  %v2267 = vunpack.c.l.b16 %v2259
  %v2268 = vunpack.c.l.b16 %v2260
  %v2269 = vpack.c.b16 %v2266, %v2265
  %v2270 = vpack.c.b16 %v2268, %v2267
  %v2274 = vsel %vm44, %v2256, 0
  %2276 = vmatprep.subr.bf16.mxu0 0
  %2277 = vmatpush1.bf16.msra.mxu0 %v2269
  %2278 = vmatprep.subr.bf16.mxu0 0
  %2279 = vmatpush1.bf16.msra.mxu0 %v2270
  %2280 = vmatprep.subr.bf16.mxu0 0
  %2281 = vmatpush1.bf16.msra.mxu0 0
  %2282 = vmatprep.subr.bf16.mxu0 0
  %2283 = vmatpush1.bf16.msra.mxu0 0
  %2284 = vmatprep.subr.bf16.mxu0 0
  %2285 = vmatpush1.bf16.msra.mxu0 0
  %2286 = vmatprep.subr.bf16.mxu0 0
  %2287 = vmatpush1.bf16.msra.mxu0 0
  %2288 = vmatprep.subr.bf16.mxu0 0
  %2289 = vmatpush1.bf16.msra.mxu0 0
  %2290 = vmatprep.subr.bf16.mxu0 0
  %2291 = vmatpush1.bf16.msra.mxu0 0
  %2292 = vmatprep.subr.bf16.mxu0 0
  %2293 = vmatpush1.bf16.msra.mxu0 0
  %2294 = vmatprep.subr.bf16.mxu0 0
  %2295 = vmatpush1.bf16.msra.mxu0 0
  %2296 = vmatprep.subr.bf16.mxu0 0
  %2297 = vmatpush1.bf16.msra.mxu0 0
  %2298 = vmatprep.subr.bf16.mxu0 0
  %2299 = vmatpush1.bf16.msra.mxu0 0
  %2300 = vmatprep.subr.bf16.mxu0 0
  %2301 = vmatpush1.bf16.msra.mxu0 0
  %2302 = vmatprep.subr.bf16.mxu0 0
  %2303 = vmatpush1.bf16.msra.mxu0 0
  %2304 = vmatprep.subr.bf16.mxu0 0
  %2305 = vmatpush1.bf16.msra.mxu0 0
  %2306 = vmatprep.subr.bf16.mxu0 0
  %2307 = vmatpush1.bf16.msra.mxu0 0
  %2308 = vmatprep.mubr.bf16.mxu0 0
  %2309 = vmatmul.mubr.bf16.gmra.mrb[0].mxu0 %v2274
  %v2310 = vpop.f32.mrb[0].mxu0
  %v2311 = vadd.f32 0.0, %v2310
  %v2312 = vpop.f32.mrb[0].mxu0
  %v2313 = vpop.f32.mrb[0].mxu0
  %v2314 = vpop.f32.mrb[0].mxu0
  %2315 = vdwg.mxu0
  %v2316 = vld [vmem:[#allocation4] sm:$0x3]
  %v2317 = vpack.c.bf16 %v2316, %v2316
  %v2318 = vld [vmem:[%s2] sm:$0xf]
  %v2319 = vld [vmem:[%s2 + $0x4] sm:$0xf]
  %v2320 = vld [vmem:[%s2 + $0x8] sm:$0xf]
  %v2321 = vld [vmem:[%s2 + $0xc] sm:$0xf]
  %v2326 = vunpack.c.l.b16 %v2318
  %v2327 = vunpack.c.l.b16 %v2319
  %v2328 = vunpack.c.l.b16 %v2320
  %v2329 = vunpack.c.l.b16 %v2321
  %v2330 = vpack.c.b16 %v2327, %v2326
  %v2331 = vpack.c.b16 %v2329, %v2328
  %v2335 = vsel %vm44, %v2317, 0
  %2337 = vmatprep.subr.bf16.mxu0 0
  %2338 = vmatpush1.bf16.msra.mxu0 %v2330
  %2339 = vmatprep.subr.bf16.mxu0 0
  %2340 = vmatpush1.bf16.msra.mxu0 %v2331
  %2341 = vmatprep.subr.bf16.mxu0 0
  %2342 = vmatpush1.bf16.msra.mxu0 0
  %2343 = vmatprep.subr.bf16.mxu0 0
  %2344 = vmatpush1.bf16.msra.mxu0 0
  %2345 = vmatprep.subr.bf16.mxu0 0
  %2346 = vmatpush1.bf16.msra.mxu0 0
  %2347 = vmatprep.subr.bf16.mxu0 0
  %2348 = vmatpush1.bf16.msra.mxu0 0
  %2349 = vmatprep.subr.bf16.mxu0 0
  %2350 = vmatpush1.bf16.msra.mxu0 0
  %2351 = vmatprep.subr.bf16.mxu0 0
  %2352 = vmatpush1.bf16.msra.mxu0 0
  %2353 = vmatprep.subr.bf16.mxu0 0
  %2354 = vmatpush1.bf16.msra.mxu0 0
  %2355 = vmatprep.subr.bf16.mxu0 0
  %2356 = vmatpush1.bf16.msra.mxu0 0
  %2357 = vmatprep.subr.bf16.mxu0 0
  %2358 = vmatpush1.bf16.msra.mxu0 0
  %2359 = vmatprep.subr.bf16.mxu0 0
  %2360 = vmatpush1.bf16.msra.mxu0 0
  %2361 = vmatprep.subr.bf16.mxu0 0
  %2362 = vmatpush1.bf16.msra.mxu0 0
  %2363 = vmatprep.subr.bf16.mxu0 0
  %2364 = vmatpush1.bf16.msra.mxu0 0
  %2365 = vmatprep.subr.bf16.mxu0 0
  %2366 = vmatpush1.bf16.msra.mxu0 0
  %2367 = vmatprep.subr.bf16.mxu0 0
  %2368 = vmatpush1.bf16.msra.mxu0 0
  %2369 = vmatprep.mubr.bf16.mxu0 0
  %2370 = vmatmul.mubr.bf16.gmra.mrb[0].mxu0 %v2335
  %v2371 = vpop.f32.mrb[0].mxu0
  %v2372 = vadd.f32 0.0, %v2371
  %v2373 = vpop.f32.mrb[0].mxu0
  %v2374 = vpop.f32.mrb[0].mxu0
  %v2375 = vpop.f32.mrb[0].mxu0
  %2376 = vdwg.mxu0
  %v2377 = vld [vmem:[%s0] sm:$0x8]
  %v2378 = vld [vmem:[%s0 + $0x8] sm:$0x8]
  %v2379 = vunpack.c.l.bf16 %v2377
  %v2380 = vunpack.c.l.bf16 %v2378
  %v2381 = vld [vmem:[%s0 + $0x4] sm:$0x1]
  %v2382 = vld [vmem:[%s0 + $0xc] sm:$0x1]
  %v2383 = vunpack.c.l.bf16 %v2381
  %v2384 = vunpack.c.l.bf16 %v2382
  %v2386 = vrot.slane %v2311, 1
  %v2387 = vrot.slane %v2311, 2
  %v2390 = vadd.f32 %v2379, %v2386
  %v2391 = vadd.f32 %v2380, %v2387
  %v2392 = vld [vmem:[#allocation3] sm:$0x3]
  %v2393 = vxor.u32 %v2390, 2147483648
  %v2394 = vxor.u32 %v2391, 2147483648
  %v2395 = vmul.f32 %v2393, 1.442695
  %v2396 = vpow.pop %v2395
  %v2397 = vmul.f32 %v2394, 1.442695
  %v2398 = vpow.pop %v2397
  %v2399 = vadd.f32 %v2396, 1.0
  %v2400 = vadd.f32 %v2398, 1.0
  %v2401 = vrcp.pop %v2399
  %v2402 = vmul.f32 1.0, %v2401
  %v2403 = vrcp.pop %v2400
  %v2404 = vmul.f32 1.0, %v2403
  %v2405 = vtanh.pop %v2390
  %v2406 = vtanh.pop %v2391
  %v2408 = vrot.slane %v2392, 1
  %v2409 = vrot.slane %v2392, 2
  %2410 = vrot.lane.b32.xlu0 %v2408, 32
  %v2411 = vpop.permute.xlu0 %2410
  %2412 = vrot.lane.b32.xlu0 %v2409, 32
  %v2413 = vpop.permute.xlu0 %2412
  %v2416 = vmul.f32 %v2402, %v2411
  %v2417 = vmul.f32 %v2404, %v2413
  %2420 = vrot.lane.b32.xlu0 %v2405, 64
  %v2421 = vpop.permute.xlu0 %2420
  %2422 = vrot.lane.b32.xlu0 %v2406, 64
  %v2423 = vpop.permute.xlu0 %2422
  %v2426 = vmul.f32 %v2402, %v2421
  %v2427 = vmul.f32 %v2404, %v2423
  %2430 = vrot.lane.b32.xlu0 %v2426, 32
  %v2431 = vpop.permute.xlu0 %2430
  %2432 = vrot.lane.b32.xlu0 %v2427, 32
  %v2433 = vpop.permute.xlu0 %2432
  %v2436 = vadd.f32 %v2416, %v2431
  %v2437 = vadd.f32 %v2417, %v2433
  %v2438 = vtanh.pop %v2436
  %v2439 = vtanh.pop %v2437
  %2442 = vrot.lane.b32.xlu0 %v2438, 64
  %v2443 = vpop.permute.xlu0 %2442
  %2444 = vrot.lane.b32.xlu0 %v2439, 64
  %v2445 = vpop.permute.xlu0 %2444
  %v2448 = vmul.f32 %v2402, %v2443
  %v2449 = vmul.f32 %v2404, %v2445
  %v2451 = vrot.slane %v2372, 1
  %v2454 = vadd.f32 %v2383, %v2372
  %v2455 = vadd.f32 %v2384, %v2451
  %v2456 = vld [vmem:[#allocation5] sm:$0x3]
  %v2457 = vxor.u32 %v2454, 2147483648
  %v2458 = vxor.u32 %v2455, 2147483648
  %v2459 = vmul.f32 %v2457, 1.442695
  %v2460 = vpow.pop %v2459
  %v2461 = vmul.f32 %v2458, 1.442695
  %v2462 = vpow.pop %v2461
  %v2463 = vadd.f32 %v2460, 1.0
  %v2464 = vadd.f32 %v2462, 1.0
  %v2465 = vrcp.pop %v2463
  %v2466 = vmul.f32 1.0, %v2465
  %v2467 = vrcp.pop %v2464
  %v2468 = vmul.f32 1.0, %v2467
  %v2469 = vtanh.pop %v2454
  %v2470 = vtanh.pop %v2455
  %v2472 = vrot.slane %v2456, 1
  %2473 = vrot.lane.b32.xlu0 %v2456, 32
  %v2474 = vpop.permute.xlu0 %2473
  %2475 = vrot.lane.b32.xlu0 %v2472, 32
  %v2476 = vpop.permute.xlu0 %2475
  %v2479 = vmul.f32 %v2466, %v2474
  %v2480 = vmul.f32 %v2468, %v2476
  %2483 = vrot.lane.b32.xlu0 %v2469, 64
  %v2484 = vpop.permute.xlu0 %2483
  %2485 = vrot.lane.b32.xlu0 %v2470, 64
  %v2486 = vpop.permute.xlu0 %2485
  %v2489 = vmul.f32 %v2466, %v2484
  %v2490 = vmul.f32 %v2468, %v2486
  %2493 = vrot.lane.b32.xlu0 %v2489, 32
  %v2494 = vpop.permute.xlu0 %2493
  %2495 = vrot.lane.b32.xlu0 %v2490, 32
  %v2496 = vpop.permute.xlu0 %2495
  %v2499 = vadd.f32 %v2479, %v2494
  %v2500 = vadd.f32 %v2480, %v2496
  %v2501 = vtanh.pop %v2499
  %v2502 = vtanh.pop %v2500
  %2505 = vrot.lane.b32.xlu0 %v2501, 64
  %v2506 = vpop.permute.xlu0 %2505
  %2507 = vrot.lane.b32.xlu0 %v2502, 64
  %v2508 = vpop.permute.xlu0 %2507
  %v2511 = vmul.f32 %v2466, %v2506
  %v2512 = vmul.f32 %v2468, %v2508
  %v2515 = vrot.slane %v2448, 7
  %v2516 = vrot.slane %v2449, 6
  %v2517 = vsel %vm295, %v2516, %v2515
  %2518 = vrot.lane.b32.xlu0 %v2517, 32
  %v2519 = vpop.permute.xlu0 %2518
  %v2521 = vsel %vm317, %v2519, %v2255
  %2522 = vst.msk [vmem:[#allocation2] sm:$0x3] %vm18, %v2521
  %v2523 = vld [vmem:[#allocation3] sm:$0x3]
  %v2526 = vrot.slane %v2436, 7
  %v2527 = vrot.slane %v2437, 6
  %v2528 = vsel %vm295, %v2527, %v2526
  %2529 = vrot.lane.b32.xlu0 %v2528, 96
  %v2530 = vpop.permute.xlu0 %2529
  %v2532 = vsel %vm317, %v2530, %v2523
  %2533 = vst.msk [vmem:[#allocation3] sm:$0x3] %vm18, %v2532
  %v2534 = vld [vmem:[#allocation4] sm:$0x3]
  %v2537 = vrot.slane %v2512, 7
  %v2538 = vsel %vm295, %v2537, %v2511
  %2539 = vrot.lane.b32.xlu0 %v2538, 32
  %v2540 = vpop.permute.xlu0 %2539
  %v2542 = vsel %vm291, %v2540, %v2534
  %2543 = vst.msk [vmem:[#allocation4] sm:$0x3] %vm18, %v2542
  %v2544 = vld [vmem:[#allocation5] sm:$0x3]
  %v2547 = vrot.slane %v2500, 7
  %v2548 = vsel %vm295, %v2547, %v2499
  %2549 = vrot.lane.b32.xlu0 %v2548, 96
  %v2550 = vpop.permute.xlu0 %2549
  %v2552 = vsel %vm291, %v2550, %v2544
  %2553 = vst.msk [vmem:[#allocation5] sm:$0x3] %vm18, %v2552
  %v2554 = vsel %vm317, %v2519, -1e+30
  %v2555 = vsel %vm291, %v2540, -1e+30
  %2557 = vrot.lane.b32.xlu0 %v2555, 32
  %v2558 = vpop.permute.xlu0 %2557
  %v2560 = vsel %vm44, %v2554, %v2558
  %v2561 = vld [vmem:[%s4] sm:$0x3]
  %v2562 = vmax.f32 %v2561, %v2560
  %2563 = vst.msk [vmem:[%s4] sm:$0x3] %vm23, %v2562
  // Predicated region
  $region18: #{model_forward.15} parent=0 // pred_check
    _
  $region19: #{model_forward.15} parent=0 // pred_check_branch
    %2565 = sbr.rel (0) target = $region21
  $region20: #{model_forward.15} parent=0 // pred_region
    _
  $region21: #{model_forward.15} parent=0 // pred_fallthru
    _
  // Predicated region
  $region22: #{model_forward.15} parent=0 // pred_check
    _
  $region23: #{model_forward.15} parent=0 // pred_check_branch
    %2567 = sbr.rel (0) target = $region25
  $region24: #{model_forward.15} parent=0 // pred_region
    _
  $region25: #{model_forward.15} parent=0 // pred_fallthru
    _

</llo_original>
